<compile_context>
chip_gen: v5e
topology: v5e:2x2
jax: 0.10.0
libtpu: 0.0.40
codegen_flags: <defaults>
</compile_context>

<pallas_src>
import jax
import jax.numpy as jnp
from jax import lax
from jax.experimental import pallas as pl
from jax.experimental.pallas import tpu as pltpu


# ----------------------------------------------------------------------------
# small helpers
# ----------------------------------------------------------------------------
def _round_up(x, m):
    return (x + m - 1) // m * m


def _taps(k, pad):
    """Row-major (dh, dw) offsets of a k x k conv with symmetric padding."""
    return [(kh - pad, kw - pad) for kh in range(k) for kw in range(k)]


def _phase_taps():
    """ConvTranspose2d(k=4, s=2, p=1): output phase (py, px) (y = 2u+py, x = 2v+px)
    is a 4-tap stride-1 conv:  sum_t W[:, :, kh_t, kw_t]^T @ inp[u+du_t, v+dv_t]."""
    phases = []
    for py in (0, 1):
        for px in (0, 1):
            lst = []
            for kh in range(4):
                if kh % 2 != (py + 1) % 2:
                    continue
                for kw in range(4):
                    if kw % 2 != (px + 1) % 2:
                        continue
                    lst.append(((py + 1 - kh) // 2, (px + 1 - kw) // 2, kh, kw))
            phases.append(lst)
    return phases  # 4 lists of (du, dv, kh, kw)


# ----------------------------------------------------------------------------
# in-kernel building blocks (operate on jnp values inside the kernel body)
# ----------------------------------------------------------------------------
def _shifted_cat(canvas_f32, shifts, Wp, G, Lc):
    """Concatenate lane-shifted views of the flat canvas along the channel axis
    -> (num_taps*Cin, Lc), cast to bf16 for the MXU."""
    pieces = []
    for dh, dw in shifts:
        s = G + dh * Wp + dw
        pieces.append(canvas_f32[:, s:s + Lc])
    return jnp.concatenate(pieces, axis=0).astype(jnp.bfloat16)


def _reguard(y, G, Ltot, Lc):
    """Re-embed an (C, Lc) result into a guarded (C, Ltot) canvas (zero guards)."""
    zl = jnp.zeros((y.shape[0], G), y.dtype)
    zr = jnp.zeros((y.shape[0], Ltot - G - Lc), y.dtype)
    return jnp.concatenate([zl, y, zr], axis=1)


# ----------------------------------------------------------------------------
# the three fused Pallas kernels
# ----------------------------------------------------------------------------
def _make_kernel_stage1(Wp, Lc, G, Ltot, k_in, p_in):
    taps_in = _taps(k_in, p_in)   # 7x7, pad 3
    taps_dn = _taps(3, 1)         # 3x3, pad 1 (stride-2 subsample done in glue)

    def kernel(x_ref, w_in_ref, b_in_ref, w_dn_ref, b_dn_ref, mask_ref, out_ref):
        mask = mask_ref[...]                                           # (1, Lc)
        x = x_ref[...]                                                 # (Cin_pad, Ltot) f32
        # inConv + folded BN + ReLU
        xc = _shifted_cat(x, taps_in, Wp, G, Lc)                       # (49*Cin_pad, Lc) bf16
        a = jnp.dot(w_in_ref[...], xc, preferred_element_type=jnp.float32)
        a = jnp.maximum(a + b_in_ref[...], 0.0) * mask
        a = _reguard(a, G, Ltot, Lc)
        # down conv (computed on the full res-1 grid) + folded BN + ReLU
        dc = _shifted_cat(a, taps_dn, Wp, G, Lc)                       # (9*fdim, Lc) bf16
        d = jnp.dot(w_dn_ref[...], dc, preferred_element_type=jnp.float32)
        out_ref[...] = jnp.maximum(d + b_dn_ref[...], 0.0)

    return kernel


def _make_kernel_stage2(Wp, Lc, G, Ltot, n_res, phase_taps):
    taps3 = _taps(3, 1)

    def kernel(x_ref, wres_ref, bres_ref, wup_ref, bup_ref, mask_ref, out_ref):
        mask = mask_ref[...]                                           # (1, Lc)
        cur = x_ref[...]                                               # (dim, Ltot) f32
        # nRes residual blocks, intermediate h kept in VMEM
        for r in range(n_res):
            xc = _shifted_cat(cur, taps3, Wp, G, Lc)                   # (9*dim, Lc)
            h = jnp.dot(wres_ref[2 * r], xc, preferred_element_type=jnp.float32)
            h = jnp.maximum(h + bres_ref[2 * r], 0.0) * mask
            h = _reguard(h, G, Ltot, Lc)
            hc = _shifted_cat(h, taps3, Wp, G, Lc)
            y = jnp.dot(wres_ref[2 * r + 1], hc, preferred_element_type=jnp.float32)
            y = jnp.maximum(cur[:, G:G + Lc] + y + bres_ref[2 * r + 1], 0.0) * mask
            cur = _reguard(y, G, Ltot, Lc)
        # ConvTranspose2d(k=4, s=2, p=1) as 4 sub-pixel phases (+ folded BN + ReLU)
        outs = []
        for p_idx in range(4):
            shifts = [(du, dv) for (du, dv, _, _) in phase_taps[p_idx]]
            pc = _shifted_cat(cur, shifts, Wp, G, Lc)                  # (4*dim, Lc)
            o = jnp.dot(wup_ref[p_idx], pc, preferred_element_type=jnp.float32)
            outs.append(jnp.maximum(o + bup_ref[...], 0.0))
        out_ref[...] = jnp.concatenate(outs, axis=0)                   # (4*fdim, Lc)

    return kernel


def _make_kernel_stage3(Wp, Lc, G, Ltot):
    taps3 = _taps(3, 1)

    def kernel(x_ref, w_ref, o_ref):
        xc = _shifted_cat(x_ref[...], taps3, Wp, G, Lc)                # (9*fdim, Lc)
        o_ref[...] = jnp.dot(w_ref[...], xc, preferred_element_type=jnp.float32)

    return kernel


def _full_block_call(kernel, out_shape, args):
    """Single-step pallas_call with whole-array VMEM blocks."""
    def fb(shape):
        nd = len(shape)
        return pl.BlockSpec(shape, lambda i, _nd=nd: (0,) * _nd)

    return pl.pallas_call(
        kernel,
        out_shape=jax.ShapeDtypeStruct(out_shape, jnp.float32),
        grid=(1,),
        in_specs=[fb(a.shape) for a in args],
        out_specs=fb(out_shape),
        compiler_params=pltpu.CompilerParams(dimension_semantics=("arbitrary",)),
    )(*args)


# ----------------------------------------------------------------------------
# weight packing (BN scale folded into bf16 matmul weights, taps along K)
# ----------------------------------------------------------------------------
def _pack_conv(w_hwio, scale, cin_pad=None):
    KH, KW, Cin, Cout = w_hwio.shape
    w = w_hwio * scale.reshape(1, 1, 1, Cout)
    if cin_pad is not None and cin_pad > Cin:
        w = jnp.pad(w, ((0, 0), (0, 0), (0, cin_pad - Cin), (0, 0)))
        Cin = cin_pad
    w = jnp.transpose(w, (3, 0, 1, 2)).reshape(Cout, KH * KW * Cin)
    return w.astype(jnp.bfloat16)


def _pack_up(w_t, scale, phases):
    """PyTorch ConvTranspose weight (Cin, Cout, 4, 4) -> (4, Cout, 4*Cin) bf16."""
    mats = []
    for lst in phases:
        blocks = [w_t[:, :, kh, kw].T * scale[:, None] for (_, _, kh, kw) in lst]
        mats.append(jnp.concatenate(blocks, axis=1))
    return jnp.stack(mats, axis=0).astype(jnp.bfloat16)


# ----------------------------------------------------------------------------
# RefineNet forward (Pallas)
# ----------------------------------------------------------------------------
def refine_net_forward(params, x_nchw):
    N, Cin, H, W = x_nchw.shape
    fdim = params["in"]["w"].shape[3]
    dim = params["down"][0]["w"].shape[3]
    out_ch = params["out"]["w"].shape[3]
    nRes = len(params["res"])
    assert len(params["down"]) == 1 and len(params["up"]) == 1, "specialised to nDown=1"
    assert H % 2 == 0 and W % 2 == 0

    # ---- geometry of the three flat canvases ----
    M1 = 3
    Hp1, Wp1 = H + 2 * M1, W + 2 * M1
    Lc1 = N * Hp1 * Wp1
    G1 = M1 * Wp1 + M1
    Lt1 = _round_up(Lc1 + 2 * G1, 128)

    H2, W2 = H // 2, W // 2
    Hp2, Wp2 = H2 + 2, W2 + 2
    Lc2 = N * Hp2 * Wp2
    G2 = Wp2 + 1
    Lt2 = _round_up(Lc2 + 2 * G2, 128)

    Hp3, Wp3 = H + 2, W + 2
    Lc3 = N * Hp3 * Wp3
    G3 = Wp3 + 1
    Lt3 = _round_up(Lc3 + 2 * G3, 128)

    cin_pad = max(8, _round_up(Cin, 8))
    out_pad = max(8, _round_up(out_ch, 8))
    phases = _phase_taps()

    # ---- pack weights ----
    w_in = _pack_conv(params["in"]["w"], params["in"]["scale"], cin_pad=cin_pad)
    b_in = params["in"]["bias"].reshape(fdim, 1)
    w_dn = _pack_conv(params["down"][0]["w"], params["down"][0]["scale"])
    b_dn = params["down"][0]["bias"].reshape(dim, 1)
    wres = jnp.stack([_pack_conv(c["w"], c["scale"])
                      for blk in params["res"] for c in (blk["c1"], blk["c2"])], 0)
    bres = jnp.stack([c["bias"].reshape(dim, 1)
                      for blk in params["res"] for c in (blk["c1"], blk["c2"])], 0)
    w_up = _pack_up(params["up"][0]["wt"], params["up"][0]["scale"], phases)
    b_up = params["up"][0]["bias"].reshape(fdim, 1)
    w_out = _pack_conv(params["out"]["w"], jnp.ones((out_ch,), jnp.float32))
    w_out = jnp.pad(w_out, ((0, out_pad - out_ch), (0, 0)))

    # ---- stage 1: inConv + down conv ----
    xc = jnp.transpose(x_nchw, (1, 0, 2, 3)).astype(jnp.float32)
    xc = jnp.pad(xc, ((0, cin_pad - Cin), (0, 0), (M1, M1), (M1, M1)))
    x1 = jnp.pad(xc.reshape(cin_pad, Lc1), ((0, 0), (G1, Lt1 - Lc1 - G1)))
    mask1 = jnp.zeros((N, Hp1, Wp1), jnp.float32).at[:, M1:M1 + H, M1:M1 + W].set(1.0)
    mask1 = mask1.reshape(1, Lc1)

    k1 = _make_kernel_stage1(Wp1, Lc1, G1, Lt1, 7, 3)
    d_full = _full_block_call(k1, (dim, Lc1), [x1, w_in, b_in, w_dn, b_dn, mask1])

    # glue: stride-2 subsample -> res-2 canvas
    d_img = d_full.reshape(dim, N, Hp1, Wp1)[:, :, M1:M1 + H:2, M1:M1 + W:2]
    c2 = jnp.pad(d_img, ((0, 0), (0, 0), (1, 1), (1, 1))).reshape(dim, Lc2)
    x2 = jnp.pad(c2, ((0, 0), (G2, Lt2 - Lc2 - G2)))
    mask2 = jnp.zeros((N, Hp2, Wp2), jnp.float32).at[:, 1:1 + H2, 1:1 + W2].set(1.0)
    mask2 = mask2.reshape(1, Lc2)

    # ---- stage 2: residual blocks + transpose conv (4 sub-pixel phases) ----
    k2 = _make_kernel_stage2(Wp2, Lc2, G2, Lt2, nRes, phases)
    ph = _full_block_call(k2, (4 * fdim, Lc2), [x2, wres, bres, w_up, b_up, mask2])

    # glue: interleave phases into the 2x upsampled image -> res-1 canvas (margin 1)
    ph = ph.reshape(2, 2, fdim, N, Hp2, Wp2)[:, :, :, :, 1:1 + H2, 1:1 + W2]
    up_img = jnp.transpose(ph, (2, 3, 4, 0, 5, 1)).reshape(fdim, N, H, W)
    c3 = jnp.pad(up_img, ((0, 0), (0, 0), (1, 1), (1, 1))).reshape(fdim, Lc3)
    x3 = jnp.pad(c3, ((0, 0), (G3, Lt3 - Lc3 - G3)))

    # ---- stage 3: outConv (no BN, no activation) ----
    k3 = _make_kernel_stage3(Wp3, Lc3, G3, Lt3)
    y = _full_block_call(k3, (out_pad, Lc3), [x3, w_out])

    y = y[:out_ch].reshape(out_ch, N, Hp3, Wp3)[:, :, 1:1 + H, 1:1 + W]
    return jnp.transpose(y, (1, 0, 2, 3))


# ----------------------------------------------------------------------------
# parameters (deterministic synthetic; PyTorch shapes -> HWIO / IOHW)
# ----------------------------------------------------------------------------
def _fold_bn(gamma, beta, mean, var, conv_bias=None, eps=1e-5):
    scale = gamma / jnp.sqrt(var + eps)
    bias = beta - mean * scale
    if conv_bias is not None:
        bias = bias + scale * conv_bias
    return scale, bias


def _bn_raw(key, c):
    k1, k2, k3, k4 = jax.random.split(key, 4)
    gamma = 0.5 + jax.random.uniform(k1, (c,), jnp.float32)
    beta = 0.1 * jax.random.normal(k2, (c,), jnp.float32)
    mean = 0.1 * jax.random.normal(k3, (c,), jnp.float32)
    var = 0.5 + jax.random.uniform(k4, (c,), jnp.float32)
    return gamma, beta, mean, var


def init_params(key, in_ch, out_ch=1, fdim=16, nDown=1, nRes=3):
    keys = iter(jax.random.split(key, 64))

    def conv_w(k, cout, cin, kh, kw):                 # PyTorch OIHW -> HWIO
        w = 0.1 * jax.random.normal(k, (cout, cin, kh, kw), jnp.float32)
        return jnp.transpose(w, (2, 3, 1, 0))

    params = {}
    w = conv_w(next(keys), fdim, in_ch, 7, 7)
    s, b = _fold_bn(*_bn_raw(next(keys), fdim))
    params["in"] = dict(w=w, scale=s, bias=b)

    params["down"] = []
    for i in range(nDown):
        cin, cout = fdim * 2 ** i, fdim * 2 ** (i + 1)
        w = conv_w(next(keys), cout, cin, 3, 3)
        s, b = _fold_bn(*_bn_raw(next(keys), cout))
        params["down"].append(dict(w=w, scale=s, bias=b))

    dim = fdim * 2 ** nDown
    params["res"] = []
    for _ in range(nRes):
        blk = {}
        for name in ("c1", "c2"):
            w = conv_w(next(keys), dim, dim, 3, 3)
            cb = 0.1 * jax.random.normal(next(keys), (dim,), jnp.float32)
            s, b = _fold_bn(*_bn_raw(next(keys), dim), conv_bias=cb)
            blk[name] = dict(w=w, scale=s, bias=b)
        params["res"].append(blk)

    params["up"] = []
    for i in range(nDown):
        cin, cout = fdim * 2 ** (nDown - i), fdim * 2 ** (nDown - i - 1)
        wt = 0.1 * jax.random.normal(next(keys), (cin, cout, 4, 4), jnp.float32)
        s, b = _fold_bn(*_bn_raw(next(keys), cout))
        params["up"].append(dict(wt=wt, scale=s, bias=b))

    w = conv_w(next(keys), out_ch, fdim, 3, 3)
    params["out"] = dict(w=w)
    return params


# ----------------------------------------------------------------------------
# pure-lax reference (same bf16-input / f32-accumulate math for tight checking)
# ----------------------------------------------------------------------------
def refine_net_reference(params, x_nchw):
    def conv(x, w_hwio, scale, bias, *, stride=1, pad=0, relu=True, residual=None):
        wf = (w_hwio * scale.reshape(1, 1, 1, -1)).astype(jnp.bfloat16)
        y = lax.conv_general_dilated(
            x.astype(jnp.bfloat16), wf, (stride, stride), [(pad, pad), (pad, pad)],
            dimension_numbers=("NHWC", "HWIO", "NHWC"),
            preferred_element_type=jnp.float32)
        y = y + bias
        if residual is not None:
            y = y + residual
        return jnp.maximum(y, 0.0) if relu else y

    x = jnp.transpose(x_nchw, (0, 2, 3, 1)).astype(jnp.float32)
    out = conv(x, params["in"]["w"], params["in"]["scale"], params["in"]["bias"], pad=3)
    for l in params["down"]:
        out = conv(out, l["w"], l["scale"], l["bias"], stride=2, pad=1)
    for blk in params["res"]:
        h = conv(out, blk["c1"]["w"], blk["c1"]["scale"], blk["c1"]["bias"], pad=1)
        out = conv(h, blk["c2"]["w"], blk["c2"]["scale"], blk["c2"]["bias"], pad=1,
                   residual=out)
    for l in params["up"]:
        # ConvTranspose2d(k=4,s=2,p=1) == zero-dilate by 2, pad 2, flipped-kernel conv
        w = jnp.transpose(l["wt"][:, :, ::-1, ::-1], (2, 3, 0, 1))
        wf = (w * l["scale"].reshape(1, 1, 1, -1)).astype(jnp.bfloat16)
        y = lax.conv_general_dilated(
            out.astype(jnp.bfloat16), wf, (1, 1), [(2, 2), (2, 2)],
            lhs_dilation=(2, 2), dimension_numbers=("NHWC", "HWIO", "NHWC"),
            preferred_element_type=jnp.float32)
        out = jnp.maximum(y + l["bias"], 0.0)
    oc = params["out"]["w"].shape[3]
    out = conv(out, params["out"]["w"], jnp.ones((oc,), jnp.float32),
               jnp.zeros((oc,), jnp.float32), pad=1, relu=False)
    return jnp.transpose(out, (0, 3, 1, 2))


# ----------------------------------------------------------------------------
if __name__ == "__main__":
    key = jax.random.PRNGKey(0)
    kp, kx = jax.random.split(key)

    in_ch, out_ch, fdim, nDown, nRes = 4, 1, 16, 1, 3
    N, H, W = 2, 16, 16

    params = init_params(kp, in_ch, out_ch, fdim, nDown, nRes)
    x = jax.random.normal(kx, (N, in_ch, H, W), jnp.float32)

    y = jax.block_until_ready(jax.jit(refine_net_forward)(params, x))
    assert y.shape == (N, out_ch, H, W), y.shape

    y_ref = jax.block_until_ready(jax.jit(refine_net_reference)(params, x))
    err = float(jnp.max(jnp.abs(y - y_ref)))
    scale = float(jnp.max(jnp.abs(y_ref)))
    assert err <= 2e-2 * (1.0 + scale), f"max abs err {err} (ref scale {scale})"

    print("KERNEL_OK")
</pallas_src>

<mosaic_0001>
module attributes {stable_mosaic.version = 11 : i64} {
  func.func @kernel(%arg0: i32, %arg1: memref<8x1152xf32, #tpu.memory_space<vmem>>, %arg2: memref<16x392xbf16, #tpu.memory_space<vmem>>, %arg3: memref<16x1xf32, #tpu.memory_space<vmem>>, %arg4: memref<32x144xbf16, #tpu.memory_space<vmem>>, %arg5: memref<32x1xf32, #tpu.memory_space<vmem>>, %arg6: memref<1x968xf32, #tpu.memory_space<vmem>>, %arg7: memref<32x968xf32, #tpu.memory_space<vmem>>) attributes {dimension_semantics = [#tpu.dimension_semantics<arbitrary>], iteration_bounds = array<i64: 1>, scalar_prefetch = 0 : i64, scratch_operands = 0 : i64, tpu.core_type = #tpu.core_type<tc>, window_params = [{pipeline_mode = #tpu.pipeline_mode<synchronous>, transform_indices = @transform_0, window_bounds = array<i64: 8, 1152>}, {pipeline_mode = #tpu.pipeline_mode<synchronous>, transform_indices = @transform_1, window_bounds = array<i64: 16, 392>}, {pipeline_mode = #tpu.pipeline_mode<synchronous>, transform_indices = @transform_2, window_bounds = array<i64: 16, 1>}, {pipeline_mode = #tpu.pipeline_mode<synchronous>, transform_indices = @transform_3, window_bounds = array<i64: 32, 144>}, {pipeline_mode = #tpu.pipeline_mode<synchronous>, transform_indices = @transform_4, window_bounds = array<i64: 32, 1>}, {pipeline_mode = #tpu.pipeline_mode<synchronous>, transform_indices = @transform_5, window_bounds = array<i64: 1, 968>}, {pipeline_mode = #tpu.pipeline_mode<synchronous>, transform_indices = @transform_6, window_bounds = array<i64: 32, 968>}]} {
    %c0 = arith.constant 0 : index
    %c0_0 = arith.constant 0 : index
    %0 = vector.load %arg6[%c0, %c0_0] : memref<1x968xf32, #tpu.memory_space<vmem>>, vector<1x968xf32>
    %c0_1 = arith.constant 0 : index
    %c0_2 = arith.constant 0 : index
    %1 = vector.load %arg1[%c0_1, %c0_2] : memref<8x1152xf32, #tpu.memory_space<vmem>>, vector<8x1152xf32>
    %2 = vector.extract_strided_slice %1 {offsets = [0, 0], sizes = [8, 968], strides = [1, 1]} : vector<8x1152xf32> to vector<8x968xf32>
    %3 = vector.extract_strided_slice %1 {offsets = [0, 1], sizes = [8, 968], strides = [1, 1]} : vector<8x1152xf32> to vector<8x968xf32>
    %4 = vector.extract_strided_slice %1 {offsets = [0, 2], sizes = [8, 968], strides = [1, 1]} : vector<8x1152xf32> to vector<8x968xf32>
    %5 = vector.extract_strided_slice %1 {offsets = [0, 3], sizes = [8, 968], strides = [1, 1]} : vector<8x1152xf32> to vector<8x968xf32>
    %6 = vector.extract_strided_slice %1 {offsets = [0, 4], sizes = [8, 968], strides = [1, 1]} : vector<8x1152xf32> to vector<8x968xf32>
    %7 = vector.extract_strided_slice %1 {offsets = [0, 5], sizes = [8, 968], strides = [1, 1]} : vector<8x1152xf32> to vector<8x968xf32>
    %8 = vector.extract_strided_slice %1 {offsets = [0, 6], sizes = [8, 968], strides = [1, 1]} : vector<8x1152xf32> to vector<8x968xf32>
    %9 = vector.extract_strided_slice %1 {offsets = [0, 22], sizes = [8, 968], strides = [1, 1]} : vector<8x1152xf32> to vector<8x968xf32>
    %10 = vector.extract_strided_slice %1 {offsets = [0, 23], sizes = [8, 968], strides = [1, 1]} : vector<8x1152xf32> to vector<8x968xf32>
    %11 = vector.extract_strided_slice %1 {offsets = [0, 24], sizes = [8, 968], strides = [1, 1]} : vector<8x1152xf32> to vector<8x968xf32>
    %12 = vector.extract_strided_slice %1 {offsets = [0, 25], sizes = [8, 968], strides = [1, 1]} : vector<8x1152xf32> to vector<8x968xf32>
    %13 = vector.extract_strided_slice %1 {offsets = [0, 26], sizes = [8, 968], strides = [1, 1]} : vector<8x1152xf32> to vector<8x968xf32>
    %14 = vector.extract_strided_slice %1 {offsets = [0, 27], sizes = [8, 968], strides = [1, 1]} : vector<8x1152xf32> to vector<8x968xf32>
    %15 = vector.extract_strided_slice %1 {offsets = [0, 28], sizes = [8, 968], strides = [1, 1]} : vector<8x1152xf32> to vector<8x968xf32>
    %16 = vector.extract_strided_slice %1 {offsets = [0, 44], sizes = [8, 968], strides = [1, 1]} : vector<8x1152xf32> to vector<8x968xf32>
    %17 = vector.extract_strided_slice %1 {offsets = [0, 45], sizes = [8, 968], strides = [1, 1]} : vector<8x1152xf32> to vector<8x968xf32>
    %18 = vector.extract_strided_slice %1 {offsets = [0, 46], sizes = [8, 968], strides = [1, 1]} : vector<8x1152xf32> to vector<8x968xf32>
    %19 = vector.extract_strided_slice %1 {offsets = [0, 47], sizes = [8, 968], strides = [1, 1]} : vector<8x1152xf32> to vector<8x968xf32>
    %20 = vector.extract_strided_slice %1 {offsets = [0, 48], sizes = [8, 968], strides = [1, 1]} : vector<8x1152xf32> to vector<8x968xf32>
    %21 = vector.extract_strided_slice %1 {offsets = [0, 49], sizes = [8, 968], strides = [1, 1]} : vector<8x1152xf32> to vector<8x968xf32>
    %22 = vector.extract_strided_slice %1 {offsets = [0, 50], sizes = [8, 968], strides = [1, 1]} : vector<8x1152xf32> to vector<8x968xf32>
    %23 = vector.extract_strided_slice %1 {offsets = [0, 66], sizes = [8, 968], strides = [1, 1]} : vector<8x1152xf32> to vector<8x968xf32>
    %24 = vector.extract_strided_slice %1 {offsets = [0, 67], sizes = [8, 968], strides = [1, 1]} : vector<8x1152xf32> to vector<8x968xf32>
    %25 = vector.extract_strided_slice %1 {offsets = [0, 68], sizes = [8, 968], strides = [1, 1]} : vector<8x1152xf32> to vector<8x968xf32>
    %26 = vector.extract_strided_slice %1 {offsets = [0, 69], sizes = [8, 968], strides = [1, 1]} : vector<8x1152xf32> to vector<8x968xf32>
    %27 = vector.extract_strided_slice %1 {offsets = [0, 70], sizes = [8, 968], strides = [1, 1]} : vector<8x1152xf32> to vector<8x968xf32>
    %28 = vector.extract_strided_slice %1 {offsets = [0, 71], sizes = [8, 968], strides = [1, 1]} : vector<8x1152xf32> to vector<8x968xf32>
    %29 = vector.extract_strided_slice %1 {offsets = [0, 72], sizes = [8, 968], strides = [1, 1]} : vector<8x1152xf32> to vector<8x968xf32>
    %30 = vector.extract_strided_slice %1 {offsets = [0, 88], sizes = [8, 968], strides = [1, 1]} : vector<8x1152xf32> to vector<8x968xf32>
    %31 = vector.extract_strided_slice %1 {offsets = [0, 89], sizes = [8, 968], strides = [1, 1]} : vector<8x1152xf32> to vector<8x968xf32>
    %32 = vector.extract_strided_slice %1 {offsets = [0, 90], sizes = [8, 968], strides = [1, 1]} : vector<8x1152xf32> to vector<8x968xf32>
    %33 = vector.extract_strided_slice %1 {offsets = [0, 91], sizes = [8, 968], strides = [1, 1]} : vector<8x1152xf32> to vector<8x968xf32>
    %34 = vector.extract_strided_slice %1 {offsets = [0, 92], sizes = [8, 968], strides = [1, 1]} : vector<8x1152xf32> to vector<8x968xf32>
    %35 = vector.extract_strided_slice %1 {offsets = [0, 93], sizes = [8, 968], strides = [1, 1]} : vector<8x1152xf32> to vector<8x968xf32>
    %36 = vector.extract_strided_slice %1 {offsets = [0, 94], sizes = [8, 968], strides = [1, 1]} : vector<8x1152xf32> to vector<8x968xf32>
    %37 = vector.extract_strided_slice %1 {offsets = [0, 110], sizes = [8, 968], strides = [1, 1]} : vector<8x1152xf32> to vector<8x968xf32>
    %38 = vector.extract_strided_slice %1 {offsets = [0, 111], sizes = [8, 968], strides = [1, 1]} : vector<8x1152xf32> to vector<8x968xf32>
    %39 = vector.extract_strided_slice %1 {offsets = [0, 112], sizes = [8, 968], strides = [1, 1]} : vector<8x1152xf32> to vector<8x968xf32>
    %40 = vector.extract_strided_slice %1 {offsets = [0, 113], sizes = [8, 968], strides = [1, 1]} : vector<8x1152xf32> to vector<8x968xf32>
    %41 = vector.extract_strided_slice %1 {offsets = [0, 114], sizes = [8, 968], strides = [1, 1]} : vector<8x1152xf32> to vector<8x968xf32>
    %42 = vector.extract_strided_slice %1 {offsets = [0, 115], sizes = [8, 968], strides = [1, 1]} : vector<8x1152xf32> to vector<8x968xf32>
    %43 = vector.extract_strided_slice %1 {offsets = [0, 116], sizes = [8, 968], strides = [1, 1]} : vector<8x1152xf32> to vector<8x968xf32>
    %44 = vector.extract_strided_slice %1 {offsets = [0, 132], sizes = [8, 968], strides = [1, 1]} : vector<8x1152xf32> to vector<8x968xf32>
    %45 = vector.extract_strided_slice %1 {offsets = [0, 133], sizes = [8, 968], strides = [1, 1]} : vector<8x1152xf32> to vector<8x968xf32>
    %46 = vector.extract_strided_slice %1 {offsets = [0, 134], sizes = [8, 968], strides = [1, 1]} : vector<8x1152xf32> to vector<8x968xf32>
    %47 = vector.extract_strided_slice %1 {offsets = [0, 135], sizes = [8, 968], strides = [1, 1]} : vector<8x1152xf32> to vector<8x968xf32>
    %48 = vector.extract_strided_slice %1 {offsets = [0, 136], sizes = [8, 968], strides = [1, 1]} : vector<8x1152xf32> to vector<8x968xf32>
    %49 = vector.extract_strided_slice %1 {offsets = [0, 137], sizes = [8, 968], strides = [1, 1]} : vector<8x1152xf32> to vector<8x968xf32>
    %50 = vector.extract_strided_slice %1 {offsets = [0, 138], sizes = [8, 968], strides = [1, 1]} : vector<8x1152xf32> to vector<8x968xf32>
    %51 = tpu.concatenate %2, %3, %4, %5, %6, %7, %8, %9, %10, %11, %12, %13, %14, %15, %16, %17 in 0 : vector<8x968xf32>, vector<8x968xf32>, vector<8x968xf32>, vector<8x968xf32>, vector<8x968xf32>, vector<8x968xf32>, vector<8x968xf32>, vector<8x968xf32>, vector<8x968xf32>, vector<8x968xf32>, vector<8x968xf32>, vector<8x968xf32>, vector<8x968xf32>, vector<8x968xf32>, vector<8x968xf32>, vector<8x968xf32> -> vector<128x968xf32>
    %52 = tpu.concatenate %18, %19, %20, %21, %22, %23, %24, %25, %26, %27, %28, %29, %30, %31, %32, %33 in 0 : vector<8x968xf32>, vector<8x968xf32>, vector<8x968xf32>, vector<8x968xf32>, vector<8x968xf32>, vector<8x968xf32>, vector<8x968xf32>, vector<8x968xf32>, vector<8x968xf32>, vector<8x968xf32>, vector<8x968xf32>, vector<8x968xf32>, vector<8x968xf32>, vector<8x968xf32>, vector<8x968xf32>, vector<8x968xf32> -> vector<128x968xf32>
    %53 = tpu.concatenate %34, %35, %36, %37, %38, %39, %40, %41, %42, %43, %44, %45, %46, %47, %48, %49 in 0 : vector<8x968xf32>, vector<8x968xf32>, vector<8x968xf32>, vector<8x968xf32>, vector<8x968xf32>, vector<8x968xf32>, vector<8x968xf32>, vector<8x968xf32>, vector<8x968xf32>, vector<8x968xf32>, vector<8x968xf32>, vector<8x968xf32>, vector<8x968xf32>, vector<8x968xf32>, vector<8x968xf32>, vector<8x968xf32> -> vector<128x968xf32>
    %54 = tpu.concatenate %51, %52, %53, %50 in 0 : vector<128x968xf32>, vector<128x968xf32>, vector<128x968xf32>, vector<8x968xf32> -> vector<392x968xf32>
    %55 = arith.truncf %54 : vector<392x968xf32> to vector<392x968xbf16>
    %c0_3 = arith.constant 0 : index
    %c0_4 = arith.constant 0 : index
    %56 = vector.load %arg2[%c0_3, %c0_4] : memref<16x392xbf16, #tpu.memory_space<vmem>>, vector<16x392xbf16>
    %cst = arith.constant dense<0.000000e+00> : vector<16x968xf32>
    %57 = tpu.matmul %56, %55, %cst {dimension_numbers = #tpu.dot_dimension_numbers<[1], [0], [0], [1], [0, 0, 1, 1], [], []>} : vector<16x392xbf16>, vector<392x968xbf16>, vector<16x968xf32> -> vector<16x968xf32>
    %c0_5 = arith.constant 0 : index
    %c0_6 = arith.constant 0 : index
    %58 = vector.load %arg3[%c0_5, %c0_6] : memref<16x1xf32, #tpu.memory_space<vmem>>, vector<16x1xf32>
    %59 = vector.broadcast %58 : vector<16x1xf32> to vector<16x968xf32>
    %60 = arith.addf %57, %59 : vector<16x968xf32>
    %cst_7 = arith.constant 0.000000e+00 : f32
    %61 = vector.broadcast %cst_7 : f32 to vector<16x968xf32>
    %62 = arith.maximumf %60, %61 : vector<16x968xf32>
    %63 = vector.broadcast %0 : vector<1x968xf32> to vector<16x968xf32>
    %64 = arith.mulf %62, %63 : vector<16x968xf32>
    %cst_8 = arith.constant 0.000000e+00 : f32
    %65 = vector.broadcast %cst_8 : f32 to vector<16x69xf32>
    %cst_9 = arith.constant 0.000000e+00 : f32
    %66 = vector.broadcast %cst_9 : f32 to vector<16x115xf32>
    %67 = tpu.concatenate %65, %64, %66 in 1 : vector<16x69xf32>, vector<16x968xf32>, vector<16x115xf32> -> vector<16x1152xf32>
    %68 = vector.extract_strided_slice %67 {offsets = [0, 46], sizes = [16, 968], strides = [1, 1]} : vector<16x1152xf32> to vector<16x968xf32>
    %69 = vector.extract_strided_slice %67 {offsets = [0, 47], sizes = [16, 968], strides = [1, 1]} : vector<16x1152xf32> to vector<16x968xf32>
    %70 = vector.extract_strided_slice %67 {offsets = [0, 48], sizes = [16, 968], strides = [1, 1]} : vector<16x1152xf32> to vector<16x968xf32>
    %71 = vector.extract_strided_slice %67 {offsets = [0, 68], sizes = [16, 968], strides = [1, 1]} : vector<16x1152xf32> to vector<16x968xf32>
    %72 = vector.extract_strided_slice %67 {offsets = [0, 69], sizes = [16, 968], strides = [1, 1]} : vector<16x1152xf32> to vector<16x968xf32>
    %73 = vector.extract_strided_slice %67 {offsets = [0, 70], sizes = [16, 968], strides = [1, 1]} : vector<16x1152xf32> to vector<16x968xf32>
    %74 = vector.extract_strided_slice %67 {offsets = [0, 90], sizes = [16, 968], strides = [1, 1]} : vector<16x1152xf32> to vector<16x968xf32>
    %75 = vector.extract_strided_slice %67 {offsets = [0, 91], sizes = [16, 968], strides = [1, 1]} : vector<16x1152xf32> to vector<16x968xf32>
    %76 = vector.extract_strided_slice %67 {offsets = [0, 92], sizes = [16, 968], strides = [1, 1]} : vector<16x1152xf32> to vector<16x968xf32>
    %77 = tpu.concatenate %68, %69, %70, %71, %72, %73, %74, %75, %76 in 0 : vector<16x968xf32>, vector<16x968xf32>, vector<16x968xf32>, vector<16x968xf32>, vector<16x968xf32>, vector<16x968xf32>, vector<16x968xf32>, vector<16x968xf32>, vector<16x968xf32> -> vector<144x968xf32>
    %78 = arith.truncf %77 : vector<144x968xf32> to vector<144x968xbf16>
    %c0_10 = arith.constant 0 : index
    %c0_11 = arith.constant 0 : index
    %79 = vector.load %arg4[%c0_10, %c0_11] : memref<32x144xbf16, #tpu.memory_space<vmem>>, vector<32x144xbf16>
    %cst_12 = arith.constant dense<0.000000e+00> : vector<32x968xf32>
    %80 = tpu.matmul %79, %78, %cst_12 {dimension_numbers = #tpu.dot_dimension_numbers<[1], [0], [0], [1], [0, 0, 1, 1], [], []>} : vector<32x144xbf16>, vector<144x968xbf16>, vector<32x968xf32> -> vector<32x968xf32>
    %c0_13 = arith.constant 0 : index
    %c0_14 = arith.constant 0 : index
    %81 = vector.load %arg5[%c0_13, %c0_14] : memref<32x1xf32, #tpu.memory_space<vmem>>, vector<32x1xf32>
    %82 = vector.broadcast %81 : vector<32x1xf32> to vector<32x968xf32>
    %83 = arith.addf %80, %82 : vector<32x968xf32>
    %cst_15 = arith.constant 0.000000e+00 : f32
    %84 = vector.broadcast %cst_15 : f32 to vector<32x968xf32>
    %85 = arith.maximumf %83, %84 : vector<32x968xf32>
    %c0_16 = arith.constant 0 : index
    %c0_17 = arith.constant 0 : index
    %86 = vector.load %arg7[%c0_16, %c0_17] : memref<32x968xf32, #tpu.memory_space<vmem>>, vector<32x968xf32>
    tpu.vector_store %arg7[%c0_16, %c0_17], %85 {strides = array<i32>} : memref<32x968xf32, #tpu.memory_space<vmem>>, vector<32x968xf32>,
    return
  }
  func.func @transform_0(%arg0: i32) -> (i32, i32) {
    %c0_i32 = arith.constant 0 : i32
    %c0_i32_0 = arith.constant 0 : i32
    %c0_i32_1 = arith.constant 0 : i32
    return %c0_i32, %c0_i32_0 : i32, i32
  }
  func.func @transform_1(%arg0: i32) -> (i32, i32) {
    %c0_i32 = arith.constant 0 : i32
    %c0_i32_0 = arith.constant 0 : i32
    %c0_i32_1 = arith.constant 0 : i32
    return %c0_i32, %c0_i32_0 : i32, i32
  }
  func.func @transform_2(%arg0: i32) -> (i32, i32) {
    %c0_i32 = arith.constant 0 : i32
    %c0_i32_0 = arith.constant 0 : i32
    %c0_i32_1 = arith.constant 0 : i32
    return %c0_i32, %c0_i32_0 : i32, i32
  }
  func.func @transform_3(%arg0: i32) -> (i32, i32) {
    %c0_i32 = arith.constant 0 : i32
    %c0_i32_0 = arith.constant 0 : i32
    %c0_i32_1 = arith.constant 0 : i32
    return %c0_i32, %c0_i32_0 : i32, i32
  }
  func.func @transform_4(%arg0: i32) -> (i32, i32) {
    %c0_i32 = arith.constant 0 : i32
    %c0_i32_0 = arith.constant 0 : i32
    %c0_i32_1 = arith.constant 0 : i32
    return %c0_i32, %c0_i32_0 : i32, i32
  }
  func.func @transform_5(%arg0: i32) -> (i32, i32) {
    %c0_i32 = arith.constant 0 : i32
    %c0_i32_0 = arith.constant 0 : i32
    %c0_i32_1 = arith.constant 0 : i32
    return %c0_i32, %c0_i32_0 : i32, i32
  }
  func.func @transform_6(%arg0: i32) -> (i32, i32) {
    %c0_i32 = arith.constant 0 : i32
    %c0_i32_0 = arith.constant 0 : i32
    %c0_i32_1 = arith.constant 0 : i32
    return %c0_i32, %c0_i32_0 : i32, i32
  }
}

module attributes {stable_mosaic.version = 11 : i64} {
  func.func @kernel(%arg0: i32, %arg1: memref<32x256xf32, #tpu.memory_space<vmem>>, %arg2: memref<6x32x288xbf16, #tpu.memory_space<vmem>>, %arg3: memref<6x32x1xf32, #tpu.memory_space<vmem>>, %arg4: memref<4x16x128xbf16, #tpu.memory_space<vmem>>, %arg5: memref<16x1xf32, #tpu.memory_space<vmem>>, %arg6: memref<1x200xf32, #tpu.memory_space<vmem>>, %arg7: memref<64x200xf32, #tpu.memory_space<vmem>>) attributes {dimension_semantics = [#tpu.dimension_semantics<arbitrary>], iteration_bounds = array<i64: 1>, scalar_prefetch = 0 : i64, scratch_operands = 0 : i64, tpu.core_type = #tpu.core_type<tc>, window_params = [{pipeline_mode = #tpu.pipeline_mode<synchronous>, transform_indices = @transform_0, window_bounds = array<i64: 32, 256>}, {pipeline_mode = #tpu.pipeline_mode<synchronous>, transform_indices = @transform_1, window_bounds = array<i64: 6, 32, 288>}, {pipeline_mode = #tpu.pipeline_mode<synchronous>, transform_indices = @transform_2, window_bounds = array<i64: 6, 32, 1>}, {pipeline_mode = #tpu.pipeline_mode<synchronous>, transform_indices = @transform_3, window_bounds = array<i64: 4, 16, 128>}, {pipeline_mode = #tpu.pipeline_mode<synchronous>, transform_indices = @transform_4, window_bounds = array<i64: 16, 1>}, {pipeline_mode = #tpu.pipeline_mode<synchronous>, transform_indices = @transform_5, window_bounds = array<i64: 1, 200>}, {pipeline_mode = #tpu.pipeline_mode<synchronous>, transform_indices = @transform_6, window_bounds = array<i64: 64, 200>}]} {
    %c0 = arith.constant 0 : index
    %c0_0 = arith.constant 0 : index
    %0 = vector.load %arg6[%c0, %c0_0] : memref<1x200xf32, #tpu.memory_space<vmem>>, vector<1x200xf32>
    %c0_1 = arith.constant 0 : index
    %c0_2 = arith.constant 0 : index
    %1 = vector.load %arg1[%c0_1, %c0_2] : memref<32x256xf32, #tpu.memory_space<vmem>>, vector<32x256xf32>
    %2 = vector.extract_strided_slice %1 {offsets = [0, 0], sizes = [32, 200], strides = [1, 1]} : vector<32x256xf32> to vector<32x200xf32>
    %3 = vector.extract_strided_slice %1 {offsets = [0, 1], sizes = [32, 200], strides = [1, 1]} : vector<32x256xf32> to vector<32x200xf32>
    %4 = vector.extract_strided_slice %1 {offsets = [0, 2], sizes = [32, 200], strides = [1, 1]} : vector<32x256xf32> to vector<32x200xf32>
    %5 = vector.extract_strided_slice %1 {offsets = [0, 10], sizes = [32, 200], strides = [1, 1]} : vector<32x256xf32> to vector<32x200xf32>
    %6 = vector.extract_strided_slice %1 {offsets = [0, 11], sizes = [32, 200], strides = [1, 1]} : vector<32x256xf32> to vector<32x200xf32>
    %7 = vector.extract_strided_slice %1 {offsets = [0, 12], sizes = [32, 200], strides = [1, 1]} : vector<32x256xf32> to vector<32x200xf32>
    %8 = vector.extract_strided_slice %1 {offsets = [0, 20], sizes = [32, 200], strides = [1, 1]} : vector<32x256xf32> to vector<32x200xf32>
    %9 = vector.extract_strided_slice %1 {offsets = [0, 21], sizes = [32, 200], strides = [1, 1]} : vector<32x256xf32> to vector<32x200xf32>
    %10 = vector.extract_strided_slice %1 {offsets = [0, 22], sizes = [32, 200], strides = [1, 1]} : vector<32x256xf32> to vector<32x200xf32>
    %11 = tpu.concatenate %2, %3, %4, %5, %6, %7, %8, %9, %10 in 0 : vector<32x200xf32>, vector<32x200xf32>, vector<32x200xf32>, vector<32x200xf32>, vector<32x200xf32>, vector<32x200xf32>, vector<32x200xf32>, vector<32x200xf32>, vector<32x200xf32> -> vector<288x200xf32>
    %12 = arith.truncf %11 : vector<288x200xf32> to vector<288x200xbf16>
    %c0_3 = arith.constant 0 : index
    %c0_4 = arith.constant 0 : index
    %c0_5 = arith.constant 0 : index
    %13 = vector.load %arg2[%c0_3, %c0_4, %c0_5] : memref<6x32x288xbf16, #tpu.memory_space<vmem>>, vector<1x32x288xbf16>
    %14 = vector.shape_cast %13 : vector<1x32x288xbf16> to vector<32x288xbf16>
    %cst = arith.constant dense<0.000000e+00> : vector<32x200xf32>
    %15 = tpu.matmul %14, %12, %cst {dimension_numbers = #tpu.dot_dimension_numbers<[1], [0], [0], [1], [0, 0, 1, 1], [], []>} : vector<32x288xbf16>, vector<288x200xbf16>, vector<32x200xf32> -> vector<32x200xf32>
    %c0_6 = arith.constant 0 : index
    %c0_7 = arith.constant 0 : index
    %c0_8 = arith.constant 0 : index
    %16 = vector.load %arg3[%c0_6, %c0_7, %c0_8] : memref<6x32x1xf32, #tpu.memory_space<vmem>>, vector<1x32x1xf32>
    %17 = vector.shape_cast %16 : vector<1x32x1xf32> to vector<32x1xf32>
    %18 = vector.broadcast %17 : vector<32x1xf32> to vector<32x200xf32>
    %19 = arith.addf %15, %18 : vector<32x200xf32>
    %cst_9 = arith.constant 0.000000e+00 : f32
    %20 = vector.broadcast %cst_9 : f32 to vector<32x200xf32>
    %21 = arith.maximumf %19, %20 : vector<32x200xf32>
    %22 = vector.broadcast %0 : vector<1x200xf32> to vector<32x200xf32>
    %23 = arith.mulf %21, %22 : vector<32x200xf32>
    %cst_10 = arith.constant 0.000000e+00 : f32
    %24 = vector.broadcast %cst_10 : f32 to vector<32x11xf32>
    %cst_11 = arith.constant 0.000000e+00 : f32
    %25 = vector.broadcast %cst_11 : f32 to vector<32x45xf32>
    %26 = tpu.concatenate %24, %23, %25 in 1 : vector<32x11xf32>, vector<32x200xf32>, vector<32x45xf32> -> vector<32x256xf32>
    %27 = vector.extract_strided_slice %26 {offsets = [0, 0], sizes = [32, 200], strides = [1, 1]} : vector<32x256xf32> to vector<32x200xf32>
    %28 = vector.extract_strided_slice %26 {offsets = [0, 1], sizes = [32, 200], strides = [1, 1]} : vector<32x256xf32> to vector<32x200xf32>
    %29 = vector.extract_strided_slice %26 {offsets = [0, 2], sizes = [32, 200], strides = [1, 1]} : vector<32x256xf32> to vector<32x200xf32>
    %30 = vector.extract_strided_slice %26 {offsets = [0, 10], sizes = [32, 200], strides = [1, 1]} : vector<32x256xf32> to vector<32x200xf32>
    %31 = vector.extract_strided_slice %26 {offsets = [0, 11], sizes = [32, 200], strides = [1, 1]} : vector<32x256xf32> to vector<32x200xf32>
    %32 = vector.extract_strided_slice %26 {offsets = [0, 12], sizes = [32, 200], strides = [1, 1]} : vector<32x256xf32> to vector<32x200xf32>
    %33 = vector.extract_strided_slice %26 {offsets = [0, 20], sizes = [32, 200], strides = [1, 1]} : vector<32x256xf32> to vector<32x200xf32>
    %34 = vector.extract_strided_slice %26 {offsets = [0, 21], sizes = [32, 200], strides = [1, 1]} : vector<32x256xf32> to vector<32x200xf32>
    %35 = vector.extract_strided_slice %26 {offsets = [0, 22], sizes = [32, 200], strides = [1, 1]} : vector<32x256xf32> to vector<32x200xf32>
    %36 = tpu.concatenate %27, %28, %29, %30, %31, %32, %33, %34, %35 in 0 : vector<32x200xf32>, vector<32x200xf32>, vector<32x200xf32>, vector<32x200xf32>, vector<32x200xf32>, vector<32x200xf32>, vector<32x200xf32>, vector<32x200xf32>, vector<32x200xf32> -> vector<288x200xf32>
    %37 = arith.truncf %36 : vector<288x200xf32> to vector<288x200xbf16>
    %c1 = arith.constant 1 : index
    %c0_12 = arith.constant 0 : index
    %c0_13 = arith.constant 0 : index
    %38 = vector.load %arg2[%c1, %c0_12, %c0_13] : memref<6x32x288xbf16, #tpu.memory_space<vmem>>, vector<1x32x288xbf16>
    %39 = vector.shape_cast %38 : vector<1x32x288xbf16> to vector<32x288xbf16>
    %cst_14 = arith.constant dense<0.000000e+00> : vector<32x200xf32>
    %40 = tpu.matmul %39, %37, %cst_14 {dimension_numbers = #tpu.dot_dimension_numbers<[1], [0], [0], [1], [0, 0, 1, 1], [], []>} : vector<32x288xbf16>, vector<288x200xbf16>, vector<32x200xf32> -> vector<32x200xf32>
    %41 = vector.extract_strided_slice %1 {offsets = [0, 11], sizes = [32, 200], strides = [1, 1]} : vector<32x256xf32> to vector<32x200xf32>
    %42 = arith.addf %41, %40 : vector<32x200xf32>
    %c1_15 = arith.constant 1 : index
    %c0_16 = arith.constant 0 : index
    %c0_17 = arith.constant 0 : index
    %43 = vector.load %arg3[%c1_15, %c0_16, %c0_17] : memref<6x32x1xf32, #tpu.memory_space<vmem>>, vector<1x32x1xf32>
    %44 = vector.shape_cast %43 : vector<1x32x1xf32> to vector<32x1xf32>
    %45 = vector.broadcast %44 : vector<32x1xf32> to vector<32x200xf32>
    %46 = arith.addf %42, %45 : vector<32x200xf32>
    %cst_18 = arith.constant 0.000000e+00 : f32
    %47 = vector.broadcast %cst_18 : f32 to vector<32x200xf32>
    %48 = arith.maximumf %46, %47 : vector<32x200xf32>
    %49 = vector.broadcast %0 : vector<1x200xf32> to vector<32x200xf32>
    %50 = arith.mulf %48, %49 : vector<32x200xf32>
    %cst_19 = arith.constant 0.000000e+00 : f32
    %51 = vector.broadcast %cst_19 : f32 to vector<32x11xf32>
    %cst_20 = arith.constant 0.000000e+00 : f32
    %52 = vector.broadcast %cst_20 : f32 to vector<32x45xf32>
    %53 = tpu.concatenate %51, %50, %52 in 1 : vector<32x11xf32>, vector<32x200xf32>, vector<32x45xf32> -> vector<32x256xf32>
    %54 = vector.extract_strided_slice %53 {offsets = [0, 0], sizes = [32, 200], strides = [1, 1]} : vector<32x256xf32> to vector<32x200xf32>
    %55 = vector.extract_strided_slice %53 {offsets = [0, 1], sizes = [32, 200], strides = [1, 1]} : vector<32x256xf32> to vector<32x200xf32>
    %56 = vector.extract_strided_slice %53 {offsets = [0, 2], sizes = [32, 200], strides = [1, 1]} : vector<32x256xf32> to vector<32x200xf32>
    %57 = vector.extract_strided_slice %53 {offsets = [0, 10], sizes = [32, 200], strides = [1, 1]} : vector<32x256xf32> to vector<32x200xf32>
    %58 = vector.extract_strided_slice %53 {offsets = [0, 11], sizes = [32, 200], strides = [1, 1]} : vector<32x256xf32> to vector<32x200xf32>
    %59 = vector.extract_strided_slice %53 {offsets = [0, 12], sizes = [32, 200], strides = [1, 1]} : vector<32x256xf32> to vector<32x200xf32>
    %60 = vector.extract_strided_slice %53 {offsets = [0, 20], sizes = [32, 200], strides = [1, 1]} : vector<32x256xf32> to vector<32x200xf32>
    %61 = vector.extract_strided_slice %53 {offsets = [0, 21], sizes = [32, 200], strides = [1, 1]} : vector<32x256xf32> to vector<32x200xf32>
    %62 = vector.extract_strided_slice %53 {offsets = [0, 22], sizes = [32, 200], strides = [1, 1]} : vector<32x256xf32> to vector<32x200xf32>
    %63 = tpu.concatenate %54, %55, %56, %57, %58, %59, %60, %61, %62 in 0 : vector<32x200xf32>, vector<32x200xf32>, vector<32x200xf32>, vector<32x200xf32>, vector<32x200xf32>, vector<32x200xf32>, vector<32x200xf32>, vector<32x200xf32>, vector<32x200xf32> -> vector<288x200xf32>
    %64 = arith.truncf %63 : vector<288x200xf32> to vector<288x200xbf16>
    %c2 = arith.constant 2 : index
    %c0_21 = arith.constant 0 : index
    %c0_22 = arith.constant 0 : index
    %65 = vector.load %arg2[%c2, %c0_21, %c0_22] : memref<6x32x288xbf16, #tpu.memory_space<vmem>>, vector<1x32x288xbf16>
    %66 = vector.shape_cast %65 : vector<1x32x288xbf16> to vector<32x288xbf16>
    %cst_23 = arith.constant dense<0.000000e+00> : vector<32x200xf32>
    %67 = tpu.matmul %66, %64, %cst_23 {dimension_numbers = #tpu.dot_dimension_numbers<[1], [0], [0], [1], [0, 0, 1, 1], [], []>} : vector<32x288xbf16>, vector<288x200xbf16>, vector<32x200xf32> -> vector<32x200xf32>
    %c2_24 = arith.constant 2 : index
    %c0_25 = arith.constant 0 : index
    %c0_26 = arith.constant 0 : index
    %68 = vector.load %arg3[%c2_24, %c0_25, %c0_26] : memref<6x32x1xf32, #tpu.memory_space<vmem>>, vector<1x32x1xf32>
    %69 = vector.shape_cast %68 : vector<1x32x1xf32> to vector<32x1xf32>
    %70 = vector.broadcast %69 : vector<32x1xf32> to vector<32x200xf32>
    %71 = arith.addf %67, %70 : vector<32x200xf32>
    %cst_27 = arith.constant 0.000000e+00 : f32
    %72 = vector.broadcast %cst_27 : f32 to vector<32x200xf32>
    %73 = arith.maximumf %71, %72 : vector<32x200xf32>
    %74 = vector.broadcast %0 : vector<1x200xf32> to vector<32x200xf32>
    %75 = arith.mulf %73, %74 : vector<32x200xf32>
    %cst_28 = arith.constant 0.000000e+00 : f32
    %76 = vector.broadcast %cst_28 : f32 to vector<32x11xf32>
    %cst_29 = arith.constant 0.000000e+00 : f32
    %77 = vector.broadcast %cst_29 : f32 to vector<32x45xf32>
    %78 = tpu.concatenate %76, %75, %77 in 1 : vector<32x11xf32>, vector<32x200xf32>, vector<32x45xf32> -> vector<32x256xf32>
    %79 = vector.extract_strided_slice %78 {offsets = [0, 0], sizes = [32, 200], strides = [1, 1]} : vector<32x256xf32> to vector<32x200xf32>
    %80 = vector.extract_strided_slice %78 {offsets = [0, 1], sizes = [32, 200], strides = [1, 1]} : vector<32x256xf32> to vector<32x200xf32>
    %81 = vector.extract_strided_slice %78 {offsets = [0, 2], sizes = [32, 200], strides = [1, 1]} : vector<32x256xf32> to vector<32x200xf32>
    %82 = vector.extract_strided_slice %78 {offsets = [0, 10], sizes = [32, 200], strides = [1, 1]} : vector<32x256xf32> to vector<32x200xf32>
    %83 = vector.extract_strided_slice %78 {offsets = [0, 11], sizes = [32, 200], strides = [1, 1]} : vector<32x256xf32> to vector<32x200xf32>
    %84 = vector.extract_strided_slice %78 {offsets = [0, 12], sizes = [32, 200], strides = [1, 1]} : vector<32x256xf32> to vector<32x200xf32>
    %85 = vector.extract_strided_slice %78 {offsets = [0, 20], sizes = [32, 200], strides = [1, 1]} : vector<32x256xf32> to vector<32x200xf32>
    %86 = vector.extract_strided_slice %78 {offsets = [0, 21], sizes = [32, 200], strides = [1, 1]} : vector<32x256xf32> to vector<32x200xf32>
    %87 = vector.extract_strided_slice %78 {offsets = [0, 22], sizes = [32, 200], strides = [1, 1]} : vector<32x256xf32> to vector<32x200xf32>
    %88 = tpu.concatenate %79, %80, %81, %82, %83, %84, %85, %86, %87 in 0 : vector<32x200xf32>, vector<32x200xf32>, vector<32x200xf32>, vector<32x200xf32>, vector<32x200xf32>, vector<32x200xf32>, vector<32x200xf32>, vector<32x200xf32>, vector<32x200xf32> -> vector<288x200xf32>
    %89 = arith.truncf %88 : vector<288x200xf32> to vector<288x200xbf16>
    %c3 = arith.constant 3 : index
    %c0_30 = arith.constant 0 : index
    %c0_31 = arith.constant 0 : index
    %90 = vector.load %arg2[%c3, %c0_30, %c0_31] : memref<6x32x288xbf16, #tpu.memory_space<vmem>>, vector<1x32x288xbf16>
    %91 = vector.shape_cast %90 : vector<1x32x288xbf16> to vector<32x288xbf16>
    %cst_32 = arith.constant dense<0.000000e+00> : vector<32x200xf32>
    %92 = tpu.matmul %91, %89, %cst_32 {dimension_numbers = #tpu.dot_dimension_numbers<[1], [0], [0], [1], [0, 0, 1, 1], [], []>} : vector<32x288xbf16>, vector<288x200xbf16>, vector<32x200xf32> -> vector<32x200xf32>
    %93 = vector.extract_strided_slice %53 {offsets = [0, 11], sizes = [32, 200], strides = [1, 1]} : vector<32x256xf32> to vector<32x200xf32>
    %94 = arith.addf %93, %92 : vector<32x200xf32>
    %c3_33 = arith.constant 3 : index
    %c0_34 = arith.constant 0 : index
    %c0_35 = arith.constant 0 : index
    %95 = vector.load %arg3[%c3_33, %c0_34, %c0_35] : memref<6x32x1xf32, #tpu.memory_space<vmem>>, vector<1x32x1xf32>
    %96 = vector.shape_cast %95 : vector<1x32x1xf32> to vector<32x1xf32>
    %97 = vector.broadcast %96 : vector<32x1xf32> to vector<32x200xf32>
    %98 = arith.addf %94, %97 : vector<32x200xf32>
    %cst_36 = arith.constant 0.000000e+00 : f32
    %99 = vector.broadcast %cst_36 : f32 to vector<32x200xf32>
    %100 = arith.maximumf %98, %99 : vector<32x200xf32>
    %101 = vector.broadcast %0 : vector<1x200xf32> to vector<32x200xf32>
    %102 = arith.mulf %100, %101 : vector<32x200xf32>
    %cst_37 = arith.constant 0.000000e+00 : f32
    %103 = vector.broadcast %cst_37 : f32 to vector<32x11xf32>
    %cst_38 = arith.constant 0.000000e+00 : f32
    %104 = vector.broadcast %cst_38 : f32 to vector<32x45xf32>
    %105 = tpu.concatenate %103, %102, %104 in 1 : vector<32x11xf32>, vector<32x200xf32>, vector<32x45xf32> -> vector<32x256xf32>
    %106 = vector.extract_strided_slice %105 {offsets = [0, 0], sizes = [32, 200], strides = [1, 1]} : vector<32x256xf32> to vector<32x200xf32>
    %107 = vector.extract_strided_slice %105 {offsets = [0, 1], sizes = [32, 200], strides = [1, 1]} : vector<32x256xf32> to vector<32x200xf32>
    %108 = vector.extract_strided_slice %105 {offsets = [0, 2], sizes = [32, 200], strides = [1, 1]} : vector<32x256xf32> to vector<32x200xf32>
    %109 = vector.extract_strided_slice %105 {offsets = [0, 10], sizes = [32, 200], strides = [1, 1]} : vector<32x256xf32> to vector<32x200xf32>
    %110 = vector.extract_strided_slice %105 {offsets = [0, 11], sizes = [32, 200], strides = [1, 1]} : vector<32x256xf32> to vector<32x200xf32>
    %111 = vector.extract_strided_slice %105 {offsets = [0, 12], sizes = [32, 200], strides = [1, 1]} : vector<32x256xf32> to vector<32x200xf32>
    %112 = vector.extract_strided_slice %105 {offsets = [0, 20], sizes = [32, 200], strides = [1, 1]} : vector<32x256xf32> to vector<32x200xf32>
    %113 = vector.extract_strided_slice %105 {offsets = [0, 21], sizes = [32, 200], strides = [1, 1]} : vector<32x256xf32> to vector<32x200xf32>
    %114 = vector.extract_strided_slice %105 {offsets = [0, 22], sizes = [32, 200], strides = [1, 1]} : vector<32x256xf32> to vector<32x200xf32>
    %115 = tpu.concatenate %106, %107, %108, %109, %110, %111, %112, %113, %114 in 0 : vector<32x200xf32>, vector<32x200xf32>, vector<32x200xf32>, vector<32x200xf32>, vector<32x200xf32>, vector<32x200xf32>, vector<32x200xf32>, vector<32x200xf32>, vector<32x200xf32> -> vector<288x200xf32>
    %116 = arith.truncf %115 : vector<288x200xf32> to vector<288x200xbf16>
    %c4 = arith.constant 4 : index
    %c0_39 = arith.constant 0 : index
    %c0_40 = arith.constant 0 : index
    %117 = vector.load %arg2[%c4, %c0_39, %c0_40] : memref<6x32x288xbf16, #tpu.memory_space<vmem>>, vector<1x32x288xbf16>
    %118 = vector.shape_cast %117 : vector<1x32x288xbf16> to vector<32x288xbf16>
    %cst_41 = arith.constant dense<0.000000e+00> : vector<32x200xf32>
    %119 = tpu.matmul %118, %116, %cst_41 {dimension_numbers = #tpu.dot_dimension_numbers<[1], [0], [0], [1], [0, 0, 1, 1], [], []>} : vector<32x288xbf16>, vector<288x200xbf16>, vector<32x200xf32> -> vector<32x200xf32>
    %c4_42 = arith.constant 4 : index
    %c0_43 = arith.constant 0 : index
    %c0_44 = arith.constant 0 : index
    %120 = vector.load %arg3[%c4_42, %c0_43, %c0_44] : memref<6x32x1xf32, #tpu.memory_space<vmem>>, vector<1x32x1xf32>
    %121 = vector.shape_cast %120 : vector<1x32x1xf32> to vector<32x1xf32>
    %122 = vector.broadcast %121 : vector<32x1xf32> to vector<32x200xf32>
    %123 = arith.addf %119, %122 : vector<32x200xf32>
    %cst_45 = arith.constant 0.000000e+00 : f32
    %124 = vector.broadcast %cst_45 : f32 to vector<32x200xf32>
    %125 = arith.maximumf %123, %124 : vector<32x200xf32>
    %126 = vector.broadcast %0 : vector<1x200xf32> to vector<32x200xf32>
    %127 = arith.mulf %125, %126 : vector<32x200xf32>
    %cst_46 = arith.constant 0.000000e+00 : f32
    %128 = vector.broadcast %cst_46 : f32 to vector<32x11xf32>
    %cst_47 = arith.constant 0.000000e+00 : f32
    %129 = vector.broadcast %cst_47 : f32 to vector<32x45xf32>
    %130 = tpu.concatenate %128, %127, %129 in 1 : vector<32x11xf32>, vector<32x200xf32>, vector<32x45xf32> -> vector<32x256xf32>
    %131 = vector.extract_strided_slice %130 {offsets = [0, 0], sizes = [32, 200], strides = [1, 1]} : vector<32x256xf32> to vector<32x200xf32>
    %132 = vector.extract_strided_slice %130 {offsets = [0, 1], sizes = [32, 200], strides = [1, 1]} : vector<32x256xf32> to vector<32x200xf32>
    %133 = vector.extract_strided_slice %130 {offsets = [0, 2], sizes = [32, 200], strides = [1, 1]} : vector<32x256xf32> to vector<32x200xf32>
    %134 = vector.extract_strided_slice %130 {offsets = [0, 10], sizes = [32, 200], strides = [1, 1]} : vector<32x256xf32> to vector<32x200xf32>
    %135 = vector.extract_strided_slice %130 {offsets = [0, 11], sizes = [32, 200], strides = [1, 1]} : vector<32x256xf32> to vector<32x200xf32>
    %136 = vector.extract_strided_slice %130 {offsets = [0, 12], sizes = [32, 200], strides = [1, 1]} : vector<32x256xf32> to vector<32x200xf32>
    %137 = vector.extract_strided_slice %130 {offsets = [0, 20], sizes = [32, 200], strides = [1, 1]} : vector<32x256xf32> to vector<32x200xf32>
    %138 = vector.extract_strided_slice %130 {offsets = [0, 21], sizes = [32, 200], strides = [1, 1]} : vector<32x256xf32> to vector<32x200xf32>
    %139 = vector.extract_strided_slice %130 {offsets = [0, 22], sizes = [32, 200], strides = [1, 1]} : vector<32x256xf32> to vector<32x200xf32>
    %140 = tpu.concatenate %131, %132, %133, %134, %135, %136, %137, %138, %139 in 0 : vector<32x200xf32>, vector<32x200xf32>, vector<32x200xf32>, vector<32x200xf32>, vector<32x200xf32>, vector<32x200xf32>, vector<32x200xf32>, vector<32x200xf32>, vector<32x200xf32> -> vector<288x200xf32>
    %141 = arith.truncf %140 : vector<288x200xf32> to vector<288x200xbf16>
    %c5 = arith.constant 5 : index
    %c0_48 = arith.constant 0 : index
    %c0_49 = arith.constant 0 : index
    %142 = vector.load %arg2[%c5, %c0_48, %c0_49] : memref<6x32x288xbf16, #tpu.memory_space<vmem>>, vector<1x32x288xbf16>
    %143 = vector.shape_cast %142 : vector<1x32x288xbf16> to vector<32x288xbf16>
    %cst_50 = arith.constant dense<0.000000e+00> : vector<32x200xf32>
    %144 = tpu.matmul %143, %141, %cst_50 {dimension_numbers = #tpu.dot_dimension_numbers<[1], [0], [0], [1], [0, 0, 1, 1], [], []>} : vector<32x288xbf16>, vector<288x200xbf16>, vector<32x200xf32> -> vector<32x200xf32>
    %145 = vector.extract_strided_slice %105 {offsets = [0, 11], sizes = [32, 200], strides = [1, 1]} : vector<32x256xf32> to vector<32x200xf32>
    %146 = arith.addf %145, %144 : vector<32x200xf32>
    %c5_51 = arith.constant 5 : index
    %c0_52 = arith.constant 0 : index
    %c0_53 = arith.constant 0 : index
    %147 = vector.load %arg3[%c5_51, %c0_52, %c0_53] : memref<6x32x1xf32, #tpu.memory_space<vmem>>, vector<1x32x1xf32>
    %148 = vector.shape_cast %147 : vector<1x32x1xf32> to vector<32x1xf32>
    %149 = vector.broadcast %148 : vector<32x1xf32> to vector<32x200xf32>
    %150 = arith.addf %146, %149 : vector<32x200xf32>
    %cst_54 = arith.constant 0.000000e+00 : f32
    %151 = vector.broadcast %cst_54 : f32 to vector<32x200xf32>
    %152 = arith.maximumf %150, %151 : vector<32x200xf32>
    %153 = vector.broadcast %0 : vector<1x200xf32> to vector<32x200xf32>
    %154 = arith.mulf %152, %153 : vector<32x200xf32>
    %cst_55 = arith.constant 0.000000e+00 : f32
    %155 = vector.broadcast %cst_55 : f32 to vector<32x11xf32>
    %cst_56 = arith.constant 0.000000e+00 : f32
    %156 = vector.broadcast %cst_56 : f32 to vector<32x45xf32>
    %157 = tpu.concatenate %155, %154, %156 in 1 : vector<32x11xf32>, vector<32x200xf32>, vector<32x45xf32> -> vector<32x256xf32>
    %158 = vector.extract_strided_slice %157 {offsets = [0, 11], sizes = [32, 200], strides = [1, 1]} : vector<32x256xf32> to vector<32x200xf32>
    %159 = vector.extract_strided_slice %157 {offsets = [0, 10], sizes = [32, 200], strides = [1, 1]} : vector<32x256xf32> to vector<32x200xf32>
    %160 = vector.extract_strided_slice %157 {offsets = [0, 1], sizes = [32, 200], strides = [1, 1]} : vector<32x256xf32> to vector<32x200xf32>
    %161 = vector.extract_strided_slice %157 {offsets = [0, 0], sizes = [32, 200], strides = [1, 1]} : vector<32x256xf32> to vector<32x200xf32>
    %162 = tpu.concatenate %158, %159, %160, %161 in 0 : vector<32x200xf32>, vector<32x200xf32>, vector<32x200xf32>, vector<32x200xf32> -> vector<128x200xf32>
    %163 = arith.truncf %162 : vector<128x200xf32> to vector<128x200xbf16>
    %c0_57 = arith.constant 0 : index
    %c0_58 = arith.constant 0 : index
    %c0_59 = arith.constant 0 : index
    %164 = vector.load %arg4[%c0_57, %c0_58, %c0_59] : memref<4x16x128xbf16, #tpu.memory_space<vmem>>, vector<1x16x128xbf16>
    %165 = vector.shape_cast %164 : vector<1x16x128xbf16> to vector<16x128xbf16>
    %cst_60 = arith.constant dense<0.000000e+00> : vector<16x200xf32>
    %166 = tpu.matmul %165, %163, %cst_60 {dimension_numbers = #tpu.dot_dimension_numbers<[1], [0], [0], [1], [0, 0, 1, 1], [], []>} : vector<16x128xbf16>, vector<128x200xbf16>, vector<16x200xf32> -> vector<16x200xf32>
    %c0_61 = arith.constant 0 : index
    %c0_62 = arith.constant 0 : index
    %167 = vector.load %arg5[%c0_61, %c0_62] : memref<16x1xf32, #tpu.memory_space<vmem>>, vector<16x1xf32>
    %168 = vector.broadcast %167 : vector<16x1xf32> to vector<16x200xf32>
    %169 = arith.addf %166, %168 : vector<16x200xf32>
    %cst_63 = arith.constant 0.000000e+00 : f32
    %170 = vector.broadcast %cst_63 : f32 to vector<16x200xf32>
    %171 = arith.maximumf %169, %170 : vector<16x200xf32>
    %172 = vector.extract_strided_slice %157 {offsets = [0, 12], sizes = [32, 200], strides = [1, 1]} : vector<32x256xf32> to vector<32x200xf32>
    %173 = vector.extract_strided_slice %157 {offsets = [0, 11], sizes = [32, 200], strides = [1, 1]} : vector<32x256xf32> to vector<32x200xf32>
    %174 = vector.extract_strided_slice %157 {offsets = [0, 2], sizes = [32, 200], strides = [1, 1]} : vector<32x256xf32> to vector<32x200xf32>
    %175 = vector.extract_strided_slice %157 {offsets = [0, 1], sizes = [32, 200], strides = [1, 1]} : vector<32x256xf32> to vector<32x200xf32>
    %176 = tpu.concatenate %172, %173, %174, %175 in 0 : vector<32x200xf32>, vector<32x200xf32>, vector<32x200xf32>, vector<32x200xf32> -> vector<128x200xf32>
    %177 = arith.truncf %176 : vector<128x200xf32> to vector<128x200xbf16>
    %c1_64 = arith.constant 1 : index
    %c0_65 = arith.constant 0 : index
    %c0_66 = arith.constant 0 : index
    %178 = vector.load %arg4[%c1_64, %c0_65, %c0_66] : memref<4x16x128xbf16, #tpu.memory_space<vmem>>, vector<1x16x128xbf16>
    %179 = vector.shape_cast %178 : vector<1x16x128xbf16> to vector<16x128xbf16>
    %cst_67 = arith.constant dense<0.000000e+00> : vector<16x200xf32>
    %180 = tpu.matmul %179, %177, %cst_67 {dimension_numbers = #tpu.dot_dimension_numbers<[1], [0], [0], [1], [0, 0, 1, 1], [], []>} : vector<16x128xbf16>, vector<128x200xbf16>, vector<16x200xf32> -> vector<16x200xf32>
    %c0_68 = arith.constant 0 : index
    %c0_69 = arith.constant 0 : index
    %181 = vector.load %arg5[%c0_68, %c0_69] : memref<16x1xf32, #tpu.memory_space<vmem>>, vector<16x1xf32>
    %182 = vector.broadcast %181 : vector<16x1xf32> to vector<16x200xf32>
    %183 = arith.addf %180, %182 : vector<16x200xf32>
    %cst_70 = arith.constant 0.000000e+00 : f32
    %184 = vector.broadcast %cst_70 : f32 to vector<16x200xf32>
    %185 = arith.maximumf %183, %184 : vector<16x200xf32>
    %186 = vector.extract_strided_slice %157 {offsets = [0, 21], sizes = [32, 200], strides = [1, 1]} : vector<32x256xf32> to vector<32x200xf32>
    %187 = vector.extract_strided_slice %157 {offsets = [0, 20], sizes = [32, 200], strides = [1, 1]} : vector<32x256xf32> to vector<32x200xf32>
    %188 = vector.extract_strided_slice %157 {offsets = [0, 11], sizes = [32, 200], strides = [1, 1]} : vector<32x256xf32> to vector<32x200xf32>
    %189 = vector.extract_strided_slice %157 {offsets = [0, 10], sizes = [32, 200], strides = [1, 1]} : vector<32x256xf32> to vector<32x200xf32>
    %190 = tpu.concatenate %186, %187, %188, %189 in 0 : vector<32x200xf32>, vector<32x200xf32>, vector<32x200xf32>, vector<32x200xf32> -> vector<128x200xf32>
    %191 = arith.truncf %190 : vector<128x200xf32> to vector<128x200xbf16>
    %c2_71 = arith.constant 2 : index
    %c0_72 = arith.constant 0 : index
    %c0_73 = arith.constant 0 : index
    %192 = vector.load %arg4[%c2_71, %c0_72, %c0_73] : memref<4x16x128xbf16, #tpu.memory_space<vmem>>, vector<1x16x128xbf16>
    %193 = vector.shape_cast %192 : vector<1x16x128xbf16> to vector<16x128xbf16>
    %cst_74 = arith.constant dense<0.000000e+00> : vector<16x200xf32>
    %194 = tpu.matmul %193, %191, %cst_74 {dimension_numbers = #tpu.dot_dimension_numbers<[1], [0], [0], [1], [0, 0, 1, 1], [], []>} : vector<16x128xbf16>, vector<128x200xbf16>, vector<16x200xf32> -> vector<16x200xf32>
    %c0_75 = arith.constant 0 : index
    %c0_76 = arith.constant 0 : index
    %195 = vector.load %arg5[%c0_75, %c0_76] : memref<16x1xf32, #tpu.memory_space<vmem>>, vector<16x1xf32>
    %196 = vector.broadcast %195 : vector<16x1xf32> to vector<16x200xf32>
    %197 = arith.addf %194, %196 : vector<16x200xf32>
    %cst_77 = arith.constant 0.000000e+00 : f32
    %198 = vector.broadcast %cst_77 : f32 to vector<16x200xf32>
    %199 = arith.maximumf %197, %198 : vector<16x200xf32>
    %200 = vector.extract_strided_slice %157 {offsets = [0, 22], sizes = [32, 200], strides = [1, 1]} : vector<32x256xf32> to vector<32x200xf32>
    %201 = vector.extract_strided_slice %157 {offsets = [0, 21], sizes = [32, 200], strides = [1, 1]} : vector<32x256xf32> to vector<32x200xf32>
    %202 = vector.extract_strided_slice %157 {offsets = [0, 12], sizes = [32, 200], strides = [1, 1]} : vector<32x256xf32> to vector<32x200xf32>
    %203 = vector.extract_strided_slice %157 {offsets = [0, 11], sizes = [32, 200], strides = [1, 1]} : vector<32x256xf32> to vector<32x200xf32>
    %204 = tpu.concatenate %200, %201, %202, %203 in 0 : vector<32x200xf32>, vector<32x200xf32>, vector<32x200xf32>, vector<32x200xf32> -> vector<128x200xf32>
    %205 = arith.truncf %204 : vector<128x200xf32> to vector<128x200xbf16>
    %c3_78 = arith.constant 3 : index
    %c0_79 = arith.constant 0 : index
    %c0_80 = arith.constant 0 : index
    %206 = vector.load %arg4[%c3_78, %c0_79, %c0_80] : memref<4x16x128xbf16, #tpu.memory_space<vmem>>, vector<1x16x128xbf16>
    %207 = vector.shape_cast %206 : vector<1x16x128xbf16> to vector<16x128xbf16>
    %cst_81 = arith.constant dense<0.000000e+00> : vector<16x200xf32>
    %208 = tpu.matmul %207, %205, %cst_81 {dimension_numbers = #tpu.dot_dimension_numbers<[1], [0], [0], [1], [0, 0, 1, 1], [], []>} : vector<16x128xbf16>, vector<128x200xbf16>, vector<16x200xf32> -> vector<16x200xf32>
    %c0_82 = arith.constant 0 : index
    %c0_83 = arith.constant 0 : index
    %209 = vector.load %arg5[%c0_82, %c0_83] : memref<16x1xf32, #tpu.memory_space<vmem>>, vector<16x1xf32>
    %210 = vector.broadcast %209 : vector<16x1xf32> to vector<16x200xf32>
    %211 = arith.addf %208, %210 : vector<16x200xf32>
    %cst_84 = arith.constant 0.000000e+00 : f32
    %212 = vector.broadcast %cst_84 : f32 to vector<16x200xf32>
    %213 = arith.maximumf %211, %212 : vector<16x200xf32>
    %214 = tpu.concatenate %171, %185, %199, %213 in 0 : vector<16x200xf32>, vector<16x200xf32>, vector<16x200xf32>, vector<16x200xf32> -> vector<64x200xf32>
    %c0_85 = arith.constant 0 : index
    %c0_86 = arith.constant 0 : index
    %215 = vector.load %arg7[%c0_85, %c0_86] : memref<64x200xf32, #tpu.memory_space<vmem>>, vector<64x200xf32>
    tpu.vector_store %arg7[%c0_85, %c0_86], %214 {strides = array<i32>} : memref<64x200xf32, #tpu.memory_space<vmem>>, vector<64x200xf32>,
    return
  }
  func.func @transform_0(%arg0: i32) -> (i32, i32) {
    %c0_i32 = arith.constant 0 : i32
    %c0_i32_0 = arith.constant 0 : i32
    %c0_i32_1 = arith.constant 0 : i32
    return %c0_i32, %c0_i32_0 : i32, i32
  }
  func.func @transform_1(%arg0: i32) -> (i32, i32, i32) {
    %c0_i32 = arith.constant 0 : i32
    %c0_i32_0 = arith.constant 0 : i32
    %c0_i32_1 = arith.constant 0 : i32
    %c0_i32_2 = arith.constant 0 : i32
    return %c0_i32, %c0_i32_0, %c0_i32_1 : i32, i32, i32
  }
  func.func @transform_2(%arg0: i32) -> (i32, i32, i32) {
    %c0_i32 = arith.constant 0 : i32
    %c0_i32_0 = arith.constant 0 : i32
    %c0_i32_1 = arith.constant 0 : i32
    %c0_i32_2 = arith.constant 0 : i32
    return %c0_i32, %c0_i32_0, %c0_i32_1 : i32, i32, i32
  }
  func.func @transform_3(%arg0: i32) -> (i32, i32, i32) {
    %c0_i32 = arith.constant 0 : i32
    %c0_i32_0 = arith.constant 0 : i32
    %c0_i32_1 = arith.constant 0 : i32
    %c0_i32_2 = arith.constant 0 : i32
    return %c0_i32, %c0_i32_0, %c0_i32_1 : i32, i32, i32
  }
  func.func @transform_4(%arg0: i32) -> (i32, i32) {
    %c0_i32 = arith.constant 0 : i32
    %c0_i32_0 = arith.constant 0 : i32
    %c0_i32_1 = arith.constant 0 : i32
    return %c0_i32, %c0_i32_0 : i32, i32
  }
  func.func @transform_5(%arg0: i32) -> (i32, i32) {
    %c0_i32 = arith.constant 0 : i32
    %c0_i32_0 = arith.constant 0 : i32
    %c0_i32_1 = arith.constant 0 : i32
    return %c0_i32, %c0_i32_0 : i32, i32
  }
  func.func @transform_6(%arg0: i32) -> (i32, i32) {
    %c0_i32 = arith.constant 0 : i32
    %c0_i32_0 = arith.constant 0 : i32
    %c0_i32_1 = arith.constant 0 : i32
    return %c0_i32, %c0_i32_0 : i32, i32
  }
}

module attributes {stable_mosaic.version = 11 : i64} {
  func.func @kernel(%arg0: i32, %arg1: memref<16x768xf32, #tpu.memory_space<vmem>>, %arg2: memref<8x144xbf16, #tpu.memory_space<vmem>>, %arg3: memref<8x648xf32, #tpu.memory_space<vmem>>) attributes {dimension_semantics = [#tpu.dimension_semantics<arbitrary>], iteration_bounds = array<i64: 1>, scalar_prefetch = 0 : i64, scratch_operands = 0 : i64, tpu.core_type = #tpu.core_type<tc>, window_params = [{pipeline_mode = #tpu.pipeline_mode<synchronous>, transform_indices = @transform_0, window_bounds = array<i64: 16, 768>}, {pipeline_mode = #tpu.pipeline_mode<synchronous>, transform_indices = @transform_1, window_bounds = array<i64: 8, 144>}, {pipeline_mode = #tpu.pipeline_mode<synchronous>, transform_indices = @transform_2, window_bounds = array<i64: 8, 648>}]} {
    %c0 = arith.constant 0 : index
    %c0_0 = arith.constant 0 : index
    %0 = vector.load %arg1[%c0, %c0_0] : memref<16x768xf32, #tpu.memory_space<vmem>>, vector<16x768xf32>
    %1 = vector.extract_strided_slice %0 {offsets = [0, 0], sizes = [16, 648], strides = [1, 1]} : vector<16x768xf32> to vector<16x648xf32>
    %2 = vector.extract_strided_slice %0 {offsets = [0, 1], sizes = [16, 648], strides = [1, 1]} : vector<16x768xf32> to vector<16x648xf32>
    %3 = vector.extract_strided_slice %0 {offsets = [0, 2], sizes = [16, 648], strides = [1, 1]} : vector<16x768xf32> to vector<16x648xf32>
    %4 = vector.extract_strided_slice %0 {offsets = [0, 18], sizes = [16, 648], strides = [1, 1]} : vector<16x768xf32> to vector<16x648xf32>
    %5 = vector.extract_strided_slice %0 {offsets = [0, 19], sizes = [16, 648], strides = [1, 1]} : vector<16x768xf32> to vector<16x648xf32>
    %6 = vector.extract_strided_slice %0 {offsets = [0, 20], sizes = [16, 648], strides = [1, 1]} : vector<16x768xf32> to vector<16x648xf32>
    %7 = vector.extract_strided_slice %0 {offsets = [0, 36], sizes = [16, 648], strides = [1, 1]} : vector<16x768xf32> to vector<16x648xf32>
    %8 = vector.extract_strided_slice %0 {offsets = [0, 37], sizes = [16, 648], strides = [1, 1]} : vector<16x768xf32> to vector<16x648xf32>
    %9 = vector.extract_strided_slice %0 {offsets = [0, 38], sizes = [16, 648], strides = [1, 1]} : vector<16x768xf32> to vector<16x648xf32>
    %10 = tpu.concatenate %1, %2, %3, %4, %5, %6, %7, %8, %9 in 0 : vector<16x648xf32>, vector<16x648xf32>, vector<16x648xf32>, vector<16x648xf32>, vector<16x648xf32>, vector<16x648xf32>, vector<16x648xf32>, vector<16x648xf32>, vector<16x648xf32> -> vector<144x648xf32>
    %11 = arith.truncf %10 : vector<144x648xf32> to vector<144x648xbf16>
    %c0_1 = arith.constant 0 : index
    %c0_2 = arith.constant 0 : index
    %12 = vector.load %arg2[%c0_1, %c0_2] : memref<8x144xbf16, #tpu.memory_space<vmem>>, vector<8x144xbf16>
    %cst = arith.constant dense<0.000000e+00> : vector<8x648xf32>
    %13 = tpu.matmul %12, %11, %cst {dimension_numbers = #tpu.dot_dimension_numbers<[1], [0], [0], [1], [0, 0, 1, 1], [], []>} : vector<8x144xbf16>, vector<144x648xbf16>, vector<8x648xf32> -> vector<8x648xf32>
    %c0_3 = arith.constant 0 : index
    %c0_4 = arith.constant 0 : index
    %14 = vector.load %arg3[%c0_3, %c0_4] : memref<8x648xf32, #tpu.memory_space<vmem>>, vector<8x648xf32>
    tpu.vector_store %arg3[%c0_3, %c0_4], %13 {strides = array<i32>} : memref<8x648xf32, #tpu.memory_space<vmem>>, vector<8x648xf32>,
    return
  }
  func.func @transform_0(%arg0: i32) -> (i32, i32) {
    %c0_i32 = arith.constant 0 : i32
    %c0_i32_0 = arith.constant 0 : i32
    %c0_i32_1 = arith.constant 0 : i32
    return %c0_i32, %c0_i32_0 : i32, i32
  }
  func.func @transform_1(%arg0: i32) -> (i32, i32) {
    %c0_i32 = arith.constant 0 : i32
    %c0_i32_0 = arith.constant 0 : i32
    %c0_i32_1 = arith.constant 0 : i32
    return %c0_i32, %c0_i32_0 : i32, i32
  }
  func.func @transform_2(%arg0: i32) -> (i32, i32) {
    %c0_i32 = arith.constant 0 : i32
    %c0_i32_0 = arith.constant 0 : i32
    %c0_i32_1 = arith.constant 0 : i32
    return %c0_i32, %c0_i32_0 : i32, i32
  }
}

</mosaic_0001>

<llo_original>
// kernel: refine_net_forward.3
$region0: #{refine_net_forward.3}
  #allocation0 [shape = 'u32[]', space=smem, size = 0x4, offset = 0x4, fixed_abs, tag = 'smem constant byte address 0x4 - core index']
  #allocation1 [shape = 'u32[72,128]{1,0:T(1,128)}', space=vmem, size = 0x9000, scoped, tag = 'internal scratch']
  %s0 = inlined_call_operand.vmem [shape: f32[8,1152], index: 0, kind: input, shape index: {}]
  %s1 = inlined_call_operand.vmem [shape: bf16[16,392], index: 1, kind: input, shape index: {}]
  %s2 = inlined_call_operand.vmem [shape: f32[16,1], index: 2, kind: input, shape index: {}]
  %s3 = inlined_call_operand.vmem [shape: bf16[32,144], index: 3, kind: input, shape index: {}]
  %s4 = inlined_call_operand.vmem [shape: f32[32,1], index: 4, kind: input, shape index: {}]
  %s5 = inlined_call_operand.vmem [shape: f32[1,968], index: 5, kind: input, shape index: {}]
  %s6 = inlined_call_operand.vmem [shape: f32[32,968], index: 6, kind: output, shape index: {}]
  %s7 = sld [smem:[#allocation0]]
  $region34: #{refine_net_forward.3} parent=0
    _
  %s9 = ssub.s32 1, %s7
  %s10 = scalar_select 0, %s9, %s7
  // Predicated region
  $region2: #{refine_net_forward.3} parent=0 // pred_check
    _
  $region3: #{refine_net_forward.3} parent=0 // pred_check_branch
    %12 = sbr.rel (0) target = $region5
  $region4: #{refine_net_forward.3} parent=0 // pred_region
    _
  $region5: #{refine_net_forward.3} parent=0 // pred_fallthru
    _
  // Predicated region
  $region6: #{refine_net_forward.3} parent=0 // pred_check
    _
  $region7: #{refine_net_forward.3} parent=0 // pred_check_branch
    %14 = sbr.rel (0) target = $region9
  $region8: #{refine_net_forward.3} parent=0 // pred_region
    _
  $region9: #{refine_net_forward.3} parent=0 // pred_fallthru
    _
  // Predicated region
  $region10: #{refine_net_forward.3} parent=0 // pred_check
    _
  $region11: #{refine_net_forward.3} parent=0 // pred_check_branch
    %16 = sbr.rel (0) target = $region13
  $region12: #{refine_net_forward.3} parent=0 // pred_region
    _
  $region13: #{refine_net_forward.3} parent=0 // pred_fallthru
    _
  // Predicated region
  $region14: #{refine_net_forward.3} parent=0 // pred_check
    _
  $region15: #{refine_net_forward.3} parent=0 // pred_check_branch
    %18 = sbr.rel (0) target = $region17
  $region16: #{refine_net_forward.3} parent=0 // pred_region
    _
  $region17: #{refine_net_forward.3} parent=0 // pred_fallthru
    _
  // Predicated region
  $region18: #{refine_net_forward.3} parent=0 // pred_check
    _
  $region19: #{refine_net_forward.3} parent=0 // pred_check_branch
    %20 = sbr.rel (0) target = $region21
  $region20: #{refine_net_forward.3} parent=0 // pred_region
    _
  $region21: #{refine_net_forward.3} parent=0 // pred_fallthru
    _
  // Predicated region
  $region22: #{refine_net_forward.3} parent=0 // pred_check
    _
  $region23: #{refine_net_forward.3} parent=0 // pred_check_branch
    %22 = sbr.rel (0) target = $region25
  $region24: #{refine_net_forward.3} parent=0 // pred_region
    _
  $region25: #{refine_net_forward.3} parent=0 // pred_fallthru
    _
  %v24 = vld [vmem:[%s5] sm:$0xff]
  %v25 = vld [vmem:[%s0] sm:$0xff]
  %v26 = vld [vmem:[%s0 + $0x8] sm:$0xff]
  %v27 = vld [vmem:[%s0 + $0x10] sm:$0xff]
  %v28 = vld [vmem:[%s0 + $0x18] sm:$0xff]
  %v29 = vld [vmem:[%s0 + $0x20] sm:$0xff]
  %v30 = vld [vmem:[%s0 + $0x28] sm:$0xff]
  %v31 = vld [vmem:[%s0 + $0x30] sm:$0xff]
  %v32 = vld [vmem:[%s0 + $0x38] sm:$0xff]
  %v33 = vld [vmem:[%s0 + $0x40] sm:$0xff]
  %42 = vrot.lane.b32.xlu0 %v25, 127
  %v43 = vpop.permute.xlu0 %42
  %44 = vrot.lane.b32.xlu0 %v26, 127
  %v45 = vpop.permute.xlu0 %44
  %46 = vrot.lane.b32.xlu0 %v27, 127
  %v47 = vpop.permute.xlu0 %46
  %48 = vrot.lane.b32.xlu0 %v28, 127
  %v49 = vpop.permute.xlu0 %48
  %50 = vrot.lane.b32.xlu0 %v29, 127
  %v51 = vpop.permute.xlu0 %50
  %52 = vrot.lane.b32.xlu0 %v30, 127
  %v53 = vpop.permute.xlu0 %52
  %54 = vrot.lane.b32.xlu0 %v31, 127
  %v55 = vpop.permute.xlu0 %54
  %56 = vrot.lane.b32.xlu0 %v32, 127
  %v57 = vpop.permute.xlu0 %56
  %vm58 = vcmask 1039360
  %v59 = vsel %vm58, %v43, %v45
  %v60 = vsel %vm58, %v45, %v47
  %v61 = vsel %vm58, %v47, %v49
  %v62 = vsel %vm58, %v49, %v51
  %v63 = vsel %vm58, %v51, %v53
  %v64 = vsel %vm58, %v53, %v55
  %v65 = vsel %vm58, %v55, %v57
  %74 = vrot.lane.b32.xlu0 %v25, 126
  %v75 = vpop.permute.xlu0 %74
  %76 = vrot.lane.b32.xlu0 %v26, 126
  %v77 = vpop.permute.xlu0 %76
  %78 = vrot.lane.b32.xlu0 %v27, 126
  %v79 = vpop.permute.xlu0 %78
  %80 = vrot.lane.b32.xlu0 %v28, 126
  %v81 = vpop.permute.xlu0 %80
  %82 = vrot.lane.b32.xlu0 %v29, 126
  %v83 = vpop.permute.xlu0 %82
  %84 = vrot.lane.b32.xlu0 %v30, 126
  %v85 = vpop.permute.xlu0 %84
  %86 = vrot.lane.b32.xlu0 %v31, 126
  %v87 = vpop.permute.xlu0 %86
  %88 = vrot.lane.b32.xlu0 %v32, 126
  %v89 = vpop.permute.xlu0 %88
  %vm90 = vcmask 1031168
  %v91 = vsel %vm90, %v75, %v77
  %v92 = vsel %vm90, %v77, %v79
  %v93 = vsel %vm90, %v79, %v81
  %v94 = vsel %vm90, %v81, %v83
  %v95 = vsel %vm90, %v83, %v85
  %v96 = vsel %vm90, %v85, %v87
  %v97 = vsel %vm90, %v87, %v89
  %106 = vrot.lane.b32.xlu0 %v25, 125
  %v107 = vpop.permute.xlu0 %106
  %108 = vrot.lane.b32.xlu0 %v26, 125
  %v109 = vpop.permute.xlu0 %108
  %110 = vrot.lane.b32.xlu0 %v27, 125
  %v111 = vpop.permute.xlu0 %110
  %112 = vrot.lane.b32.xlu0 %v28, 125
  %v113 = vpop.permute.xlu0 %112
  %114 = vrot.lane.b32.xlu0 %v29, 125
  %v115 = vpop.permute.xlu0 %114
  %116 = vrot.lane.b32.xlu0 %v30, 125
  %v117 = vpop.permute.xlu0 %116
  %118 = vrot.lane.b32.xlu0 %v31, 125
  %v119 = vpop.permute.xlu0 %118
  %120 = vrot.lane.b32.xlu0 %v32, 125
  %v121 = vpop.permute.xlu0 %120
  %vm122 = vcmask 1022976
  %v123 = vsel %vm122, %v107, %v109
  %v124 = vsel %vm122, %v109, %v111
  %v125 = vsel %vm122, %v111, %v113
  %v126 = vsel %vm122, %v113, %v115
  %v127 = vsel %vm122, %v115, %v117
  %v128 = vsel %vm122, %v117, %v119
  %v129 = vsel %vm122, %v119, %v121
  %138 = vrot.lane.b32.xlu0 %v25, 124
  %v139 = vpop.permute.xlu0 %138
  %140 = vrot.lane.b32.xlu0 %v26, 124
  %v141 = vpop.permute.xlu0 %140
  %142 = vrot.lane.b32.xlu0 %v27, 124
  %v143 = vpop.permute.xlu0 %142
  %144 = vrot.lane.b32.xlu0 %v28, 124
  %v145 = vpop.permute.xlu0 %144
  %146 = vrot.lane.b32.xlu0 %v29, 124
  %v147 = vpop.permute.xlu0 %146
  %148 = vrot.lane.b32.xlu0 %v30, 124
  %v149 = vpop.permute.xlu0 %148
  %150 = vrot.lane.b32.xlu0 %v31, 124
  %v151 = vpop.permute.xlu0 %150
  %152 = vrot.lane.b32.xlu0 %v32, 124
  %v153 = vpop.permute.xlu0 %152
  %vm154 = vcmask 1014784
  %v155 = vsel %vm154, %v139, %v141
  %v156 = vsel %vm154, %v141, %v143
  %v157 = vsel %vm154, %v143, %v145
  %v158 = vsel %vm154, %v145, %v147
  %v159 = vsel %vm154, %v147, %v149
  %v160 = vsel %vm154, %v149, %v151
  %v161 = vsel %vm154, %v151, %v153
  %170 = vrot.lane.b32.xlu0 %v25, 123
  %v171 = vpop.permute.xlu0 %170
  %172 = vrot.lane.b32.xlu0 %v26, 123
  %v173 = vpop.permute.xlu0 %172
  %174 = vrot.lane.b32.xlu0 %v27, 123
  %v175 = vpop.permute.xlu0 %174
  %176 = vrot.lane.b32.xlu0 %v28, 123
  %v177 = vpop.permute.xlu0 %176
  %178 = vrot.lane.b32.xlu0 %v29, 123
  %v179 = vpop.permute.xlu0 %178
  %180 = vrot.lane.b32.xlu0 %v30, 123
  %v181 = vpop.permute.xlu0 %180
  %182 = vrot.lane.b32.xlu0 %v31, 123
  %v183 = vpop.permute.xlu0 %182
  %184 = vrot.lane.b32.xlu0 %v32, 123
  %v185 = vpop.permute.xlu0 %184
  %vm186 = vcmask 1006592
  %v187 = vsel %vm186, %v171, %v173
  %v188 = vsel %vm186, %v173, %v175
  %v189 = vsel %vm186, %v175, %v177
  %v190 = vsel %vm186, %v177, %v179
  %v191 = vsel %vm186, %v179, %v181
  %v192 = vsel %vm186, %v181, %v183
  %v193 = vsel %vm186, %v183, %v185
  %202 = vrot.lane.b32.xlu0 %v25, 122
  %v203 = vpop.permute.xlu0 %202
  %204 = vrot.lane.b32.xlu0 %v26, 122
  %v205 = vpop.permute.xlu0 %204
  %206 = vrot.lane.b32.xlu0 %v27, 122
  %v207 = vpop.permute.xlu0 %206
  %208 = vrot.lane.b32.xlu0 %v28, 122
  %v209 = vpop.permute.xlu0 %208
  %210 = vrot.lane.b32.xlu0 %v29, 122
  %v211 = vpop.permute.xlu0 %210
  %212 = vrot.lane.b32.xlu0 %v30, 122
  %v213 = vpop.permute.xlu0 %212
  %214 = vrot.lane.b32.xlu0 %v31, 122
  %v215 = vpop.permute.xlu0 %214
  %216 = vrot.lane.b32.xlu0 %v32, 122
  %v217 = vpop.permute.xlu0 %216
  %vm218 = vcmask 998400
  %v219 = vsel %vm218, %v203, %v205
  %v220 = vsel %vm218, %v205, %v207
  %v221 = vsel %vm218, %v207, %v209
  %v222 = vsel %vm218, %v209, %v211
  %v223 = vsel %vm218, %v211, %v213
  %v224 = vsel %vm218, %v213, %v215
  %v225 = vsel %vm218, %v215, %v217
  %234 = vrot.lane.b32.xlu0 %v25, 106
  %v235 = vpop.permute.xlu0 %234
  %236 = vrot.lane.b32.xlu0 %v26, 106
  %v237 = vpop.permute.xlu0 %236
  %238 = vrot.lane.b32.xlu0 %v27, 106
  %v239 = vpop.permute.xlu0 %238
  %240 = vrot.lane.b32.xlu0 %v28, 106
  %v241 = vpop.permute.xlu0 %240
  %242 = vrot.lane.b32.xlu0 %v29, 106
  %v243 = vpop.permute.xlu0 %242
  %244 = vrot.lane.b32.xlu0 %v30, 106
  %v245 = vpop.permute.xlu0 %244
  %246 = vrot.lane.b32.xlu0 %v31, 106
  %v247 = vpop.permute.xlu0 %246
  %248 = vrot.lane.b32.xlu0 %v32, 106
  %v249 = vpop.permute.xlu0 %248
  %vm250 = vcmask 867328
  %v251 = vsel %vm250, %v235, %v237
  %v252 = vsel %vm250, %v237, %v239
  %v253 = vsel %vm250, %v239, %v241
  %v254 = vsel %vm250, %v241, %v243
  %v255 = vsel %vm250, %v243, %v245
  %v256 = vsel %vm250, %v245, %v247
  %v257 = vsel %vm250, %v247, %v249
  %266 = vrot.lane.b32.xlu0 %v25, 105
  %v267 = vpop.permute.xlu0 %266
  %268 = vrot.lane.b32.xlu0 %v26, 105
  %v269 = vpop.permute.xlu0 %268
  %270 = vrot.lane.b32.xlu0 %v27, 105
  %v271 = vpop.permute.xlu0 %270
  %272 = vrot.lane.b32.xlu0 %v28, 105
  %v273 = vpop.permute.xlu0 %272
  %274 = vrot.lane.b32.xlu0 %v29, 105
  %v275 = vpop.permute.xlu0 %274
  %276 = vrot.lane.b32.xlu0 %v30, 105
  %v277 = vpop.permute.xlu0 %276
  %278 = vrot.lane.b32.xlu0 %v31, 105
  %v279 = vpop.permute.xlu0 %278
  %280 = vrot.lane.b32.xlu0 %v32, 105
  %v281 = vpop.permute.xlu0 %280
  %vm282 = vcmask 859136
  %v283 = vsel %vm282, %v267, %v269
  %v284 = vsel %vm282, %v269, %v271
  %v285 = vsel %vm282, %v271, %v273
  %v286 = vsel %vm282, %v273, %v275
  %v287 = vsel %vm282, %v275, %v277
  %v288 = vsel %vm282, %v277, %v279
  %v289 = vsel %vm282, %v279, %v281
  %298 = vrot.lane.b32.xlu0 %v25, 104
  %v299 = vpop.permute.xlu0 %298
  %300 = vrot.lane.b32.xlu0 %v26, 104
  %v301 = vpop.permute.xlu0 %300
  %302 = vrot.lane.b32.xlu0 %v27, 104
  %v303 = vpop.permute.xlu0 %302
  %304 = vrot.lane.b32.xlu0 %v28, 104
  %v305 = vpop.permute.xlu0 %304
  %306 = vrot.lane.b32.xlu0 %v29, 104
  %v307 = vpop.permute.xlu0 %306
  %308 = vrot.lane.b32.xlu0 %v30, 104
  %v309 = vpop.permute.xlu0 %308
  %310 = vrot.lane.b32.xlu0 %v31, 104
  %v311 = vpop.permute.xlu0 %310
  %312 = vrot.lane.b32.xlu0 %v32, 104
  %v313 = vpop.permute.xlu0 %312
  %vm314 = vcmask 850944
  %v315 = vsel %vm314, %v299, %v301
  %v316 = vsel %vm314, %v301, %v303
  %v317 = vsel %vm314, %v303, %v305
  %v318 = vsel %vm314, %v305, %v307
  %v319 = vsel %vm314, %v307, %v309
  %v320 = vsel %vm314, %v309, %v311
  %v321 = vsel %vm314, %v311, %v313
  %330 = vrot.lane.b32.xlu0 %v25, 103
  %v331 = vpop.permute.xlu0 %330
  %332 = vrot.lane.b32.xlu0 %v26, 103
  %v333 = vpop.permute.xlu0 %332
  %334 = vrot.lane.b32.xlu0 %v27, 103
  %v335 = vpop.permute.xlu0 %334
  %336 = vrot.lane.b32.xlu0 %v28, 103
  %v337 = vpop.permute.xlu0 %336
  %338 = vrot.lane.b32.xlu0 %v29, 103
  %v339 = vpop.permute.xlu0 %338
  %340 = vrot.lane.b32.xlu0 %v30, 103
  %v341 = vpop.permute.xlu0 %340
  %342 = vrot.lane.b32.xlu0 %v31, 103
  %v343 = vpop.permute.xlu0 %342
  %344 = vrot.lane.b32.xlu0 %v32, 103
  %v345 = vpop.permute.xlu0 %344
  %vm346 = vcmask 842752
  %v347 = vsel %vm346, %v331, %v333
  %v348 = vsel %vm346, %v333, %v335
  %v349 = vsel %vm346, %v335, %v337
  %v350 = vsel %vm346, %v337, %v339
  %v351 = vsel %vm346, %v339, %v341
  %v352 = vsel %vm346, %v341, %v343
  %v353 = vsel %vm346, %v343, %v345
  %362 = vrot.lane.b32.xlu0 %v25, 102
  %v363 = vpop.permute.xlu0 %362
  %364 = vrot.lane.b32.xlu0 %v26, 102
  %v365 = vpop.permute.xlu0 %364
  %366 = vrot.lane.b32.xlu0 %v27, 102
  %v367 = vpop.permute.xlu0 %366
  %368 = vrot.lane.b32.xlu0 %v28, 102
  %v369 = vpop.permute.xlu0 %368
  %370 = vrot.lane.b32.xlu0 %v29, 102
  %v371 = vpop.permute.xlu0 %370
  %372 = vrot.lane.b32.xlu0 %v30, 102
  %v373 = vpop.permute.xlu0 %372
  %374 = vrot.lane.b32.xlu0 %v31, 102
  %v375 = vpop.permute.xlu0 %374
  %376 = vrot.lane.b32.xlu0 %v32, 102
  %v377 = vpop.permute.xlu0 %376
  %vm378 = vcmask 834560
  %v379 = vsel %vm378, %v363, %v365
  %v380 = vsel %vm378, %v365, %v367
  %v381 = vsel %vm378, %v367, %v369
  %v382 = vsel %vm378, %v369, %v371
  %v383 = vsel %vm378, %v371, %v373
  %v384 = vsel %vm378, %v373, %v375
  %v385 = vsel %vm378, %v375, %v377
  %394 = vrot.lane.b32.xlu0 %v25, 101
  %v395 = vpop.permute.xlu0 %394
  %396 = vrot.lane.b32.xlu0 %v26, 101
  %v397 = vpop.permute.xlu0 %396
  %398 = vrot.lane.b32.xlu0 %v27, 101
  %v399 = vpop.permute.xlu0 %398
  %400 = vrot.lane.b32.xlu0 %v28, 101
  %v401 = vpop.permute.xlu0 %400
  %402 = vrot.lane.b32.xlu0 %v29, 101
  %v403 = vpop.permute.xlu0 %402
  %404 = vrot.lane.b32.xlu0 %v30, 101
  %v405 = vpop.permute.xlu0 %404
  %406 = vrot.lane.b32.xlu0 %v31, 101
  %v407 = vpop.permute.xlu0 %406
  %408 = vrot.lane.b32.xlu0 %v32, 101
  %v409 = vpop.permute.xlu0 %408
  %vm410 = vcmask 826368
  %v411 = vsel %vm410, %v395, %v397
  %v412 = vsel %vm410, %v397, %v399
  %v413 = vsel %vm410, %v399, %v401
  %v414 = vsel %vm410, %v401, %v403
  %v415 = vsel %vm410, %v403, %v405
  %v416 = vsel %vm410, %v405, %v407
  %v417 = vsel %vm410, %v407, %v409
  %426 = vrot.lane.b32.xlu0 %v25, 100
  %v427 = vpop.permute.xlu0 %426
  %428 = vrot.lane.b32.xlu0 %v26, 100
  %v429 = vpop.permute.xlu0 %428
  %430 = vrot.lane.b32.xlu0 %v27, 100
  %v431 = vpop.permute.xlu0 %430
  %432 = vrot.lane.b32.xlu0 %v28, 100
  %v433 = vpop.permute.xlu0 %432
  %434 = vrot.lane.b32.xlu0 %v29, 100
  %v435 = vpop.permute.xlu0 %434
  %436 = vrot.lane.b32.xlu0 %v30, 100
  %v437 = vpop.permute.xlu0 %436
  %438 = vrot.lane.b32.xlu0 %v31, 100
  %v439 = vpop.permute.xlu0 %438
  %440 = vrot.lane.b32.xlu0 %v32, 100
  %v441 = vpop.permute.xlu0 %440
  %vm442 = vcmask 818176
  %v443 = vsel %vm442, %v427, %v429
  %v444 = vsel %vm442, %v429, %v431
  %v445 = vsel %vm442, %v431, %v433
  %v446 = vsel %vm442, %v433, %v435
  %v447 = vsel %vm442, %v435, %v437
  %v448 = vsel %vm442, %v437, %v439
  %v449 = vsel %vm442, %v439, %v441
  %458 = vrot.lane.b32.xlu0 %v25, 84
  %v459 = vpop.permute.xlu0 %458
  %460 = vrot.lane.b32.xlu0 %v26, 84
  %v461 = vpop.permute.xlu0 %460
  %462 = vrot.lane.b32.xlu0 %v27, 84
  %v463 = vpop.permute.xlu0 %462
  %464 = vrot.lane.b32.xlu0 %v28, 84
  %v465 = vpop.permute.xlu0 %464
  %466 = vrot.lane.b32.xlu0 %v29, 84
  %v467 = vpop.permute.xlu0 %466
  %468 = vrot.lane.b32.xlu0 %v30, 84
  %v469 = vpop.permute.xlu0 %468
  %470 = vrot.lane.b32.xlu0 %v31, 84
  %v471 = vpop.permute.xlu0 %470
  %472 = vrot.lane.b32.xlu0 %v32, 84
  %v473 = vpop.permute.xlu0 %472
  %vm474 = vcmask 687104
  %v475 = vsel %vm474, %v459, %v461
  %v476 = vsel %vm474, %v461, %v463
  %v477 = vsel %vm474, %v463, %v465
  %v478 = vsel %vm474, %v465, %v467
  %v479 = vsel %vm474, %v467, %v469
  %v480 = vsel %vm474, %v469, %v471
  %v481 = vsel %vm474, %v471, %v473
  %490 = vrot.lane.b32.xlu0 %v25, 83
  %v491 = vpop.permute.xlu0 %490
  %492 = vrot.lane.b32.xlu0 %v26, 83
  %v493 = vpop.permute.xlu0 %492
  %494 = vrot.lane.b32.xlu0 %v27, 83
  %v495 = vpop.permute.xlu0 %494
  %496 = vrot.lane.b32.xlu0 %v28, 83
  %v497 = vpop.permute.xlu0 %496
  %498 = vrot.lane.b32.xlu0 %v29, 83
  %v499 = vpop.permute.xlu0 %498
  %500 = vrot.lane.b32.xlu0 %v30, 83
  %v501 = vpop.permute.xlu0 %500
  %502 = vrot.lane.b32.xlu0 %v31, 83
  %v503 = vpop.permute.xlu0 %502
  %504 = vrot.lane.b32.xlu0 %v32, 83
  %v505 = vpop.permute.xlu0 %504
  %vm506 = vcmask 678912
  %v507 = vsel %vm506, %v491, %v493
  %v508 = vsel %vm506, %v493, %v495
  %v509 = vsel %vm506, %v495, %v497
  %v510 = vsel %vm506, %v497, %v499
  %v511 = vsel %vm506, %v499, %v501
  %v512 = vsel %vm506, %v501, %v503
  %v513 = vsel %vm506, %v503, %v505
  %523 = vrot.lane.b32.xlu0 %v25, 108
  %v524 = vpop.permute.xlu0 %523
  %525 = vrot.lane.b32.xlu0 %v26, 108
  %v526 = vpop.permute.xlu0 %525
  %527 = vrot.lane.b32.xlu0 %v27, 108
  %v528 = vpop.permute.xlu0 %527
  %529 = vrot.lane.b32.xlu0 %v28, 108
  %v530 = vpop.permute.xlu0 %529
  %531 = vrot.lane.b32.xlu0 %v29, 108
  %v532 = vpop.permute.xlu0 %531
  %533 = vrot.lane.b32.xlu0 %v30, 108
  %v534 = vpop.permute.xlu0 %533
  %535 = vrot.lane.b32.xlu0 %v31, 108
  %v536 = vpop.permute.xlu0 %535
  %537 = vrot.lane.b32.xlu0 %v32, 108
  %v538 = vpop.permute.xlu0 %537
  %539 = vrot.lane.b32.xlu0 %v33, 108
  %v540 = vpop.permute.xlu0 %539
  %vm541 = vcmask 883712
  %v542 = vsel %vm541, %v524, %v526
  %v543 = vsel %vm541, %v526, %v528
  %v544 = vsel %vm541, %v528, %v530
  %v545 = vsel %vm541, %v530, %v532
  %v546 = vsel %vm541, %v532, %v534
  %v547 = vsel %vm541, %v534, %v536
  %v548 = vsel %vm541, %v536, %v538
  %v549 = vsel %vm541, %v538, %v540
  %550 = vrot.lane.b32.xlu0 %v25, 107
  %v551 = vpop.permute.xlu0 %550
  %552 = vrot.lane.b32.xlu0 %v26, 107
  %v553 = vpop.permute.xlu0 %552
  %554 = vrot.lane.b32.xlu0 %v27, 107
  %v555 = vpop.permute.xlu0 %554
  %556 = vrot.lane.b32.xlu0 %v28, 107
  %v557 = vpop.permute.xlu0 %556
  %558 = vrot.lane.b32.xlu0 %v29, 107
  %v559 = vpop.permute.xlu0 %558
  %560 = vrot.lane.b32.xlu0 %v30, 107
  %v561 = vpop.permute.xlu0 %560
  %562 = vrot.lane.b32.xlu0 %v31, 107
  %v563 = vpop.permute.xlu0 %562
  %564 = vrot.lane.b32.xlu0 %v32, 107
  %v565 = vpop.permute.xlu0 %564
  %566 = vrot.lane.b32.xlu0 %v33, 107
  %v567 = vpop.permute.xlu0 %566
  %vm568 = vcmask 875520
  %v569 = vsel %vm568, %v551, %v553
  %v570 = vsel %vm568, %v553, %v555
  %v571 = vsel %vm568, %v555, %v557
  %v572 = vsel %vm568, %v557, %v559
  %v573 = vsel %vm568, %v559, %v561
  %v574 = vsel %vm568, %v561, %v563
  %v575 = vsel %vm568, %v563, %v565
  %v576 = vsel %vm568, %v565, %v567
  %577 = vrot.lane.b32.xlu0 %v33, 106
  %v578 = vpop.permute.xlu0 %577
  %v579 = vsel %vm250, %v249, %v578
  %580 = vrot.lane.b32.xlu0 %v33, 105
  %v581 = vpop.permute.xlu0 %580
  %v582 = vsel %vm282, %v281, %v581
  %583 = vrot.lane.b32.xlu0 %v33, 104
  %v584 = vpop.permute.xlu0 %583
  %v585 = vsel %vm314, %v313, %v584
  %586 = vrot.lane.b32.xlu0 %v33, 103
  %v587 = vpop.permute.xlu0 %586
  %v588 = vsel %vm346, %v345, %v587
  %589 = vrot.lane.b32.xlu0 %v33, 102
  %v590 = vpop.permute.xlu0 %589
  %v591 = vsel %vm378, %v377, %v590
  %592 = vrot.lane.b32.xlu0 %v25, 86
  %v593 = vpop.permute.xlu0 %592
  %594 = vrot.lane.b32.xlu0 %v26, 86
  %v595 = vpop.permute.xlu0 %594
  %596 = vrot.lane.b32.xlu0 %v27, 86
  %v597 = vpop.permute.xlu0 %596
  %598 = vrot.lane.b32.xlu0 %v28, 86
  %v599 = vpop.permute.xlu0 %598
  %600 = vrot.lane.b32.xlu0 %v29, 86
  %v601 = vpop.permute.xlu0 %600
  %602 = vrot.lane.b32.xlu0 %v30, 86
  %v603 = vpop.permute.xlu0 %602
  %604 = vrot.lane.b32.xlu0 %v31, 86
  %v605 = vpop.permute.xlu0 %604
  %606 = vrot.lane.b32.xlu0 %v32, 86
  %v607 = vpop.permute.xlu0 %606
  %608 = vrot.lane.b32.xlu0 %v33, 86
  %v609 = vpop.permute.xlu0 %608
  %vm610 = vcmask 703488
  %v611 = vsel %vm610, %v593, %v595
  %v612 = vsel %vm610, %v595, %v597
  %v613 = vsel %vm610, %v597, %v599
  %v614 = vsel %vm610, %v599, %v601
  %v615 = vsel %vm610, %v601, %v603
  %v616 = vsel %vm610, %v603, %v605
  %v617 = vsel %vm610, %v605, %v607
  %v618 = vsel %vm610, %v607, %v609
  %619 = vrot.lane.b32.xlu0 %v25, 85
  %v620 = vpop.permute.xlu0 %619
  %621 = vrot.lane.b32.xlu0 %v26, 85
  %v622 = vpop.permute.xlu0 %621
  %623 = vrot.lane.b32.xlu0 %v27, 85
  %v624 = vpop.permute.xlu0 %623
  %625 = vrot.lane.b32.xlu0 %v28, 85
  %v626 = vpop.permute.xlu0 %625
  %627 = vrot.lane.b32.xlu0 %v29, 85
  %v628 = vpop.permute.xlu0 %627
  %629 = vrot.lane.b32.xlu0 %v30, 85
  %v630 = vpop.permute.xlu0 %629
  %631 = vrot.lane.b32.xlu0 %v31, 85
  %v632 = vpop.permute.xlu0 %631
  %633 = vrot.lane.b32.xlu0 %v32, 85
  %v634 = vpop.permute.xlu0 %633
  %635 = vrot.lane.b32.xlu0 %v33, 85
  %v636 = vpop.permute.xlu0 %635
  %vm637 = vcmask 695296
  %v638 = vsel %vm637, %v620, %v622
  %v639 = vsel %vm637, %v622, %v624
  %v640 = vsel %vm637, %v624, %v626
  %v641 = vsel %vm637, %v626, %v628
  %v642 = vsel %vm637, %v628, %v630
  %v643 = vsel %vm637, %v630, %v632
  %v644 = vsel %vm637, %v632, %v634
  %v645 = vsel %vm637, %v634, %v636
  %646 = vrot.lane.b32.xlu0 %v33, 84
  %v647 = vpop.permute.xlu0 %646
  %v648 = vsel %vm474, %v473, %v647
  %649 = vrot.lane.b32.xlu0 %v33, 83
  %v650 = vpop.permute.xlu0 %649
  %v651 = vsel %vm506, %v505, %v650
  %652 = vrot.lane.b32.xlu0 %v33, 127
  %v653 = vpop.permute.xlu0 %652
  %v654 = vsel %vm58, %v57, %v653
  %655 = vrot.lane.b32.xlu0 %v33, 126
  %v656 = vpop.permute.xlu0 %655
  %v657 = vsel %vm90, %v89, %v656
  %658 = vrot.lane.b32.xlu0 %v25, 110
  %v659 = vpop.permute.xlu0 %658
  %660 = vrot.lane.b32.xlu0 %v26, 110
  %v661 = vpop.permute.xlu0 %660
  %662 = vrot.lane.b32.xlu0 %v27, 110
  %v663 = vpop.permute.xlu0 %662
  %664 = vrot.lane.b32.xlu0 %v28, 110
  %v665 = vpop.permute.xlu0 %664
  %666 = vrot.lane.b32.xlu0 %v29, 110
  %v667 = vpop.permute.xlu0 %666
  %668 = vrot.lane.b32.xlu0 %v30, 110
  %v669 = vpop.permute.xlu0 %668
  %670 = vrot.lane.b32.xlu0 %v31, 110
  %v671 = vpop.permute.xlu0 %670
  %672 = vrot.lane.b32.xlu0 %v32, 110
  %v673 = vpop.permute.xlu0 %672
  %674 = vrot.lane.b32.xlu0 %v33, 110
  %v675 = vpop.permute.xlu0 %674
  %vm676 = vcmask 900096
  %v677 = vsel %vm676, %v659, %v661
  %v678 = vsel %vm676, %v661, %v663
  %v679 = vsel %vm676, %v663, %v665
  %v680 = vsel %vm676, %v665, %v667
  %v681 = vsel %vm676, %v667, %v669
  %v682 = vsel %vm676, %v669, %v671
  %v683 = vsel %vm676, %v671, %v673
  %v684 = vsel %vm676, %v673, %v675
  %685 = vrot.lane.b32.xlu0 %v25, 109
  %v686 = vpop.permute.xlu0 %685
  %687 = vrot.lane.b32.xlu0 %v26, 109
  %v688 = vpop.permute.xlu0 %687
  %689 = vrot.lane.b32.xlu0 %v27, 109
  %v690 = vpop.permute.xlu0 %689
  %691 = vrot.lane.b32.xlu0 %v28, 109
  %v692 = vpop.permute.xlu0 %691
  %693 = vrot.lane.b32.xlu0 %v29, 109
  %v694 = vpop.permute.xlu0 %693
  %695 = vrot.lane.b32.xlu0 %v30, 109
  %v696 = vpop.permute.xlu0 %695
  %697 = vrot.lane.b32.xlu0 %v31, 109
  %v698 = vpop.permute.xlu0 %697
  %699 = vrot.lane.b32.xlu0 %v32, 109
  %v700 = vpop.permute.xlu0 %699
  %701 = vrot.lane.b32.xlu0 %v33, 109
  %v702 = vpop.permute.xlu0 %701
  %vm703 = vcmask 891904
  %v704 = vsel %vm703, %v686, %v688
  %v705 = vsel %vm703, %v688, %v690
  %v706 = vsel %vm703, %v690, %v692
  %v707 = vsel %vm703, %v692, %v694
  %v708 = vsel %vm703, %v694, %v696
  %v709 = vsel %vm703, %v696, %v698
  %v710 = vsel %vm703, %v698, %v700
  %v711 = vsel %vm703, %v700, %v702
  %712 = vrot.lane.b32.xlu0 %v26, 88
  %v713 = vpop.permute.xlu0 %712
  %714 = vrot.lane.b32.xlu0 %v27, 88
  %v715 = vpop.permute.xlu0 %714
  %716 = vrot.lane.b32.xlu0 %v28, 88
  %v717 = vpop.permute.xlu0 %716
  %718 = vrot.lane.b32.xlu0 %v29, 88
  %v719 = vpop.permute.xlu0 %718
  %720 = vrot.lane.b32.xlu0 %v30, 88
  %v721 = vpop.permute.xlu0 %720
  %722 = vrot.lane.b32.xlu0 %v31, 88
  %v723 = vpop.permute.xlu0 %722
  %724 = vrot.lane.b32.xlu0 %v32, 88
  %v725 = vpop.permute.xlu0 %724
  %726 = vrot.lane.b32.xlu0 %v33, 88
  %v727 = vpop.permute.xlu0 %726
  %vm728 = vcmask 719872
  %v729 = vsel %vm728, %v713, %v715
  %v730 = vsel %vm728, %v715, %v717
  %v731 = vsel %vm728, %v717, %v719
  %v732 = vsel %vm728, %v719, %v721
  %v733 = vsel %vm728, %v721, %v723
  %v734 = vsel %vm728, %v723, %v725
  %v735 = vsel %vm728, %v725, %v727
  %736 = vrot.lane.b32.xlu0 %v26, 87
  %v737 = vpop.permute.xlu0 %736
  %738 = vrot.lane.b32.xlu0 %v27, 87
  %v739 = vpop.permute.xlu0 %738
  %740 = vrot.lane.b32.xlu0 %v28, 87
  %v741 = vpop.permute.xlu0 %740
  %742 = vrot.lane.b32.xlu0 %v29, 87
  %v743 = vpop.permute.xlu0 %742
  %744 = vrot.lane.b32.xlu0 %v30, 87
  %v745 = vpop.permute.xlu0 %744
  %746 = vrot.lane.b32.xlu0 %v31, 87
  %v747 = vpop.permute.xlu0 %746
  %748 = vrot.lane.b32.xlu0 %v32, 87
  %v749 = vpop.permute.xlu0 %748
  %750 = vrot.lane.b32.xlu0 %v33, 87
  %v751 = vpop.permute.xlu0 %750
  %vm752 = vcmask 711680
  %v753 = vsel %vm752, %v737, %v739
  %v754 = vsel %vm752, %v739, %v741
  %v755 = vsel %vm752, %v741, %v743
  %v756 = vsel %vm752, %v743, %v745
  %v757 = vsel %vm752, %v745, %v747
  %v758 = vsel %vm752, %v747, %v749
  %v759 = vsel %vm752, %v749, %v751
  %760 = vrot.lane.b32.xlu0 %v25, 82
  %v761 = vpop.permute.xlu0 %760
  %762 = vrot.lane.b32.xlu0 %v26, 82
  %v763 = vpop.permute.xlu0 %762
  %764 = vrot.lane.b32.xlu0 %v27, 82
  %v765 = vpop.permute.xlu0 %764
  %766 = vrot.lane.b32.xlu0 %v28, 82
  %v767 = vpop.permute.xlu0 %766
  %768 = vrot.lane.b32.xlu0 %v29, 82
  %v769 = vpop.permute.xlu0 %768
  %770 = vrot.lane.b32.xlu0 %v30, 82
  %v771 = vpop.permute.xlu0 %770
  %772 = vrot.lane.b32.xlu0 %v31, 82
  %v773 = vpop.permute.xlu0 %772
  %774 = vrot.lane.b32.xlu0 %v32, 82
  %v775 = vpop.permute.xlu0 %774
  %776 = vrot.lane.b32.xlu0 %v59, 82
  %v777 = vpop.permute.xlu0 %776
  %778 = vrot.lane.b32.xlu0 %v60, 82
  %v779 = vpop.permute.xlu0 %778
  %780 = vrot.lane.b32.xlu0 %v61, 82
  %v781 = vpop.permute.xlu0 %780
  %782 = vrot.lane.b32.xlu0 %v62, 82
  %v783 = vpop.permute.xlu0 %782
  %784 = vrot.lane.b32.xlu0 %v63, 82
  %v785 = vpop.permute.xlu0 %784
  %786 = vrot.lane.b32.xlu0 %v64, 82
  %v787 = vpop.permute.xlu0 %786
  %788 = vrot.lane.b32.xlu0 %v65, 82
  %v789 = vpop.permute.xlu0 %788
  %790 = vrot.lane.b32.xlu0 %v57, 82
  %v791 = vpop.permute.xlu0 %790
  %792 = vrot.lane.b32.xlu0 %v91, 82
  %v793 = vpop.permute.xlu0 %792
  %794 = vrot.lane.b32.xlu0 %v92, 82
  %v795 = vpop.permute.xlu0 %794
  %796 = vrot.lane.b32.xlu0 %v93, 82
  %v797 = vpop.permute.xlu0 %796
  %798 = vrot.lane.b32.xlu0 %v94, 82
  %v799 = vpop.permute.xlu0 %798
  %800 = vrot.lane.b32.xlu0 %v95, 82
  %v801 = vpop.permute.xlu0 %800
  %802 = vrot.lane.b32.xlu0 %v96, 82
  %v803 = vpop.permute.xlu0 %802
  %804 = vrot.lane.b32.xlu0 %v97, 82
  %v805 = vpop.permute.xlu0 %804
  %806 = vrot.lane.b32.xlu0 %v89, 82
  %v807 = vpop.permute.xlu0 %806
  %808 = vrot.lane.b32.xlu0 %v123, 82
  %v809 = vpop.permute.xlu0 %808
  %810 = vrot.lane.b32.xlu0 %v124, 82
  %v811 = vpop.permute.xlu0 %810
  %812 = vrot.lane.b32.xlu0 %v125, 82
  %v813 = vpop.permute.xlu0 %812
  %814 = vrot.lane.b32.xlu0 %v126, 82
  %v815 = vpop.permute.xlu0 %814
  %816 = vrot.lane.b32.xlu0 %v127, 82
  %v817 = vpop.permute.xlu0 %816
  %818 = vrot.lane.b32.xlu0 %v128, 82
  %v819 = vpop.permute.xlu0 %818
  %820 = vrot.lane.b32.xlu0 %v129, 82
  %v821 = vpop.permute.xlu0 %820
  %822 = vrot.lane.b32.xlu0 %v121, 82
  %v823 = vpop.permute.xlu0 %822
  %824 = vrot.lane.b32.xlu0 %v155, 82
  %v825 = vpop.permute.xlu0 %824
  %826 = vrot.lane.b32.xlu0 %v156, 82
  %v827 = vpop.permute.xlu0 %826
  %828 = vrot.lane.b32.xlu0 %v157, 82
  %v829 = vpop.permute.xlu0 %828
  %830 = vrot.lane.b32.xlu0 %v158, 82
  %v831 = vpop.permute.xlu0 %830
  %832 = vrot.lane.b32.xlu0 %v159, 82
  %v833 = vpop.permute.xlu0 %832
  %834 = vrot.lane.b32.xlu0 %v160, 82
  %v835 = vpop.permute.xlu0 %834
  %836 = vrot.lane.b32.xlu0 %v161, 82
  %v837 = vpop.permute.xlu0 %836
  %838 = vrot.lane.b32.xlu0 %v153, 82
  %v839 = vpop.permute.xlu0 %838
  %840 = vrot.lane.b32.xlu0 %v542, 82
  %v841 = vpop.permute.xlu0 %840
  %842 = vrot.lane.b32.xlu0 %v543, 82
  %v843 = vpop.permute.xlu0 %842
  %844 = vrot.lane.b32.xlu0 %v544, 82
  %v845 = vpop.permute.xlu0 %844
  %846 = vrot.lane.b32.xlu0 %v545, 82
  %v847 = vpop.permute.xlu0 %846
  %848 = vrot.lane.b32.xlu0 %v546, 82
  %v849 = vpop.permute.xlu0 %848
  %850 = vrot.lane.b32.xlu0 %v547, 82
  %v851 = vpop.permute.xlu0 %850
  %852 = vrot.lane.b32.xlu0 %v548, 82
  %v853 = vpop.permute.xlu0 %852
  %854 = vrot.lane.b32.xlu0 %v549, 82
  %v855 = vpop.permute.xlu0 %854
  %856 = vrot.lane.b32.xlu0 %v569, 82
  %v857 = vpop.permute.xlu0 %856
  %858 = vrot.lane.b32.xlu0 %v570, 82
  %v859 = vpop.permute.xlu0 %858
  %860 = vrot.lane.b32.xlu0 %v571, 82
  %v861 = vpop.permute.xlu0 %860
  %862 = vrot.lane.b32.xlu0 %v572, 82
  %v863 = vpop.permute.xlu0 %862
  %864 = vrot.lane.b32.xlu0 %v573, 82
  %v865 = vpop.permute.xlu0 %864
  %866 = vrot.lane.b32.xlu0 %v574, 82
  %v867 = vpop.permute.xlu0 %866
  %868 = vrot.lane.b32.xlu0 %v575, 82
  %v869 = vpop.permute.xlu0 %868
  %870 = vrot.lane.b32.xlu0 %v576, 82
  %v871 = vpop.permute.xlu0 %870
  %872 = vrot.lane.b32.xlu0 %v251, 82
  %v873 = vpop.permute.xlu0 %872
  %874 = vrot.lane.b32.xlu0 %v252, 82
  %v875 = vpop.permute.xlu0 %874
  %876 = vrot.lane.b32.xlu0 %v253, 82
  %v877 = vpop.permute.xlu0 %876
  %878 = vrot.lane.b32.xlu0 %v254, 82
  %v879 = vpop.permute.xlu0 %878
  %880 = vrot.lane.b32.xlu0 %v255, 82
  %v881 = vpop.permute.xlu0 %880
  %882 = vrot.lane.b32.xlu0 %v256, 82
  %v883 = vpop.permute.xlu0 %882
  %884 = vrot.lane.b32.xlu0 %v257, 82
  %v885 = vpop.permute.xlu0 %884
  %886 = vrot.lane.b32.xlu0 %v579, 82
  %v887 = vpop.permute.xlu0 %886
  %888 = vrot.lane.b32.xlu0 %v283, 82
  %v889 = vpop.permute.xlu0 %888
  %890 = vrot.lane.b32.xlu0 %v284, 82
  %v891 = vpop.permute.xlu0 %890
  %892 = vrot.lane.b32.xlu0 %v285, 82
  %v893 = vpop.permute.xlu0 %892
  %894 = vrot.lane.b32.xlu0 %v286, 82
  %v895 = vpop.permute.xlu0 %894
  %896 = vrot.lane.b32.xlu0 %v287, 82
  %v897 = vpop.permute.xlu0 %896
  %898 = vrot.lane.b32.xlu0 %v288, 82
  %v899 = vpop.permute.xlu0 %898
  %900 = vrot.lane.b32.xlu0 %v289, 82
  %v901 = vpop.permute.xlu0 %900
  %902 = vrot.lane.b32.xlu0 %v582, 82
  %v903 = vpop.permute.xlu0 %902
  %904 = vrot.lane.b32.xlu0 %v315, 82
  %v905 = vpop.permute.xlu0 %904
  %906 = vrot.lane.b32.xlu0 %v316, 82
  %v907 = vpop.permute.xlu0 %906
  %908 = vrot.lane.b32.xlu0 %v317, 82
  %v909 = vpop.permute.xlu0 %908
  %910 = vrot.lane.b32.xlu0 %v318, 82
  %v911 = vpop.permute.xlu0 %910
  %912 = vrot.lane.b32.xlu0 %v319, 82
  %v913 = vpop.permute.xlu0 %912
  %914 = vrot.lane.b32.xlu0 %v320, 82
  %v915 = vpop.permute.xlu0 %914
  %916 = vrot.lane.b32.xlu0 %v321, 82
  %v917 = vpop.permute.xlu0 %916
  %918 = vrot.lane.b32.xlu0 %v585, 82
  %v919 = vpop.permute.xlu0 %918
  %920 = vrot.lane.b32.xlu0 %v347, 82
  %v921 = vpop.permute.xlu0 %920
  %922 = vrot.lane.b32.xlu0 %v348, 82
  %v923 = vpop.permute.xlu0 %922
  %924 = vrot.lane.b32.xlu0 %v349, 82
  %v925 = vpop.permute.xlu0 %924
  %926 = vrot.lane.b32.xlu0 %v350, 82
  %v927 = vpop.permute.xlu0 %926
  %928 = vrot.lane.b32.xlu0 %v351, 82
  %v929 = vpop.permute.xlu0 %928
  %930 = vrot.lane.b32.xlu0 %v352, 82
  %v931 = vpop.permute.xlu0 %930
  %932 = vrot.lane.b32.xlu0 %v353, 82
  %v933 = vpop.permute.xlu0 %932
  %934 = vrot.lane.b32.xlu0 %v588, 82
  %v935 = vpop.permute.xlu0 %934
  %936 = vrot.lane.b32.xlu0 %v379, 82
  %v937 = vpop.permute.xlu0 %936
  %938 = vrot.lane.b32.xlu0 %v380, 82
  %v939 = vpop.permute.xlu0 %938
  %940 = vrot.lane.b32.xlu0 %v381, 82
  %v941 = vpop.permute.xlu0 %940
  %942 = vrot.lane.b32.xlu0 %v382, 82
  %v943 = vpop.permute.xlu0 %942
  %944 = vrot.lane.b32.xlu0 %v383, 82
  %v945 = vpop.permute.xlu0 %944
  %946 = vrot.lane.b32.xlu0 %v384, 82
  %v947 = vpop.permute.xlu0 %946
  %948 = vrot.lane.b32.xlu0 %v385, 82
  %v949 = vpop.permute.xlu0 %948
  %950 = vrot.lane.b32.xlu0 %v591, 82
  %v951 = vpop.permute.xlu0 %950
  %952 = vrot.lane.b32.xlu0 %v611, 82
  %v953 = vpop.permute.xlu0 %952
  %954 = vrot.lane.b32.xlu0 %v612, 82
  %v955 = vpop.permute.xlu0 %954
  %956 = vrot.lane.b32.xlu0 %v613, 82
  %v957 = vpop.permute.xlu0 %956
  %958 = vrot.lane.b32.xlu0 %v614, 82
  %v959 = vpop.permute.xlu0 %958
  %960 = vrot.lane.b32.xlu0 %v615, 82
  %v961 = vpop.permute.xlu0 %960
  %962 = vrot.lane.b32.xlu0 %v616, 82
  %v963 = vpop.permute.xlu0 %962
  %964 = vrot.lane.b32.xlu0 %v617, 82
  %v965 = vpop.permute.xlu0 %964
  %966 = vrot.lane.b32.xlu0 %v618, 82
  %v967 = vpop.permute.xlu0 %966
  %968 = vrot.lane.b32.xlu0 %v638, 82
  %v969 = vpop.permute.xlu0 %968
  %970 = vrot.lane.b32.xlu0 %v639, 82
  %v971 = vpop.permute.xlu0 %970
  %972 = vrot.lane.b32.xlu0 %v640, 82
  %v973 = vpop.permute.xlu0 %972
  %974 = vrot.lane.b32.xlu0 %v641, 82
  %v975 = vpop.permute.xlu0 %974
  %976 = vrot.lane.b32.xlu0 %v642, 82
  %v977 = vpop.permute.xlu0 %976
  %978 = vrot.lane.b32.xlu0 %v643, 82
  %v979 = vpop.permute.xlu0 %978
  %980 = vrot.lane.b32.xlu0 %v644, 82
  %v981 = vpop.permute.xlu0 %980
  %982 = vrot.lane.b32.xlu0 %v645, 82
  %v983 = vpop.permute.xlu0 %982
  %984 = vrot.lane.b32.xlu0 %v475, 82
  %v985 = vpop.permute.xlu0 %984
  %986 = vrot.lane.b32.xlu0 %v476, 82
  %v987 = vpop.permute.xlu0 %986
  %988 = vrot.lane.b32.xlu0 %v477, 82
  %v989 = vpop.permute.xlu0 %988
  %990 = vrot.lane.b32.xlu0 %v478, 82
  %v991 = vpop.permute.xlu0 %990
  %992 = vrot.lane.b32.xlu0 %v479, 82
  %v993 = vpop.permute.xlu0 %992
  %994 = vrot.lane.b32.xlu0 %v480, 82
  %v995 = vpop.permute.xlu0 %994
  %996 = vrot.lane.b32.xlu0 %v481, 82
  %v997 = vpop.permute.xlu0 %996
  %998 = vrot.lane.b32.xlu0 %v648, 82
  %v999 = vpop.permute.xlu0 %998
  %1000 = vrot.lane.b32.xlu0 %v507, 82
  %v1001 = vpop.permute.xlu0 %1000
  %1002 = vrot.lane.b32.xlu0 %v508, 82
  %v1003 = vpop.permute.xlu0 %1002
  %1004 = vrot.lane.b32.xlu0 %v509, 82
  %v1005 = vpop.permute.xlu0 %1004
  %1006 = vrot.lane.b32.xlu0 %v510, 82
  %v1007 = vpop.permute.xlu0 %1006
  %1008 = vrot.lane.b32.xlu0 %v511, 82
  %v1009 = vpop.permute.xlu0 %1008
  %1010 = vrot.lane.b32.xlu0 %v512, 82
  %v1011 = vpop.permute.xlu0 %1010
  %1012 = vrot.lane.b32.xlu0 %v513, 82
  %v1013 = vpop.permute.xlu0 %1012
  %1014 = vrot.lane.b32.xlu0 %v651, 82
  %v1015 = vpop.permute.xlu0 %1014
  %vm1016 = vcmask 670720
  %v1017 = vsel %vm1016, %v761, %v763
  %v1018 = vsel %vm1016, %v763, %v765
  %v1019 = vsel %vm1016, %v765, %v767
  %v1020 = vsel %vm1016, %v767, %v769
  %v1021 = vsel %vm1016, %v769, %v771
  %v1022 = vsel %vm1016, %v771, %v773
  %v1023 = vsel %vm1016, %v773, %v775
  %v1024 = vsel %vm1016, %v777, %v779
  %v1025 = vsel %vm1016, %v779, %v781
  %v1026 = vsel %vm1016, %v781, %v783
  %v1027 = vsel %vm1016, %v783, %v785
  %v1028 = vsel %vm1016, %v785, %v787
  %v1029 = vsel %vm1016, %v787, %v789
  %v1030 = vsel %vm1016, %v789, %v791
  %v1031 = vsel %vm1016, %v793, %v795
  %v1032 = vsel %vm1016, %v795, %v797
  %v1033 = vsel %vm1016, %v797, %v799
  %v1034 = vsel %vm1016, %v799, %v801
  %v1035 = vsel %vm1016, %v801, %v803
  %v1036 = vsel %vm1016, %v803, %v805
  %v1037 = vsel %vm1016, %v805, %v807
  %v1038 = vsel %vm1016, %v809, %v811
  %v1039 = vsel %vm1016, %v811, %v813
  %v1040 = vsel %vm1016, %v813, %v815
  %v1041 = vsel %vm1016, %v815, %v817
  %v1042 = vsel %vm1016, %v817, %v819
  %v1043 = vsel %vm1016, %v819, %v821
  %v1044 = vsel %vm1016, %v821, %v823
  %v1045 = vsel %vm1016, %v825, %v827
  %v1046 = vsel %vm1016, %v827, %v829
  %v1047 = vsel %vm1016, %v829, %v831
  %v1048 = vsel %vm1016, %v831, %v833
  %v1049 = vsel %vm1016, %v833, %v835
  %v1050 = vsel %vm1016, %v835, %v837
  %v1051 = vsel %vm1016, %v837, %v839
  %v1052 = vsel %vm1016, %v841, %v843
  %v1053 = vsel %vm1016, %v843, %v845
  %v1054 = vsel %vm1016, %v845, %v847
  %v1055 = vsel %vm1016, %v847, %v849
  %v1056 = vsel %vm1016, %v849, %v851
  %v1057 = vsel %vm1016, %v851, %v853
  %v1058 = vsel %vm1016, %v853, %v855
  %v1059 = vsel %vm1016, %v857, %v859
  %v1060 = vsel %vm1016, %v859, %v861
  %v1061 = vsel %vm1016, %v861, %v863
  %v1062 = vsel %vm1016, %v863, %v865
  %v1063 = vsel %vm1016, %v865, %v867
  %v1064 = vsel %vm1016, %v867, %v869
  %v1065 = vsel %vm1016, %v869, %v871
  %v1066 = vsel %vm1016, %v873, %v875
  %v1067 = vsel %vm1016, %v875, %v877
  %v1068 = vsel %vm1016, %v877, %v879
  %v1069 = vsel %vm1016, %v879, %v881
  %v1070 = vsel %vm1016, %v881, %v883
  %v1071 = vsel %vm1016, %v883, %v885
  %v1072 = vsel %vm1016, %v885, %v887
  %v1073 = vsel %vm1016, %v889, %v891
  %v1074 = vsel %vm1016, %v891, %v893
  %v1075 = vsel %vm1016, %v893, %v895
  %v1076 = vsel %vm1016, %v895, %v897
  %v1077 = vsel %vm1016, %v897, %v899
  %v1078 = vsel %vm1016, %v899, %v901
  %v1079 = vsel %vm1016, %v901, %v903
  %v1080 = vsel %vm1016, %v905, %v907
  %v1081 = vsel %vm1016, %v907, %v909
  %v1082 = vsel %vm1016, %v909, %v911
  %v1083 = vsel %vm1016, %v911, %v913
  %v1084 = vsel %vm1016, %v913, %v915
  %v1085 = vsel %vm1016, %v915, %v917
  %v1086 = vsel %vm1016, %v917, %v919
  %v1087 = vsel %vm1016, %v921, %v923
  %v1088 = vsel %vm1016, %v923, %v925
  %v1089 = vsel %vm1016, %v925, %v927
  %v1090 = vsel %vm1016, %v927, %v929
  %v1091 = vsel %vm1016, %v929, %v931
  %v1092 = vsel %vm1016, %v931, %v933
  %v1093 = vsel %vm1016, %v933, %v935
  %v1094 = vsel %vm1016, %v937, %v939
  %v1095 = vsel %vm1016, %v939, %v941
  %v1096 = vsel %vm1016, %v941, %v943
  %v1097 = vsel %vm1016, %v943, %v945
  %v1098 = vsel %vm1016, %v945, %v947
  %v1099 = vsel %vm1016, %v947, %v949
  %v1100 = vsel %vm1016, %v949, %v951
  %v1101 = vsel %vm1016, %v953, %v955
  %v1102 = vsel %vm1016, %v955, %v957
  %v1103 = vsel %vm1016, %v957, %v959
  %v1104 = vsel %vm1016, %v959, %v961
  %v1105 = vsel %vm1016, %v961, %v963
  %v1106 = vsel %vm1016, %v963, %v965
  %v1107 = vsel %vm1016, %v965, %v967
  %v1108 = vsel %vm1016, %v969, %v971
  %v1109 = vsel %vm1016, %v971, %v973
  %v1110 = vsel %vm1016, %v973, %v975
  %v1111 = vsel %vm1016, %v975, %v977
  %v1112 = vsel %vm1016, %v977, %v979
  %v1113 = vsel %vm1016, %v979, %v981
  %v1114 = vsel %vm1016, %v981, %v983
  %v1115 = vsel %vm1016, %v985, %v987
  %v1116 = vsel %vm1016, %v987, %v989
  %v1117 = vsel %vm1016, %v989, %v991
  %v1118 = vsel %vm1016, %v991, %v993
  %v1119 = vsel %vm1016, %v993, %v995
  %v1120 = vsel %vm1016, %v995, %v997
  %v1121 = vsel %vm1016, %v997, %v999
  %v1122 = vsel %vm1016, %v1001, %v1003
  %v1123 = vsel %vm1016, %v1003, %v1005
  %v1124 = vsel %vm1016, %v1005, %v1007
  %v1125 = vsel %vm1016, %v1007, %v1009
  %v1126 = vsel %vm1016, %v1009, %v1011
  %v1127 = vsel %vm1016, %v1011, %v1013
  %v1128 = vsel %vm1016, %v1013, %v1015
  %1257 = vrot.lane.b32.xlu0 %v25, 36
  %v1258 = vpop.permute.xlu0 %1257
  %1259 = vrot.lane.b32.xlu0 %v26, 36
  %v1260 = vpop.permute.xlu0 %1259
  %1261 = vrot.lane.b32.xlu0 %v27, 36
  %v1262 = vpop.permute.xlu0 %1261
  %1263 = vrot.lane.b32.xlu0 %v28, 36
  %v1264 = vpop.permute.xlu0 %1263
  %1265 = vrot.lane.b32.xlu0 %v29, 36
  %v1266 = vpop.permute.xlu0 %1265
  %1267 = vrot.lane.b32.xlu0 %v30, 36
  %v1268 = vpop.permute.xlu0 %1267
  %1269 = vrot.lane.b32.xlu0 %v31, 36
  %v1270 = vpop.permute.xlu0 %1269
  %1271 = vrot.lane.b32.xlu0 %v32, 36
  %v1272 = vpop.permute.xlu0 %1271
  %1273 = vrot.lane.b32.xlu0 %v33, 36
  %v1274 = vpop.permute.xlu0 %1273
  %1275 = vrot.lane.b32.xlu0 %v59, 36
  %v1276 = vpop.permute.xlu0 %1275
  %1277 = vrot.lane.b32.xlu0 %v60, 36
  %v1278 = vpop.permute.xlu0 %1277
  %1279 = vrot.lane.b32.xlu0 %v61, 36
  %v1280 = vpop.permute.xlu0 %1279
  %1281 = vrot.lane.b32.xlu0 %v62, 36
  %v1282 = vpop.permute.xlu0 %1281
  %1283 = vrot.lane.b32.xlu0 %v63, 36
  %v1284 = vpop.permute.xlu0 %1283
  %1285 = vrot.lane.b32.xlu0 %v64, 36
  %v1286 = vpop.permute.xlu0 %1285
  %1287 = vrot.lane.b32.xlu0 %v65, 36
  %v1288 = vpop.permute.xlu0 %1287
  %1289 = vrot.lane.b32.xlu0 %v654, 36
  %v1290 = vpop.permute.xlu0 %1289
  %1291 = vrot.lane.b32.xlu0 %v653, 36
  %v1292 = vpop.permute.xlu0 %1291
  %1293 = vrot.lane.b32.xlu0 %v91, 36
  %v1294 = vpop.permute.xlu0 %1293
  %1295 = vrot.lane.b32.xlu0 %v92, 36
  %v1296 = vpop.permute.xlu0 %1295
  %1297 = vrot.lane.b32.xlu0 %v93, 36
  %v1298 = vpop.permute.xlu0 %1297
  %1299 = vrot.lane.b32.xlu0 %v94, 36
  %v1300 = vpop.permute.xlu0 %1299
  %1301 = vrot.lane.b32.xlu0 %v95, 36
  %v1302 = vpop.permute.xlu0 %1301
  %1303 = vrot.lane.b32.xlu0 %v96, 36
  %v1304 = vpop.permute.xlu0 %1303
  %1305 = vrot.lane.b32.xlu0 %v97, 36
  %v1306 = vpop.permute.xlu0 %1305
  %1307 = vrot.lane.b32.xlu0 %v657, 36
  %v1308 = vpop.permute.xlu0 %1307
  %1309 = vrot.lane.b32.xlu0 %v656, 36
  %v1310 = vpop.permute.xlu0 %1309
  %1311 = vrot.lane.b32.xlu0 %v677, 36
  %v1312 = vpop.permute.xlu0 %1311
  %1313 = vrot.lane.b32.xlu0 %v678, 36
  %v1314 = vpop.permute.xlu0 %1313
  %1315 = vrot.lane.b32.xlu0 %v679, 36
  %v1316 = vpop.permute.xlu0 %1315
  %1317 = vrot.lane.b32.xlu0 %v680, 36
  %v1318 = vpop.permute.xlu0 %1317
  %1319 = vrot.lane.b32.xlu0 %v681, 36
  %v1320 = vpop.permute.xlu0 %1319
  %1321 = vrot.lane.b32.xlu0 %v682, 36
  %v1322 = vpop.permute.xlu0 %1321
  %1323 = vrot.lane.b32.xlu0 %v683, 36
  %v1324 = vpop.permute.xlu0 %1323
  %1325 = vrot.lane.b32.xlu0 %v684, 36
  %v1326 = vpop.permute.xlu0 %1325
  %1327 = vrot.lane.b32.xlu0 %v675, 36
  %v1328 = vpop.permute.xlu0 %1327
  %1329 = vrot.lane.b32.xlu0 %v704, 36
  %v1330 = vpop.permute.xlu0 %1329
  %1331 = vrot.lane.b32.xlu0 %v705, 36
  %v1332 = vpop.permute.xlu0 %1331
  %1333 = vrot.lane.b32.xlu0 %v706, 36
  %v1334 = vpop.permute.xlu0 %1333
  %1335 = vrot.lane.b32.xlu0 %v707, 36
  %v1336 = vpop.permute.xlu0 %1335
  %1337 = vrot.lane.b32.xlu0 %v708, 36
  %v1338 = vpop.permute.xlu0 %1337
  %1339 = vrot.lane.b32.xlu0 %v709, 36
  %v1340 = vpop.permute.xlu0 %1339
  %1341 = vrot.lane.b32.xlu0 %v710, 36
  %v1342 = vpop.permute.xlu0 %1341
  %1343 = vrot.lane.b32.xlu0 %v711, 36
  %v1344 = vpop.permute.xlu0 %1343
  %1345 = vrot.lane.b32.xlu0 %v702, 36
  %v1346 = vpop.permute.xlu0 %1345
  %1347 = vrot.lane.b32.xlu0 %v542, 36
  %v1348 = vpop.permute.xlu0 %1347
  %1349 = vrot.lane.b32.xlu0 %v543, 36
  %v1350 = vpop.permute.xlu0 %1349
  %1351 = vrot.lane.b32.xlu0 %v544, 36
  %v1352 = vpop.permute.xlu0 %1351
  %1353 = vrot.lane.b32.xlu0 %v545, 36
  %v1354 = vpop.permute.xlu0 %1353
  %1355 = vrot.lane.b32.xlu0 %v546, 36
  %v1356 = vpop.permute.xlu0 %1355
  %1357 = vrot.lane.b32.xlu0 %v547, 36
  %v1358 = vpop.permute.xlu0 %1357
  %1359 = vrot.lane.b32.xlu0 %v548, 36
  %v1360 = vpop.permute.xlu0 %1359
  %1361 = vrot.lane.b32.xlu0 %v549, 36
  %v1362 = vpop.permute.xlu0 %1361
  %1363 = vrot.lane.b32.xlu0 %v540, 36
  %v1364 = vpop.permute.xlu0 %1363
  %1365 = vrot.lane.b32.xlu0 %v569, 36
  %v1366 = vpop.permute.xlu0 %1365
  %1367 = vrot.lane.b32.xlu0 %v570, 36
  %v1368 = vpop.permute.xlu0 %1367
  %1369 = vrot.lane.b32.xlu0 %v571, 36
  %v1370 = vpop.permute.xlu0 %1369
  %1371 = vrot.lane.b32.xlu0 %v572, 36
  %v1372 = vpop.permute.xlu0 %1371
  %1373 = vrot.lane.b32.xlu0 %v573, 36
  %v1374 = vpop.permute.xlu0 %1373
  %1375 = vrot.lane.b32.xlu0 %v574, 36
  %v1376 = vpop.permute.xlu0 %1375
  %1377 = vrot.lane.b32.xlu0 %v575, 36
  %v1378 = vpop.permute.xlu0 %1377
  %1379 = vrot.lane.b32.xlu0 %v576, 36
  %v1380 = vpop.permute.xlu0 %1379
  %1381 = vrot.lane.b32.xlu0 %v567, 36
  %v1382 = vpop.permute.xlu0 %1381
  %1383 = vrot.lane.b32.xlu0 %v251, 36
  %v1384 = vpop.permute.xlu0 %1383
  %1385 = vrot.lane.b32.xlu0 %v252, 36
  %v1386 = vpop.permute.xlu0 %1385
  %1387 = vrot.lane.b32.xlu0 %v253, 36
  %v1388 = vpop.permute.xlu0 %1387
  %1389 = vrot.lane.b32.xlu0 %v254, 36
  %v1390 = vpop.permute.xlu0 %1389
  %1391 = vrot.lane.b32.xlu0 %v255, 36
  %v1392 = vpop.permute.xlu0 %1391
  %1393 = vrot.lane.b32.xlu0 %v256, 36
  %v1394 = vpop.permute.xlu0 %1393
  %1395 = vrot.lane.b32.xlu0 %v257, 36
  %v1396 = vpop.permute.xlu0 %1395
  %1397 = vrot.lane.b32.xlu0 %v579, 36
  %v1398 = vpop.permute.xlu0 %1397
  %1399 = vrot.lane.b32.xlu0 %v578, 36
  %v1400 = vpop.permute.xlu0 %1399
  %1401 = vrot.lane.b32.xlu0 %v283, 36
  %v1402 = vpop.permute.xlu0 %1401
  %1403 = vrot.lane.b32.xlu0 %v284, 36
  %v1404 = vpop.permute.xlu0 %1403
  %1405 = vrot.lane.b32.xlu0 %v285, 36
  %v1406 = vpop.permute.xlu0 %1405
  %1407 = vrot.lane.b32.xlu0 %v286, 36
  %v1408 = vpop.permute.xlu0 %1407
  %1409 = vrot.lane.b32.xlu0 %v287, 36
  %v1410 = vpop.permute.xlu0 %1409
  %1411 = vrot.lane.b32.xlu0 %v288, 36
  %v1412 = vpop.permute.xlu0 %1411
  %1413 = vrot.lane.b32.xlu0 %v289, 36
  %v1414 = vpop.permute.xlu0 %1413
  %1415 = vrot.lane.b32.xlu0 %v582, 36
  %v1416 = vpop.permute.xlu0 %1415
  %1417 = vrot.lane.b32.xlu0 %v581, 36
  %v1418 = vpop.permute.xlu0 %1417
  %1419 = vrot.lane.b32.xlu0 %v315, 36
  %v1420 = vpop.permute.xlu0 %1419
  %1421 = vrot.lane.b32.xlu0 %v316, 36
  %v1422 = vpop.permute.xlu0 %1421
  %1423 = vrot.lane.b32.xlu0 %v317, 36
  %v1424 = vpop.permute.xlu0 %1423
  %1425 = vrot.lane.b32.xlu0 %v318, 36
  %v1426 = vpop.permute.xlu0 %1425
  %1427 = vrot.lane.b32.xlu0 %v319, 36
  %v1428 = vpop.permute.xlu0 %1427
  %1429 = vrot.lane.b32.xlu0 %v320, 36
  %v1430 = vpop.permute.xlu0 %1429
  %1431 = vrot.lane.b32.xlu0 %v321, 36
  %v1432 = vpop.permute.xlu0 %1431
  %1433 = vrot.lane.b32.xlu0 %v585, 36
  %v1434 = vpop.permute.xlu0 %1433
  %1435 = vrot.lane.b32.xlu0 %v584, 36
  %v1436 = vpop.permute.xlu0 %1435
  %1437 = vrot.lane.b32.xlu0 %v713, 36
  %v1438 = vpop.permute.xlu0 %1437
  %1439 = vrot.lane.b32.xlu0 %v729, 36
  %v1440 = vpop.permute.xlu0 %1439
  %1441 = vrot.lane.b32.xlu0 %v730, 36
  %v1442 = vpop.permute.xlu0 %1441
  %1443 = vrot.lane.b32.xlu0 %v731, 36
  %v1444 = vpop.permute.xlu0 %1443
  %1445 = vrot.lane.b32.xlu0 %v732, 36
  %v1446 = vpop.permute.xlu0 %1445
  %1447 = vrot.lane.b32.xlu0 %v733, 36
  %v1448 = vpop.permute.xlu0 %1447
  %1449 = vrot.lane.b32.xlu0 %v734, 36
  %v1450 = vpop.permute.xlu0 %1449
  %1451 = vrot.lane.b32.xlu0 %v735, 36
  %v1452 = vpop.permute.xlu0 %1451
  %1453 = vrot.lane.b32.xlu0 %v727, 36
  %v1454 = vpop.permute.xlu0 %1453
  %1455 = vrot.lane.b32.xlu0 %v737, 36
  %v1456 = vpop.permute.xlu0 %1455
  %1457 = vrot.lane.b32.xlu0 %v753, 36
  %v1458 = vpop.permute.xlu0 %1457
  %1459 = vrot.lane.b32.xlu0 %v754, 36
  %v1460 = vpop.permute.xlu0 %1459
  %1461 = vrot.lane.b32.xlu0 %v755, 36
  %v1462 = vpop.permute.xlu0 %1461
  %1463 = vrot.lane.b32.xlu0 %v756, 36
  %v1464 = vpop.permute.xlu0 %1463
  %1465 = vrot.lane.b32.xlu0 %v757, 36
  %v1466 = vpop.permute.xlu0 %1465
  %1467 = vrot.lane.b32.xlu0 %v758, 36
  %v1468 = vpop.permute.xlu0 %1467
  %1469 = vrot.lane.b32.xlu0 %v759, 36
  %v1470 = vpop.permute.xlu0 %1469
  %1471 = vrot.lane.b32.xlu0 %v751, 36
  %v1472 = vpop.permute.xlu0 %1471
  %1473 = vrot.lane.b32.xlu0 %v595, 36
  %v1474 = vpop.permute.xlu0 %1473
  %1475 = vrot.lane.b32.xlu0 %v612, 36
  %v1476 = vpop.permute.xlu0 %1475
  %1477 = vrot.lane.b32.xlu0 %v613, 36
  %v1478 = vpop.permute.xlu0 %1477
  %1479 = vrot.lane.b32.xlu0 %v614, 36
  %v1480 = vpop.permute.xlu0 %1479
  %1481 = vrot.lane.b32.xlu0 %v615, 36
  %v1482 = vpop.permute.xlu0 %1481
  %1483 = vrot.lane.b32.xlu0 %v616, 36
  %v1484 = vpop.permute.xlu0 %1483
  %1485 = vrot.lane.b32.xlu0 %v617, 36
  %v1486 = vpop.permute.xlu0 %1485
  %1487 = vrot.lane.b32.xlu0 %v618, 36
  %v1488 = vpop.permute.xlu0 %1487
  %1489 = vrot.lane.b32.xlu0 %v609, 36
  %v1490 = vpop.permute.xlu0 %1489
  %1491 = vrot.lane.b32.xlu0 %v622, 36
  %v1492 = vpop.permute.xlu0 %1491
  %1493 = vrot.lane.b32.xlu0 %v639, 36
  %v1494 = vpop.permute.xlu0 %1493
  %1495 = vrot.lane.b32.xlu0 %v640, 36
  %v1496 = vpop.permute.xlu0 %1495
  %1497 = vrot.lane.b32.xlu0 %v641, 36
  %v1498 = vpop.permute.xlu0 %1497
  %1499 = vrot.lane.b32.xlu0 %v642, 36
  %v1500 = vpop.permute.xlu0 %1499
  %1501 = vrot.lane.b32.xlu0 %v643, 36
  %v1502 = vpop.permute.xlu0 %1501
  %1503 = vrot.lane.b32.xlu0 %v644, 36
  %v1504 = vpop.permute.xlu0 %1503
  %1505 = vrot.lane.b32.xlu0 %v645, 36
  %v1506 = vpop.permute.xlu0 %1505
  %1507 = vrot.lane.b32.xlu0 %v636, 36
  %v1508 = vpop.permute.xlu0 %1507
  %1509 = vrot.lane.b32.xlu0 %v461, 36
  %v1510 = vpop.permute.xlu0 %1509
  %1511 = vrot.lane.b32.xlu0 %v476, 36
  %v1512 = vpop.permute.xlu0 %1511
  %1513 = vrot.lane.b32.xlu0 %v477, 36
  %v1514 = vpop.permute.xlu0 %1513
  %1515 = vrot.lane.b32.xlu0 %v478, 36
  %v1516 = vpop.permute.xlu0 %1515
  %1517 = vrot.lane.b32.xlu0 %v479, 36
  %v1518 = vpop.permute.xlu0 %1517
  %1519 = vrot.lane.b32.xlu0 %v480, 36
  %v1520 = vpop.permute.xlu0 %1519
  %1521 = vrot.lane.b32.xlu0 %v481, 36
  %v1522 = vpop.permute.xlu0 %1521
  %1523 = vrot.lane.b32.xlu0 %v648, 36
  %v1524 = vpop.permute.xlu0 %1523
  %1525 = vrot.lane.b32.xlu0 %v647, 36
  %v1526 = vpop.permute.xlu0 %1525
  %1527 = vrot.lane.b32.xlu0 %v493, 36
  %v1528 = vpop.permute.xlu0 %1527
  %1529 = vrot.lane.b32.xlu0 %v508, 36
  %v1530 = vpop.permute.xlu0 %1529
  %1531 = vrot.lane.b32.xlu0 %v509, 36
  %v1532 = vpop.permute.xlu0 %1531
  %1533 = vrot.lane.b32.xlu0 %v510, 36
  %v1534 = vpop.permute.xlu0 %1533
  %1535 = vrot.lane.b32.xlu0 %v511, 36
  %v1536 = vpop.permute.xlu0 %1535
  %1537 = vrot.lane.b32.xlu0 %v512, 36
  %v1538 = vpop.permute.xlu0 %1537
  %1539 = vrot.lane.b32.xlu0 %v513, 36
  %v1540 = vpop.permute.xlu0 %1539
  %1541 = vrot.lane.b32.xlu0 %v651, 36
  %v1542 = vpop.permute.xlu0 %1541
  %1543 = vrot.lane.b32.xlu0 %v650, 36
  %v1544 = vpop.permute.xlu0 %1543
  %vm1545 = vcmask 293888
  %v1546 = vsel %vm1545, %v1258, %v1260
  %v1547 = vsel %vm1545, %v1260, %v1262
  %v1548 = vsel %vm1545, %v1262, %v1264
  %v1549 = vsel %vm1545, %v1264, %v1266
  %v1550 = vsel %vm1545, %v1266, %v1268
  %v1551 = vsel %vm1545, %v1268, %v1270
  %v1552 = vsel %vm1545, %v1270, %v1272
  %v1553 = vsel %vm1545, %v1272, %v1274
  %v1554 = vsel %vm1545, %v1276, %v1278
  %v1555 = vsel %vm1545, %v1278, %v1280
  %v1556 = vsel %vm1545, %v1280, %v1282
  %v1557 = vsel %vm1545, %v1282, %v1284
  %v1558 = vsel %vm1545, %v1284, %v1286
  %v1559 = vsel %vm1545, %v1286, %v1288
  %v1560 = vsel %vm1545, %v1288, %v1290
  %v1561 = vsel %vm1545, %v1290, %v1292
  %v1562 = vsel %vm1545, %v1294, %v1296
  %v1563 = vsel %vm1545, %v1296, %v1298
  %v1564 = vsel %vm1545, %v1298, %v1300
  %v1565 = vsel %vm1545, %v1300, %v1302
  %v1566 = vsel %vm1545, %v1302, %v1304
  %v1567 = vsel %vm1545, %v1304, %v1306
  %v1568 = vsel %vm1545, %v1306, %v1308
  %v1569 = vsel %vm1545, %v1308, %v1310
  %v1570 = vsel %vm1545, %v1312, %v1314
  %v1571 = vsel %vm1545, %v1314, %v1316
  %v1572 = vsel %vm1545, %v1316, %v1318
  %v1573 = vsel %vm1545, %v1318, %v1320
  %v1574 = vsel %vm1545, %v1320, %v1322
  %v1575 = vsel %vm1545, %v1322, %v1324
  %v1576 = vsel %vm1545, %v1324, %v1326
  %v1577 = vsel %vm1545, %v1326, %v1328
  %v1578 = vsel %vm1545, %v1330, %v1332
  %v1579 = vsel %vm1545, %v1332, %v1334
  %v1580 = vsel %vm1545, %v1334, %v1336
  %v1581 = vsel %vm1545, %v1336, %v1338
  %v1582 = vsel %vm1545, %v1338, %v1340
  %v1583 = vsel %vm1545, %v1340, %v1342
  %v1584 = vsel %vm1545, %v1342, %v1344
  %v1585 = vsel %vm1545, %v1344, %v1346
  %v1586 = vsel %vm1545, %v1348, %v1350
  %v1587 = vsel %vm1545, %v1350, %v1352
  %v1588 = vsel %vm1545, %v1352, %v1354
  %v1589 = vsel %vm1545, %v1354, %v1356
  %v1590 = vsel %vm1545, %v1356, %v1358
  %v1591 = vsel %vm1545, %v1358, %v1360
  %v1592 = vsel %vm1545, %v1360, %v1362
  %v1593 = vsel %vm1545, %v1362, %v1364
  %v1594 = vsel %vm1545, %v1366, %v1368
  %v1595 = vsel %vm1545, %v1368, %v1370
  %v1596 = vsel %vm1545, %v1370, %v1372
  %v1597 = vsel %vm1545, %v1372, %v1374
  %v1598 = vsel %vm1545, %v1374, %v1376
  %v1599 = vsel %vm1545, %v1376, %v1378
  %v1600 = vsel %vm1545, %v1378, %v1380
  %v1601 = vsel %vm1545, %v1380, %v1382
  %v1602 = vsel %vm1545, %v1384, %v1386
  %v1603 = vsel %vm1545, %v1386, %v1388
  %v1604 = vsel %vm1545, %v1388, %v1390
  %v1605 = vsel %vm1545, %v1390, %v1392
  %v1606 = vsel %vm1545, %v1392, %v1394
  %v1607 = vsel %vm1545, %v1394, %v1396
  %v1608 = vsel %vm1545, %v1396, %v1398
  %v1609 = vsel %vm1545, %v1398, %v1400
  %v1610 = vsel %vm1545, %v1402, %v1404
  %v1611 = vsel %vm1545, %v1404, %v1406
  %v1612 = vsel %vm1545, %v1406, %v1408
  %v1613 = vsel %vm1545, %v1408, %v1410
  %v1614 = vsel %vm1545, %v1410, %v1412
  %v1615 = vsel %vm1545, %v1412, %v1414
  %v1616 = vsel %vm1545, %v1414, %v1416
  %v1617 = vsel %vm1545, %v1416, %v1418
  %v1618 = vsel %vm1545, %v1420, %v1422
  %v1619 = vsel %vm1545, %v1422, %v1424
  %v1620 = vsel %vm1545, %v1424, %v1426
  %v1621 = vsel %vm1545, %v1426, %v1428
  %v1622 = vsel %vm1545, %v1428, %v1430
  %v1623 = vsel %vm1545, %v1430, %v1432
  %v1624 = vsel %vm1545, %v1432, %v1434
  %v1625 = vsel %vm1545, %v1434, %v1436
  %v1626 = vsel %vm1545, %v1438, %v1440
  %v1627 = vsel %vm1545, %v1440, %v1442
  %v1628 = vsel %vm1545, %v1442, %v1444
  %v1629 = vsel %vm1545, %v1444, %v1446
  %v1630 = vsel %vm1545, %v1446, %v1448
  %v1631 = vsel %vm1545, %v1448, %v1450
  %v1632 = vsel %vm1545, %v1450, %v1452
  %v1633 = vsel %vm1545, %v1452, %v1454
  %v1634 = vsel %vm1545, %v1456, %v1458
  %v1635 = vsel %vm1545, %v1458, %v1460
  %v1636 = vsel %vm1545, %v1460, %v1462
  %v1637 = vsel %vm1545, %v1462, %v1464
  %v1638 = vsel %vm1545, %v1464, %v1466
  %v1639 = vsel %vm1545, %v1466, %v1468
  %v1640 = vsel %vm1545, %v1468, %v1470
  %v1641 = vsel %vm1545, %v1470, %v1472
  %v1642 = vsel %vm1545, %v1474, %v1476
  %v1643 = vsel %vm1545, %v1476, %v1478
  %v1644 = vsel %vm1545, %v1478, %v1480
  %v1645 = vsel %vm1545, %v1480, %v1482
  %v1646 = vsel %vm1545, %v1482, %v1484
  %v1647 = vsel %vm1545, %v1484, %v1486
  %v1648 = vsel %vm1545, %v1486, %v1488
  %v1649 = vsel %vm1545, %v1488, %v1490
  %v1650 = vsel %vm1545, %v1492, %v1494
  %v1651 = vsel %vm1545, %v1494, %v1496
  %v1652 = vsel %vm1545, %v1496, %v1498
  %v1653 = vsel %vm1545, %v1498, %v1500
  %v1654 = vsel %vm1545, %v1500, %v1502
  %v1655 = vsel %vm1545, %v1502, %v1504
  %v1656 = vsel %vm1545, %v1504, %v1506
  %v1657 = vsel %vm1545, %v1506, %v1508
  %v1658 = vsel %vm1545, %v1510, %v1512
  %v1659 = vsel %vm1545, %v1512, %v1514
  %v1660 = vsel %vm1545, %v1514, %v1516
  %v1661 = vsel %vm1545, %v1516, %v1518
  %v1662 = vsel %vm1545, %v1518, %v1520
  %v1663 = vsel %vm1545, %v1520, %v1522
  %v1664 = vsel %vm1545, %v1522, %v1524
  %v1665 = vsel %vm1545, %v1524, %v1526
  %v1666 = vsel %vm1545, %v1528, %v1530
  %v1667 = vsel %vm1545, %v1530, %v1532
  %v1668 = vsel %vm1545, %v1532, %v1534
  %v1669 = vsel %vm1545, %v1534, %v1536
  %v1670 = vsel %vm1545, %v1536, %v1538
  %v1671 = vsel %vm1545, %v1538, %v1540
  %v1672 = vsel %vm1545, %v1540, %v1542
  %v1673 = vsel %vm1545, %v1542, %v1544
  %1802 = vrot.lane.b32.xlu0 %v26, 118
  %v1803 = vpop.permute.xlu0 %1802
  %1804 = vrot.lane.b32.xlu0 %v27, 118
  %v1805 = vpop.permute.xlu0 %1804
  %1806 = vrot.lane.b32.xlu0 %v28, 118
  %v1807 = vpop.permute.xlu0 %1806
  %1808 = vrot.lane.b32.xlu0 %v29, 118
  %v1809 = vpop.permute.xlu0 %1808
  %1810 = vrot.lane.b32.xlu0 %v30, 118
  %v1811 = vpop.permute.xlu0 %1810
  %1812 = vrot.lane.b32.xlu0 %v31, 118
  %v1813 = vpop.permute.xlu0 %1812
  %1814 = vrot.lane.b32.xlu0 %v32, 118
  %v1815 = vpop.permute.xlu0 %1814
  %1816 = vrot.lane.b32.xlu0 %v33, 118
  %v1817 = vpop.permute.xlu0 %1816
  %vm1818 = vcmask 965632
  %v1819 = vsel %vm1818, %v1803, %v1805
  %v1820 = vsel %vm1818, %v1805, %v1807
  %v1821 = vsel %vm1818, %v1807, %v1809
  %v1822 = vsel %vm1818, %v1809, %v1811
  %v1823 = vsel %vm1818, %v1811, %v1813
  %v1824 = vsel %vm1818, %v1813, %v1815
  %v1825 = vsel %vm1818, %v1815, %v1817
  %v1834 = vpack.c.bf16 %v59, %v25
  %v1835 = vpack.c.bf16 %v60, %v26
  %v1836 = vpack.c.bf16 %v61, %v27
  %v1837 = vpack.c.bf16 %v62, %v28
  %v1838 = vpack.c.bf16 %v63, %v29
  %v1839 = vpack.c.bf16 %v64, %v30
  %v1840 = vpack.c.bf16 %v65, %v31
  %v1841 = vpack.c.bf16 %v57, %v32
  %v1842 = vpack.c.bf16 %v123, %v91
  %v1843 = vpack.c.bf16 %v124, %v92
  %v1844 = vpack.c.bf16 %v125, %v93
  %v1845 = vpack.c.bf16 %v126, %v94
  %v1846 = vpack.c.bf16 %v127, %v95
  %v1847 = vpack.c.bf16 %v128, %v96
  %v1848 = vpack.c.bf16 %v129, %v97
  %v1849 = vpack.c.bf16 %v121, %v89
  %v1850 = vpack.c.bf16 %v187, %v155
  %v1851 = vpack.c.bf16 %v188, %v156
  %v1852 = vpack.c.bf16 %v189, %v157
  %v1853 = vpack.c.bf16 %v190, %v158
  %v1854 = vpack.c.bf16 %v191, %v159
  %v1855 = vpack.c.bf16 %v192, %v160
  %v1856 = vpack.c.bf16 %v193, %v161
  %v1857 = vpack.c.bf16 %v185, %v153
  %v1858 = vpack.c.bf16 %v251, %v219
  %v1859 = vpack.c.bf16 %v252, %v220
  %v1860 = vpack.c.bf16 %v253, %v221
  %v1861 = vpack.c.bf16 %v254, %v222
  %v1862 = vpack.c.bf16 %v255, %v223
  %v1863 = vpack.c.bf16 %v256, %v224
  %v1864 = vpack.c.bf16 %v257, %v225
  %v1865 = vpack.c.bf16 %v249, %v217
  %v1866 = vpack.c.bf16 %v315, %v283
  %v1867 = vpack.c.bf16 %v316, %v284
  %v1868 = vpack.c.bf16 %v317, %v285
  %v1869 = vpack.c.bf16 %v318, %v286
  %v1870 = vpack.c.bf16 %v319, %v287
  %v1871 = vpack.c.bf16 %v320, %v288
  %v1872 = vpack.c.bf16 %v321, %v289
  %v1873 = vpack.c.bf16 %v313, %v281
  %v1874 = vpack.c.bf16 %v379, %v347
  %v1875 = vpack.c.bf16 %v380, %v348
  %v1876 = vpack.c.bf16 %v381, %v349
  %v1877 = vpack.c.bf16 %v382, %v350
  %v1878 = vpack.c.bf16 %v383, %v351
  %v1879 = vpack.c.bf16 %v384, %v352
  %v1880 = vpack.c.bf16 %v385, %v353
  %v1881 = vpack.c.bf16 %v377, %v345
  %v1882 = vpack.c.bf16 %v443, %v411
  %v1883 = vpack.c.bf16 %v444, %v412
  %v1884 = vpack.c.bf16 %v445, %v413
  %v1885 = vpack.c.bf16 %v446, %v414
  %v1886 = vpack.c.bf16 %v447, %v415
  %v1887 = vpack.c.bf16 %v448, %v416
  %v1888 = vpack.c.bf16 %v449, %v417
  %v1889 = vpack.c.bf16 %v441, %v409
  %v1890 = vpack.c.bf16 %v507, %v475
  %v1891 = vpack.c.bf16 %v508, %v476
  %v1892 = vpack.c.bf16 %v509, %v477
  %v1893 = vpack.c.bf16 %v510, %v478
  %v1894 = vpack.c.bf16 %v511, %v479
  %v1895 = vpack.c.bf16 %v512, %v480
  %v1896 = vpack.c.bf16 %v513, %v481
  %v1897 = vpack.c.bf16 %v505, %v473
  %v1898 = vpack.c.bf16 %v1024, %v1017
  %v1899 = vpack.c.bf16 %v1025, %v1018
  %v1900 = vpack.c.bf16 %v1026, %v1019
  %v1901 = vpack.c.bf16 %v1027, %v1020
  %v1902 = vpack.c.bf16 %v1028, %v1021
  %v1903 = vpack.c.bf16 %v1029, %v1022
  %v1904 = vpack.c.bf16 %v1030, %v1023
  %v1905 = vpack.c.bf16 %v791, %v775
  %v1906 = vpack.c.bf16 %v1038, %v1031
  %v1907 = vpack.c.bf16 %v1039, %v1032
  %v1908 = vpack.c.bf16 %v1040, %v1033
  %v1909 = vpack.c.bf16 %v1041, %v1034
  %v1910 = vpack.c.bf16 %v1042, %v1035
  %v1911 = vpack.c.bf16 %v1043, %v1036
  %v1912 = vpack.c.bf16 %v1044, %v1037
  %v1913 = vpack.c.bf16 %v823, %v807
  %v1914 = vpack.c.bf16 %v1052, %v1045
  %v1915 = vpack.c.bf16 %v1053, %v1046
  %v1916 = vpack.c.bf16 %v1054, %v1047
  %v1917 = vpack.c.bf16 %v1055, %v1048
  %v1918 = vpack.c.bf16 %v1056, %v1049
  %v1919 = vpack.c.bf16 %v1057, %v1050
  %v1920 = vpack.c.bf16 %v1058, %v1051
  %v1921 = vpack.c.bf16 %v855, %v839
  %v1922 = vpack.c.bf16 %v1066, %v1059
  %v1923 = vpack.c.bf16 %v1067, %v1060
  %v1924 = vpack.c.bf16 %v1068, %v1061
  %v1925 = vpack.c.bf16 %v1069, %v1062
  %v1926 = vpack.c.bf16 %v1070, %v1063
  %v1927 = vpack.c.bf16 %v1071, %v1064
  %v1928 = vpack.c.bf16 %v1072, %v1065
  %v1929 = vpack.c.bf16 %v887, %v871
  %v1930 = vpack.c.bf16 %v1080, %v1073
  %v1931 = vpack.c.bf16 %v1081, %v1074
  %v1932 = vpack.c.bf16 %v1082, %v1075
  %v1933 = vpack.c.bf16 %v1083, %v1076
  %v1934 = vpack.c.bf16 %v1084, %v1077
  %v1935 = vpack.c.bf16 %v1085, %v1078
  %v1936 = vpack.c.bf16 %v1086, %v1079
  %v1937 = vpack.c.bf16 %v919, %v903
  %v1938 = vpack.c.bf16 %v1094, %v1087
  %v1939 = vpack.c.bf16 %v1095, %v1088
  %v1940 = vpack.c.bf16 %v1096, %v1089
  %v1941 = vpack.c.bf16 %v1097, %v1090
  %v1942 = vpack.c.bf16 %v1098, %v1091
  %v1943 = vpack.c.bf16 %v1099, %v1092
  %v1944 = vpack.c.bf16 %v1100, %v1093
  %v1945 = vpack.c.bf16 %v951, %v935
  %v1946 = vpack.c.bf16 %v1108, %v1101
  %v1947 = vpack.c.bf16 %v1109, %v1102
  %v1948 = vpack.c.bf16 %v1110, %v1103
  %v1949 = vpack.c.bf16 %v1111, %v1104
  %v1950 = vpack.c.bf16 %v1112, %v1105
  %v1951 = vpack.c.bf16 %v1113, %v1106
  %v1952 = vpack.c.bf16 %v1114, %v1107
  %v1953 = vpack.c.bf16 %v983, %v967
  %v1954 = vpack.c.bf16 %v1122, %v1115
  %v1955 = vpack.c.bf16 %v1123, %v1116
  %v1956 = vpack.c.bf16 %v1124, %v1117
  %v1957 = vpack.c.bf16 %v1125, %v1118
  %v1958 = vpack.c.bf16 %v1126, %v1119
  %v1959 = vpack.c.bf16 %v1127, %v1120
  %v1960 = vpack.c.bf16 %v1128, %v1121
  %v1961 = vpack.c.bf16 %v1015, %v999
  %v1962 = vpack.c.bf16 %v1554, %v1546
  %v1963 = vpack.c.bf16 %v1555, %v1547
  %v1964 = vpack.c.bf16 %v1556, %v1548
  %v1965 = vpack.c.bf16 %v1557, %v1549
  %v1966 = vpack.c.bf16 %v1558, %v1550
  %v1967 = vpack.c.bf16 %v1559, %v1551
  %v1968 = vpack.c.bf16 %v1560, %v1552
  %v1969 = vpack.c.bf16 %v1561, %v1553
  %v1970 = vpack.c.bf16 %v1570, %v1562
  %v1971 = vpack.c.bf16 %v1571, %v1563
  %v1972 = vpack.c.bf16 %v1572, %v1564
  %v1973 = vpack.c.bf16 %v1573, %v1565
  %v1974 = vpack.c.bf16 %v1574, %v1566
  %v1975 = vpack.c.bf16 %v1575, %v1567
  %v1976 = vpack.c.bf16 %v1576, %v1568
  %v1977 = vpack.c.bf16 %v1577, %v1569
  %v1978 = vpack.c.bf16 %v1586, %v1578
  %v1979 = vpack.c.bf16 %v1587, %v1579
  %v1980 = vpack.c.bf16 %v1588, %v1580
  %v1981 = vpack.c.bf16 %v1589, %v1581
  %v1982 = vpack.c.bf16 %v1590, %v1582
  %v1983 = vpack.c.bf16 %v1591, %v1583
  %v1984 = vpack.c.bf16 %v1592, %v1584
  %v1985 = vpack.c.bf16 %v1593, %v1585
  %v1986 = vpack.c.bf16 %v1602, %v1594
  %v1987 = vpack.c.bf16 %v1603, %v1595
  %v1988 = vpack.c.bf16 %v1604, %v1596
  %v1989 = vpack.c.bf16 %v1605, %v1597
  %v1990 = vpack.c.bf16 %v1606, %v1598
  %v1991 = vpack.c.bf16 %v1607, %v1599
  %v1992 = vpack.c.bf16 %v1608, %v1600
  %v1993 = vpack.c.bf16 %v1609, %v1601
  %v1994 = vpack.c.bf16 %v1618, %v1610
  %v1995 = vpack.c.bf16 %v1619, %v1611
  %v1996 = vpack.c.bf16 %v1620, %v1612
  %v1997 = vpack.c.bf16 %v1621, %v1613
  %v1998 = vpack.c.bf16 %v1622, %v1614
  %v1999 = vpack.c.bf16 %v1623, %v1615
  %v2000 = vpack.c.bf16 %v1624, %v1616
  %v2001 = vpack.c.bf16 %v1625, %v1617
  %v2002 = vpack.c.bf16 %v1634, %v1626
  %v2003 = vpack.c.bf16 %v1635, %v1627
  %v2004 = vpack.c.bf16 %v1636, %v1628
  %v2005 = vpack.c.bf16 %v1637, %v1629
  %v2006 = vpack.c.bf16 %v1638, %v1630
  %v2007 = vpack.c.bf16 %v1639, %v1631
  %v2008 = vpack.c.bf16 %v1640, %v1632
  %v2009 = vpack.c.bf16 %v1641, %v1633
  %v2010 = vpack.c.bf16 %v1650, %v1642
  %v2011 = vpack.c.bf16 %v1651, %v1643
  %v2012 = vpack.c.bf16 %v1652, %v1644
  %v2013 = vpack.c.bf16 %v1653, %v1645
  %v2014 = vpack.c.bf16 %v1654, %v1646
  %v2015 = vpack.c.bf16 %v1655, %v1647
  %v2016 = vpack.c.bf16 %v1656, %v1648
  %v2017 = vpack.c.bf16 %v1657, %v1649
  %v2018 = vpack.c.bf16 %v1666, %v1658
  %v2019 = vpack.c.bf16 %v1667, %v1659
  %v2020 = vpack.c.bf16 %v1668, %v1660
  %v2021 = vpack.c.bf16 %v1669, %v1661
  %v2022 = vpack.c.bf16 %v1670, %v1662
  %v2023 = vpack.c.bf16 %v1671, %v1663
  %v2024 = vpack.c.bf16 %v1672, %v1664
  %v2025 = vpack.c.bf16 %v1673, %v1665
  %v2026 = vpack.c.bf16 %v1819, %v1819
  %v2027 = vpack.c.bf16 %v1820, %v1820
  %v2028 = vpack.c.bf16 %v1821, %v1821
  %v2029 = vpack.c.bf16 %v1822, %v1822
  %v2030 = vpack.c.bf16 %v1823, %v1823
  %v2031 = vpack.c.bf16 %v1824, %v1824
  %v2032 = vpack.c.bf16 %v1825, %v1825
  %v2033 = vpack.c.bf16 %v1817, %v1817
  %v2034 = vld [vmem:[%s1] sm:$0xff]
  %v2035 = vld [vmem:[%s1 + $0x8] sm:$0xff]
  %v2036 = vld [vmem:[%s1 + $0x10] sm:$0xff]
  %v2037 = vld [vmem:[%s1 + $0x18] sm:$0xff]
  %v2038 = vld [vmem:[%s2] sm:$0xff]
  %v2039 = vld [vmem:[%s2 + $0x8] sm:$0xff]
  %2041 = vset.pattern.permute.xlu0 0
  %2042 = vperm.xlu0 %2041, %v2038
  %v2043 = vpop.permute.xlu0 %2042
  %2046 = vset.pattern.permute.xlu0 0
  %2047 = vperm.xlu0 %2046, %v2039
  %v2048 = vpop.permute.xlu0 %2047
  %v2054 = vunpack.c.l.b16 %v2034
  %v2055 = vunpack.c.h.b16 %v2034
  %v2056 = vunpack.c.l.b16 %v2035
  %v2057 = vunpack.c.h.b16 %v2035
  %v2058 = vunpack.c.l.b16 %v2036
  %v2059 = vunpack.c.h.b16 %v2036
  %v2060 = vunpack.c.l.b16 %v2037
  %v2061 = vunpack.c.h.b16 %v2037
  %v2062 = vpack.c.b16 %v2058, %v2054
  %v2063 = vpack.c.b16 %v2059, %v2055
  %v2064 = vpack.c.b16 %v2060, %v2056
  %v2065 = vpack.c.b16 %v2061, %v2057
  %vm2069 = vcmask 64512
  %v2071 = vsel %vm2069, %v2065, 0
  %vm2073 = vcmask 1043456
  %v2075 = vsel %vm2073, %v2026, 0
  %v2078 = vsel %vm2073, %v2027, 0
  %v2081 = vsel %vm2073, %v2028, 0
  %v2084 = vsel %vm2073, %v2029, 0
  %v2087 = vsel %vm2073, %v2030, 0
  %v2090 = vsel %vm2073, %v2031, 0
  %v2093 = vsel %vm2073, %v2032, 0
  %v2096 = vsel %vm2073, %v2033, 0
  %2098 = vmatpush.bf16.msra.mxu0 %v1890
  %2099 = vmatpush.bf16.msra.mxu0 %v1882
  %2100 = vmatpush.bf16.msra.mxu0 %v1874
  %2101 = vmatpush.bf16.msra.mxu0 %v1866
  %2102 = vmatpush.bf16.msra.mxu0 %v1858
  %2103 = vmatpush.bf16.msra.mxu0 %v1850
  %2104 = vmatpush.bf16.msra.mxu0 %v1842
  %2105 = vmatpush.bf16.msra.mxu0 %v1834
  %2106 = vmatmul.bf16.gmra.mxu0 %v2062
  %v2107 = vpop.f32.mrf.mxu0
  %v2108 = vadd.f32 %v2043, %v2107
  %v2109 = vpop.f32.mrf.mxu0
  %v2110 = vadd.f32 %v2048, %v2109
  %2111 = vdwg.mxu0
  %2112 = vmatpush.bf16.msra.mxu0 %v1954
  %2113 = vmatpush.bf16.msra.mxu0 %v1946
  %2114 = vmatpush.bf16.msra.mxu0 %v1938
  %2115 = vmatpush.bf16.msra.mxu0 %v1930
  %2116 = vmatpush.bf16.msra.mxu0 %v1922
  %2117 = vmatpush.bf16.msra.mxu0 %v1914
  %2118 = vmatpush.bf16.msra.mxu0 %v1906
  %2119 = vmatpush.bf16.msra.mxu0 %v1898
  %2120 = vmatmul.bf16.gmra.mxu0 %v2063
  %v2121 = vpop.f32.mrf.mxu0
  %v2122 = vadd.f32 %v2108, %v2121
  %v2123 = vpop.f32.mrf.mxu0
  %v2124 = vadd.f32 %v2110, %v2123
  %2125 = vdwg.mxu0
  %2126 = vmatpush.bf16.msra.mxu0 %v2018
  %2127 = vmatpush.bf16.msra.mxu0 %v2010
  %2128 = vmatpush.bf16.msra.mxu0 %v2002
  %2129 = vmatpush.bf16.msra.mxu0 %v1994
  %2130 = vmatpush.bf16.msra.mxu0 %v1986
  %2131 = vmatpush.bf16.msra.mxu0 %v1978
  %2132 = vmatpush.bf16.msra.mxu0 %v1970
  %2133 = vmatpush.bf16.msra.mxu0 %v1962
  %2134 = vmatmul.bf16.gmra.mxu0 %v2064
  %v2135 = vpop.f32.mrf.mxu0
  %v2136 = vadd.f32 %v2122, %v2135
  %v2137 = vpop.f32.mrf.mxu0
  %v2138 = vadd.f32 %v2124, %v2137
  %2139 = vdwg.mxu0
  %2140 = vmatpush.bf16.msra.mxu0 0
  %2141 = vmatpush.bf16.msra.mxu0 0
  %2142 = vmatpush.bf16.msra.mxu0 0
  %2143 = vmatpush.bf16.msra.mxu0 0
  %2144 = vmatpush.bf16.msra.mxu0 0
  %2145 = vmatpush.bf16.msra.mxu0 0
  %2146 = vmatpush.bf16.msra.mxu0 0
  %2147 = vmatpush.bf16.msra.mxu0 %v2075
  %2148 = vmatmul.bf16.gmra.mxu0 %v2071
  %v2149 = vpop.f32.mrf.mxu0
  %v2150 = vadd.f32 %v2136, %v2149
  %v2151 = vpop.f32.mrf.mxu0
  %v2152 = vadd.f32 %v2138, %v2151
  %2153 = vdwg.mxu0
  %2154 = vmatpush.bf16.msra.mxu0 %v1891
  %2155 = vmatpush.bf16.msra.mxu0 %v1883
  %2156 = vmatpush.bf16.msra.mxu0 %v1875
  %2157 = vmatpush.bf16.msra.mxu0 %v1867
  %2158 = vmatpush.bf16.msra.mxu0 %v1859
  %2159 = vmatpush.bf16.msra.mxu0 %v1851
  %2160 = vmatpush.bf16.msra.mxu0 %v1843
  %2161 = vmatpush.bf16.msra.mxu0 %v1835
  %2162 = vmatmul.bf16.gmra.mxu0 %v2062
  %v2163 = vpop.f32.mrf.mxu0
  %v2164 = vadd.f32 %v2043, %v2163
  %v2165 = vpop.f32.mrf.mxu0
  %v2166 = vadd.f32 %v2048, %v2165
  %2167 = vdwg.mxu0
  %2168 = vmatpush.bf16.msra.mxu0 %v1955
  %2169 = vmatpush.bf16.msra.mxu0 %v1947
  %2170 = vmatpush.bf16.msra.mxu0 %v1939
  %2171 = vmatpush.bf16.msra.mxu0 %v1931
  %2172 = vmatpush.bf16.msra.mxu0 %v1923
  %2173 = vmatpush.bf16.msra.mxu0 %v1915
  %2174 = vmatpush.bf16.msra.mxu0 %v1907
  %2175 = vmatpush.bf16.msra.mxu0 %v1899
  %2176 = vmatmul.bf16.gmra.mxu0 %v2063
  %v2177 = vpop.f32.mrf.mxu0
  %v2178 = vadd.f32 %v2164, %v2177
  %v2179 = vpop.f32.mrf.mxu0
  %v2180 = vadd.f32 %v2166, %v2179
  %2181 = vdwg.mxu0
  %2182 = vmatpush.bf16.msra.mxu0 %v2019
  %2183 = vmatpush.bf16.msra.mxu0 %v2011
  %2184 = vmatpush.bf16.msra.mxu0 %v2003
  %2185 = vmatpush.bf16.msra.mxu0 %v1995
  %2186 = vmatpush.bf16.msra.mxu0 %v1987
  %2187 = vmatpush.bf16.msra.mxu0 %v1979
  %2188 = vmatpush.bf16.msra.mxu0 %v1971
  %2189 = vmatpush.bf16.msra.mxu0 %v1963
  %2190 = vmatmul.bf16.gmra.mxu0 %v2064
  %v2191 = vpop.f32.mrf.mxu0
  %v2192 = vadd.f32 %v2178, %v2191
  %v2193 = vpop.f32.mrf.mxu0
  %v2194 = vadd.f32 %v2180, %v2193
  %2195 = vdwg.mxu0
  %2196 = vmatpush.bf16.msra.mxu0 0
  %2197 = vmatpush.bf16.msra.mxu0 0
  %2198 = vmatpush.bf16.msra.mxu0 0
  %2199 = vmatpush.bf16.msra.mxu0 0
  %2200 = vmatpush.bf16.msra.mxu0 0
  %2201 = vmatpush.bf16.msra.mxu0 0
  %2202 = vmatpush.bf16.msra.mxu0 0
  %2203 = vmatpush.bf16.msra.mxu0 %v2078
  %2204 = vmatmul.bf16.gmra.mxu0 %v2071
  %v2205 = vpop.f32.mrf.mxu0
  %v2206 = vadd.f32 %v2192, %v2205
  %v2207 = vpop.f32.mrf.mxu0
  %v2208 = vadd.f32 %v2194, %v2207
  %2209 = vdwg.mxu0
  %2210 = vmatpush.bf16.msra.mxu0 %v1892
  %2211 = vmatpush.bf16.msra.mxu0 %v1884
  %2212 = vmatpush.bf16.msra.mxu0 %v1876
  %2213 = vmatpush.bf16.msra.mxu0 %v1868
  %2214 = vmatpush.bf16.msra.mxu0 %v1860
  %2215 = vmatpush.bf16.msra.mxu0 %v1852
  %2216 = vmatpush.bf16.msra.mxu0 %v1844
  %2217 = vmatpush.bf16.msra.mxu0 %v1836
  %2218 = vmatmul.bf16.gmra.mxu0 %v2062
  %v2219 = vpop.f32.mrf.mxu0
  %v2220 = vadd.f32 %v2043, %v2219
  %v2221 = vpop.f32.mrf.mxu0
  %v2222 = vadd.f32 %v2048, %v2221
  %2223 = vdwg.mxu0
  %2224 = vmatpush.bf16.msra.mxu0 %v1956
  %2225 = vmatpush.bf16.msra.mxu0 %v1948
  %2226 = vmatpush.bf16.msra.mxu0 %v1940
  %2227 = vmatpush.bf16.msra.mxu0 %v1932
  %2228 = vmatpush.bf16.msra.mxu0 %v1924
  %2229 = vmatpush.bf16.msra.mxu0 %v1916
  %2230 = vmatpush.bf16.msra.mxu0 %v1908
  %2231 = vmatpush.bf16.msra.mxu0 %v1900
  %2232 = vmatmul.bf16.gmra.mxu0 %v2063
  %v2233 = vpop.f32.mrf.mxu0
  %v2234 = vadd.f32 %v2220, %v2233
  %v2235 = vpop.f32.mrf.mxu0
  %v2236 = vadd.f32 %v2222, %v2235
  %2237 = vdwg.mxu0
  %2238 = vmatpush.bf16.msra.mxu0 %v2020
  %2239 = vmatpush.bf16.msra.mxu0 %v2012
  %2240 = vmatpush.bf16.msra.mxu0 %v2004
  %2241 = vmatpush.bf16.msra.mxu0 %v1996
  %2242 = vmatpush.bf16.msra.mxu0 %v1988
  %2243 = vmatpush.bf16.msra.mxu0 %v1980
  %2244 = vmatpush.bf16.msra.mxu0 %v1972
  %2245 = vmatpush.bf16.msra.mxu0 %v1964
  %2246 = vmatmul.bf16.gmra.mxu0 %v2064
  %v2247 = vpop.f32.mrf.mxu0
  %v2248 = vadd.f32 %v2234, %v2247
  %v2249 = vpop.f32.mrf.mxu0
  %v2250 = vadd.f32 %v2236, %v2249
  %2251 = vdwg.mxu0
  %2252 = vmatpush.bf16.msra.mxu0 0
  %2253 = vmatpush.bf16.msra.mxu0 0
  %2254 = vmatpush.bf16.msra.mxu0 0
  %2255 = vmatpush.bf16.msra.mxu0 0
  %2256 = vmatpush.bf16.msra.mxu0 0
  %2257 = vmatpush.bf16.msra.mxu0 0
  %2258 = vmatpush.bf16.msra.mxu0 0
  %2259 = vmatpush.bf16.msra.mxu0 %v2081
  %2260 = vmatmul.bf16.gmra.mxu0 %v2071
  %v2261 = vpop.f32.mrf.mxu0
  %v2262 = vadd.f32 %v2248, %v2261
  %v2263 = vpop.f32.mrf.mxu0
  %v2264 = vadd.f32 %v2250, %v2263
  %2265 = vdwg.mxu0
  %2266 = vmatpush.bf16.msra.mxu0 %v1893
  %2267 = vmatpush.bf16.msra.mxu0 %v1885
  %2268 = vmatpush.bf16.msra.mxu0 %v1877
  %2269 = vmatpush.bf16.msra.mxu0 %v1869
  %2270 = vmatpush.bf16.msra.mxu0 %v1861
  %2271 = vmatpush.bf16.msra.mxu0 %v1853
  %2272 = vmatpush.bf16.msra.mxu0 %v1845
  %2273 = vmatpush.bf16.msra.mxu0 %v1837
  %2274 = vmatmul.bf16.gmra.mxu0 %v2062
  %v2275 = vpop.f32.mrf.mxu0
  %v2276 = vadd.f32 %v2043, %v2275
  %v2277 = vpop.f32.mrf.mxu0
  %v2278 = vadd.f32 %v2048, %v2277
  %2279 = vdwg.mxu0
  %2280 = vmatpush.bf16.msra.mxu0 %v1957
  %2281 = vmatpush.bf16.msra.mxu0 %v1949
  %2282 = vmatpush.bf16.msra.mxu0 %v1941
  %2283 = vmatpush.bf16.msra.mxu0 %v1933
  %2284 = vmatpush.bf16.msra.mxu0 %v1925
  %2285 = vmatpush.bf16.msra.mxu0 %v1917
  %2286 = vmatpush.bf16.msra.mxu0 %v1909
  %2287 = vmatpush.bf16.msra.mxu0 %v1901
  %2288 = vmatmul.bf16.gmra.mxu0 %v2063
  %v2289 = vpop.f32.mrf.mxu0
  %v2290 = vadd.f32 %v2276, %v2289
  %v2291 = vpop.f32.mrf.mxu0
  %v2292 = vadd.f32 %v2278, %v2291
  %2293 = vdwg.mxu0
  %2294 = vmatpush.bf16.msra.mxu0 %v2021
  %2295 = vmatpush.bf16.msra.mxu0 %v2013
  %2296 = vmatpush.bf16.msra.mxu0 %v2005
  %2297 = vmatpush.bf16.msra.mxu0 %v1997
  %2298 = vmatpush.bf16.msra.mxu0 %v1989
  %2299 = vmatpush.bf16.msra.mxu0 %v1981
  %2300 = vmatpush.bf16.msra.mxu0 %v1973
  %2301 = vmatpush.bf16.msra.mxu0 %v1965
  %2302 = vmatmul.bf16.gmra.mxu0 %v2064
  %v2303 = vpop.f32.mrf.mxu0
  %v2304 = vadd.f32 %v2290, %v2303
  %v2305 = vpop.f32.mrf.mxu0
  %v2306 = vadd.f32 %v2292, %v2305
  %2307 = vdwg.mxu0
  %2308 = vmatpush.bf16.msra.mxu0 0
  %2309 = vmatpush.bf16.msra.mxu0 0
  %2310 = vmatpush.bf16.msra.mxu0 0
  %2311 = vmatpush.bf16.msra.mxu0 0
  %2312 = vmatpush.bf16.msra.mxu0 0
  %2313 = vmatpush.bf16.msra.mxu0 0
  %2314 = vmatpush.bf16.msra.mxu0 0
  %2315 = vmatpush.bf16.msra.mxu0 %v2084
  %2316 = vmatmul.bf16.gmra.mxu0 %v2071
  %v2317 = vpop.f32.mrf.mxu0
  %v2318 = vadd.f32 %v2304, %v2317
  %v2319 = vpop.f32.mrf.mxu0
  %v2320 = vadd.f32 %v2306, %v2319
  %2321 = vdwg.mxu0
  %2322 = vmatpush.bf16.msra.mxu0 %v1894
  %2323 = vmatpush.bf16.msra.mxu0 %v1886
  %2324 = vmatpush.bf16.msra.mxu0 %v1878
  %2325 = vmatpush.bf16.msra.mxu0 %v1870
  %2326 = vmatpush.bf16.msra.mxu0 %v1862
  %2327 = vmatpush.bf16.msra.mxu0 %v1854
  %2328 = vmatpush.bf16.msra.mxu0 %v1846
  %2329 = vmatpush.bf16.msra.mxu0 %v1838
  %2330 = vmatmul.bf16.gmra.mxu0 %v2062
  %v2331 = vpop.f32.mrf.mxu0
  %v2332 = vadd.f32 %v2043, %v2331
  %v2333 = vpop.f32.mrf.mxu0
  %v2334 = vadd.f32 %v2048, %v2333
  %2335 = vdwg.mxu0
  %2336 = vmatpush.bf16.msra.mxu0 %v1958
  %2337 = vmatpush.bf16.msra.mxu0 %v1950
  %2338 = vmatpush.bf16.msra.mxu0 %v1942
  %2339 = vmatpush.bf16.msra.mxu0 %v1934
  %2340 = vmatpush.bf16.msra.mxu0 %v1926
  %2341 = vmatpush.bf16.msra.mxu0 %v1918
  %2342 = vmatpush.bf16.msra.mxu0 %v1910
  %2343 = vmatpush.bf16.msra.mxu0 %v1902
  %2344 = vmatmul.bf16.gmra.mxu0 %v2063
  %v2345 = vpop.f32.mrf.mxu0
  %v2346 = vadd.f32 %v2332, %v2345
  %v2347 = vpop.f32.mrf.mxu0
  %v2348 = vadd.f32 %v2334, %v2347
  %2349 = vdwg.mxu0
  %2350 = vmatpush.bf16.msra.mxu0 %v2022
  %2351 = vmatpush.bf16.msra.mxu0 %v2014
  %2352 = vmatpush.bf16.msra.mxu0 %v2006
  %2353 = vmatpush.bf16.msra.mxu0 %v1998
  %2354 = vmatpush.bf16.msra.mxu0 %v1990
  %2355 = vmatpush.bf16.msra.mxu0 %v1982
  %2356 = vmatpush.bf16.msra.mxu0 %v1974
  %2357 = vmatpush.bf16.msra.mxu0 %v1966
  %2358 = vmatmul.bf16.gmra.mxu0 %v2064
  %v2359 = vpop.f32.mrf.mxu0
  %v2360 = vadd.f32 %v2346, %v2359
  %v2361 = vpop.f32.mrf.mxu0
  %v2362 = vadd.f32 %v2348, %v2361
  %2363 = vdwg.mxu0
  %2364 = vmatpush.bf16.msra.mxu0 0
  %2365 = vmatpush.bf16.msra.mxu0 0
  %2366 = vmatpush.bf16.msra.mxu0 0
  %2367 = vmatpush.bf16.msra.mxu0 0
  %2368 = vmatpush.bf16.msra.mxu0 0
  %2369 = vmatpush.bf16.msra.mxu0 0
  %2370 = vmatpush.bf16.msra.mxu0 0
  %2371 = vmatpush.bf16.msra.mxu0 %v2087
  %2372 = vmatmul.bf16.gmra.mxu0 %v2071
  %v2373 = vpop.f32.mrf.mxu0
  %v2374 = vadd.f32 %v2360, %v2373
  %v2375 = vpop.f32.mrf.mxu0
  %v2376 = vadd.f32 %v2362, %v2375
  %2377 = vdwg.mxu0
  %2378 = vmatpush.bf16.msra.mxu0 %v1895
  %2379 = vmatpush.bf16.msra.mxu0 %v1887
  %2380 = vmatpush.bf16.msra.mxu0 %v1879
  %2381 = vmatpush.bf16.msra.mxu0 %v1871
  %2382 = vmatpush.bf16.msra.mxu0 %v1863
  %2383 = vmatpush.bf16.msra.mxu0 %v1855
  %2384 = vmatpush.bf16.msra.mxu0 %v1847
  %2385 = vmatpush.bf16.msra.mxu0 %v1839
  %2386 = vmatmul.bf16.gmra.mxu0 %v2062
  %v2387 = vpop.f32.mrf.mxu0
  %v2388 = vadd.f32 %v2043, %v2387
  %v2389 = vpop.f32.mrf.mxu0
  %v2390 = vadd.f32 %v2048, %v2389
  %2391 = vdwg.mxu0
  %2392 = vmatpush.bf16.msra.mxu0 %v1959
  %2393 = vmatpush.bf16.msra.mxu0 %v1951
  %2394 = vmatpush.bf16.msra.mxu0 %v1943
  %2395 = vmatpush.bf16.msra.mxu0 %v1935
  %2396 = vmatpush.bf16.msra.mxu0 %v1927
  %2397 = vmatpush.bf16.msra.mxu0 %v1919
  %2398 = vmatpush.bf16.msra.mxu0 %v1911
  %2399 = vmatpush.bf16.msra.mxu0 %v1903
  %2400 = vmatmul.bf16.gmra.mxu0 %v2063
  %v2401 = vpop.f32.mrf.mxu0
  %v2402 = vadd.f32 %v2388, %v2401
  %v2403 = vpop.f32.mrf.mxu0
  %v2404 = vadd.f32 %v2390, %v2403
  %2405 = vdwg.mxu0
  %2406 = vmatpush.bf16.msra.mxu0 %v2023
  %2407 = vmatpush.bf16.msra.mxu0 %v2015
  %2408 = vmatpush.bf16.msra.mxu0 %v2007
  %2409 = vmatpush.bf16.msra.mxu0 %v1999
  %2410 = vmatpush.bf16.msra.mxu0 %v1991
  %2411 = vmatpush.bf16.msra.mxu0 %v1983
  %2412 = vmatpush.bf16.msra.mxu0 %v1975
  %2413 = vmatpush.bf16.msra.mxu0 %v1967
  %2414 = vmatmul.bf16.gmra.mxu0 %v2064
  %v2415 = vpop.f32.mrf.mxu0
  %v2416 = vadd.f32 %v2402, %v2415
  %v2417 = vpop.f32.mrf.mxu0
  %v2418 = vadd.f32 %v2404, %v2417
  %2419 = vdwg.mxu0
  %2420 = vmatpush.bf16.msra.mxu0 0
  %2421 = vmatpush.bf16.msra.mxu0 0
  %2422 = vmatpush.bf16.msra.mxu0 0
  %2423 = vmatpush.bf16.msra.mxu0 0
  %2424 = vmatpush.bf16.msra.mxu0 0
  %2425 = vmatpush.bf16.msra.mxu0 0
  %2426 = vmatpush.bf16.msra.mxu0 0
  %2427 = vmatpush.bf16.msra.mxu0 %v2090
  %2428 = vmatmul.bf16.gmra.mxu0 %v2071
  %v2429 = vpop.f32.mrf.mxu0
  %v2430 = vadd.f32 %v2416, %v2429
  %v2431 = vpop.f32.mrf.mxu0
  %v2432 = vadd.f32 %v2418, %v2431
  %2433 = vdwg.mxu0
  %2434 = vmatpush.bf16.msra.mxu0 %v1896
  %2435 = vmatpush.bf16.msra.mxu0 %v1888
  %2436 = vmatpush.bf16.msra.mxu0 %v1880
  %2437 = vmatpush.bf16.msra.mxu0 %v1872
  %2438 = vmatpush.bf16.msra.mxu0 %v1864
  %2439 = vmatpush.bf16.msra.mxu0 %v1856
  %2440 = vmatpush.bf16.msra.mxu0 %v1848
  %2441 = vmatpush.bf16.msra.mxu0 %v1840
  %2442 = vmatmul.bf16.gmra.mxu0 %v2062
  %v2443 = vpop.f32.mrf.mxu0
  %v2444 = vadd.f32 %v2043, %v2443
  %v2445 = vpop.f32.mrf.mxu0
  %v2446 = vadd.f32 %v2048, %v2445
  %2447 = vdwg.mxu0
  %2448 = vmatpush.bf16.msra.mxu0 %v1960
  %2449 = vmatpush.bf16.msra.mxu0 %v1952
  %2450 = vmatpush.bf16.msra.mxu0 %v1944
  %2451 = vmatpush.bf16.msra.mxu0 %v1936
  %2452 = vmatpush.bf16.msra.mxu0 %v1928
  %2453 = vmatpush.bf16.msra.mxu0 %v1920
  %2454 = vmatpush.bf16.msra.mxu0 %v1912
  %2455 = vmatpush.bf16.msra.mxu0 %v1904
  %2456 = vmatmul.bf16.gmra.mxu0 %v2063
  %v2457 = vpop.f32.mrf.mxu0
  %v2458 = vadd.f32 %v2444, %v2457
  %v2459 = vpop.f32.mrf.mxu0
  %v2460 = vadd.f32 %v2446, %v2459
  %2461 = vdwg.mxu0
  %2462 = vmatpush.bf16.msra.mxu0 %v2024
  %2463 = vmatpush.bf16.msra.mxu0 %v2016
  %2464 = vmatpush.bf16.msra.mxu0 %v2008
  %2465 = vmatpush.bf16.msra.mxu0 %v2000
  %2466 = vmatpush.bf16.msra.mxu0 %v1992
  %2467 = vmatpush.bf16.msra.mxu0 %v1984
  %2468 = vmatpush.bf16.msra.mxu0 %v1976
  %2469 = vmatpush.bf16.msra.mxu0 %v1968
  %2470 = vmatmul.bf16.gmra.mxu0 %v2064
  %v2471 = vpop.f32.mrf.mxu0
  %v2472 = vadd.f32 %v2458, %v2471
  %v2473 = vpop.f32.mrf.mxu0
  %v2474 = vadd.f32 %v2460, %v2473
  %2475 = vdwg.mxu0
  %2476 = vmatpush.bf16.msra.mxu0 0
  %2477 = vmatpush.bf16.msra.mxu0 0
  %2478 = vmatpush.bf16.msra.mxu0 0
  %2479 = vmatpush.bf16.msra.mxu0 0
  %2480 = vmatpush.bf16.msra.mxu0 0
  %2481 = vmatpush.bf16.msra.mxu0 0
  %2482 = vmatpush.bf16.msra.mxu0 0
  %2483 = vmatpush.bf16.msra.mxu0 %v2093
  %2484 = vmatmul.bf16.gmra.mxu0 %v2071
  %v2485 = vpop.f32.mrf.mxu0
  %v2486 = vadd.f32 %v2472, %v2485
  %v2487 = vpop.f32.mrf.mxu0
  %v2488 = vadd.f32 %v2474, %v2487
  %2489 = vdwg.mxu0
  %2490 = vmatpush.bf16.msra.mxu0 %v1897
  %2491 = vmatpush.bf16.msra.mxu0 %v1889
  %2492 = vmatpush.bf16.msra.mxu0 %v1881
  %2493 = vmatpush.bf16.msra.mxu0 %v1873
  %2494 = vmatpush.bf16.msra.mxu0 %v1865
  %2495 = vmatpush.bf16.msra.mxu0 %v1857
  %2496 = vmatpush.bf16.msra.mxu0 %v1849
  %2497 = vmatpush.bf16.msra.mxu0 %v1841
  %2498 = vmatmul.bf16.gmra.mxu0 %v2062
  %v2499 = vpop.f32.mrf.mxu0
  %v2500 = vadd.f32 %v2043, %v2499
  %v2501 = vpop.f32.mrf.mxu0
  %v2502 = vadd.f32 %v2048, %v2501
  %2503 = vdwg.mxu0
  %2504 = vmatpush.bf16.msra.mxu0 %v1961
  %2505 = vmatpush.bf16.msra.mxu0 %v1953
  %2506 = vmatpush.bf16.msra.mxu0 %v1945
  %2507 = vmatpush.bf16.msra.mxu0 %v1937
  %2508 = vmatpush.bf16.msra.mxu0 %v1929
  %2509 = vmatpush.bf16.msra.mxu0 %v1921
  %2510 = vmatpush.bf16.msra.mxu0 %v1913
  %2511 = vmatpush.bf16.msra.mxu0 %v1905
  %2512 = vmatmul.bf16.gmra.mxu0 %v2063
  %v2513 = vpop.f32.mrf.mxu0
  %v2514 = vadd.f32 %v2500, %v2513
  %v2515 = vpop.f32.mrf.mxu0
  %v2516 = vadd.f32 %v2502, %v2515
  %2517 = vdwg.mxu0
  %2518 = vmatpush.bf16.msra.mxu0 %v2025
  %2519 = vmatpush.bf16.msra.mxu0 %v2017
  %2520 = vmatpush.bf16.msra.mxu0 %v2009
  %2521 = vmatpush.bf16.msra.mxu0 %v2001
  %2522 = vmatpush.bf16.msra.mxu0 %v1993
  %2523 = vmatpush.bf16.msra.mxu0 %v1985
  %2524 = vmatpush.bf16.msra.mxu0 %v1977
  %2525 = vmatpush.bf16.msra.mxu0 %v1969
  %2526 = vmatmul.bf16.gmra.mxu0 %v2064
  %v2527 = vpop.f32.mrf.mxu0
  %v2528 = vadd.f32 %v2514, %v2527
  %v2529 = vpop.f32.mrf.mxu0
  %v2530 = vadd.f32 %v2516, %v2529
  %2531 = vdwg.mxu0
  %2532 = vmatpush.bf16.msra.mxu0 0
  %2533 = vmatpush.bf16.msra.mxu0 0
  %2534 = vmatpush.bf16.msra.mxu0 0
  %2535 = vmatpush.bf16.msra.mxu0 0
  %2536 = vmatpush.bf16.msra.mxu0 0
  %2537 = vmatpush.bf16.msra.mxu0 0
  %2538 = vmatpush.bf16.msra.mxu0 0
  %2539 = vmatpush.bf16.msra.mxu0 %v2096
  %2540 = vmatmul.bf16.gmra.mxu0 %v2071
  %v2541 = vpop.f32.mrf.mxu0
  %v2542 = vadd.f32 %v2528, %v2541
  %v2543 = vpop.f32.mrf.mxu0
  %v2544 = vadd.f32 %v2530, %v2543
  %2545 = vdwg.mxu0
  %v2546 = vmax.f32 %v2150, 0.0
  %v2547 = vmax.f32 %v2206, 0.0
  %v2548 = vmax.f32 %v2262, 0.0
  %v2549 = vmax.f32 %v2318, 0.0
  %v2550 = vmax.f32 %v2374, 0.0
  %v2551 = vmax.f32 %v2430, 0.0
  %v2552 = vmax.f32 %v2486, 0.0
  %v2553 = vmax.f32 %v2542, 0.0
  %v2554 = vmax.f32 %v2152, 0.0
  %v2555 = vmax.f32 %v2208, 0.0
  %v2556 = vmax.f32 %v2264, 0.0
  %v2557 = vmax.f32 %v2320, 0.0
  %v2558 = vmax.f32 %v2376, 0.0
  %v2559 = vmax.f32 %v2432, 0.0
  %v2560 = vmax.f32 %v2488, 0.0
  %v2561 = vmax.f32 %v2544, 0.0
  %v2563 = vperm.slane %v24, 0
  %v2564 = vperm.slane %v24, 1
  %v2565 = vperm.slane %v24, 2
  %v2566 = vperm.slane %v24, 3
  %v2567 = vperm.slane %v24, 4
  %v2568 = vperm.slane %v24, 5
  %v2569 = vperm.slane %v24, 6
  %v2570 = vperm.slane %v24, 7
  %v2579 = vmul.f32 %v2546, %v2563
  %v2580 = vmul.f32 %v2547, %v2564
  %v2581 = vmul.f32 %v2548, %v2565
  %v2582 = vmul.f32 %v2549, %v2566
  %v2583 = vmul.f32 %v2550, %v2567
  %v2584 = vmul.f32 %v2551, %v2568
  %v2585 = vmul.f32 %v2552, %v2569
  %v2586 = vmul.f32 %v2553, %v2570
  %v2587 = vmul.f32 %v2554, %v2563
  %v2588 = vmul.f32 %v2555, %v2564
  %v2589 = vmul.f32 %v2556, %v2565
  %v2590 = vmul.f32 %v2557, %v2566
  %v2591 = vmul.f32 %v2558, %v2567
  %v2592 = vmul.f32 %v2559, %v2568
  %v2593 = vmul.f32 %v2560, %v2569
  %v2594 = vmul.f32 %v2561, %v2570
  %2611 = vrot.lane.b32.xlu0 %v2579, 69
  %v2612 = vpop.permute.xlu0 %2611
  %2613 = vrot.lane.b32.xlu0 %v2580, 69
  %v2614 = vpop.permute.xlu0 %2613
  %2615 = vrot.lane.b32.xlu0 %v2581, 69
  %v2616 = vpop.permute.xlu0 %2615
  %2617 = vrot.lane.b32.xlu0 %v2582, 69
  %v2618 = vpop.permute.xlu0 %2617
  %2619 = vrot.lane.b32.xlu0 %v2583, 69
  %v2620 = vpop.permute.xlu0 %2619
  %2621 = vrot.lane.b32.xlu0 %v2584, 69
  %v2622 = vpop.permute.xlu0 %2621
  %2623 = vrot.lane.b32.xlu0 %v2585, 69
  %v2624 = vpop.permute.xlu0 %2623
  %2625 = vrot.lane.b32.xlu0 %v2586, 69
  %v2626 = vpop.permute.xlu0 %2625
  %2627 = vrot.lane.b32.xlu0 %v2587, 69
  %v2628 = vpop.permute.xlu0 %2627
  %2629 = vrot.lane.b32.xlu0 %v2588, 69
  %v2630 = vpop.permute.xlu0 %2629
  %2631 = vrot.lane.b32.xlu0 %v2589, 69
  %v2632 = vpop.permute.xlu0 %2631
  %2633 = vrot.lane.b32.xlu0 %v2590, 69
  %v2634 = vpop.permute.xlu0 %2633
  %2635 = vrot.lane.b32.xlu0 %v2591, 69
  %v2636 = vpop.permute.xlu0 %2635
  %2637 = vrot.lane.b32.xlu0 %v2592, 69
  %v2638 = vpop.permute.xlu0 %2637
  %2639 = vrot.lane.b32.xlu0 %v2593, 69
  %v2640 = vpop.permute.xlu0 %2639
  %2641 = vrot.lane.b32.xlu0 %v2594, 69
  %v2642 = vpop.permute.xlu0 %2641
  %vm2643 = vcmask 564224
  %v2644 = vsel %vm2643, %v2612, %v2614
  %v2645 = vsel %vm2643, %v2614, %v2616
  %v2646 = vsel %vm2643, %v2616, %v2618
  %v2647 = vsel %vm2643, %v2618, %v2620
  %v2648 = vsel %vm2643, %v2620, %v2622
  %v2649 = vsel %vm2643, %v2622, %v2624
  %v2650 = vsel %vm2643, %v2624, %v2626
  %v2651 = vsel %vm2643, %v2628, %v2630
  %v2652 = vsel %vm2643, %v2630, %v2632
  %v2653 = vsel %vm2643, %v2632, %v2634
  %v2654 = vsel %vm2643, %v2634, %v2636
  %v2655 = vsel %vm2643, %v2636, %v2638
  %v2656 = vsel %vm2643, %v2638, %v2640
  %v2657 = vsel %vm2643, %v2640, %v2642
  %v2676 = vsel %vm2643, 0.0, %v2612
  %v2677 = vsel %vm2643, 0.0, %v2628
  %vm2678 = vcmask 105472
  %v2679 = vsel %vm2678, %v2626, 0.0
  %v2680 = vsel %vm2678, %v2642, 0.0
  %2683 = vrot.lane.b32.xlu0 %v2676, 127
  %v2684 = vpop.permute.xlu0 %2683
  %2685 = vrot.lane.b32.xlu0 %v2644, 127
  %v2686 = vpop.permute.xlu0 %2685
  %2687 = vrot.lane.b32.xlu0 %v2645, 127
  %v2688 = vpop.permute.xlu0 %2687
  %2689 = vrot.lane.b32.xlu0 %v2646, 127
  %v2690 = vpop.permute.xlu0 %2689
  %2691 = vrot.lane.b32.xlu0 %v2647, 127
  %v2692 = vpop.permute.xlu0 %2691
  %2693 = vrot.lane.b32.xlu0 %v2648, 127
  %v2694 = vpop.permute.xlu0 %2693
  %2695 = vrot.lane.b32.xlu0 %v2649, 127
  %v2696 = vpop.permute.xlu0 %2695
  %2697 = vrot.lane.b32.xlu0 %v2650, 127
  %v2698 = vpop.permute.xlu0 %2697
  %2699 = vrot.lane.b32.xlu0 %v2677, 127
  %v2700 = vpop.permute.xlu0 %2699
  %2701 = vrot.lane.b32.xlu0 %v2651, 127
  %v2702 = vpop.permute.xlu0 %2701
  %2703 = vrot.lane.b32.xlu0 %v2652, 127
  %v2704 = vpop.permute.xlu0 %2703
  %2705 = vrot.lane.b32.xlu0 %v2653, 127
  %v2706 = vpop.permute.xlu0 %2705
  %2707 = vrot.lane.b32.xlu0 %v2654, 127
  %v2708 = vpop.permute.xlu0 %2707
  %2709 = vrot.lane.b32.xlu0 %v2655, 127
  %v2710 = vpop.permute.xlu0 %2709
  %2711 = vrot.lane.b32.xlu0 %v2656, 127
  %v2712 = vpop.permute.xlu0 %2711
  %2713 = vrot.lane.b32.xlu0 %v2657, 127
  %v2714 = vpop.permute.xlu0 %2713
  %v2715 = vsel %vm58, %v2684, %v2686
  %v2716 = vsel %vm58, %v2686, %v2688
  %v2717 = vsel %vm58, %v2688, %v2690
  %v2718 = vsel %vm58, %v2690, %v2692
  %v2719 = vsel %vm58, %v2692, %v2694
  %v2720 = vsel %vm58, %v2694, %v2696
  %v2721 = vsel %vm58, %v2696, %v2698
  %v2722 = vsel %vm58, %v2700, %v2702
  %v2723 = vsel %vm58, %v2702, %v2704
  %v2724 = vsel %vm58, %v2704, %v2706
  %v2725 = vsel %vm58, %v2706, %v2708
  %v2726 = vsel %vm58, %v2708, %v2710
  %v2727 = vsel %vm58, %v2710, %v2712
  %v2728 = vsel %vm58, %v2712, %v2714
  %2745 = vrot.lane.b32.xlu0 %v2676, 126
  %v2746 = vpop.permute.xlu0 %2745
  %2747 = vrot.lane.b32.xlu0 %v2644, 126
  %v2748 = vpop.permute.xlu0 %2747
  %2749 = vrot.lane.b32.xlu0 %v2645, 126
  %v2750 = vpop.permute.xlu0 %2749
  %2751 = vrot.lane.b32.xlu0 %v2646, 126
  %v2752 = vpop.permute.xlu0 %2751
  %2753 = vrot.lane.b32.xlu0 %v2647, 126
  %v2754 = vpop.permute.xlu0 %2753
  %2755 = vrot.lane.b32.xlu0 %v2648, 126
  %v2756 = vpop.permute.xlu0 %2755
  %2757 = vrot.lane.b32.xlu0 %v2649, 126
  %v2758 = vpop.permute.xlu0 %2757
  %2759 = vrot.lane.b32.xlu0 %v2650, 126
  %v2760 = vpop.permute.xlu0 %2759
  %2761 = vrot.lane.b32.xlu0 %v2677, 126
  %v2762 = vpop.permute.xlu0 %2761
  %2763 = vrot.lane.b32.xlu0 %v2651, 126
  %v2764 = vpop.permute.xlu0 %2763
  %2765 = vrot.lane.b32.xlu0 %v2652, 126
  %v2766 = vpop.permute.xlu0 %2765
  %2767 = vrot.lane.b32.xlu0 %v2653, 126
  %v2768 = vpop.permute.xlu0 %2767
  %2769 = vrot.lane.b32.xlu0 %v2654, 126
  %v2770 = vpop.permute.xlu0 %2769
  %2771 = vrot.lane.b32.xlu0 %v2655, 126
  %v2772 = vpop.permute.xlu0 %2771
  %2773 = vrot.lane.b32.xlu0 %v2656, 126
  %v2774 = vpop.permute.xlu0 %2773
  %2775 = vrot.lane.b32.xlu0 %v2657, 126
  %v2776 = vpop.permute.xlu0 %2775
  %v2777 = vsel %vm90, %v2746, %v2748
  %v2778 = vsel %vm90, %v2748, %v2750
  %v2779 = vsel %vm90, %v2750, %v2752
  %v2780 = vsel %vm90, %v2752, %v2754
  %v2781 = vsel %vm90, %v2754, %v2756
  %v2782 = vsel %vm90, %v2756, %v2758
  %v2783 = vsel %vm90, %v2758, %v2760
  %v2784 = vsel %vm90, %v2762, %v2764
  %v2785 = vsel %vm90, %v2764, %v2766
  %v2786 = vsel %vm90, %v2766, %v2768
  %v2787 = vsel %vm90, %v2768, %v2770
  %v2788 = vsel %vm90, %v2770, %v2772
  %v2789 = vsel %vm90, %v2772, %v2774
  %v2790 = vsel %vm90, %v2774, %v2776
  %2809 = vrot.lane.b32.xlu0 %v2676, 106
  %v2810 = vpop.permute.xlu0 %2809
  %2811 = vrot.lane.b32.xlu0 %v2644, 106
  %v2812 = vpop.permute.xlu0 %2811
  %2813 = vrot.lane.b32.xlu0 %v2645, 106
  %v2814 = vpop.permute.xlu0 %2813
  %2815 = vrot.lane.b32.xlu0 %v2646, 106
  %v2816 = vpop.permute.xlu0 %2815
  %2817 = vrot.lane.b32.xlu0 %v2647, 106
  %v2818 = vpop.permute.xlu0 %2817
  %2819 = vrot.lane.b32.xlu0 %v2648, 106
  %v2820 = vpop.permute.xlu0 %2819
  %2821 = vrot.lane.b32.xlu0 %v2649, 106
  %v2822 = vpop.permute.xlu0 %2821
  %2823 = vrot.lane.b32.xlu0 %v2650, 106
  %v2824 = vpop.permute.xlu0 %2823
  %2825 = vrot.lane.b32.xlu0 %v2679, 106
  %v2826 = vpop.permute.xlu0 %2825
  %2827 = vrot.lane.b32.xlu0 %v2677, 106
  %v2828 = vpop.permute.xlu0 %2827
  %2829 = vrot.lane.b32.xlu0 %v2651, 106
  %v2830 = vpop.permute.xlu0 %2829
  %2831 = vrot.lane.b32.xlu0 %v2652, 106
  %v2832 = vpop.permute.xlu0 %2831
  %2833 = vrot.lane.b32.xlu0 %v2653, 106
  %v2834 = vpop.permute.xlu0 %2833
  %2835 = vrot.lane.b32.xlu0 %v2654, 106
  %v2836 = vpop.permute.xlu0 %2835
  %2837 = vrot.lane.b32.xlu0 %v2655, 106
  %v2838 = vpop.permute.xlu0 %2837
  %2839 = vrot.lane.b32.xlu0 %v2656, 106
  %v2840 = vpop.permute.xlu0 %2839
  %2841 = vrot.lane.b32.xlu0 %v2657, 106
  %v2842 = vpop.permute.xlu0 %2841
  %2843 = vrot.lane.b32.xlu0 %v2680, 106
  %v2844 = vpop.permute.xlu0 %2843
  %v2845 = vsel %vm250, %v2810, %v2812
  %v2846 = vsel %vm250, %v2812, %v2814
  %v2847 = vsel %vm250, %v2814, %v2816
  %v2848 = vsel %vm250, %v2816, %v2818
  %v2849 = vsel %vm250, %v2818, %v2820
  %v2850 = vsel %vm250, %v2820, %v2822
  %v2851 = vsel %vm250, %v2822, %v2824
  %v2852 = vsel %vm250, %v2824, %v2826
  %v2853 = vsel %vm250, %v2828, %v2830
  %v2854 = vsel %vm250, %v2830, %v2832
  %v2855 = vsel %vm250, %v2832, %v2834
  %v2856 = vsel %vm250, %v2834, %v2836
  %v2857 = vsel %vm250, %v2836, %v2838
  %v2858 = vsel %vm250, %v2838, %v2840
  %v2859 = vsel %vm250, %v2840, %v2842
  %v2860 = vsel %vm250, %v2842, %v2844
  %2877 = vrot.lane.b32.xlu0 %v2676, 105
  %v2878 = vpop.permute.xlu0 %2877
  %2879 = vrot.lane.b32.xlu0 %v2644, 105
  %v2880 = vpop.permute.xlu0 %2879
  %2881 = vrot.lane.b32.xlu0 %v2645, 105
  %v2882 = vpop.permute.xlu0 %2881
  %2883 = vrot.lane.b32.xlu0 %v2646, 105
  %v2884 = vpop.permute.xlu0 %2883
  %2885 = vrot.lane.b32.xlu0 %v2647, 105
  %v2886 = vpop.permute.xlu0 %2885
  %2887 = vrot.lane.b32.xlu0 %v2648, 105
  %v2888 = vpop.permute.xlu0 %2887
  %2889 = vrot.lane.b32.xlu0 %v2649, 105
  %v2890 = vpop.permute.xlu0 %2889
  %2891 = vrot.lane.b32.xlu0 %v2650, 105
  %v2892 = vpop.permute.xlu0 %2891
  %2893 = vrot.lane.b32.xlu0 %v2679, 105
  %v2894 = vpop.permute.xlu0 %2893
  %2895 = vrot.lane.b32.xlu0 %v2677, 105
  %v2896 = vpop.permute.xlu0 %2895
  %2897 = vrot.lane.b32.xlu0 %v2651, 105
  %v2898 = vpop.permute.xlu0 %2897
  %2899 = vrot.lane.b32.xlu0 %v2652, 105
  %v2900 = vpop.permute.xlu0 %2899
  %2901 = vrot.lane.b32.xlu0 %v2653, 105
  %v2902 = vpop.permute.xlu0 %2901
  %2903 = vrot.lane.b32.xlu0 %v2654, 105
  %v2904 = vpop.permute.xlu0 %2903
  %2905 = vrot.lane.b32.xlu0 %v2655, 105
  %v2906 = vpop.permute.xlu0 %2905
  %2907 = vrot.lane.b32.xlu0 %v2656, 105
  %v2908 = vpop.permute.xlu0 %2907
  %2909 = vrot.lane.b32.xlu0 %v2657, 105
  %v2910 = vpop.permute.xlu0 %2909
  %2911 = vrot.lane.b32.xlu0 %v2680, 105
  %v2912 = vpop.permute.xlu0 %2911
  %v2913 = vsel %vm282, %v2878, %v2880
  %v2914 = vsel %vm282, %v2880, %v2882
  %v2915 = vsel %vm282, %v2882, %v2884
  %v2916 = vsel %vm282, %v2884, %v2886
  %v2917 = vsel %vm282, %v2886, %v2888
  %v2918 = vsel %vm282, %v2888, %v2890
  %v2919 = vsel %vm282, %v2890, %v2892
  %v2920 = vsel %vm282, %v2892, %v2894
  %v2921 = vsel %vm282, %v2896, %v2898
  %v2922 = vsel %vm282, %v2898, %v2900
  %v2923 = vsel %vm282, %v2900, %v2902
  %v2924 = vsel %vm282, %v2902, %v2904
  %v2925 = vsel %vm282, %v2904, %v2906
  %v2926 = vsel %vm282, %v2906, %v2908
  %v2927 = vsel %vm282, %v2908, %v2910
  %v2928 = vsel %vm282, %v2910, %v2912
  %2945 = vrot.lane.b32.xlu0 %v2676, 104
  %v2946 = vpop.permute.xlu0 %2945
  %2947 = vrot.lane.b32.xlu0 %v2644, 104
  %v2948 = vpop.permute.xlu0 %2947
  %2949 = vrot.lane.b32.xlu0 %v2645, 104
  %v2950 = vpop.permute.xlu0 %2949
  %2951 = vrot.lane.b32.xlu0 %v2646, 104
  %v2952 = vpop.permute.xlu0 %2951
  %2953 = vrot.lane.b32.xlu0 %v2647, 104
  %v2954 = vpop.permute.xlu0 %2953
  %2955 = vrot.lane.b32.xlu0 %v2648, 104
  %v2956 = vpop.permute.xlu0 %2955
  %2957 = vrot.lane.b32.xlu0 %v2649, 104
  %v2958 = vpop.permute.xlu0 %2957
  %2959 = vrot.lane.b32.xlu0 %v2650, 104
  %v2960 = vpop.permute.xlu0 %2959
  %2961 = vrot.lane.b32.xlu0 %v2679, 104
  %v2962 = vpop.permute.xlu0 %2961
  %2963 = vrot.lane.b32.xlu0 %v2677, 104
  %v2964 = vpop.permute.xlu0 %2963
  %2965 = vrot.lane.b32.xlu0 %v2651, 104
  %v2966 = vpop.permute.xlu0 %2965
  %2967 = vrot.lane.b32.xlu0 %v2652, 104
  %v2968 = vpop.permute.xlu0 %2967
  %2969 = vrot.lane.b32.xlu0 %v2653, 104
  %v2970 = vpop.permute.xlu0 %2969
  %2971 = vrot.lane.b32.xlu0 %v2654, 104
  %v2972 = vpop.permute.xlu0 %2971
  %2973 = vrot.lane.b32.xlu0 %v2655, 104
  %v2974 = vpop.permute.xlu0 %2973
  %2975 = vrot.lane.b32.xlu0 %v2656, 104
  %v2976 = vpop.permute.xlu0 %2975
  %2977 = vrot.lane.b32.xlu0 %v2657, 104
  %v2978 = vpop.permute.xlu0 %2977
  %2979 = vrot.lane.b32.xlu0 %v2680, 104
  %v2980 = vpop.permute.xlu0 %2979
  %v2981 = vsel %vm314, %v2946, %v2948
  %v2982 = vsel %vm314, %v2948, %v2950
  %v2983 = vsel %vm314, %v2950, %v2952
  %v2984 = vsel %vm314, %v2952, %v2954
  %v2985 = vsel %vm314, %v2954, %v2956
  %v2986 = vsel %vm314, %v2956, %v2958
  %v2987 = vsel %vm314, %v2958, %v2960
  %v2988 = vsel %vm314, %v2960, %v2962
  %v2989 = vsel %vm314, %v2964, %v2966
  %v2990 = vsel %vm314, %v2966, %v2968
  %v2991 = vsel %vm314, %v2968, %v2970
  %v2992 = vsel %vm314, %v2970, %v2972
  %v2993 = vsel %vm314, %v2972, %v2974
  %v2994 = vsel %vm314, %v2974, %v2976
  %v2995 = vsel %vm314, %v2976, %v2978
  %v2996 = vsel %vm314, %v2978, %v2980
  %3013 = vrot.lane.b32.xlu0 %v2676, 84
  %v3014 = vpop.permute.xlu0 %3013
  %3015 = vrot.lane.b32.xlu0 %v2644, 84
  %v3016 = vpop.permute.xlu0 %3015
  %3017 = vrot.lane.b32.xlu0 %v2645, 84
  %v3018 = vpop.permute.xlu0 %3017
  %3019 = vrot.lane.b32.xlu0 %v2646, 84
  %v3020 = vpop.permute.xlu0 %3019
  %3021 = vrot.lane.b32.xlu0 %v2647, 84
  %v3022 = vpop.permute.xlu0 %3021
  %3023 = vrot.lane.b32.xlu0 %v2648, 84
  %v3024 = vpop.permute.xlu0 %3023
  %3025 = vrot.lane.b32.xlu0 %v2649, 84
  %v3026 = vpop.permute.xlu0 %3025
  %3027 = vrot.lane.b32.xlu0 %v2650, 84
  %v3028 = vpop.permute.xlu0 %3027
  %3029 = vrot.lane.b32.xlu0 %v2679, 84
  %v3030 = vpop.permute.xlu0 %3029
  %3031 = vrot.lane.b32.xlu0 %v2677, 84
  %v3032 = vpop.permute.xlu0 %3031
  %3033 = vrot.lane.b32.xlu0 %v2651, 84
  %v3034 = vpop.permute.xlu0 %3033
  %3035 = vrot.lane.b32.xlu0 %v2652, 84
  %v3036 = vpop.permute.xlu0 %3035
  %3037 = vrot.lane.b32.xlu0 %v2653, 84
  %v3038 = vpop.permute.xlu0 %3037
  %3039 = vrot.lane.b32.xlu0 %v2654, 84
  %v3040 = vpop.permute.xlu0 %3039
  %3041 = vrot.lane.b32.xlu0 %v2655, 84
  %v3042 = vpop.permute.xlu0 %3041
  %3043 = vrot.lane.b32.xlu0 %v2656, 84
  %v3044 = vpop.permute.xlu0 %3043
  %3045 = vrot.lane.b32.xlu0 %v2657, 84
  %v3046 = vpop.permute.xlu0 %3045
  %3047 = vrot.lane.b32.xlu0 %v2680, 84
  %v3048 = vpop.permute.xlu0 %3047
  %v3049 = vsel %vm474, %v3014, %v3016
  %v3050 = vsel %vm474, %v3016, %v3018
  %v3051 = vsel %vm474, %v3018, %v3020
  %v3052 = vsel %vm474, %v3020, %v3022
  %v3053 = vsel %vm474, %v3022, %v3024
  %v3054 = vsel %vm474, %v3024, %v3026
  %v3055 = vsel %vm474, %v3026, %v3028
  %v3056 = vsel %vm474, %v3028, %v3030
  %v3057 = vsel %vm474, %v3032, %v3034
  %v3058 = vsel %vm474, %v3034, %v3036
  %v3059 = vsel %vm474, %v3036, %v3038
  %v3060 = vsel %vm474, %v3038, %v3040
  %v3061 = vsel %vm474, %v3040, %v3042
  %v3062 = vsel %vm474, %v3042, %v3044
  %v3063 = vsel %vm474, %v3044, %v3046
  %v3064 = vsel %vm474, %v3046, %v3048
  %3081 = vrot.lane.b32.xlu0 %v2676, 83
  %v3082 = vpop.permute.xlu0 %3081
  %3083 = vrot.lane.b32.xlu0 %v2644, 83
  %v3084 = vpop.permute.xlu0 %3083
  %3085 = vrot.lane.b32.xlu0 %v2645, 83
  %v3086 = vpop.permute.xlu0 %3085
  %3087 = vrot.lane.b32.xlu0 %v2646, 83
  %v3088 = vpop.permute.xlu0 %3087
  %3089 = vrot.lane.b32.xlu0 %v2647, 83
  %v3090 = vpop.permute.xlu0 %3089
  %3091 = vrot.lane.b32.xlu0 %v2648, 83
  %v3092 = vpop.permute.xlu0 %3091
  %3093 = vrot.lane.b32.xlu0 %v2649, 83
  %v3094 = vpop.permute.xlu0 %3093
  %3095 = vrot.lane.b32.xlu0 %v2650, 83
  %v3096 = vpop.permute.xlu0 %3095
  %3097 = vrot.lane.b32.xlu0 %v2679, 83
  %v3098 = vpop.permute.xlu0 %3097
  %3099 = vrot.lane.b32.xlu0 %v2677, 83
  %v3100 = vpop.permute.xlu0 %3099
  %3101 = vrot.lane.b32.xlu0 %v2651, 83
  %v3102 = vpop.permute.xlu0 %3101
  %3103 = vrot.lane.b32.xlu0 %v2652, 83
  %v3104 = vpop.permute.xlu0 %3103
  %3105 = vrot.lane.b32.xlu0 %v2653, 83
  %v3106 = vpop.permute.xlu0 %3105
  %3107 = vrot.lane.b32.xlu0 %v2654, 83
  %v3108 = vpop.permute.xlu0 %3107
  %3109 = vrot.lane.b32.xlu0 %v2655, 83
  %v3110 = vpop.permute.xlu0 %3109
  %3111 = vrot.lane.b32.xlu0 %v2656, 83
  %v3112 = vpop.permute.xlu0 %3111
  %3113 = vrot.lane.b32.xlu0 %v2657, 83
  %v3114 = vpop.permute.xlu0 %3113
  %3115 = vrot.lane.b32.xlu0 %v2680, 83
  %v3116 = vpop.permute.xlu0 %3115
  %v3117 = vsel %vm506, %v3082, %v3084
  %v3118 = vsel %vm506, %v3084, %v3086
  %v3119 = vsel %vm506, %v3086, %v3088
  %v3120 = vsel %vm506, %v3088, %v3090
  %v3121 = vsel %vm506, %v3090, %v3092
  %v3122 = vsel %vm506, %v3092, %v3094
  %v3123 = vsel %vm506, %v3094, %v3096
  %v3124 = vsel %vm506, %v3096, %v3098
  %v3125 = vsel %vm506, %v3100, %v3102
  %v3126 = vsel %vm506, %v3102, %v3104
  %v3127 = vsel %vm506, %v3104, %v3106
  %v3128 = vsel %vm506, %v3106, %v3108
  %v3129 = vsel %vm506, %v3108, %v3110
  %v3130 = vsel %vm506, %v3110, %v3112
  %v3131 = vsel %vm506, %v3112, %v3114
  %v3132 = vsel %vm506, %v3114, %v3116
  %3149 = vrot.lane.b32.xlu0 %v2676, 82
  %v3150 = vpop.permute.xlu0 %3149
  %3151 = vrot.lane.b32.xlu0 %v2644, 82
  %v3152 = vpop.permute.xlu0 %3151
  %3153 = vrot.lane.b32.xlu0 %v2645, 82
  %v3154 = vpop.permute.xlu0 %3153
  %3155 = vrot.lane.b32.xlu0 %v2646, 82
  %v3156 = vpop.permute.xlu0 %3155
  %3157 = vrot.lane.b32.xlu0 %v2647, 82
  %v3158 = vpop.permute.xlu0 %3157
  %3159 = vrot.lane.b32.xlu0 %v2648, 82
  %v3160 = vpop.permute.xlu0 %3159
  %3161 = vrot.lane.b32.xlu0 %v2649, 82
  %v3162 = vpop.permute.xlu0 %3161
  %3163 = vrot.lane.b32.xlu0 %v2650, 82
  %v3164 = vpop.permute.xlu0 %3163
  %3165 = vrot.lane.b32.xlu0 %v2679, 82
  %v3166 = vpop.permute.xlu0 %3165
  %3167 = vrot.lane.b32.xlu0 %v2677, 82
  %v3168 = vpop.permute.xlu0 %3167
  %3169 = vrot.lane.b32.xlu0 %v2651, 82
  %v3170 = vpop.permute.xlu0 %3169
  %3171 = vrot.lane.b32.xlu0 %v2652, 82
  %v3172 = vpop.permute.xlu0 %3171
  %3173 = vrot.lane.b32.xlu0 %v2653, 82
  %v3174 = vpop.permute.xlu0 %3173
  %3175 = vrot.lane.b32.xlu0 %v2654, 82
  %v3176 = vpop.permute.xlu0 %3175
  %3177 = vrot.lane.b32.xlu0 %v2655, 82
  %v3178 = vpop.permute.xlu0 %3177
  %3179 = vrot.lane.b32.xlu0 %v2656, 82
  %v3180 = vpop.permute.xlu0 %3179
  %3181 = vrot.lane.b32.xlu0 %v2657, 82
  %v3182 = vpop.permute.xlu0 %3181
  %3183 = vrot.lane.b32.xlu0 %v2680, 82
  %v3184 = vpop.permute.xlu0 %3183
  %v3185 = vsel %vm1016, %v3150, %v3152
  %v3186 = vsel %vm1016, %v3152, %v3154
  %v3187 = vsel %vm1016, %v3154, %v3156
  %v3188 = vsel %vm1016, %v3156, %v3158
  %v3189 = vsel %vm1016, %v3158, %v3160
  %v3190 = vsel %vm1016, %v3160, %v3162
  %v3191 = vsel %vm1016, %v3162, %v3164
  %v3192 = vsel %vm1016, %v3164, %v3166
  %v3193 = vsel %vm1016, %v3168, %v3170
  %v3194 = vsel %vm1016, %v3170, %v3172
  %v3195 = vsel %vm1016, %v3172, %v3174
  %v3196 = vsel %vm1016, %v3174, %v3176
  %v3197 = vsel %vm1016, %v3176, %v3178
  %v3198 = vsel %vm1016, %v3178, %v3180
  %v3199 = vsel %vm1016, %v3180, %v3182
  %v3200 = vsel %vm1016, %v3182, %v3184
  %v3217 = vpack.c.bf16 %v2677, %v2676
  %v3218 = vpack.c.bf16 %v2651, %v2644
  %v3219 = vpack.c.bf16 %v2652, %v2645
  %v3220 = vpack.c.bf16 %v2653, %v2646
  %v3221 = vpack.c.bf16 %v2654, %v2647
  %v3222 = vpack.c.bf16 %v2655, %v2648
  %v3223 = vpack.c.bf16 %v2656, %v2649
  %v3224 = vpack.c.bf16 %v2657, %v2650
  %v3225 = vpack.c.bf16 %v2722, %v2715
  %v3226 = vpack.c.bf16 %v2723, %v2716
  %v3227 = vpack.c.bf16 %v2724, %v2717
  %v3228 = vpack.c.bf16 %v2725, %v2718
  %v3229 = vpack.c.bf16 %v2726, %v2719
  %v3230 = vpack.c.bf16 %v2727, %v2720
  %v3231 = vpack.c.bf16 %v2728, %v2721
  %v3232 = vpack.c.bf16 %v2714, %v2698
  %v3233 = vpack.c.bf16 %v2784, %v2777
  %v3234 = vpack.c.bf16 %v2785, %v2778
  %v3235 = vpack.c.bf16 %v2786, %v2779
  %v3236 = vpack.c.bf16 %v2787, %v2780
  %v3237 = vpack.c.bf16 %v2788, %v2781
  %v3238 = vpack.c.bf16 %v2789, %v2782
  %v3239 = vpack.c.bf16 %v2790, %v2783
  %v3240 = vpack.c.bf16 %v2776, %v2760
  %v3241 = vpack.c.bf16 %v2853, %v2845
  %v3242 = vpack.c.bf16 %v2854, %v2846
  %v3243 = vpack.c.bf16 %v2855, %v2847
  %v3244 = vpack.c.bf16 %v2856, %v2848
  %v3245 = vpack.c.bf16 %v2857, %v2849
  %v3246 = vpack.c.bf16 %v2858, %v2850
  %v3247 = vpack.c.bf16 %v2859, %v2851
  %v3248 = vpack.c.bf16 %v2860, %v2852
  %v3249 = vpack.c.bf16 %v2921, %v2913
  %v3250 = vpack.c.bf16 %v2922, %v2914
  %v3251 = vpack.c.bf16 %v2923, %v2915
  %v3252 = vpack.c.bf16 %v2924, %v2916
  %v3253 = vpack.c.bf16 %v2925, %v2917
  %v3254 = vpack.c.bf16 %v2926, %v2918
  %v3255 = vpack.c.bf16 %v2927, %v2919
  %v3256 = vpack.c.bf16 %v2928, %v2920
  %v3257 = vpack.c.bf16 %v2989, %v2981
  %v3258 = vpack.c.bf16 %v2990, %v2982
  %v3259 = vpack.c.bf16 %v2991, %v2983
  %v3260 = vpack.c.bf16 %v2992, %v2984
  %v3261 = vpack.c.bf16 %v2993, %v2985
  %v3262 = vpack.c.bf16 %v2994, %v2986
  %v3263 = vpack.c.bf16 %v2995, %v2987
  %v3264 = vpack.c.bf16 %v2996, %v2988
  %v3265 = vpack.c.bf16 %v3057, %v3049
  %v3266 = vpack.c.bf16 %v3058, %v3050
  %v3267 = vpack.c.bf16 %v3059, %v3051
  %v3268 = vpack.c.bf16 %v3060, %v3052
  %v3269 = vpack.c.bf16 %v3061, %v3053
  %v3270 = vpack.c.bf16 %v3062, %v3054
  %v3271 = vpack.c.bf16 %v3063, %v3055
  %v3272 = vpack.c.bf16 %v3064, %v3056
  %v3273 = vpack.c.bf16 %v3125, %v3117
  %v3274 = vpack.c.bf16 %v3126, %v3118
  %v3275 = vpack.c.bf16 %v3127, %v3119
  %v3276 = vpack.c.bf16 %v3128, %v3120
  %v3277 = vpack.c.bf16 %v3129, %v3121
  %v3278 = vpack.c.bf16 %v3130, %v3122
  %v3279 = vpack.c.bf16 %v3131, %v3123
  %v3280 = vpack.c.bf16 %v3132, %v3124
  %v3281 = vpack.c.bf16 %v3193, %v3185
  %v3282 = vpack.c.bf16 %v3194, %v3186
  %v3283 = vpack.c.bf16 %v3195, %v3187
  %v3284 = vpack.c.bf16 %v3196, %v3188
  %v3285 = vpack.c.bf16 %v3197, %v3189
  %v3286 = vpack.c.bf16 %v3198, %v3190
  %v3287 = vpack.c.bf16 %v3199, %v3191
  %v3288 = vpack.c.bf16 %v3200, %v3192
  %v3289 = vld [vmem:[%s3] sm:$0xff]
  %v3290 = vld [vmem:[%s3 + $0x8] sm:$0xff]
  %v3291 = vld [vmem:[%s3 + $0x10] sm:$0xff]
  %v3292 = vld [vmem:[%s3 + $0x18] sm:$0xff]
  %v3293 = vld [vmem:[%s4] sm:$0xff]
  %v3294 = vld [vmem:[%s4 + $0x8] sm:$0xff]
  %v3295 = vld [vmem:[%s4 + $0x10] sm:$0xff]
  %v3296 = vld [vmem:[%s4 + $0x18] sm:$0xff]
  %3298 = vset.pattern.permute.xlu0 0
  %3299 = vperm.xlu0 %3298, %v3293
  %v3300 = vpop.permute.xlu0 %3299
  %3303 = vset.pattern.permute.xlu0 0
  %3304 = vperm.xlu0 %3303, %v3294
  %v3305 = vpop.permute.xlu0 %3304
  %3308 = vset.pattern.permute.xlu0 0
  %3309 = vperm.xlu0 %3308, %v3295
  %v3310 = vpop.permute.xlu0 %3309
  %3313 = vset.pattern.permute.xlu0 0
  %3314 = vperm.xlu0 %3313, %v3296
  %v3315 = vpop.permute.xlu0 %3314
  %v3321 = vunpack.c.l.b16 %v3289
  %v3322 = vunpack.c.h.b16 %v3289
  %v3323 = vunpack.c.l.b16 %v3290
  %v3324 = vunpack.c.h.b16 %v3290
  %v3325 = vunpack.c.l.b16 %v3291
  %v3326 = vunpack.c.h.b16 %v3291
  %v3327 = vunpack.c.l.b16 %v3292
  %v3328 = vunpack.c.h.b16 %v3292
  %v3329 = vpack.c.b16 %v3323, %v3321
  %v3330 = vpack.c.b16 %v3324, %v3322
  %v3331 = vpack.c.b16 %v3327, %v3325
  %v3332 = vpack.c.b16 %v3328, %v3326
  %3407 = vrot.lane.b32.xlu0 %v3217, 82
  %v3408 = vpop.permute.xlu0 %3407
  %3409 = vrot.lane.b32.xlu0 %v3218, 82
  %v3410 = vpop.permute.xlu0 %3409
  %3411 = vrot.lane.b32.xlu0 %v3219, 82
  %v3412 = vpop.permute.xlu0 %3411
  %3413 = vrot.lane.b32.xlu0 %v3220, 82
  %v3414 = vpop.permute.xlu0 %3413
  %3415 = vrot.lane.b32.xlu0 %v3221, 82
  %v3416 = vpop.permute.xlu0 %3415
  %3417 = vrot.lane.b32.xlu0 %v3222, 82
  %v3418 = vpop.permute.xlu0 %3417
  %3419 = vrot.lane.b32.xlu0 %v3223, 82
  %v3420 = vpop.permute.xlu0 %3419
  %3421 = vrot.lane.b32.xlu0 %v3224, 82
  %v3422 = vpop.permute.xlu0 %3421
  %3423 = vrot.lane.b32.xlu0 %v3225, 82
  %v3424 = vpop.permute.xlu0 %3423
  %3425 = vrot.lane.b32.xlu0 %v3226, 82
  %v3426 = vpop.permute.xlu0 %3425
  %3427 = vrot.lane.b32.xlu0 %v3227, 82
  %v3428 = vpop.permute.xlu0 %3427
  %3429 = vrot.lane.b32.xlu0 %v3228, 82
  %v3430 = vpop.permute.xlu0 %3429
  %3431 = vrot.lane.b32.xlu0 %v3229, 82
  %v3432 = vpop.permute.xlu0 %3431
  %3433 = vrot.lane.b32.xlu0 %v3230, 82
  %v3434 = vpop.permute.xlu0 %3433
  %3435 = vrot.lane.b32.xlu0 %v3231, 82
  %v3436 = vpop.permute.xlu0 %3435
  %3437 = vrot.lane.b32.xlu0 %v3232, 82
  %v3438 = vpop.permute.xlu0 %3437
  %3439 = vrot.lane.b32.xlu0 %v3233, 82
  %v3440 = vpop.permute.xlu0 %3439
  %3441 = vrot.lane.b32.xlu0 %v3234, 82
  %v3442 = vpop.permute.xlu0 %3441
  %3443 = vrot.lane.b32.xlu0 %v3235, 82
  %v3444 = vpop.permute.xlu0 %3443
  %3445 = vrot.lane.b32.xlu0 %v3236, 82
  %v3446 = vpop.permute.xlu0 %3445
  %3447 = vrot.lane.b32.xlu0 %v3237, 82
  %v3448 = vpop.permute.xlu0 %3447
  %3449 = vrot.lane.b32.xlu0 %v3238, 82
  %v3450 = vpop.permute.xlu0 %3449
  %3451 = vrot.lane.b32.xlu0 %v3239, 82
  %v3452 = vpop.permute.xlu0 %3451
  %3453 = vrot.lane.b32.xlu0 %v3240, 82
  %v3454 = vpop.permute.xlu0 %3453
  %3455 = vrot.lane.b32.xlu0 %v3241, 82
  %v3456 = vpop.permute.xlu0 %3455
  %3457 = vrot.lane.b32.xlu0 %v3242, 82
  %v3458 = vpop.permute.xlu0 %3457
  %3459 = vrot.lane.b32.xlu0 %v3243, 82
  %v3460 = vpop.permute.xlu0 %3459
  %3461 = vrot.lane.b32.xlu0 %v3244, 82
  %v3462 = vpop.permute.xlu0 %3461
  %3463 = vrot.lane.b32.xlu0 %v3245, 82
  %v3464 = vpop.permute.xlu0 %3463
  %3465 = vrot.lane.b32.xlu0 %v3246, 82
  %v3466 = vpop.permute.xlu0 %3465
  %3467 = vrot.lane.b32.xlu0 %v3247, 82
  %v3468 = vpop.permute.xlu0 %3467
  %3469 = vrot.lane.b32.xlu0 %v3248, 82
  %v3470 = vpop.permute.xlu0 %3469
  %3471 = vrot.lane.b32.xlu0 %v3249, 82
  %v3472 = vpop.permute.xlu0 %3471
  %3473 = vrot.lane.b32.xlu0 %v3250, 82
  %v3474 = vpop.permute.xlu0 %3473
  %3475 = vrot.lane.b32.xlu0 %v3251, 82
  %v3476 = vpop.permute.xlu0 %3475
  %3477 = vrot.lane.b32.xlu0 %v3252, 82
  %v3478 = vpop.permute.xlu0 %3477
  %3479 = vrot.lane.b32.xlu0 %v3253, 82
  %v3480 = vpop.permute.xlu0 %3479
  %3481 = vrot.lane.b32.xlu0 %v3254, 82
  %v3482 = vpop.permute.xlu0 %3481
  %3483 = vrot.lane.b32.xlu0 %v3255, 82
  %v3484 = vpop.permute.xlu0 %3483
  %3485 = vrot.lane.b32.xlu0 %v3256, 82
  %v3486 = vpop.permute.xlu0 %3485
  %3487 = vrot.lane.b32.xlu0 %v3257, 82
  %v3488 = vpop.permute.xlu0 %3487
  %3489 = vrot.lane.b32.xlu0 %v3258, 82
  %v3490 = vpop.permute.xlu0 %3489
  %3491 = vrot.lane.b32.xlu0 %v3259, 82
  %v3492 = vpop.permute.xlu0 %3491
  %3493 = vrot.lane.b32.xlu0 %v3260, 82
  %v3494 = vpop.permute.xlu0 %3493
  %3495 = vrot.lane.b32.xlu0 %v3261, 82
  %v3496 = vpop.permute.xlu0 %3495
  %3497 = vrot.lane.b32.xlu0 %v3262, 82
  %v3498 = vpop.permute.xlu0 %3497
  %3499 = vrot.lane.b32.xlu0 %v3263, 82
  %v3500 = vpop.permute.xlu0 %3499
  %3501 = vrot.lane.b32.xlu0 %v3264, 82
  %v3502 = vpop.permute.xlu0 %3501
  %3503 = vrot.lane.b32.xlu0 %v3265, 82
  %v3504 = vpop.permute.xlu0 %3503
  %3505 = vrot.lane.b32.xlu0 %v3266, 82
  %v3506 = vpop.permute.xlu0 %3505
  %3507 = vrot.lane.b32.xlu0 %v3267, 82
  %v3508 = vpop.permute.xlu0 %3507
  %3509 = vrot.lane.b32.xlu0 %v3268, 82
  %v3510 = vpop.permute.xlu0 %3509
  %3511 = vrot.lane.b32.xlu0 %v3269, 82
  %v3512 = vpop.permute.xlu0 %3511
  %3513 = vrot.lane.b32.xlu0 %v3270, 82
  %v3514 = vpop.permute.xlu0 %3513
  %3515 = vrot.lane.b32.xlu0 %v3271, 82
  %v3516 = vpop.permute.xlu0 %3515
  %3517 = vrot.lane.b32.xlu0 %v3272, 82
  %v3518 = vpop.permute.xlu0 %3517
  %3519 = vrot.lane.b32.xlu0 %v3273, 82
  %v3520 = vpop.permute.xlu0 %3519
  %3521 = vrot.lane.b32.xlu0 %v3274, 82
  %v3522 = vpop.permute.xlu0 %3521
  %3523 = vrot.lane.b32.xlu0 %v3275, 82
  %v3524 = vpop.permute.xlu0 %3523
  %3525 = vrot.lane.b32.xlu0 %v3276, 82
  %v3526 = vpop.permute.xlu0 %3525
  %3527 = vrot.lane.b32.xlu0 %v3277, 82
  %v3528 = vpop.permute.xlu0 %3527
  %3529 = vrot.lane.b32.xlu0 %v3278, 82
  %v3530 = vpop.permute.xlu0 %3529
  %3531 = vrot.lane.b32.xlu0 %v3279, 82
  %v3532 = vpop.permute.xlu0 %3531
  %3533 = vrot.lane.b32.xlu0 %v3280, 82
  %v3534 = vpop.permute.xlu0 %3533
  %3535 = vrot.lane.b32.xlu0 %v3281, 82
  %v3536 = vpop.permute.xlu0 %3535
  %3537 = vrot.lane.b32.xlu0 %v3282, 82
  %v3538 = vpop.permute.xlu0 %3537
  %3539 = vrot.lane.b32.xlu0 %v3283, 82
  %v3540 = vpop.permute.xlu0 %3539
  %3541 = vrot.lane.b32.xlu0 %v3284, 82
  %v3542 = vpop.permute.xlu0 %3541
  %3543 = vrot.lane.b32.xlu0 %v3285, 82
  %v3544 = vpop.permute.xlu0 %3543
  %3545 = vrot.lane.b32.xlu0 %v3286, 82
  %v3546 = vpop.permute.xlu0 %3545
  %3547 = vrot.lane.b32.xlu0 %v3287, 82
  %v3548 = vpop.permute.xlu0 %3547
  %3549 = vrot.lane.b32.xlu0 %v3288, 82
  %v3550 = vpop.permute.xlu0 %3549
  %vm3551 = vcmask 670720
  %v3552 = vsel %vm3551, %v3408, %v3410
  %v3553 = vsel %vm3551, %v3410, %v3412
  %v3554 = vsel %vm3551, %v3412, %v3414
  %v3555 = vsel %vm3551, %v3414, %v3416
  %v3556 = vsel %vm3551, %v3416, %v3418
  %v3557 = vsel %vm3551, %v3418, %v3420
  %v3558 = vsel %vm3551, %v3420, %v3422
  %v3559 = vsel %vm3551, %v3424, %v3426
  %v3560 = vsel %vm3551, %v3426, %v3428
  %v3561 = vsel %vm3551, %v3428, %v3430
  %v3562 = vsel %vm3551, %v3430, %v3432
  %v3563 = vsel %vm3551, %v3432, %v3434
  %v3564 = vsel %vm3551, %v3434, %v3436
  %v3565 = vsel %vm3551, %v3436, %v3438
  %v3566 = vsel %vm3551, %v3440, %v3442
  %v3567 = vsel %vm3551, %v3442, %v3444
  %v3568 = vsel %vm3551, %v3444, %v3446
  %v3569 = vsel %vm3551, %v3446, %v3448
  %v3570 = vsel %vm3551, %v3448, %v3450
  %v3571 = vsel %vm3551, %v3450, %v3452
  %v3572 = vsel %vm3551, %v3452, %v3454
  %v3573 = vsel %vm3551, %v3456, %v3458
  %v3574 = vsel %vm3551, %v3458, %v3460
  %v3575 = vsel %vm3551, %v3460, %v3462
  %v3576 = vsel %vm3551, %v3462, %v3464
  %v3577 = vsel %vm3551, %v3464, %v3466
  %v3578 = vsel %vm3551, %v3466, %v3468
  %v3579 = vsel %vm3551, %v3468, %v3470
  %v3580 = vsel %vm3551, %v3472, %v3474
  %v3581 = vsel %vm3551, %v3474, %v3476
  %v3582 = vsel %vm3551, %v3476, %v3478
  %v3583 = vsel %vm3551, %v3478, %v3480
  %v3584 = vsel %vm3551, %v3480, %v3482
  %v3585 = vsel %vm3551, %v3482, %v3484
  %v3586 = vsel %vm3551, %v3484, %v3486
  %v3587 = vsel %vm3551, %v3488, %v3490
  %v3588 = vsel %vm3551, %v3490, %v3492
  %v3589 = vsel %vm3551, %v3492, %v3494
  %v3590 = vsel %vm3551, %v3494, %v3496
  %v3591 = vsel %vm3551, %v3496, %v3498
  %v3592 = vsel %vm3551, %v3498, %v3500
  %v3593 = vsel %vm3551, %v3500, %v3502
  %v3594 = vsel %vm3551, %v3504, %v3506
  %v3595 = vsel %vm3551, %v3506, %v3508
  %v3596 = vsel %vm3551, %v3508, %v3510
  %v3597 = vsel %vm3551, %v3510, %v3512
  %v3598 = vsel %vm3551, %v3512, %v3514
  %v3599 = vsel %vm3551, %v3514, %v3516
  %v3600 = vsel %vm3551, %v3516, %v3518
  %v3601 = vsel %vm3551, %v3520, %v3522
  %v3602 = vsel %vm3551, %v3522, %v3524
  %v3603 = vsel %vm3551, %v3524, %v3526
  %v3604 = vsel %vm3551, %v3526, %v3528
  %v3605 = vsel %vm3551, %v3528, %v3530
  %v3606 = vsel %vm3551, %v3530, %v3532
  %v3607 = vsel %vm3551, %v3532, %v3534
  %v3608 = vsel %vm3551, %v3536, %v3538
  %v3609 = vsel %vm3551, %v3538, %v3540
  %v3610 = vsel %vm3551, %v3540, %v3542
  %v3611 = vsel %vm3551, %v3542, %v3544
  %v3612 = vsel %vm3551, %v3544, %v3546
  %v3613 = vsel %vm3551, %v3546, %v3548
  %v3614 = vsel %vm3551, %v3548, %v3550
  %vm3687 = vcmask 130048
  %v3689 = vsel %vm3687, %v3330, 0
  %v3692 = vsel %vm3687, %v3332, 0
  %3694 = vmatpush.bf16.msra.mxu0 %v3601
  %3695 = vmatpush.bf16.msra.mxu0 %v3594
  %3696 = vmatpush.bf16.msra.mxu0 %v3587
  %3697 = vmatpush.bf16.msra.mxu0 %v3580
  %3698 = vmatpush.bf16.msra.mxu0 %v3573
  %3699 = vmatpush.bf16.msra.mxu0 %v3566
  %3700 = vmatpush.bf16.msra.mxu0 %v3559
  %3701 = vmatpush.bf16.msra.mxu0 %v3552
  %3702 = vmatmul.bf16.gmra.mxu0 %v3329
  %v3703 = vpop.f32.mrf.mxu0
  %v3704 = vadd.f32 %v3300, %v3703
  %v3705 = vpop.f32.mrf.mxu0
  %v3706 = vadd.f32 %v3305, %v3705
  %3707 = vmatmul.bf16.gmra.mxu0 %v3331
  %v3708 = vpop.f32.mrf.mxu0
  %v3709 = vadd.f32 %v3310, %v3708
  %v3710 = vpop.f32.mrf.mxu0
  %v3711 = vadd.f32 %v3315, %v3710
  %3712 = vdwg.mxu0
  %3713 = vmatpush.bf16.msra.mxu0 0
  %3714 = vmatpush.bf16.msra.mxu0 0
  %3715 = vmatpush.bf16.msra.mxu0 0
  %3716 = vmatpush.bf16.msra.mxu0 0
  %3717 = vmatpush.bf16.msra.mxu0 0
  %3718 = vmatpush.bf16.msra.mxu0 0
  %3719 = vmatpush.bf16.msra.mxu0 0
  %3720 = vmatpush.bf16.msra.mxu0 %v3608
  %3721 = vmatmul.bf16.gmra.mxu0 %v3689
  %v3722 = vpop.f32.mrf.mxu0
  %v3723 = vadd.f32 %v3704, %v3722
  %v3724 = vpop.f32.mrf.mxu0
  %v3725 = vadd.f32 %v3706, %v3724
  %3726 = vmatmul.bf16.gmra.mxu0 %v3692
  %v3727 = vpop.f32.mrf.mxu0
  %v3728 = vadd.f32 %v3709, %v3727
  %v3729 = vpop.f32.mrf.mxu0
  %v3730 = vadd.f32 %v3711, %v3729
  %3731 = vdwg.mxu0
  %3732 = vmatpush.bf16.msra.mxu0 %v3602
  %3733 = vmatpush.bf16.msra.mxu0 %v3595
  %3734 = vmatpush.bf16.msra.mxu0 %v3588
  %3735 = vmatpush.bf16.msra.mxu0 %v3581
  %3736 = vmatpush.bf16.msra.mxu0 %v3574
  %3737 = vmatpush.bf16.msra.mxu0 %v3567
  %3738 = vmatpush.bf16.msra.mxu0 %v3560
  %3739 = vmatpush.bf16.msra.mxu0 %v3553
  %3740 = vmatmul.bf16.gmra.mxu0 %v3329
  %v3741 = vpop.f32.mrf.mxu0
  %v3742 = vadd.f32 %v3300, %v3741
  %v3743 = vpop.f32.mrf.mxu0
  %v3744 = vadd.f32 %v3305, %v3743
  %3745 = vmatmul.bf16.gmra.mxu0 %v3331
  %v3746 = vpop.f32.mrf.mxu0
  %v3747 = vadd.f32 %v3310, %v3746
  %v3748 = vpop.f32.mrf.mxu0
  %v3749 = vadd.f32 %v3315, %v3748
  %3750 = vdwg.mxu0
  %3751 = vmatpush.bf16.msra.mxu0 0
  %3752 = vmatpush.bf16.msra.mxu0 0
  %3753 = vmatpush.bf16.msra.mxu0 0
  %3754 = vmatpush.bf16.msra.mxu0 0
  %3755 = vmatpush.bf16.msra.mxu0 0
  %3756 = vmatpush.bf16.msra.mxu0 0
  %3757 = vmatpush.bf16.msra.mxu0 0
  %3758 = vmatpush.bf16.msra.mxu0 %v3609
  %3759 = vmatmul.bf16.gmra.mxu0 %v3689
  %v3760 = vpop.f32.mrf.mxu0
  %v3761 = vadd.f32 %v3742, %v3760
  %v3762 = vpop.f32.mrf.mxu0
  %v3763 = vadd.f32 %v3744, %v3762
  %3764 = vmatmul.bf16.gmra.mxu0 %v3692
  %v3765 = vpop.f32.mrf.mxu0
  %v3766 = vadd.f32 %v3747, %v3765
  %v3767 = vpop.f32.mrf.mxu0
  %v3768 = vadd.f32 %v3749, %v3767
  %3769 = vdwg.mxu0
  %3770 = vmatpush.bf16.msra.mxu0 %v3603
  %3771 = vmatpush.bf16.msra.mxu0 %v3596
  %3772 = vmatpush.bf16.msra.mxu0 %v3589
  %3773 = vmatpush.bf16.msra.mxu0 %v3582
  %3774 = vmatpush.bf16.msra.mxu0 %v3575
  %3775 = vmatpush.bf16.msra.mxu0 %v3568
  %3776 = vmatpush.bf16.msra.mxu0 %v3561
  %3777 = vmatpush.bf16.msra.mxu0 %v3554
  %3778 = vmatmul.bf16.gmra.mxu0 %v3329
  %v3779 = vpop.f32.mrf.mxu0
  %v3780 = vadd.f32 %v3300, %v3779
  %v3781 = vpop.f32.mrf.mxu0
  %v3782 = vadd.f32 %v3305, %v3781
  %3783 = vmatmul.bf16.gmra.mxu0 %v3331
  %v3784 = vpop.f32.mrf.mxu0
  %v3785 = vadd.f32 %v3310, %v3784
  %v3786 = vpop.f32.mrf.mxu0
  %v3787 = vadd.f32 %v3315, %v3786
  %3788 = vdwg.mxu0
  %3789 = vmatpush.bf16.msra.mxu0 0
  %3790 = vmatpush.bf16.msra.mxu0 0
  %3791 = vmatpush.bf16.msra.mxu0 0
  %3792 = vmatpush.bf16.msra.mxu0 0
  %3793 = vmatpush.bf16.msra.mxu0 0
  %3794 = vmatpush.bf16.msra.mxu0 0
  %3795 = vmatpush.bf16.msra.mxu0 0
  %3796 = vmatpush.bf16.msra.mxu0 %v3610
  %3797 = vmatmul.bf16.gmra.mxu0 %v3689
  %v3798 = vpop.f32.mrf.mxu0
  %v3799 = vadd.f32 %v3780, %v3798
  %v3800 = vpop.f32.mrf.mxu0
  %v3801 = vadd.f32 %v3782, %v3800
  %3802 = vmatmul.bf16.gmra.mxu0 %v3692
  %v3803 = vpop.f32.mrf.mxu0
  %v3804 = vadd.f32 %v3785, %v3803
  %v3805 = vpop.f32.mrf.mxu0
  %v3806 = vadd.f32 %v3787, %v3805
  %3807 = vdwg.mxu0
  %3808 = vmatpush.bf16.msra.mxu0 %v3604
  %3809 = vmatpush.bf16.msra.mxu0 %v3597
  %3810 = vmatpush.bf16.msra.mxu0 %v3590
  %3811 = vmatpush.bf16.msra.mxu0 %v3583
  %3812 = vmatpush.bf16.msra.mxu0 %v3576
  %3813 = vmatpush.bf16.msra.mxu0 %v3569
  %3814 = vmatpush.bf16.msra.mxu0 %v3562
  %3815 = vmatpush.bf16.msra.mxu0 %v3555
  %3816 = vmatmul.bf16.gmra.mxu0 %v3329
  %v3817 = vpop.f32.mrf.mxu0
  %v3818 = vadd.f32 %v3300, %v3817
  %v3819 = vpop.f32.mrf.mxu0
  %v3820 = vadd.f32 %v3305, %v3819
  %3821 = vmatmul.bf16.gmra.mxu0 %v3331
  %v3822 = vpop.f32.mrf.mxu0
  %v3823 = vadd.f32 %v3310, %v3822
  %v3824 = vpop.f32.mrf.mxu0
  %v3825 = vadd.f32 %v3315, %v3824
  %3826 = vdwg.mxu0
  %3827 = vmatpush.bf16.msra.mxu0 0
  %3828 = vmatpush.bf16.msra.mxu0 0
  %3829 = vmatpush.bf16.msra.mxu0 0
  %3830 = vmatpush.bf16.msra.mxu0 0
  %3831 = vmatpush.bf16.msra.mxu0 0
  %3832 = vmatpush.bf16.msra.mxu0 0
  %3833 = vmatpush.bf16.msra.mxu0 0
  %3834 = vmatpush.bf16.msra.mxu0 %v3611
  %3835 = vmatmul.bf16.gmra.mxu0 %v3689
  %v3836 = vpop.f32.mrf.mxu0
  %v3837 = vadd.f32 %v3818, %v3836
  %v3838 = vpop.f32.mrf.mxu0
  %v3839 = vadd.f32 %v3820, %v3838
  %3840 = vmatmul.bf16.gmra.mxu0 %v3692
  %v3841 = vpop.f32.mrf.mxu0
  %v3842 = vadd.f32 %v3823, %v3841
  %v3843 = vpop.f32.mrf.mxu0
  %v3844 = vadd.f32 %v3825, %v3843
  %3845 = vdwg.mxu0
  %3846 = vmatpush.bf16.msra.mxu0 %v3605
  %3847 = vmatpush.bf16.msra.mxu0 %v3598
  %3848 = vmatpush.bf16.msra.mxu0 %v3591
  %3849 = vmatpush.bf16.msra.mxu0 %v3584
  %3850 = vmatpush.bf16.msra.mxu0 %v3577
  %3851 = vmatpush.bf16.msra.mxu0 %v3570
  %3852 = vmatpush.bf16.msra.mxu0 %v3563
  %3853 = vmatpush.bf16.msra.mxu0 %v3556
  %3854 = vmatmul.bf16.gmra.mxu0 %v3329
  %v3855 = vpop.f32.mrf.mxu0
  %v3856 = vadd.f32 %v3300, %v3855
  %v3857 = vpop.f32.mrf.mxu0
  %v3858 = vadd.f32 %v3305, %v3857
  %3859 = vmatmul.bf16.gmra.mxu0 %v3331
  %v3860 = vpop.f32.mrf.mxu0
  %v3861 = vadd.f32 %v3310, %v3860
  %v3862 = vpop.f32.mrf.mxu0
  %v3863 = vadd.f32 %v3315, %v3862
  %3864 = vdwg.mxu0
  %3865 = vmatpush.bf16.msra.mxu0 0
  %3866 = vmatpush.bf16.msra.mxu0 0
  %3867 = vmatpush.bf16.msra.mxu0 0
  %3868 = vmatpush.bf16.msra.mxu0 0
  %3869 = vmatpush.bf16.msra.mxu0 0
  %3870 = vmatpush.bf16.msra.mxu0 0
  %3871 = vmatpush.bf16.msra.mxu0 0
  %3872 = vmatpush.bf16.msra.mxu0 %v3612
  %3873 = vmatmul.bf16.gmra.mxu0 %v3689
  %v3874 = vpop.f32.mrf.mxu0
  %v3875 = vadd.f32 %v3856, %v3874
  %v3876 = vpop.f32.mrf.mxu0
  %v3877 = vadd.f32 %v3858, %v3876
  %3878 = vmatmul.bf16.gmra.mxu0 %v3692
  %v3879 = vpop.f32.mrf.mxu0
  %v3880 = vadd.f32 %v3861, %v3879
  %v3881 = vpop.f32.mrf.mxu0
  %v3882 = vadd.f32 %v3863, %v3881
  %3883 = vdwg.mxu0
  %3884 = vmatpush.bf16.msra.mxu0 %v3606
  %3885 = vmatpush.bf16.msra.mxu0 %v3599
  %3886 = vmatpush.bf16.msra.mxu0 %v3592
  %3887 = vmatpush.bf16.msra.mxu0 %v3585
  %3888 = vmatpush.bf16.msra.mxu0 %v3578
  %3889 = vmatpush.bf16.msra.mxu0 %v3571
  %3890 = vmatpush.bf16.msra.mxu0 %v3564
  %3891 = vmatpush.bf16.msra.mxu0 %v3557
  %3892 = vmatmul.bf16.gmra.mxu0 %v3329
  %v3893 = vpop.f32.mrf.mxu0
  %v3894 = vadd.f32 %v3300, %v3893
  %v3895 = vpop.f32.mrf.mxu0
  %v3896 = vadd.f32 %v3305, %v3895
  %3897 = vmatmul.bf16.gmra.mxu0 %v3331
  %v3898 = vpop.f32.mrf.mxu0
  %v3899 = vadd.f32 %v3310, %v3898
  %v3900 = vpop.f32.mrf.mxu0
  %v3901 = vadd.f32 %v3315, %v3900
  %3902 = vdwg.mxu0
  %3903 = vmatpush.bf16.msra.mxu0 0
  %3904 = vmatpush.bf16.msra.mxu0 0
  %3905 = vmatpush.bf16.msra.mxu0 0
  %3906 = vmatpush.bf16.msra.mxu0 0
  %3907 = vmatpush.bf16.msra.mxu0 0
  %3908 = vmatpush.bf16.msra.mxu0 0
  %3909 = vmatpush.bf16.msra.mxu0 0
  %3910 = vmatpush.bf16.msra.mxu0 %v3613
  %3911 = vmatmul.bf16.gmra.mxu0 %v3689
  %v3912 = vpop.f32.mrf.mxu0
  %v3913 = vadd.f32 %v3894, %v3912
  %v3914 = vpop.f32.mrf.mxu0
  %v3915 = vadd.f32 %v3896, %v3914
  %3916 = vmatmul.bf16.gmra.mxu0 %v3692
  %v3917 = vpop.f32.mrf.mxu0
  %v3918 = vadd.f32 %v3899, %v3917
  %v3919 = vpop.f32.mrf.mxu0
  %v3920 = vadd.f32 %v3901, %v3919
  %3921 = vdwg.mxu0
  %3922 = vmatpush.bf16.msra.mxu0 %v3607
  %3923 = vmatpush.bf16.msra.mxu0 %v3600
  %3924 = vmatpush.bf16.msra.mxu0 %v3593
  %3925 = vmatpush.bf16.msra.mxu0 %v3586
  %3926 = vmatpush.bf16.msra.mxu0 %v3579
  %3927 = vmatpush.bf16.msra.mxu0 %v3572
  %3928 = vmatpush.bf16.msra.mxu0 %v3565
  %3929 = vmatpush.bf16.msra.mxu0 %v3558
  %3930 = vmatmul.bf16.gmra.mxu0 %v3329
  %v3931 = vpop.f32.mrf.mxu0
  %v3932 = vadd.f32 %v3300, %v3931
  %v3933 = vpop.f32.mrf.mxu0
  %v3934 = vadd.f32 %v3305, %v3933
  %3935 = vmatmul.bf16.gmra.mxu0 %v3331
  %v3936 = vpop.f32.mrf.mxu0
  %v3937 = vadd.f32 %v3310, %v3936
  %v3938 = vpop.f32.mrf.mxu0
  %v3939 = vadd.f32 %v3315, %v3938
  %3940 = vdwg.mxu0
  %3941 = vmatpush.bf16.msra.mxu0 0
  %3942 = vmatpush.bf16.msra.mxu0 0
  %3943 = vmatpush.bf16.msra.mxu0 0
  %3944 = vmatpush.bf16.msra.mxu0 0
  %3945 = vmatpush.bf16.msra.mxu0 0
  %3946 = vmatpush.bf16.msra.mxu0 0
  %3947 = vmatpush.bf16.msra.mxu0 0
  %3948 = vmatpush.bf16.msra.mxu0 %v3614
  %3949 = vmatmul.bf16.gmra.mxu0 %v3689
  %v3950 = vpop.f32.mrf.mxu0
  %v3951 = vadd.f32 %v3932, %v3950
  %v3952 = vpop.f32.mrf.mxu0
  %v3953 = vadd.f32 %v3934, %v3952
  %3954 = vmatmul.bf16.gmra.mxu0 %v3692
  %v3955 = vpop.f32.mrf.mxu0
  %v3956 = vadd.f32 %v3937, %v3955
  %v3957 = vpop.f32.mrf.mxu0
  %v3958 = vadd.f32 %v3939, %v3957
  %3959 = vdwg.mxu0
  %3960 = vmatpush.bf16.msra.mxu0 %v3534
  %3961 = vmatpush.bf16.msra.mxu0 %v3518
  %3962 = vmatpush.bf16.msra.mxu0 %v3502
  %3963 = vmatpush.bf16.msra.mxu0 %v3486
  %3964 = vmatpush.bf16.msra.mxu0 %v3470
  %3965 = vmatpush.bf16.msra.mxu0 %v3454
  %3966 = vmatpush.bf16.msra.mxu0 %v3438
  %3967 = vmatpush.bf16.msra.mxu0 %v3422
  %3968 = vmatmul.bf16.gmra.mxu0 %v3329
  %v3969 = vpop.f32.mrf.mxu0
  %v3970 = vadd.f32 %v3300, %v3969
  %v3971 = vpop.f32.mrf.mxu0
  %v3972 = vadd.f32 %v3305, %v3971
  %3973 = vmatmul.bf16.gmra.mxu0 %v3331
  %v3974 = vpop.f32.mrf.mxu0
  %v3975 = vadd.f32 %v3310, %v3974
  %v3976 = vpop.f32.mrf.mxu0
  %v3977 = vadd.f32 %v3315, %v3976
  %3978 = vdwg.mxu0
  %3979 = vmatpush.bf16.msra.mxu0 0
  %3980 = vmatpush.bf16.msra.mxu0 0
  %3981 = vmatpush.bf16.msra.mxu0 0
  %3982 = vmatpush.bf16.msra.mxu0 0
  %3983 = vmatpush.bf16.msra.mxu0 0
  %3984 = vmatpush.bf16.msra.mxu0 0
  %3985 = vmatpush.bf16.msra.mxu0 0
  %3986 = vmatpush.bf16.msra.mxu0 %v3550
  %3987 = vmatmul.bf16.gmra.mxu0 %v3689
  %v3988 = vpop.f32.mrf.mxu0
  %v3989 = vadd.f32 %v3970, %v3988
  %v3990 = vpop.f32.mrf.mxu0
  %v3991 = vadd.f32 %v3972, %v3990
  %3992 = vmatmul.bf16.gmra.mxu0 %v3692
  %v3993 = vpop.f32.mrf.mxu0
  %v3994 = vadd.f32 %v3975, %v3993
  %v3995 = vpop.f32.mrf.mxu0
  %v3996 = vadd.f32 %v3977, %v3995
  %3997 = vdwg.mxu0
  %v3998 = vmax.f32 %v3723, 0.0
  %v3999 = vmax.f32 %v3761, 0.0
  %v4000 = vmax.f32 %v3799, 0.0
  %v4001 = vmax.f32 %v3837, 0.0
  %v4002 = vmax.f32 %v3875, 0.0
  %v4003 = vmax.f32 %v3913, 0.0
  %v4004 = vmax.f32 %v3951, 0.0
  %v4005 = vmax.f32 %v3989, 0.0
  %v4006 = vmax.f32 %v3725, 0.0
  %v4007 = vmax.f32 %v3763, 0.0
  %v4008 = vmax.f32 %v3801, 0.0
  %v4009 = vmax.f32 %v3839, 0.0
  %v4010 = vmax.f32 %v3877, 0.0
  %v4011 = vmax.f32 %v3915, 0.0
  %v4012 = vmax.f32 %v3953, 0.0
  %v4013 = vmax.f32 %v3991, 0.0
  %v4014 = vmax.f32 %v3728, 0.0
  %v4015 = vmax.f32 %v3766, 0.0
  %v4016 = vmax.f32 %v3804, 0.0
  %v4017 = vmax.f32 %v3842, 0.0
  %v4018 = vmax.f32 %v3880, 0.0
  %v4019 = vmax.f32 %v3918, 0.0
  %v4020 = vmax.f32 %v3956, 0.0
  %v4021 = vmax.f32 %v3994, 0.0
  %v4022 = vmax.f32 %v3730, 0.0
  %v4023 = vmax.f32 %v3768, 0.0
  %v4024 = vmax.f32 %v3806, 0.0
  %v4025 = vmax.f32 %v3844, 0.0
  %v4026 = vmax.f32 %v3882, 0.0
  %v4027 = vmax.f32 %v3920, 0.0
  %v4028 = vmax.f32 %v3958, 0.0
  %v4029 = vmax.f32 %v3996, 0.0
  %4030 = vst [vmem:[%s6] sm:$0xff] %v3998
  %4031 = vst [vmem:[%s6 + $0x8] sm:$0xff] %v3999
  %4032 = vst [vmem:[%s6 + $0x10] sm:$0xff] %v4000
  %4033 = vst [vmem:[%s6 + $0x18] sm:$0xff] %v4001
  %4034 = vst [vmem:[%s6 + $0x20] sm:$0xff] %v4002
  %4035 = vst [vmem:[%s6 + $0x28] sm:$0xff] %v4003
  %4036 = vst [vmem:[%s6 + $0x30] sm:$0xff] %v4004
  %vm4037 = vcmask 588800
  %4038 = vst.msk [vmem:[%s6 + $0x38] sm:$0xff] %vm4037, %v4005
  %4039 = vst [vmem:[%s6 + $0x40] sm:$0xff] %v4006
  %4040 = vst [vmem:[%s6 + $0x48] sm:$0xff] %v4007
  %4041 = vst [vmem:[%s6 + $0x50] sm:$0xff] %v4008
  %4042 = vst [vmem:[%s6 + $0x58] sm:$0xff] %v4009
  %4043 = vst [vmem:[%s6 + $0x60] sm:$0xff] %v4010
  %4044 = vst [vmem:[%s6 + $0x68] sm:$0xff] %v4011
  %4045 = vst [vmem:[%s6 + $0x70] sm:$0xff] %v4012
  %4046 = vst.msk [vmem:[%s6 + $0x78] sm:$0xff] %vm4037, %v4013
  %4047 = vst [vmem:[%s6 + $0x80] sm:$0xff] %v4014
  %4048 = vst [vmem:[%s6 + $0x88] sm:$0xff] %v4015
  %4049 = vst [vmem:[%s6 + $0x90] sm:$0xff] %v4016
  %4050 = vst [vmem:[%s6 + $0x98] sm:$0xff] %v4017
  %4051 = vst [vmem:[%s6 + $0xa0] sm:$0xff] %v4018
  %4052 = vst [vmem:[%s6 + $0xa8] sm:$0xff] %v4019
  %4053 = vst [vmem:[%s6 + $0xb0] sm:$0xff] %v4020
  %4054 = vst.msk [vmem:[%s6 + $0xb8] sm:$0xff] %vm4037, %v4021
  %4055 = vst [vmem:[%s6 + $0xc0] sm:$0xff] %v4022
  %4056 = vst [vmem:[%s6 + $0xc8] sm:$0xff] %v4023
  %4057 = vst [vmem:[%s6 + $0xd0] sm:$0xff] %v4024
  %4058 = vst [vmem:[%s6 + $0xd8] sm:$0xff] %v4025
  %4059 = vst [vmem:[%s6 + $0xe0] sm:$0xff] %v4026
  %4060 = vst [vmem:[%s6 + $0xe8] sm:$0xff] %v4027
  %4061 = vst [vmem:[%s6 + $0xf0] sm:$0xff] %v4028
  %4062 = vst.msk [vmem:[%s6 + $0xf8] sm:$0xff] %vm4037, %v4029
  // Predicated region
  $region26: #{refine_net_forward.3} parent=0 // pred_check
    _
  $region27: #{refine_net_forward.3} parent=0 // pred_check_branch
    %4064 = sbr.rel (0) target = $region29
  $region28: #{refine_net_forward.3} parent=0 // pred_region
    _
  $region29: #{refine_net_forward.3} parent=0 // pred_fallthru
    _
  // Predicated region
  $region30: #{refine_net_forward.3} parent=0 // pred_check
    _
  $region31: #{refine_net_forward.3} parent=0 // pred_check_branch
    %4066 = sbr.rel (0) target = $region33
  $region32: #{refine_net_forward.3} parent=0 // pred_region
    _
  $region33: #{refine_net_forward.3} parent=0 // pred_fallthru
    _

// kernel: refine_net_forward.4
$region0: #{refine_net_forward.4}
  #allocation0 [shape = 'u32[]', space=smem, size = 0x4, offset = 0x4, fixed_abs, tag = 'smem constant byte address 0x4 - core index']
  #allocation1 [shape = 'u32[72,128]{1,0:T(1,128)}', space=vmem, size = 0x9000, scoped, tag = 'internal scratch']
  %s0 = inlined_call_operand.vmem [shape: f32[32,256], index: 0, kind: input, shape index: {}]
  %s1 = inlined_call_operand.vmem [shape: bf16[6,32,288], index: 1, kind: input, shape index: {}]
  %s2 = inlined_call_operand.vmem [shape: f32[6,32,1], index: 2, kind: input, shape index: {}]
  %s3 = inlined_call_operand.vmem [shape: bf16[4,16,128], index: 3, kind: input, shape index: {}]
  %s4 = inlined_call_operand.vmem [shape: f32[16,1], index: 4, kind: input, shape index: {}]
  %s5 = inlined_call_operand.vmem [shape: f32[1,200], index: 5, kind: input, shape index: {}]
  %s6 = inlined_call_operand.vmem [shape: f32[64,200], index: 6, kind: output, shape index: {}]
  %s7 = sld [smem:[#allocation0]]
  $region34: #{refine_net_forward.4} parent=0
    _
  %s9 = ssub.s32 1, %s7
  %s10 = scalar_select 0, %s9, %s7
  // Predicated region
  $region2: #{refine_net_forward.4} parent=0 // pred_check
    _
  $region3: #{refine_net_forward.4} parent=0 // pred_check_branch
    %12 = sbr.rel (0) target = $region5
  $region4: #{refine_net_forward.4} parent=0 // pred_region
    _
  $region5: #{refine_net_forward.4} parent=0 // pred_fallthru
    _
  // Predicated region
  $region6: #{refine_net_forward.4} parent=0 // pred_check
    _
  $region7: #{refine_net_forward.4} parent=0 // pred_check_branch
    %14 = sbr.rel (0) target = $region9
  $region8: #{refine_net_forward.4} parent=0 // pred_region
    _
  $region9: #{refine_net_forward.4} parent=0 // pred_fallthru
    _
  // Predicated region
  $region10: #{refine_net_forward.4} parent=0 // pred_check
    _
  $region11: #{refine_net_forward.4} parent=0 // pred_check_branch
    %16 = sbr.rel (0) target = $region13
  $region12: #{refine_net_forward.4} parent=0 // pred_region
    _
  $region13: #{refine_net_forward.4} parent=0 // pred_fallthru
    _
  // Predicated region
  $region14: #{refine_net_forward.4} parent=0 // pred_check
    _
  $region15: #{refine_net_forward.4} parent=0 // pred_check_branch
    %18 = sbr.rel (0) target = $region17
  $region16: #{refine_net_forward.4} parent=0 // pred_region
    _
  $region17: #{refine_net_forward.4} parent=0 // pred_fallthru
    _
  // Predicated region
  $region18: #{refine_net_forward.4} parent=0 // pred_check
    _
  $region19: #{refine_net_forward.4} parent=0 // pred_check_branch
    %20 = sbr.rel (0) target = $region21
  $region20: #{refine_net_forward.4} parent=0 // pred_region
    _
  $region21: #{refine_net_forward.4} parent=0 // pred_fallthru
    _
  // Predicated region
  $region22: #{refine_net_forward.4} parent=0 // pred_check
    _
  $region23: #{refine_net_forward.4} parent=0 // pred_check_branch
    %22 = sbr.rel (0) target = $region25
  $region24: #{refine_net_forward.4} parent=0 // pred_region
    _
  $region25: #{refine_net_forward.4} parent=0 // pred_fallthru
    _
  %v24 = vld [vmem:[%s5] sm:$0x3]
  %v25 = vld [vmem:[%s0] sm:$0xff]
  %v26 = vld [vmem:[%s0 + $0x8] sm:$0xff]
  %v27 = vld [vmem:[%s0 + $0x10] sm:$0xff]
  %v28 = vld [vmem:[%s0 + $0x18] sm:$0xff]
  %v29 = vld [vmem:[%s0 + $0x20] sm:$0xff]
  %v30 = vld [vmem:[%s0 + $0x28] sm:$0xff]
  %v31 = vld [vmem:[%s0 + $0x30] sm:$0xff]
  %v32 = vld [vmem:[%s0 + $0x38] sm:$0xff]
  %41 = vrot.lane.b32.xlu0 %v25, 127
  %v42 = vpop.permute.xlu0 %41
  %43 = vrot.lane.b32.xlu0 %v26, 127
  %v44 = vpop.permute.xlu0 %43
  %45 = vrot.lane.b32.xlu0 %v27, 127
  %v46 = vpop.permute.xlu0 %45
  %47 = vrot.lane.b32.xlu0 %v28, 127
  %v48 = vpop.permute.xlu0 %47
  %49 = vrot.lane.b32.xlu0 %v29, 127
  %v50 = vpop.permute.xlu0 %49
  %51 = vrot.lane.b32.xlu0 %v30, 127
  %v52 = vpop.permute.xlu0 %51
  %53 = vrot.lane.b32.xlu0 %v31, 127
  %v54 = vpop.permute.xlu0 %53
  %55 = vrot.lane.b32.xlu0 %v32, 127
  %v56 = vpop.permute.xlu0 %55
  %vm57 = vcmask 1039360
  %v58 = vsel %vm57, %v42, %v44
  %v59 = vsel %vm57, %v46, %v48
  %v60 = vsel %vm57, %v50, %v52
  %v61 = vsel %vm57, %v54, %v56
  %70 = vrot.lane.b32.xlu0 %v25, 126
  %v71 = vpop.permute.xlu0 %70
  %72 = vrot.lane.b32.xlu0 %v26, 126
  %v73 = vpop.permute.xlu0 %72
  %74 = vrot.lane.b32.xlu0 %v27, 126
  %v75 = vpop.permute.xlu0 %74
  %76 = vrot.lane.b32.xlu0 %v28, 126
  %v77 = vpop.permute.xlu0 %76
  %78 = vrot.lane.b32.xlu0 %v29, 126
  %v79 = vpop.permute.xlu0 %78
  %80 = vrot.lane.b32.xlu0 %v30, 126
  %v81 = vpop.permute.xlu0 %80
  %82 = vrot.lane.b32.xlu0 %v31, 126
  %v83 = vpop.permute.xlu0 %82
  %84 = vrot.lane.b32.xlu0 %v32, 126
  %v85 = vpop.permute.xlu0 %84
  %vm86 = vcmask 1031168
  %v87 = vsel %vm86, %v71, %v73
  %v88 = vsel %vm86, %v75, %v77
  %v89 = vsel %vm86, %v79, %v81
  %v90 = vsel %vm86, %v83, %v85
  %99 = vrot.lane.b32.xlu0 %v25, 118
  %v100 = vpop.permute.xlu0 %99
  %101 = vrot.lane.b32.xlu0 %v26, 118
  %v102 = vpop.permute.xlu0 %101
  %103 = vrot.lane.b32.xlu0 %v27, 118
  %v104 = vpop.permute.xlu0 %103
  %105 = vrot.lane.b32.xlu0 %v28, 118
  %v106 = vpop.permute.xlu0 %105
  %107 = vrot.lane.b32.xlu0 %v29, 118
  %v108 = vpop.permute.xlu0 %107
  %109 = vrot.lane.b32.xlu0 %v30, 118
  %v110 = vpop.permute.xlu0 %109
  %111 = vrot.lane.b32.xlu0 %v31, 118
  %v112 = vpop.permute.xlu0 %111
  %113 = vrot.lane.b32.xlu0 %v32, 118
  %v114 = vpop.permute.xlu0 %113
  %vm115 = vcmask 965632
  %v116 = vsel %vm115, %v100, %v102
  %v117 = vsel %vm115, %v104, %v106
  %v118 = vsel %vm115, %v108, %v110
  %v119 = vsel %vm115, %v112, %v114
  %128 = vrot.lane.b32.xlu0 %v25, 117
  %v129 = vpop.permute.xlu0 %128
  %130 = vrot.lane.b32.xlu0 %v26, 117
  %v131 = vpop.permute.xlu0 %130
  %132 = vrot.lane.b32.xlu0 %v27, 117
  %v133 = vpop.permute.xlu0 %132
  %134 = vrot.lane.b32.xlu0 %v28, 117
  %v135 = vpop.permute.xlu0 %134
  %136 = vrot.lane.b32.xlu0 %v29, 117
  %v137 = vpop.permute.xlu0 %136
  %138 = vrot.lane.b32.xlu0 %v30, 117
  %v139 = vpop.permute.xlu0 %138
  %140 = vrot.lane.b32.xlu0 %v31, 117
  %v141 = vpop.permute.xlu0 %140
  %142 = vrot.lane.b32.xlu0 %v32, 117
  %v143 = vpop.permute.xlu0 %142
  %vm144 = vcmask 957440
  %v145 = vsel %vm144, %v129, %v131
  %v146 = vsel %vm144, %v133, %v135
  %v147 = vsel %vm144, %v137, %v139
  %v148 = vsel %vm144, %v141, %v143
  %157 = vrot.lane.b32.xlu0 %v25, 116
  %v158 = vpop.permute.xlu0 %157
  %159 = vrot.lane.b32.xlu0 %v26, 116
  %v160 = vpop.permute.xlu0 %159
  %161 = vrot.lane.b32.xlu0 %v27, 116
  %v162 = vpop.permute.xlu0 %161
  %163 = vrot.lane.b32.xlu0 %v28, 116
  %v164 = vpop.permute.xlu0 %163
  %165 = vrot.lane.b32.xlu0 %v29, 116
  %v166 = vpop.permute.xlu0 %165
  %167 = vrot.lane.b32.xlu0 %v30, 116
  %v168 = vpop.permute.xlu0 %167
  %169 = vrot.lane.b32.xlu0 %v31, 116
  %v170 = vpop.permute.xlu0 %169
  %171 = vrot.lane.b32.xlu0 %v32, 116
  %v172 = vpop.permute.xlu0 %171
  %vm173 = vcmask 949248
  %v174 = vsel %vm173, %v158, %v160
  %v175 = vsel %vm173, %v162, %v164
  %v176 = vsel %vm173, %v166, %v168
  %v177 = vsel %vm173, %v170, %v172
  %186 = vrot.lane.b32.xlu0 %v25, 108
  %v187 = vpop.permute.xlu0 %186
  %188 = vrot.lane.b32.xlu0 %v26, 108
  %v189 = vpop.permute.xlu0 %188
  %190 = vrot.lane.b32.xlu0 %v27, 108
  %v191 = vpop.permute.xlu0 %190
  %192 = vrot.lane.b32.xlu0 %v28, 108
  %v193 = vpop.permute.xlu0 %192
  %194 = vrot.lane.b32.xlu0 %v29, 108
  %v195 = vpop.permute.xlu0 %194
  %196 = vrot.lane.b32.xlu0 %v30, 108
  %v197 = vpop.permute.xlu0 %196
  %198 = vrot.lane.b32.xlu0 %v31, 108
  %v199 = vpop.permute.xlu0 %198
  %200 = vrot.lane.b32.xlu0 %v32, 108
  %v201 = vpop.permute.xlu0 %200
  %vm202 = vcmask 883712
  %v203 = vsel %vm202, %v187, %v189
  %v204 = vsel %vm202, %v191, %v193
  %v205 = vsel %vm202, %v195, %v197
  %v206 = vsel %vm202, %v199, %v201
  %215 = vrot.lane.b32.xlu0 %v25, 107
  %v216 = vpop.permute.xlu0 %215
  %217 = vrot.lane.b32.xlu0 %v26, 107
  %v218 = vpop.permute.xlu0 %217
  %219 = vrot.lane.b32.xlu0 %v27, 107
  %v220 = vpop.permute.xlu0 %219
  %221 = vrot.lane.b32.xlu0 %v28, 107
  %v222 = vpop.permute.xlu0 %221
  %223 = vrot.lane.b32.xlu0 %v29, 107
  %v224 = vpop.permute.xlu0 %223
  %225 = vrot.lane.b32.xlu0 %v30, 107
  %v226 = vpop.permute.xlu0 %225
  %227 = vrot.lane.b32.xlu0 %v31, 107
  %v228 = vpop.permute.xlu0 %227
  %229 = vrot.lane.b32.xlu0 %v32, 107
  %v230 = vpop.permute.xlu0 %229
  %vm231 = vcmask 875520
  %v232 = vsel %vm231, %v216, %v218
  %v233 = vsel %vm231, %v220, %v222
  %v234 = vsel %vm231, %v224, %v226
  %v235 = vsel %vm231, %v228, %v230
  %244 = vrot.lane.b32.xlu0 %v25, 106
  %v245 = vpop.permute.xlu0 %244
  %246 = vrot.lane.b32.xlu0 %v26, 106
  %v247 = vpop.permute.xlu0 %246
  %248 = vrot.lane.b32.xlu0 %v27, 106
  %v249 = vpop.permute.xlu0 %248
  %250 = vrot.lane.b32.xlu0 %v28, 106
  %v251 = vpop.permute.xlu0 %250
  %252 = vrot.lane.b32.xlu0 %v29, 106
  %v253 = vpop.permute.xlu0 %252
  %254 = vrot.lane.b32.xlu0 %v30, 106
  %v255 = vpop.permute.xlu0 %254
  %256 = vrot.lane.b32.xlu0 %v31, 106
  %v257 = vpop.permute.xlu0 %256
  %258 = vrot.lane.b32.xlu0 %v32, 106
  %v259 = vpop.permute.xlu0 %258
  %vm260 = vcmask 867328
  %v261 = vsel %vm260, %v245, %v247
  %v262 = vsel %vm260, %v249, %v251
  %v263 = vsel %vm260, %v253, %v255
  %v264 = vsel %vm260, %v257, %v259
  %v273 = vpack.c.bf16 %v27, %v25
  %v274 = vpack.c.bf16 %v28, %v26
  %v275 = vpack.c.bf16 %v31, %v29
  %v276 = vpack.c.bf16 %v32, %v30
  %v277 = vpack.c.bf16 %v59, %v58
  %v278 = vpack.c.bf16 %v48, %v44
  %v279 = vpack.c.bf16 %v61, %v60
  %v280 = vpack.c.bf16 %v56, %v52
  %v281 = vpack.c.bf16 %v88, %v87
  %v282 = vpack.c.bf16 %v77, %v73
  %v283 = vpack.c.bf16 %v90, %v89
  %v284 = vpack.c.bf16 %v85, %v81
  %v285 = vpack.c.bf16 %v117, %v116
  %v286 = vpack.c.bf16 %v106, %v102
  %v287 = vpack.c.bf16 %v119, %v118
  %v288 = vpack.c.bf16 %v114, %v110
  %v289 = vpack.c.bf16 %v146, %v145
  %v290 = vpack.c.bf16 %v135, %v131
  %v291 = vpack.c.bf16 %v148, %v147
  %v292 = vpack.c.bf16 %v143, %v139
  %v293 = vpack.c.bf16 %v175, %v174
  %v294 = vpack.c.bf16 %v164, %v160
  %v295 = vpack.c.bf16 %v177, %v176
  %v296 = vpack.c.bf16 %v172, %v168
  %v297 = vpack.c.bf16 %v204, %v203
  %v298 = vpack.c.bf16 %v193, %v189
  %v299 = vpack.c.bf16 %v206, %v205
  %v300 = vpack.c.bf16 %v201, %v197
  %v301 = vpack.c.bf16 %v233, %v232
  %v302 = vpack.c.bf16 %v222, %v218
  %v303 = vpack.c.bf16 %v235, %v234
  %v304 = vpack.c.bf16 %v230, %v226
  %v305 = vpack.c.bf16 %v262, %v261
  %v306 = vpack.c.bf16 %v251, %v247
  %v307 = vpack.c.bf16 %v264, %v263
  %v308 = vpack.c.bf16 %v259, %v255
  %v309 = vld [vmem:[%s1] sm:$0xff]
  %v310 = vld [vmem:[%s1 + $0x8] sm:$0xf]
  %v311 = vld [vmem:[%s1 + $0xc] sm:$0xff]
  %v312 = vld [vmem:[%s1 + $0x14] sm:$0xf]
  %v313 = vld [vmem:[%s1 + $0x18] sm:$0xff]
  %v314 = vld [vmem:[%s1 + $0x20] sm:$0xf]
  %v315 = vld [vmem:[%s1 + $0x24] sm:$0xff]
  %v316 = vld [vmem:[%s1 + $0x2c] sm:$0xf]
  %v317 = vld [vmem:[%s2] sm:$0xff]
  %v318 = vld [vmem:[%s2 + $0x8] sm:$0xff]
  %v319 = vld [vmem:[%s2 + $0x10] sm:$0xff]
  %v320 = vld [vmem:[%s2 + $0x18] sm:$0xff]
  %322 = vset.pattern.permute.xlu0 0
  %323 = vperm.xlu0 %322, %v317
  %v324 = vpop.permute.xlu0 %323
  %327 = vset.pattern.permute.xlu0 0
  %328 = vperm.xlu0 %327, %v318
  %v329 = vpop.permute.xlu0 %328
  %332 = vset.pattern.permute.xlu0 0
  %333 = vperm.xlu0 %332, %v319
  %v334 = vpop.permute.xlu0 %333
  %337 = vset.pattern.permute.xlu0 0
  %338 = vperm.xlu0 %337, %v320
  %v339 = vpop.permute.xlu0 %338
  %v349 = vunpack.c.l.b16 %v309
  %v350 = vunpack.c.h.b16 %v309
  %v351 = vunpack.c.l.b16 %v310
  %v352 = vunpack.c.l.b16 %v311
  %v353 = vunpack.c.h.b16 %v311
  %v354 = vunpack.c.l.b16 %v312
  %v355 = vunpack.c.l.b16 %v313
  %v356 = vunpack.c.h.b16 %v313
  %v357 = vunpack.c.l.b16 %v314
  %v358 = vunpack.c.l.b16 %v315
  %v359 = vunpack.c.h.b16 %v315
  %v360 = vunpack.c.l.b16 %v316
  %v361 = vpack.c.b16 %v352, %v349
  %v362 = vpack.c.b16 %v353, %v350
  %v363 = vpack.c.b16 %v354, %v351
  %v364 = vpack.c.b16 %v358, %v355
  %v365 = vpack.c.b16 %v359, %v356
  %v366 = vpack.c.b16 %v360, %v357
  %vm371 = vcmask 261120
  %v373 = vsel %vm371, %v363, 0
  %v376 = vsel %vm371, %v366, 0
  %378 = vmatpush.bf16.msra.mxu0 %v287
  %379 = vmatpush.bf16.msra.mxu0 %v285
  %380 = vmatpush.bf16.msra.mxu0 %v283
  %381 = vmatpush.bf16.msra.mxu0 %v281
  %382 = vmatpush.bf16.msra.mxu0 %v279
  %383 = vmatpush.bf16.msra.mxu0 %v277
  %384 = vmatpush.bf16.msra.mxu0 %v275
  %385 = vmatpush.bf16.msra.mxu0 %v273
  %386 = vmatmul.bf16.gmra.mxu0 %v361
  %v387 = vpop.f32.mrf.mxu0
  %v388 = vadd.f32 %v324, %v387
  %v389 = vpop.f32.mrf.mxu0
  %v390 = vadd.f32 %v329, %v389
  %391 = vmatmul.bf16.gmra.mxu0 %v364
  %v392 = vpop.f32.mrf.mxu0
  %v393 = vadd.f32 %v334, %v392
  %v394 = vpop.f32.mrf.mxu0
  %v395 = vadd.f32 %v339, %v394
  %396 = vdwg.mxu0
  %397 = vmatpush.bf16.msra.mxu0 %v303
  %398 = vmatpush.bf16.msra.mxu0 %v301
  %399 = vmatpush.bf16.msra.mxu0 %v299
  %400 = vmatpush.bf16.msra.mxu0 %v297
  %401 = vmatpush.bf16.msra.mxu0 %v295
  %402 = vmatpush.bf16.msra.mxu0 %v293
  %403 = vmatpush.bf16.msra.mxu0 %v291
  %404 = vmatpush.bf16.msra.mxu0 %v289
  %405 = vmatmul.bf16.gmra.mxu0 %v362
  %v406 = vpop.f32.mrf.mxu0
  %v407 = vadd.f32 %v388, %v406
  %v408 = vpop.f32.mrf.mxu0
  %v409 = vadd.f32 %v390, %v408
  %410 = vmatmul.bf16.gmra.mxu0 %v365
  %v411 = vpop.f32.mrf.mxu0
  %v412 = vadd.f32 %v393, %v411
  %v413 = vpop.f32.mrf.mxu0
  %v414 = vadd.f32 %v395, %v413
  %415 = vdwg.mxu0
  %416 = vmatpush.bf16.msra.mxu0 0
  %417 = vmatpush.bf16.msra.mxu0 0
  %418 = vmatpush.bf16.msra.mxu0 0
  %419 = vmatpush.bf16.msra.mxu0 0
  %420 = vmatpush.bf16.msra.mxu0 0
  %421 = vmatpush.bf16.msra.mxu0 0
  %422 = vmatpush.bf16.msra.mxu0 %v307
  %423 = vmatpush.bf16.msra.mxu0 %v305
  %424 = vmatmul.bf16.gmra.mxu0 %v373
  %v425 = vpop.f32.mrf.mxu0
  %v426 = vadd.f32 %v407, %v425
  %v427 = vpop.f32.mrf.mxu0
  %v428 = vadd.f32 %v409, %v427
  %429 = vmatmul.bf16.gmra.mxu0 %v376
  %v430 = vpop.f32.mrf.mxu0
  %v431 = vadd.f32 %v412, %v430
  %v432 = vpop.f32.mrf.mxu0
  %v433 = vadd.f32 %v414, %v432
  %434 = vdwg.mxu0
  %435 = vmatpush.bf16.msra.mxu0 %v288
  %436 = vmatpush.bf16.msra.mxu0 %v286
  %437 = vmatpush.bf16.msra.mxu0 %v284
  %438 = vmatpush.bf16.msra.mxu0 %v282
  %439 = vmatpush.bf16.msra.mxu0 %v280
  %440 = vmatpush.bf16.msra.mxu0 %v278
  %441 = vmatpush.bf16.msra.mxu0 %v276
  %442 = vmatpush.bf16.msra.mxu0 %v274
  %443 = vmatmul.bf16.gmra.mxu0 %v361
  %v444 = vpop.f32.mrf.mxu0
  %v445 = vadd.f32 %v324, %v444
  %v446 = vpop.f32.mrf.mxu0
  %v447 = vadd.f32 %v329, %v446
  %448 = vmatmul.bf16.gmra.mxu0 %v364
  %v449 = vpop.f32.mrf.mxu0
  %v450 = vadd.f32 %v334, %v449
  %v451 = vpop.f32.mrf.mxu0
  %v452 = vadd.f32 %v339, %v451
  %453 = vdwg.mxu0
  %454 = vmatpush.bf16.msra.mxu0 %v304
  %455 = vmatpush.bf16.msra.mxu0 %v302
  %456 = vmatpush.bf16.msra.mxu0 %v300
  %457 = vmatpush.bf16.msra.mxu0 %v298
  %458 = vmatpush.bf16.msra.mxu0 %v296
  %459 = vmatpush.bf16.msra.mxu0 %v294
  %460 = vmatpush.bf16.msra.mxu0 %v292
  %461 = vmatpush.bf16.msra.mxu0 %v290
  %462 = vmatmul.bf16.gmra.mxu0 %v362
  %v463 = vpop.f32.mrf.mxu0
  %v464 = vadd.f32 %v445, %v463
  %v465 = vpop.f32.mrf.mxu0
  %v466 = vadd.f32 %v447, %v465
  %467 = vmatmul.bf16.gmra.mxu0 %v365
  %v468 = vpop.f32.mrf.mxu0
  %v469 = vadd.f32 %v450, %v468
  %v470 = vpop.f32.mrf.mxu0
  %v471 = vadd.f32 %v452, %v470
  %472 = vdwg.mxu0
  %473 = vmatpush.bf16.msra.mxu0 0
  %474 = vmatpush.bf16.msra.mxu0 0
  %475 = vmatpush.bf16.msra.mxu0 0
  %476 = vmatpush.bf16.msra.mxu0 0
  %477 = vmatpush.bf16.msra.mxu0 0
  %478 = vmatpush.bf16.msra.mxu0 0
  %479 = vmatpush.bf16.msra.mxu0 %v308
  %480 = vmatpush.bf16.msra.mxu0 %v306
  %481 = vmatmul.bf16.gmra.mxu0 %v373
  %v482 = vpop.f32.mrf.mxu0
  %v483 = vadd.f32 %v464, %v482
  %v484 = vpop.f32.mrf.mxu0
  %v485 = vadd.f32 %v466, %v484
  %486 = vmatmul.bf16.gmra.mxu0 %v376
  %v487 = vpop.f32.mrf.mxu0
  %v488 = vadd.f32 %v469, %v487
  %v489 = vpop.f32.mrf.mxu0
  %v490 = vadd.f32 %v471, %v489
  %491 = vdwg.mxu0
  %v492 = vmax.f32 %v426, 0.0
  %v493 = vmax.f32 %v483, 0.0
  %v494 = vmax.f32 %v428, 0.0
  %v495 = vmax.f32 %v485, 0.0
  %v496 = vmax.f32 %v431, 0.0
  %v497 = vmax.f32 %v488, 0.0
  %v498 = vmax.f32 %v433, 0.0
  %v499 = vmax.f32 %v490, 0.0
  %v501 = vperm.slane %v24, 0
  %v502 = vperm.slane %v24, 1
  %v505 = vmul.f32 %v492, %v501
  %v506 = vmul.f32 %v493, %v502
  %v507 = vmul.f32 %v494, %v501
  %v508 = vmul.f32 %v495, %v502
  %v509 = vmul.f32 %v496, %v501
  %v510 = vmul.f32 %v497, %v502
  %v511 = vmul.f32 %v498, %v501
  %v512 = vmul.f32 %v499, %v502
  %521 = vrot.lane.b32.xlu0 %v505, 11
  %v522 = vpop.permute.xlu0 %521
  %523 = vrot.lane.b32.xlu0 %v506, 11
  %v524 = vpop.permute.xlu0 %523
  %525 = vrot.lane.b32.xlu0 %v507, 11
  %v526 = vpop.permute.xlu0 %525
  %527 = vrot.lane.b32.xlu0 %v508, 11
  %v528 = vpop.permute.xlu0 %527
  %529 = vrot.lane.b32.xlu0 %v509, 11
  %v530 = vpop.permute.xlu0 %529
  %531 = vrot.lane.b32.xlu0 %v510, 11
  %v532 = vpop.permute.xlu0 %531
  %533 = vrot.lane.b32.xlu0 %v511, 11
  %v534 = vpop.permute.xlu0 %533
  %535 = vrot.lane.b32.xlu0 %v512, 11
  %v536 = vpop.permute.xlu0 %535
  %vm537 = vcmask 89088
  %v538 = vsel %vm537, %v522, %v524
  %v539 = vsel %vm537, %v526, %v528
  %v540 = vsel %vm537, %v530, %v532
  %v541 = vsel %vm537, %v534, %v536
  %v550 = vsel %vm537, 0.0, %v522
  %v551 = vsel %vm537, 0.0, %v526
  %v552 = vsel %vm537, 0.0, %v530
  %v553 = vsel %vm537, 0.0, %v534
  %vm554 = vcmask 678912
  %v555 = vsel %vm554, %v538, 0.0
  %v556 = vsel %vm554, %v539, 0.0
  %v557 = vsel %vm554, %v540, 0.0
  %v558 = vsel %vm554, %v541, 0.0
  %567 = vrot.lane.b32.xlu0 %v550, 127
  %v568 = vpop.permute.xlu0 %567
  %569 = vrot.lane.b32.xlu0 %v555, 127
  %v570 = vpop.permute.xlu0 %569
  %571 = vrot.lane.b32.xlu0 %v551, 127
  %v572 = vpop.permute.xlu0 %571
  %573 = vrot.lane.b32.xlu0 %v556, 127
  %v574 = vpop.permute.xlu0 %573
  %575 = vrot.lane.b32.xlu0 %v552, 127
  %v576 = vpop.permute.xlu0 %575
  %577 = vrot.lane.b32.xlu0 %v557, 127
  %v578 = vpop.permute.xlu0 %577
  %579 = vrot.lane.b32.xlu0 %v553, 127
  %v580 = vpop.permute.xlu0 %579
  %581 = vrot.lane.b32.xlu0 %v558, 127
  %v582 = vpop.permute.xlu0 %581
  %v583 = vsel %vm57, %v568, %v570
  %v584 = vsel %vm57, %v572, %v574
  %v585 = vsel %vm57, %v576, %v578
  %v586 = vsel %vm57, %v580, %v582
  %595 = vrot.lane.b32.xlu0 %v550, 126
  %v596 = vpop.permute.xlu0 %595
  %597 = vrot.lane.b32.xlu0 %v555, 126
  %v598 = vpop.permute.xlu0 %597
  %599 = vrot.lane.b32.xlu0 %v551, 126
  %v600 = vpop.permute.xlu0 %599
  %601 = vrot.lane.b32.xlu0 %v556, 126
  %v602 = vpop.permute.xlu0 %601
  %603 = vrot.lane.b32.xlu0 %v552, 126
  %v604 = vpop.permute.xlu0 %603
  %605 = vrot.lane.b32.xlu0 %v557, 126
  %v606 = vpop.permute.xlu0 %605
  %607 = vrot.lane.b32.xlu0 %v553, 126
  %v608 = vpop.permute.xlu0 %607
  %609 = vrot.lane.b32.xlu0 %v558, 126
  %v610 = vpop.permute.xlu0 %609
  %v611 = vsel %vm86, %v596, %v598
  %v612 = vsel %vm86, %v600, %v602
  %v613 = vsel %vm86, %v604, %v606
  %v614 = vsel %vm86, %v608, %v610
  %623 = vrot.lane.b32.xlu0 %v550, 118
  %v624 = vpop.permute.xlu0 %623
  %625 = vrot.lane.b32.xlu0 %v555, 118
  %v626 = vpop.permute.xlu0 %625
  %627 = vrot.lane.b32.xlu0 %v551, 118
  %v628 = vpop.permute.xlu0 %627
  %629 = vrot.lane.b32.xlu0 %v556, 118
  %v630 = vpop.permute.xlu0 %629
  %631 = vrot.lane.b32.xlu0 %v552, 118
  %v632 = vpop.permute.xlu0 %631
  %633 = vrot.lane.b32.xlu0 %v557, 118
  %v634 = vpop.permute.xlu0 %633
  %635 = vrot.lane.b32.xlu0 %v553, 118
  %v636 = vpop.permute.xlu0 %635
  %637 = vrot.lane.b32.xlu0 %v558, 118
  %v638 = vpop.permute.xlu0 %637
  %v639 = vsel %vm115, %v624, %v626
  %v640 = vsel %vm115, %v628, %v630
  %v641 = vsel %vm115, %v632, %v634
  %v642 = vsel %vm115, %v636, %v638
  %651 = vrot.lane.b32.xlu0 %v550, 117
  %v652 = vpop.permute.xlu0 %651
  %653 = vrot.lane.b32.xlu0 %v555, 117
  %v654 = vpop.permute.xlu0 %653
  %655 = vrot.lane.b32.xlu0 %v551, 117
  %v656 = vpop.permute.xlu0 %655
  %657 = vrot.lane.b32.xlu0 %v556, 117
  %v658 = vpop.permute.xlu0 %657
  %659 = vrot.lane.b32.xlu0 %v552, 117
  %v660 = vpop.permute.xlu0 %659
  %661 = vrot.lane.b32.xlu0 %v557, 117
  %v662 = vpop.permute.xlu0 %661
  %663 = vrot.lane.b32.xlu0 %v553, 117
  %v664 = vpop.permute.xlu0 %663
  %665 = vrot.lane.b32.xlu0 %v558, 117
  %v666 = vpop.permute.xlu0 %665
  %v667 = vsel %vm144, %v652, %v654
  %v668 = vsel %vm144, %v656, %v658
  %v669 = vsel %vm144, %v660, %v662
  %v670 = vsel %vm144, %v664, %v666
  %679 = vrot.lane.b32.xlu0 %v550, 116
  %v680 = vpop.permute.xlu0 %679
  %681 = vrot.lane.b32.xlu0 %v555, 116
  %v682 = vpop.permute.xlu0 %681
  %683 = vrot.lane.b32.xlu0 %v551, 116
  %v684 = vpop.permute.xlu0 %683
  %685 = vrot.lane.b32.xlu0 %v556, 116
  %v686 = vpop.permute.xlu0 %685
  %687 = vrot.lane.b32.xlu0 %v552, 116
  %v688 = vpop.permute.xlu0 %687
  %689 = vrot.lane.b32.xlu0 %v557, 116
  %v690 = vpop.permute.xlu0 %689
  %691 = vrot.lane.b32.xlu0 %v553, 116
  %v692 = vpop.permute.xlu0 %691
  %693 = vrot.lane.b32.xlu0 %v558, 116
  %v694 = vpop.permute.xlu0 %693
  %v695 = vsel %vm173, %v680, %v682
  %v696 = vsel %vm173, %v684, %v686
  %v697 = vsel %vm173, %v688, %v690
  %v698 = vsel %vm173, %v692, %v694
  %707 = vrot.lane.b32.xlu0 %v550, 108
  %v708 = vpop.permute.xlu0 %707
  %709 = vrot.lane.b32.xlu0 %v555, 108
  %v710 = vpop.permute.xlu0 %709
  %711 = vrot.lane.b32.xlu0 %v551, 108
  %v712 = vpop.permute.xlu0 %711
  %713 = vrot.lane.b32.xlu0 %v556, 108
  %v714 = vpop.permute.xlu0 %713
  %715 = vrot.lane.b32.xlu0 %v552, 108
  %v716 = vpop.permute.xlu0 %715
  %717 = vrot.lane.b32.xlu0 %v557, 108
  %v718 = vpop.permute.xlu0 %717
  %719 = vrot.lane.b32.xlu0 %v553, 108
  %v720 = vpop.permute.xlu0 %719
  %721 = vrot.lane.b32.xlu0 %v558, 108
  %v722 = vpop.permute.xlu0 %721
  %v723 = vsel %vm202, %v708, %v710
  %v724 = vsel %vm202, %v712, %v714
  %v725 = vsel %vm202, %v716, %v718
  %v726 = vsel %vm202, %v720, %v722
  %735 = vrot.lane.b32.xlu0 %v550, 107
  %v736 = vpop.permute.xlu0 %735
  %737 = vrot.lane.b32.xlu0 %v555, 107
  %v738 = vpop.permute.xlu0 %737
  %739 = vrot.lane.b32.xlu0 %v551, 107
  %v740 = vpop.permute.xlu0 %739
  %741 = vrot.lane.b32.xlu0 %v556, 107
  %v742 = vpop.permute.xlu0 %741
  %743 = vrot.lane.b32.xlu0 %v552, 107
  %v744 = vpop.permute.xlu0 %743
  %745 = vrot.lane.b32.xlu0 %v557, 107
  %v746 = vpop.permute.xlu0 %745
  %747 = vrot.lane.b32.xlu0 %v553, 107
  %v748 = vpop.permute.xlu0 %747
  %749 = vrot.lane.b32.xlu0 %v558, 107
  %v750 = vpop.permute.xlu0 %749
  %v751 = vsel %vm231, %v736, %v738
  %v752 = vsel %vm231, %v740, %v742
  %v753 = vsel %vm231, %v744, %v746
  %v754 = vsel %vm231, %v748, %v750
  %763 = vrot.lane.b32.xlu0 %v550, 106
  %v764 = vpop.permute.xlu0 %763
  %765 = vrot.lane.b32.xlu0 %v555, 106
  %v766 = vpop.permute.xlu0 %765
  %767 = vrot.lane.b32.xlu0 %v551, 106
  %v768 = vpop.permute.xlu0 %767
  %769 = vrot.lane.b32.xlu0 %v556, 106
  %v770 = vpop.permute.xlu0 %769
  %771 = vrot.lane.b32.xlu0 %v552, 106
  %v772 = vpop.permute.xlu0 %771
  %773 = vrot.lane.b32.xlu0 %v557, 106
  %v774 = vpop.permute.xlu0 %773
  %775 = vrot.lane.b32.xlu0 %v553, 106
  %v776 = vpop.permute.xlu0 %775
  %777 = vrot.lane.b32.xlu0 %v558, 106
  %v778 = vpop.permute.xlu0 %777
  %v779 = vsel %vm260, %v764, %v766
  %v780 = vsel %vm260, %v768, %v770
  %v781 = vsel %vm260, %v772, %v774
  %v782 = vsel %vm260, %v776, %v778
  %v791 = vpack.c.bf16 %v551, %v550
  %v792 = vpack.c.bf16 %v556, %v555
  %v793 = vpack.c.bf16 %v553, %v552
  %v794 = vpack.c.bf16 %v558, %v557
  %v795 = vpack.c.bf16 %v584, %v583
  %v796 = vpack.c.bf16 %v574, %v570
  %v797 = vpack.c.bf16 %v586, %v585
  %v798 = vpack.c.bf16 %v582, %v578
  %v799 = vpack.c.bf16 %v612, %v611
  %v800 = vpack.c.bf16 %v602, %v598
  %v801 = vpack.c.bf16 %v614, %v613
  %v802 = vpack.c.bf16 %v610, %v606
  %v803 = vpack.c.bf16 %v640, %v639
  %v804 = vpack.c.bf16 %v630, %v626
  %v805 = vpack.c.bf16 %v642, %v641
  %v806 = vpack.c.bf16 %v638, %v634
  %v807 = vpack.c.bf16 %v668, %v667
  %v808 = vpack.c.bf16 %v658, %v654
  %v809 = vpack.c.bf16 %v670, %v669
  %v810 = vpack.c.bf16 %v666, %v662
  %v811 = vpack.c.bf16 %v696, %v695
  %v812 = vpack.c.bf16 %v686, %v682
  %v813 = vpack.c.bf16 %v698, %v697
  %v814 = vpack.c.bf16 %v694, %v690
  %v815 = vpack.c.bf16 %v724, %v723
  %v816 = vpack.c.bf16 %v714, %v710
  %v817 = vpack.c.bf16 %v726, %v725
  %v818 = vpack.c.bf16 %v722, %v718
  %v819 = vpack.c.bf16 %v752, %v751
  %v820 = vpack.c.bf16 %v742, %v738
  %v821 = vpack.c.bf16 %v754, %v753
  %v822 = vpack.c.bf16 %v750, %v746
  %v823 = vpack.c.bf16 %v780, %v779
  %v824 = vpack.c.bf16 %v770, %v766
  %v825 = vpack.c.bf16 %v782, %v781
  %v826 = vpack.c.bf16 %v778, %v774
  %s827 = scalar_lea.vmem %s1, 48
  %v828 = vld [vmem:[%s827] sm:$0xff]
  %v829 = vld [vmem:[%s827 + $0x8] sm:$0xf]
  %v830 = vld [vmem:[%s827 + $0xc] sm:$0xff]
  %v831 = vld [vmem:[%s827 + $0x14] sm:$0xf]
  %v832 = vld [vmem:[%s827 + $0x18] sm:$0xff]
  %v833 = vld [vmem:[%s827 + $0x20] sm:$0xf]
  %v834 = vld [vmem:[%s827 + $0x24] sm:$0xff]
  %v835 = vld [vmem:[%s827 + $0x2c] sm:$0xf]
  %v844 = vunpack.c.l.b16 %v828
  %v845 = vunpack.c.h.b16 %v828
  %v846 = vunpack.c.l.b16 %v829
  %v847 = vunpack.c.l.b16 %v830
  %v848 = vunpack.c.h.b16 %v830
  %v849 = vunpack.c.l.b16 %v831
  %v850 = vunpack.c.l.b16 %v832
  %v851 = vunpack.c.h.b16 %v832
  %v852 = vunpack.c.l.b16 %v833
  %v853 = vunpack.c.l.b16 %v834
  %v854 = vunpack.c.h.b16 %v834
  %v855 = vunpack.c.l.b16 %v835
  %v856 = vpack.c.b16 %v847, %v844
  %v857 = vpack.c.b16 %v848, %v845
  %v858 = vpack.c.b16 %v849, %v846
  %v859 = vpack.c.b16 %v853, %v850
  %v860 = vpack.c.b16 %v854, %v851
  %v861 = vpack.c.b16 %v855, %v852
  %v867 = vsel %vm371, %v858, 0
  %v870 = vsel %vm371, %v861, 0
  %872 = vmatpush.bf16.msra.mxu0 %v805
  %873 = vmatpush.bf16.msra.mxu0 %v803
  %874 = vmatpush.bf16.msra.mxu0 %v801
  %875 = vmatpush.bf16.msra.mxu0 %v799
  %876 = vmatpush.bf16.msra.mxu0 %v797
  %877 = vmatpush.bf16.msra.mxu0 %v795
  %878 = vmatpush.bf16.msra.mxu0 %v793
  %879 = vmatpush.bf16.msra.mxu0 %v791
  %880 = vmatmul.bf16.gmra.mxu0 %v856
  %v881 = vpop.f32.mrf.mxu0
  %v882 = vadd.f32 0.0, %v881
  %v883 = vpop.f32.mrf.mxu0
  %v884 = vadd.f32 0.0, %v883
  %885 = vmatmul.bf16.gmra.mxu0 %v859
  %v886 = vpop.f32.mrf.mxu0
  %v887 = vadd.f32 0.0, %v886
  %v888 = vpop.f32.mrf.mxu0
  %v889 = vadd.f32 0.0, %v888
  %890 = vdwg.mxu0
  %891 = vmatpush.bf16.msra.mxu0 %v821
  %892 = vmatpush.bf16.msra.mxu0 %v819
  %893 = vmatpush.bf16.msra.mxu0 %v817
  %894 = vmatpush.bf16.msra.mxu0 %v815
  %895 = vmatpush.bf16.msra.mxu0 %v813
  %896 = vmatpush.bf16.msra.mxu0 %v811
  %897 = vmatpush.bf16.msra.mxu0 %v809
  %898 = vmatpush.bf16.msra.mxu0 %v807
  %899 = vmatmul.bf16.gmra.mxu0 %v857
  %v900 = vpop.f32.mrf.mxu0
  %v901 = vadd.f32 %v882, %v900
  %v902 = vpop.f32.mrf.mxu0
  %v903 = vadd.f32 %v884, %v902
  %904 = vmatmul.bf16.gmra.mxu0 %v860
  %v905 = vpop.f32.mrf.mxu0
  %v906 = vadd.f32 %v887, %v905
  %v907 = vpop.f32.mrf.mxu0
  %v908 = vadd.f32 %v889, %v907
  %909 = vdwg.mxu0
  %910 = vmatpush.bf16.msra.mxu0 0
  %911 = vmatpush.bf16.msra.mxu0 0
  %912 = vmatpush.bf16.msra.mxu0 0
  %913 = vmatpush.bf16.msra.mxu0 0
  %914 = vmatpush.bf16.msra.mxu0 0
  %915 = vmatpush.bf16.msra.mxu0 0
  %916 = vmatpush.bf16.msra.mxu0 %v825
  %917 = vmatpush.bf16.msra.mxu0 %v823
  %918 = vmatmul.bf16.gmra.mxu0 %v867
  %v919 = vpop.f32.mrf.mxu0
  %v920 = vadd.f32 %v901, %v919
  %v921 = vpop.f32.mrf.mxu0
  %v922 = vadd.f32 %v903, %v921
  %923 = vmatmul.bf16.gmra.mxu0 %v870
  %v924 = vpop.f32.mrf.mxu0
  %v925 = vadd.f32 %v906, %v924
  %v926 = vpop.f32.mrf.mxu0
  %v927 = vadd.f32 %v908, %v926
  %928 = vdwg.mxu0
  %929 = vmatpush.bf16.msra.mxu0 %v806
  %930 = vmatpush.bf16.msra.mxu0 %v804
  %931 = vmatpush.bf16.msra.mxu0 %v802
  %932 = vmatpush.bf16.msra.mxu0 %v800
  %933 = vmatpush.bf16.msra.mxu0 %v798
  %934 = vmatpush.bf16.msra.mxu0 %v796
  %935 = vmatpush.bf16.msra.mxu0 %v794
  %936 = vmatpush.bf16.msra.mxu0 %v792
  %937 = vmatmul.bf16.gmra.mxu0 %v856
  %v938 = vpop.f32.mrf.mxu0
  %v939 = vadd.f32 0.0, %v938
  %v940 = vpop.f32.mrf.mxu0
  %v941 = vadd.f32 0.0, %v940
  %942 = vmatmul.bf16.gmra.mxu0 %v859
  %v943 = vpop.f32.mrf.mxu0
  %v944 = vadd.f32 0.0, %v943
  %v945 = vpop.f32.mrf.mxu0
  %v946 = vadd.f32 0.0, %v945
  %947 = vdwg.mxu0
  %948 = vmatpush.bf16.msra.mxu0 %v822
  %949 = vmatpush.bf16.msra.mxu0 %v820
  %950 = vmatpush.bf16.msra.mxu0 %v818
  %951 = vmatpush.bf16.msra.mxu0 %v816
  %952 = vmatpush.bf16.msra.mxu0 %v814
  %953 = vmatpush.bf16.msra.mxu0 %v812
  %954 = vmatpush.bf16.msra.mxu0 %v810
  %955 = vmatpush.bf16.msra.mxu0 %v808
  %956 = vmatmul.bf16.gmra.mxu0 %v857
  %v957 = vpop.f32.mrf.mxu0
  %v958 = vadd.f32 %v939, %v957
  %v959 = vpop.f32.mrf.mxu0
  %v960 = vadd.f32 %v941, %v959
  %961 = vmatmul.bf16.gmra.mxu0 %v860
  %v962 = vpop.f32.mrf.mxu0
  %v963 = vadd.f32 %v944, %v962
  %v964 = vpop.f32.mrf.mxu0
  %v965 = vadd.f32 %v946, %v964
  %966 = vdwg.mxu0
  %967 = vmatpush.bf16.msra.mxu0 0
  %968 = vmatpush.bf16.msra.mxu0 0
  %969 = vmatpush.bf16.msra.mxu0 0
  %970 = vmatpush.bf16.msra.mxu0 0
  %971 = vmatpush.bf16.msra.mxu0 0
  %972 = vmatpush.bf16.msra.mxu0 0
  %973 = vmatpush.bf16.msra.mxu0 %v826
  %974 = vmatpush.bf16.msra.mxu0 %v824
  %975 = vmatmul.bf16.gmra.mxu0 %v867
  %v976 = vpop.f32.mrf.mxu0
  %v977 = vadd.f32 %v958, %v976
  %v978 = vpop.f32.mrf.mxu0
  %v979 = vadd.f32 %v960, %v978
  %980 = vmatmul.bf16.gmra.mxu0 %v870
  %v981 = vpop.f32.mrf.mxu0
  %v982 = vadd.f32 %v963, %v981
  %v983 = vpop.f32.mrf.mxu0
  %v984 = vadd.f32 %v965, %v983
  %985 = vdwg.mxu0
  %994 = vrot.lane.b32.xlu0 %v920, 11
  %v995 = vpop.permute.xlu0 %994
  %996 = vrot.lane.b32.xlu0 %v977, 11
  %v997 = vpop.permute.xlu0 %996
  %998 = vrot.lane.b32.xlu0 %v922, 11
  %v999 = vpop.permute.xlu0 %998
  %1000 = vrot.lane.b32.xlu0 %v979, 11
  %v1001 = vpop.permute.xlu0 %1000
  %1002 = vrot.lane.b32.xlu0 %v925, 11
  %v1003 = vpop.permute.xlu0 %1002
  %1004 = vrot.lane.b32.xlu0 %v982, 11
  %v1005 = vpop.permute.xlu0 %1004
  %1006 = vrot.lane.b32.xlu0 %v927, 11
  %v1007 = vpop.permute.xlu0 %1006
  %1008 = vrot.lane.b32.xlu0 %v984, 11
  %v1009 = vpop.permute.xlu0 %1008
  %v1010 = vsel %vm537, %v995, %v997
  %v1011 = vsel %vm537, %v999, %v1001
  %v1012 = vsel %vm537, %v1003, %v1005
  %v1013 = vsel %vm537, %v1007, %v1009
  %v1022 = vadd.f32 %v25, %v995
  %v1023 = vadd.f32 %v26, %v1010
  %v1024 = vadd.f32 %v27, %v999
  %v1025 = vadd.f32 %v28, %v1011
  %v1026 = vadd.f32 %v29, %v1003
  %v1027 = vadd.f32 %v30, %v1012
  %v1028 = vadd.f32 %v31, %v1007
  %v1029 = vadd.f32 %v32, %v1013
  %s1030 = scalar_lea.vmem %s2, 32
  %v1031 = vld [vmem:[%s1030] sm:$0xff]
  %v1032 = vld [vmem:[%s1030 + $0x8] sm:$0xff]
  %v1033 = vld [vmem:[%s1030 + $0x10] sm:$0xff]
  %v1034 = vld [vmem:[%s1030 + $0x18] sm:$0xff]
  %1036 = vset.pattern.permute.xlu0 0
  %1037 = vperm.xlu0 %1036, %v1031
  %v1038 = vpop.permute.xlu0 %1037
  %1041 = vset.pattern.permute.xlu0 0
  %1042 = vperm.xlu0 %1041, %v1032
  %v1043 = vpop.permute.xlu0 %1042
  %1046 = vset.pattern.permute.xlu0 0
  %1047 = vperm.xlu0 %1046, %v1033
  %v1048 = vpop.permute.xlu0 %1047
  %1051 = vset.pattern.permute.xlu0 0
  %1052 = vperm.xlu0 %1051, %v1034
  %v1053 = vpop.permute.xlu0 %1052
  %v1055 = vadd.f32 %v1022, %v1038
  %v1056 = vadd.f32 %v1023, %v1038
  %v1057 = vadd.f32 %v1024, %v1043
  %v1058 = vadd.f32 %v1025, %v1043
  %v1059 = vadd.f32 %v1026, %v1048
  %v1060 = vadd.f32 %v1027, %v1048
  %v1061 = vadd.f32 %v1028, %v1053
  %v1062 = vadd.f32 %v1029, %v1053
  %v1063 = vmax.f32 %v1055, 0.0
  %v1064 = vmax.f32 %v1056, 0.0
  %v1065 = vmax.f32 %v1057, 0.0
  %v1066 = vmax.f32 %v1058, 0.0
  %v1067 = vmax.f32 %v1059, 0.0
  %v1068 = vmax.f32 %v1060, 0.0
  %v1069 = vmax.f32 %v1061, 0.0
  %v1070 = vmax.f32 %v1062, 0.0
  %1071 = vrot.lane.b32.xlu0 %v501, 11
  %v1072 = vpop.permute.xlu0 %1071
  %1073 = vrot.lane.b32.xlu0 %v502, 11
  %v1074 = vpop.permute.xlu0 %1073
  %v1075 = vsel %vm537, %v1072, %v1074
  %v1078 = vmul.f32 %v1063, %v1072
  %v1079 = vmul.f32 %v1064, %v1075
  %v1080 = vmul.f32 %v1065, %v1072
  %v1081 = vmul.f32 %v1066, %v1075
  %v1082 = vmul.f32 %v1067, %v1072
  %v1083 = vmul.f32 %v1068, %v1075
  %v1084 = vmul.f32 %v1069, %v1072
  %v1085 = vmul.f32 %v1070, %v1075
  %v1086 = vsel %vm537, 0.0, %v1078
  %v1087 = vsel %vm537, 0.0, %v1080
  %v1088 = vsel %vm537, 0.0, %v1082
  %v1089 = vsel %vm537, 0.0, %v1084
  %v1090 = vsel %vm554, %v1079, 0.0
  %v1091 = vsel %vm554, %v1081, 0.0
  %v1092 = vsel %vm554, %v1083, 0.0
  %v1093 = vsel %vm554, %v1085, 0.0
  %1102 = vrot.lane.b32.xlu0 %v1086, 127
  %v1103 = vpop.permute.xlu0 %1102
  %1104 = vrot.lane.b32.xlu0 %v1090, 127
  %v1105 = vpop.permute.xlu0 %1104
  %1106 = vrot.lane.b32.xlu0 %v1087, 127
  %v1107 = vpop.permute.xlu0 %1106
  %1108 = vrot.lane.b32.xlu0 %v1091, 127
  %v1109 = vpop.permute.xlu0 %1108
  %1110 = vrot.lane.b32.xlu0 %v1088, 127
  %v1111 = vpop.permute.xlu0 %1110
  %1112 = vrot.lane.b32.xlu0 %v1092, 127
  %v1113 = vpop.permute.xlu0 %1112
  %1114 = vrot.lane.b32.xlu0 %v1089, 127
  %v1115 = vpop.permute.xlu0 %1114
  %1116 = vrot.lane.b32.xlu0 %v1093, 127
  %v1117 = vpop.permute.xlu0 %1116
  %v1118 = vsel %vm57, %v1103, %v1105
  %v1119 = vsel %vm57, %v1107, %v1109
  %v1120 = vsel %vm57, %v1111, %v1113
  %v1121 = vsel %vm57, %v1115, %v1117
  %1130 = vrot.lane.b32.xlu0 %v1086, 126
  %v1131 = vpop.permute.xlu0 %1130
  %1132 = vrot.lane.b32.xlu0 %v1090, 126
  %v1133 = vpop.permute.xlu0 %1132
  %1134 = vrot.lane.b32.xlu0 %v1087, 126
  %v1135 = vpop.permute.xlu0 %1134
  %1136 = vrot.lane.b32.xlu0 %v1091, 126
  %v1137 = vpop.permute.xlu0 %1136
  %1138 = vrot.lane.b32.xlu0 %v1088, 126
  %v1139 = vpop.permute.xlu0 %1138
  %1140 = vrot.lane.b32.xlu0 %v1092, 126
  %v1141 = vpop.permute.xlu0 %1140
  %1142 = vrot.lane.b32.xlu0 %v1089, 126
  %v1143 = vpop.permute.xlu0 %1142
  %1144 = vrot.lane.b32.xlu0 %v1093, 126
  %v1145 = vpop.permute.xlu0 %1144
  %v1146 = vsel %vm86, %v1131, %v1133
  %v1147 = vsel %vm86, %v1135, %v1137
  %v1148 = vsel %vm86, %v1139, %v1141
  %v1149 = vsel %vm86, %v1143, %v1145
  %1158 = vrot.lane.b32.xlu0 %v1086, 118
  %v1159 = vpop.permute.xlu0 %1158
  %1160 = vrot.lane.b32.xlu0 %v1090, 118
  %v1161 = vpop.permute.xlu0 %1160
  %1162 = vrot.lane.b32.xlu0 %v1087, 118
  %v1163 = vpop.permute.xlu0 %1162
  %1164 = vrot.lane.b32.xlu0 %v1091, 118
  %v1165 = vpop.permute.xlu0 %1164
  %1166 = vrot.lane.b32.xlu0 %v1088, 118
  %v1167 = vpop.permute.xlu0 %1166
  %1168 = vrot.lane.b32.xlu0 %v1092, 118
  %v1169 = vpop.permute.xlu0 %1168
  %1170 = vrot.lane.b32.xlu0 %v1089, 118
  %v1171 = vpop.permute.xlu0 %1170
  %1172 = vrot.lane.b32.xlu0 %v1093, 118
  %v1173 = vpop.permute.xlu0 %1172
  %v1174 = vsel %vm115, %v1159, %v1161
  %v1175 = vsel %vm115, %v1163, %v1165
  %v1176 = vsel %vm115, %v1167, %v1169
  %v1177 = vsel %vm115, %v1171, %v1173
  %1186 = vrot.lane.b32.xlu0 %v1086, 117
  %v1187 = vpop.permute.xlu0 %1186
  %1188 = vrot.lane.b32.xlu0 %v1090, 117
  %v1189 = vpop.permute.xlu0 %1188
  %1190 = vrot.lane.b32.xlu0 %v1087, 117
  %v1191 = vpop.permute.xlu0 %1190
  %1192 = vrot.lane.b32.xlu0 %v1091, 117
  %v1193 = vpop.permute.xlu0 %1192
  %1194 = vrot.lane.b32.xlu0 %v1088, 117
  %v1195 = vpop.permute.xlu0 %1194
  %1196 = vrot.lane.b32.xlu0 %v1092, 117
  %v1197 = vpop.permute.xlu0 %1196
  %1198 = vrot.lane.b32.xlu0 %v1089, 117
  %v1199 = vpop.permute.xlu0 %1198
  %1200 = vrot.lane.b32.xlu0 %v1093, 117
  %v1201 = vpop.permute.xlu0 %1200
  %v1202 = vsel %vm144, %v1187, %v1189
  %v1203 = vsel %vm144, %v1191, %v1193
  %v1204 = vsel %vm144, %v1195, %v1197
  %v1205 = vsel %vm144, %v1199, %v1201
  %1214 = vrot.lane.b32.xlu0 %v1086, 116
  %v1215 = vpop.permute.xlu0 %1214
  %1216 = vrot.lane.b32.xlu0 %v1090, 116
  %v1217 = vpop.permute.xlu0 %1216
  %1218 = vrot.lane.b32.xlu0 %v1087, 116
  %v1219 = vpop.permute.xlu0 %1218
  %1220 = vrot.lane.b32.xlu0 %v1091, 116
  %v1221 = vpop.permute.xlu0 %1220
  %1222 = vrot.lane.b32.xlu0 %v1088, 116
  %v1223 = vpop.permute.xlu0 %1222
  %1224 = vrot.lane.b32.xlu0 %v1092, 116
  %v1225 = vpop.permute.xlu0 %1224
  %1226 = vrot.lane.b32.xlu0 %v1089, 116
  %v1227 = vpop.permute.xlu0 %1226
  %1228 = vrot.lane.b32.xlu0 %v1093, 116
  %v1229 = vpop.permute.xlu0 %1228
  %v1230 = vsel %vm173, %v1215, %v1217
  %v1231 = vsel %vm173, %v1219, %v1221
  %v1232 = vsel %vm173, %v1223, %v1225
  %v1233 = vsel %vm173, %v1227, %v1229
  %1242 = vrot.lane.b32.xlu0 %v1086, 108
  %v1243 = vpop.permute.xlu0 %1242
  %1244 = vrot.lane.b32.xlu0 %v1090, 108
  %v1245 = vpop.permute.xlu0 %1244
  %1246 = vrot.lane.b32.xlu0 %v1087, 108
  %v1247 = vpop.permute.xlu0 %1246
  %1248 = vrot.lane.b32.xlu0 %v1091, 108
  %v1249 = vpop.permute.xlu0 %1248
  %1250 = vrot.lane.b32.xlu0 %v1088, 108
  %v1251 = vpop.permute.xlu0 %1250
  %1252 = vrot.lane.b32.xlu0 %v1092, 108
  %v1253 = vpop.permute.xlu0 %1252
  %1254 = vrot.lane.b32.xlu0 %v1089, 108
  %v1255 = vpop.permute.xlu0 %1254
  %1256 = vrot.lane.b32.xlu0 %v1093, 108
  %v1257 = vpop.permute.xlu0 %1256
  %v1258 = vsel %vm202, %v1243, %v1245
  %v1259 = vsel %vm202, %v1247, %v1249
  %v1260 = vsel %vm202, %v1251, %v1253
  %v1261 = vsel %vm202, %v1255, %v1257
  %1270 = vrot.lane.b32.xlu0 %v1086, 107
  %v1271 = vpop.permute.xlu0 %1270
  %1272 = vrot.lane.b32.xlu0 %v1090, 107
  %v1273 = vpop.permute.xlu0 %1272
  %1274 = vrot.lane.b32.xlu0 %v1087, 107
  %v1275 = vpop.permute.xlu0 %1274
  %1276 = vrot.lane.b32.xlu0 %v1091, 107
  %v1277 = vpop.permute.xlu0 %1276
  %1278 = vrot.lane.b32.xlu0 %v1088, 107
  %v1279 = vpop.permute.xlu0 %1278
  %1280 = vrot.lane.b32.xlu0 %v1092, 107
  %v1281 = vpop.permute.xlu0 %1280
  %1282 = vrot.lane.b32.xlu0 %v1089, 107
  %v1283 = vpop.permute.xlu0 %1282
  %1284 = vrot.lane.b32.xlu0 %v1093, 107
  %v1285 = vpop.permute.xlu0 %1284
  %v1286 = vsel %vm231, %v1271, %v1273
  %v1287 = vsel %vm231, %v1275, %v1277
  %v1288 = vsel %vm231, %v1279, %v1281
  %v1289 = vsel %vm231, %v1283, %v1285
  %1298 = vrot.lane.b32.xlu0 %v1086, 106
  %v1299 = vpop.permute.xlu0 %1298
  %1300 = vrot.lane.b32.xlu0 %v1090, 106
  %v1301 = vpop.permute.xlu0 %1300
  %1302 = vrot.lane.b32.xlu0 %v1087, 106
  %v1303 = vpop.permute.xlu0 %1302
  %1304 = vrot.lane.b32.xlu0 %v1091, 106
  %v1305 = vpop.permute.xlu0 %1304
  %1306 = vrot.lane.b32.xlu0 %v1088, 106
  %v1307 = vpop.permute.xlu0 %1306
  %1308 = vrot.lane.b32.xlu0 %v1092, 106
  %v1309 = vpop.permute.xlu0 %1308
  %1310 = vrot.lane.b32.xlu0 %v1089, 106
  %v1311 = vpop.permute.xlu0 %1310
  %1312 = vrot.lane.b32.xlu0 %v1093, 106
  %v1313 = vpop.permute.xlu0 %1312
  %v1314 = vsel %vm260, %v1299, %v1301
  %v1315 = vsel %vm260, %v1303, %v1305
  %v1316 = vsel %vm260, %v1307, %v1309
  %v1317 = vsel %vm260, %v1311, %v1313
  %v1326 = vpack.c.bf16 %v1087, %v1086
  %v1327 = vpack.c.bf16 %v1091, %v1090
  %v1328 = vpack.c.bf16 %v1089, %v1088
  %v1329 = vpack.c.bf16 %v1093, %v1092
  %v1330 = vpack.c.bf16 %v1119, %v1118
  %v1331 = vpack.c.bf16 %v1109, %v1105
  %v1332 = vpack.c.bf16 %v1121, %v1120
  %v1333 = vpack.c.bf16 %v1117, %v1113
  %v1334 = vpack.c.bf16 %v1147, %v1146
  %v1335 = vpack.c.bf16 %v1137, %v1133
  %v1336 = vpack.c.bf16 %v1149, %v1148
  %v1337 = vpack.c.bf16 %v1145, %v1141
  %v1338 = vpack.c.bf16 %v1175, %v1174
  %v1339 = vpack.c.bf16 %v1165, %v1161
  %v1340 = vpack.c.bf16 %v1177, %v1176
  %v1341 = vpack.c.bf16 %v1173, %v1169
  %v1342 = vpack.c.bf16 %v1203, %v1202
  %v1343 = vpack.c.bf16 %v1193, %v1189
  %v1344 = vpack.c.bf16 %v1205, %v1204
  %v1345 = vpack.c.bf16 %v1201, %v1197
  %v1346 = vpack.c.bf16 %v1231, %v1230
  %v1347 = vpack.c.bf16 %v1221, %v1217
  %v1348 = vpack.c.bf16 %v1233, %v1232
  %v1349 = vpack.c.bf16 %v1229, %v1225
  %v1350 = vpack.c.bf16 %v1259, %v1258
  %v1351 = vpack.c.bf16 %v1249, %v1245
  %v1352 = vpack.c.bf16 %v1261, %v1260
  %v1353 = vpack.c.bf16 %v1257, %v1253
  %v1354 = vpack.c.bf16 %v1287, %v1286
  %v1355 = vpack.c.bf16 %v1277, %v1273
  %v1356 = vpack.c.bf16 %v1289, %v1288
  %v1357 = vpack.c.bf16 %v1285, %v1281
  %v1358 = vpack.c.bf16 %v1315, %v1314
  %v1359 = vpack.c.bf16 %v1305, %v1301
  %v1360 = vpack.c.bf16 %v1317, %v1316
  %v1361 = vpack.c.bf16 %v1313, %v1309
  %s1362 = scalar_lea.vmem %s1, 96
  %v1363 = vld [vmem:[%s1362] sm:$0xff]
  %v1364 = vld [vmem:[%s1362 + $0x8] sm:$0xf]
  %v1365 = vld [vmem:[%s1362 + $0xc] sm:$0xff]
  %v1366 = vld [vmem:[%s1362 + $0x14] sm:$0xf]
  %v1367 = vld [vmem:[%s1362 + $0x18] sm:$0xff]
  %v1368 = vld [vmem:[%s1362 + $0x20] sm:$0xf]
  %v1369 = vld [vmem:[%s1362 + $0x24] sm:$0xff]
  %v1370 = vld [vmem:[%s1362 + $0x2c] sm:$0xf]
  %s1371 = scalar_lea.vmem %s2, 64
  %v1372 = vld [vmem:[%s1371] sm:$0xff]
  %v1373 = vld [vmem:[%s1371 + $0x8] sm:$0xff]
  %v1374 = vld [vmem:[%s1371 + $0x10] sm:$0xff]
  %v1375 = vld [vmem:[%s1371 + $0x18] sm:$0xff]
  %1377 = vset.pattern.permute.xlu0 0
  %1378 = vperm.xlu0 %1377, %v1372
  %v1379 = vpop.permute.xlu0 %1378
  %1382 = vset.pattern.permute.xlu0 0
  %1383 = vperm.xlu0 %1382, %v1373
  %v1384 = vpop.permute.xlu0 %1383
  %1387 = vset.pattern.permute.xlu0 0
  %1388 = vperm.xlu0 %1387, %v1374
  %v1389 = vpop.permute.xlu0 %1388
  %1392 = vset.pattern.permute.xlu0 0
  %1393 = vperm.xlu0 %1392, %v1375
  %v1394 = vpop.permute.xlu0 %1393
  %v1404 = vunpack.c.l.b16 %v1363
  %v1405 = vunpack.c.h.b16 %v1363
  %v1406 = vunpack.c.l.b16 %v1364
  %v1407 = vunpack.c.l.b16 %v1365
  %v1408 = vunpack.c.h.b16 %v1365
  %v1409 = vunpack.c.l.b16 %v1366
  %v1410 = vunpack.c.l.b16 %v1367
  %v1411 = vunpack.c.h.b16 %v1367
  %v1412 = vunpack.c.l.b16 %v1368
  %v1413 = vunpack.c.l.b16 %v1369
  %v1414 = vunpack.c.h.b16 %v1369
  %v1415 = vunpack.c.l.b16 %v1370
  %v1416 = vpack.c.b16 %v1407, %v1404
  %v1417 = vpack.c.b16 %v1408, %v1405
  %v1418 = vpack.c.b16 %v1409, %v1406
  %v1419 = vpack.c.b16 %v1413, %v1410
  %v1420 = vpack.c.b16 %v1414, %v1411
  %v1421 = vpack.c.b16 %v1415, %v1412
  %v1427 = vsel %vm371, %v1418, 0
  %v1430 = vsel %vm371, %v1421, 0
  %1432 = vmatpush.bf16.msra.mxu0 %v1340
  %1433 = vmatpush.bf16.msra.mxu0 %v1338
  %1434 = vmatpush.bf16.msra.mxu0 %v1336
  %1435 = vmatpush.bf16.msra.mxu0 %v1334
  %1436 = vmatpush.bf16.msra.mxu0 %v1332
  %1437 = vmatpush.bf16.msra.mxu0 %v1330
  %1438 = vmatpush.bf16.msra.mxu0 %v1328
  %1439 = vmatpush.bf16.msra.mxu0 %v1326
  %1440 = vmatmul.bf16.gmra.mxu0 %v1416
  %v1441 = vpop.f32.mrf.mxu0
  %v1442 = vadd.f32 %v1379, %v1441
  %v1443 = vpop.f32.mrf.mxu0
  %v1444 = vadd.f32 %v1384, %v1443
  %1445 = vmatmul.bf16.gmra.mxu0 %v1419
  %v1446 = vpop.f32.mrf.mxu0
  %v1447 = vadd.f32 %v1389, %v1446
  %v1448 = vpop.f32.mrf.mxu0
  %v1449 = vadd.f32 %v1394, %v1448
  %1450 = vdwg.mxu0
  %1451 = vmatpush.bf16.msra.mxu0 %v1356
  %1452 = vmatpush.bf16.msra.mxu0 %v1354
  %1453 = vmatpush.bf16.msra.mxu0 %v1352
  %1454 = vmatpush.bf16.msra.mxu0 %v1350
  %1455 = vmatpush.bf16.msra.mxu0 %v1348
  %1456 = vmatpush.bf16.msra.mxu0 %v1346
  %1457 = vmatpush.bf16.msra.mxu0 %v1344
  %1458 = vmatpush.bf16.msra.mxu0 %v1342
  %1459 = vmatmul.bf16.gmra.mxu0 %v1417
  %v1460 = vpop.f32.mrf.mxu0
  %v1461 = vadd.f32 %v1442, %v1460
  %v1462 = vpop.f32.mrf.mxu0
  %v1463 = vadd.f32 %v1444, %v1462
  %1464 = vmatmul.bf16.gmra.mxu0 %v1420
  %v1465 = vpop.f32.mrf.mxu0
  %v1466 = vadd.f32 %v1447, %v1465
  %v1467 = vpop.f32.mrf.mxu0
  %v1468 = vadd.f32 %v1449, %v1467
  %1469 = vdwg.mxu0
  %1470 = vmatpush.bf16.msra.mxu0 0
  %1471 = vmatpush.bf16.msra.mxu0 0
  %1472 = vmatpush.bf16.msra.mxu0 0
  %1473 = vmatpush.bf16.msra.mxu0 0
  %1474 = vmatpush.bf16.msra.mxu0 0
  %1475 = vmatpush.bf16.msra.mxu0 0
  %1476 = vmatpush.bf16.msra.mxu0 %v1360
  %1477 = vmatpush.bf16.msra.mxu0 %v1358
  %1478 = vmatmul.bf16.gmra.mxu0 %v1427
  %v1479 = vpop.f32.mrf.mxu0
  %v1480 = vadd.f32 %v1461, %v1479
  %v1481 = vpop.f32.mrf.mxu0
  %v1482 = vadd.f32 %v1463, %v1481
  %1483 = vmatmul.bf16.gmra.mxu0 %v1430
  %v1484 = vpop.f32.mrf.mxu0
  %v1485 = vadd.f32 %v1466, %v1484
  %v1486 = vpop.f32.mrf.mxu0
  %v1487 = vadd.f32 %v1468, %v1486
  %1488 = vdwg.mxu0
  %1489 = vmatpush.bf16.msra.mxu0 %v1341
  %1490 = vmatpush.bf16.msra.mxu0 %v1339
  %1491 = vmatpush.bf16.msra.mxu0 %v1337
  %1492 = vmatpush.bf16.msra.mxu0 %v1335
  %1493 = vmatpush.bf16.msra.mxu0 %v1333
  %1494 = vmatpush.bf16.msra.mxu0 %v1331
  %1495 = vmatpush.bf16.msra.mxu0 %v1329
  %1496 = vmatpush.bf16.msra.mxu0 %v1327
  %1497 = vmatmul.bf16.gmra.mxu0 %v1416
  %v1498 = vpop.f32.mrf.mxu0
  %v1499 = vadd.f32 %v1379, %v1498
  %v1500 = vpop.f32.mrf.mxu0
  %v1501 = vadd.f32 %v1384, %v1500
  %1502 = vmatmul.bf16.gmra.mxu0 %v1419
  %v1503 = vpop.f32.mrf.mxu0
  %v1504 = vadd.f32 %v1389, %v1503
  %v1505 = vpop.f32.mrf.mxu0
  %v1506 = vadd.f32 %v1394, %v1505
  %1507 = vdwg.mxu0
  %1508 = vmatpush.bf16.msra.mxu0 %v1357
  %1509 = vmatpush.bf16.msra.mxu0 %v1355
  %1510 = vmatpush.bf16.msra.mxu0 %v1353
  %1511 = vmatpush.bf16.msra.mxu0 %v1351
  %1512 = vmatpush.bf16.msra.mxu0 %v1349
  %1513 = vmatpush.bf16.msra.mxu0 %v1347
  %1514 = vmatpush.bf16.msra.mxu0 %v1345
  %1515 = vmatpush.bf16.msra.mxu0 %v1343
  %1516 = vmatmul.bf16.gmra.mxu0 %v1417
  %v1517 = vpop.f32.mrf.mxu0
  %v1518 = vadd.f32 %v1499, %v1517
  %v1519 = vpop.f32.mrf.mxu0
  %v1520 = vadd.f32 %v1501, %v1519
  %1521 = vmatmul.bf16.gmra.mxu0 %v1420
  %v1522 = vpop.f32.mrf.mxu0
  %v1523 = vadd.f32 %v1504, %v1522
  %v1524 = vpop.f32.mrf.mxu0
  %v1525 = vadd.f32 %v1506, %v1524
  %1526 = vdwg.mxu0
  %1527 = vmatpush.bf16.msra.mxu0 0
  %1528 = vmatpush.bf16.msra.mxu0 0
  %1529 = vmatpush.bf16.msra.mxu0 0
  %1530 = vmatpush.bf16.msra.mxu0 0
  %1531 = vmatpush.bf16.msra.mxu0 0
  %1532 = vmatpush.bf16.msra.mxu0 0
  %1533 = vmatpush.bf16.msra.mxu0 %v1361
  %1534 = vmatpush.bf16.msra.mxu0 %v1359
  %1535 = vmatmul.bf16.gmra.mxu0 %v1427
  %v1536 = vpop.f32.mrf.mxu0
  %v1537 = vadd.f32 %v1518, %v1536
  %v1538 = vpop.f32.mrf.mxu0
  %v1539 = vadd.f32 %v1520, %v1538
  %1540 = vmatmul.bf16.gmra.mxu0 %v1430
  %v1541 = vpop.f32.mrf.mxu0
  %v1542 = vadd.f32 %v1523, %v1541
  %v1543 = vpop.f32.mrf.mxu0
  %v1544 = vadd.f32 %v1525, %v1543
  %1545 = vdwg.mxu0
  %v1546 = vmax.f32 %v1480, 0.0
  %v1547 = vmax.f32 %v1537, 0.0
  %v1548 = vmax.f32 %v1482, 0.0
  %v1549 = vmax.f32 %v1539, 0.0
  %v1550 = vmax.f32 %v1485, 0.0
  %v1551 = vmax.f32 %v1542, 0.0
  %v1552 = vmax.f32 %v1487, 0.0
  %v1553 = vmax.f32 %v1544, 0.0
  %v1554 = vmul.f32 %v1546, %v501
  %v1555 = vmul.f32 %v1547, %v502
  %v1556 = vmul.f32 %v1548, %v501
  %v1557 = vmul.f32 %v1549, %v502
  %v1558 = vmul.f32 %v1550, %v501
  %v1559 = vmul.f32 %v1551, %v502
  %v1560 = vmul.f32 %v1552, %v501
  %v1561 = vmul.f32 %v1553, %v502
  %1570 = vrot.lane.b32.xlu0 %v1554, 11
  %v1571 = vpop.permute.xlu0 %1570
  %1572 = vrot.lane.b32.xlu0 %v1555, 11
  %v1573 = vpop.permute.xlu0 %1572
  %1574 = vrot.lane.b32.xlu0 %v1556, 11
  %v1575 = vpop.permute.xlu0 %1574
  %1576 = vrot.lane.b32.xlu0 %v1557, 11
  %v1577 = vpop.permute.xlu0 %1576
  %1578 = vrot.lane.b32.xlu0 %v1558, 11
  %v1579 = vpop.permute.xlu0 %1578
  %1580 = vrot.lane.b32.xlu0 %v1559, 11
  %v1581 = vpop.permute.xlu0 %1580
  %1582 = vrot.lane.b32.xlu0 %v1560, 11
  %v1583 = vpop.permute.xlu0 %1582
  %1584 = vrot.lane.b32.xlu0 %v1561, 11
  %v1585 = vpop.permute.xlu0 %1584
  %v1586 = vsel %vm537, %v1571, %v1573
  %v1587 = vsel %vm537, %v1575, %v1577
  %v1588 = vsel %vm537, %v1579, %v1581
  %v1589 = vsel %vm537, %v1583, %v1585
  %v1598 = vsel %vm537, 0.0, %v1571
  %v1599 = vsel %vm537, 0.0, %v1575
  %v1600 = vsel %vm537, 0.0, %v1579
  %v1601 = vsel %vm537, 0.0, %v1583
  %v1602 = vsel %vm554, %v1586, 0.0
  %v1603 = vsel %vm554, %v1587, 0.0
  %v1604 = vsel %vm554, %v1588, 0.0
  %v1605 = vsel %vm554, %v1589, 0.0
  %1614 = vrot.lane.b32.xlu0 %v1598, 127
  %v1615 = vpop.permute.xlu0 %1614
  %1616 = vrot.lane.b32.xlu0 %v1602, 127
  %v1617 = vpop.permute.xlu0 %1616
  %1618 = vrot.lane.b32.xlu0 %v1599, 127
  %v1619 = vpop.permute.xlu0 %1618
  %1620 = vrot.lane.b32.xlu0 %v1603, 127
  %v1621 = vpop.permute.xlu0 %1620
  %1622 = vrot.lane.b32.xlu0 %v1600, 127
  %v1623 = vpop.permute.xlu0 %1622
  %1624 = vrot.lane.b32.xlu0 %v1604, 127
  %v1625 = vpop.permute.xlu0 %1624
  %1626 = vrot.lane.b32.xlu0 %v1601, 127
  %v1627 = vpop.permute.xlu0 %1626
  %1628 = vrot.lane.b32.xlu0 %v1605, 127
  %v1629 = vpop.permute.xlu0 %1628
  %v1630 = vsel %vm57, %v1615, %v1617
  %v1631 = vsel %vm57, %v1619, %v1621
  %v1632 = vsel %vm57, %v1623, %v1625
  %v1633 = vsel %vm57, %v1627, %v1629
  %1642 = vrot.lane.b32.xlu0 %v1598, 126
  %v1643 = vpop.permute.xlu0 %1642
  %1644 = vrot.lane.b32.xlu0 %v1602, 126
  %v1645 = vpop.permute.xlu0 %1644
  %1646 = vrot.lane.b32.xlu0 %v1599, 126
  %v1647 = vpop.permute.xlu0 %1646
  %1648 = vrot.lane.b32.xlu0 %v1603, 126
  %v1649 = vpop.permute.xlu0 %1648
  %1650 = vrot.lane.b32.xlu0 %v1600, 126
  %v1651 = vpop.permute.xlu0 %1650
  %1652 = vrot.lane.b32.xlu0 %v1604, 126
  %v1653 = vpop.permute.xlu0 %1652
  %1654 = vrot.lane.b32.xlu0 %v1601, 126
  %v1655 = vpop.permute.xlu0 %1654
  %1656 = vrot.lane.b32.xlu0 %v1605, 126
  %v1657 = vpop.permute.xlu0 %1656
  %v1658 = vsel %vm86, %v1643, %v1645
  %v1659 = vsel %vm86, %v1647, %v1649
  %v1660 = vsel %vm86, %v1651, %v1653
  %v1661 = vsel %vm86, %v1655, %v1657
  %1670 = vrot.lane.b32.xlu0 %v1598, 118
  %v1671 = vpop.permute.xlu0 %1670
  %1672 = vrot.lane.b32.xlu0 %v1602, 118
  %v1673 = vpop.permute.xlu0 %1672
  %1674 = vrot.lane.b32.xlu0 %v1599, 118
  %v1675 = vpop.permute.xlu0 %1674
  %1676 = vrot.lane.b32.xlu0 %v1603, 118
  %v1677 = vpop.permute.xlu0 %1676
  %1678 = vrot.lane.b32.xlu0 %v1600, 118
  %v1679 = vpop.permute.xlu0 %1678
  %1680 = vrot.lane.b32.xlu0 %v1604, 118
  %v1681 = vpop.permute.xlu0 %1680
  %1682 = vrot.lane.b32.xlu0 %v1601, 118
  %v1683 = vpop.permute.xlu0 %1682
  %1684 = vrot.lane.b32.xlu0 %v1605, 118
  %v1685 = vpop.permute.xlu0 %1684
  %v1686 = vsel %vm115, %v1671, %v1673
  %v1687 = vsel %vm115, %v1675, %v1677
  %v1688 = vsel %vm115, %v1679, %v1681
  %v1689 = vsel %vm115, %v1683, %v1685
  %1698 = vrot.lane.b32.xlu0 %v1598, 117
  %v1699 = vpop.permute.xlu0 %1698
  %1700 = vrot.lane.b32.xlu0 %v1602, 117
  %v1701 = vpop.permute.xlu0 %1700
  %1702 = vrot.lane.b32.xlu0 %v1599, 117
  %v1703 = vpop.permute.xlu0 %1702
  %1704 = vrot.lane.b32.xlu0 %v1603, 117
  %v1705 = vpop.permute.xlu0 %1704
  %1706 = vrot.lane.b32.xlu0 %v1600, 117
  %v1707 = vpop.permute.xlu0 %1706
  %1708 = vrot.lane.b32.xlu0 %v1604, 117
  %v1709 = vpop.permute.xlu0 %1708
  %1710 = vrot.lane.b32.xlu0 %v1601, 117
  %v1711 = vpop.permute.xlu0 %1710
  %1712 = vrot.lane.b32.xlu0 %v1605, 117
  %v1713 = vpop.permute.xlu0 %1712
  %v1714 = vsel %vm144, %v1699, %v1701
  %v1715 = vsel %vm144, %v1703, %v1705
  %v1716 = vsel %vm144, %v1707, %v1709
  %v1717 = vsel %vm144, %v1711, %v1713
  %1726 = vrot.lane.b32.xlu0 %v1598, 116
  %v1727 = vpop.permute.xlu0 %1726
  %1728 = vrot.lane.b32.xlu0 %v1602, 116
  %v1729 = vpop.permute.xlu0 %1728
  %1730 = vrot.lane.b32.xlu0 %v1599, 116
  %v1731 = vpop.permute.xlu0 %1730
  %1732 = vrot.lane.b32.xlu0 %v1603, 116
  %v1733 = vpop.permute.xlu0 %1732
  %1734 = vrot.lane.b32.xlu0 %v1600, 116
  %v1735 = vpop.permute.xlu0 %1734
  %1736 = vrot.lane.b32.xlu0 %v1604, 116
  %v1737 = vpop.permute.xlu0 %1736
  %1738 = vrot.lane.b32.xlu0 %v1601, 116
  %v1739 = vpop.permute.xlu0 %1738
  %1740 = vrot.lane.b32.xlu0 %v1605, 116
  %v1741 = vpop.permute.xlu0 %1740
  %v1742 = vsel %vm173, %v1727, %v1729
  %v1743 = vsel %vm173, %v1731, %v1733
  %v1744 = vsel %vm173, %v1735, %v1737
  %v1745 = vsel %vm173, %v1739, %v1741
  %1754 = vrot.lane.b32.xlu0 %v1598, 108
  %v1755 = vpop.permute.xlu0 %1754
  %1756 = vrot.lane.b32.xlu0 %v1602, 108
  %v1757 = vpop.permute.xlu0 %1756
  %1758 = vrot.lane.b32.xlu0 %v1599, 108
  %v1759 = vpop.permute.xlu0 %1758
  %1760 = vrot.lane.b32.xlu0 %v1603, 108
  %v1761 = vpop.permute.xlu0 %1760
  %1762 = vrot.lane.b32.xlu0 %v1600, 108
  %v1763 = vpop.permute.xlu0 %1762
  %1764 = vrot.lane.b32.xlu0 %v1604, 108
  %v1765 = vpop.permute.xlu0 %1764
  %1766 = vrot.lane.b32.xlu0 %v1601, 108
  %v1767 = vpop.permute.xlu0 %1766
  %1768 = vrot.lane.b32.xlu0 %v1605, 108
  %v1769 = vpop.permute.xlu0 %1768
  %v1770 = vsel %vm202, %v1755, %v1757
  %v1771 = vsel %vm202, %v1759, %v1761
  %v1772 = vsel %vm202, %v1763, %v1765
  %v1773 = vsel %vm202, %v1767, %v1769
  %1782 = vrot.lane.b32.xlu0 %v1598, 107
  %v1783 = vpop.permute.xlu0 %1782
  %1784 = vrot.lane.b32.xlu0 %v1602, 107
  %v1785 = vpop.permute.xlu0 %1784
  %1786 = vrot.lane.b32.xlu0 %v1599, 107
  %v1787 = vpop.permute.xlu0 %1786
  %1788 = vrot.lane.b32.xlu0 %v1603, 107
  %v1789 = vpop.permute.xlu0 %1788
  %1790 = vrot.lane.b32.xlu0 %v1600, 107
  %v1791 = vpop.permute.xlu0 %1790
  %1792 = vrot.lane.b32.xlu0 %v1604, 107
  %v1793 = vpop.permute.xlu0 %1792
  %1794 = vrot.lane.b32.xlu0 %v1601, 107
  %v1795 = vpop.permute.xlu0 %1794
  %1796 = vrot.lane.b32.xlu0 %v1605, 107
  %v1797 = vpop.permute.xlu0 %1796
  %v1798 = vsel %vm231, %v1783, %v1785
  %v1799 = vsel %vm231, %v1787, %v1789
  %v1800 = vsel %vm231, %v1791, %v1793
  %v1801 = vsel %vm231, %v1795, %v1797
  %1810 = vrot.lane.b32.xlu0 %v1598, 106
  %v1811 = vpop.permute.xlu0 %1810
  %1812 = vrot.lane.b32.xlu0 %v1602, 106
  %v1813 = vpop.permute.xlu0 %1812
  %1814 = vrot.lane.b32.xlu0 %v1599, 106
  %v1815 = vpop.permute.xlu0 %1814
  %1816 = vrot.lane.b32.xlu0 %v1603, 106
  %v1817 = vpop.permute.xlu0 %1816
  %1818 = vrot.lane.b32.xlu0 %v1600, 106
  %v1819 = vpop.permute.xlu0 %1818
  %1820 = vrot.lane.b32.xlu0 %v1604, 106
  %v1821 = vpop.permute.xlu0 %1820
  %1822 = vrot.lane.b32.xlu0 %v1601, 106
  %v1823 = vpop.permute.xlu0 %1822
  %1824 = vrot.lane.b32.xlu0 %v1605, 106
  %v1825 = vpop.permute.xlu0 %1824
  %v1826 = vsel %vm260, %v1811, %v1813
  %v1827 = vsel %vm260, %v1815, %v1817
  %v1828 = vsel %vm260, %v1819, %v1821
  %v1829 = vsel %vm260, %v1823, %v1825
  %v1838 = vpack.c.bf16 %v1599, %v1598
  %v1839 = vpack.c.bf16 %v1603, %v1602
  %v1840 = vpack.c.bf16 %v1601, %v1600
  %v1841 = vpack.c.bf16 %v1605, %v1604
  %v1842 = vpack.c.bf16 %v1631, %v1630
  %v1843 = vpack.c.bf16 %v1621, %v1617
  %v1844 = vpack.c.bf16 %v1633, %v1632
  %v1845 = vpack.c.bf16 %v1629, %v1625
  %v1846 = vpack.c.bf16 %v1659, %v1658
  %v1847 = vpack.c.bf16 %v1649, %v1645
  %v1848 = vpack.c.bf16 %v1661, %v1660
  %v1849 = vpack.c.bf16 %v1657, %v1653
  %v1850 = vpack.c.bf16 %v1687, %v1686
  %v1851 = vpack.c.bf16 %v1677, %v1673
  %v1852 = vpack.c.bf16 %v1689, %v1688
  %v1853 = vpack.c.bf16 %v1685, %v1681
  %v1854 = vpack.c.bf16 %v1715, %v1714
  %v1855 = vpack.c.bf16 %v1705, %v1701
  %v1856 = vpack.c.bf16 %v1717, %v1716
  %v1857 = vpack.c.bf16 %v1713, %v1709
  %v1858 = vpack.c.bf16 %v1743, %v1742
  %v1859 = vpack.c.bf16 %v1733, %v1729
  %v1860 = vpack.c.bf16 %v1745, %v1744
  %v1861 = vpack.c.bf16 %v1741, %v1737
  %v1862 = vpack.c.bf16 %v1771, %v1770
  %v1863 = vpack.c.bf16 %v1761, %v1757
  %v1864 = vpack.c.bf16 %v1773, %v1772
  %v1865 = vpack.c.bf16 %v1769, %v1765
  %v1866 = vpack.c.bf16 %v1799, %v1798
  %v1867 = vpack.c.bf16 %v1789, %v1785
  %v1868 = vpack.c.bf16 %v1801, %v1800
  %v1869 = vpack.c.bf16 %v1797, %v1793
  %v1870 = vpack.c.bf16 %v1827, %v1826
  %v1871 = vpack.c.bf16 %v1817, %v1813
  %v1872 = vpack.c.bf16 %v1829, %v1828
  %v1873 = vpack.c.bf16 %v1825, %v1821
  %s1874 = scalar_lea.vmem %s1, 144
  %v1875 = vld [vmem:[%s1874] sm:$0xff]
  %v1876 = vld [vmem:[%s1874 + $0x8] sm:$0xf]
  %v1877 = vld [vmem:[%s1874 + $0xc] sm:$0xff]
  %v1878 = vld [vmem:[%s1874 + $0x14] sm:$0xf]
  %v1879 = vld [vmem:[%s1874 + $0x18] sm:$0xff]
  %v1880 = vld [vmem:[%s1874 + $0x20] sm:$0xf]
  %v1881 = vld [vmem:[%s1874 + $0x24] sm:$0xff]
  %v1882 = vld [vmem:[%s1874 + $0x2c] sm:$0xf]
  %v1891 = vunpack.c.l.b16 %v1875
  %v1892 = vunpack.c.h.b16 %v1875
  %v1893 = vunpack.c.l.b16 %v1876
  %v1894 = vunpack.c.l.b16 %v1877
  %v1895 = vunpack.c.h.b16 %v1877
  %v1896 = vunpack.c.l.b16 %v1878
  %v1897 = vunpack.c.l.b16 %v1879
  %v1898 = vunpack.c.h.b16 %v1879
  %v1899 = vunpack.c.l.b16 %v1880
  %v1900 = vunpack.c.l.b16 %v1881
  %v1901 = vunpack.c.h.b16 %v1881
  %v1902 = vunpack.c.l.b16 %v1882
  %v1903 = vpack.c.b16 %v1894, %v1891
  %v1904 = vpack.c.b16 %v1895, %v1892
  %v1905 = vpack.c.b16 %v1896, %v1893
  %v1906 = vpack.c.b16 %v1900, %v1897
  %v1907 = vpack.c.b16 %v1901, %v1898
  %v1908 = vpack.c.b16 %v1902, %v1899
  %v1914 = vsel %vm371, %v1905, 0
  %v1917 = vsel %vm371, %v1908, 0
  %1919 = vmatpush.bf16.msra.mxu0 %v1852
  %1920 = vmatpush.bf16.msra.mxu0 %v1850
  %1921 = vmatpush.bf16.msra.mxu0 %v1848
  %1922 = vmatpush.bf16.msra.mxu0 %v1846
  %1923 = vmatpush.bf16.msra.mxu0 %v1844
  %1924 = vmatpush.bf16.msra.mxu0 %v1842
  %1925 = vmatpush.bf16.msra.mxu0 %v1840
  %1926 = vmatpush.bf16.msra.mxu0 %v1838
  %1927 = vmatmul.bf16.gmra.mxu0 %v1903
  %v1928 = vpop.f32.mrf.mxu0
  %v1929 = vadd.f32 0.0, %v1928
  %v1930 = vpop.f32.mrf.mxu0
  %v1931 = vadd.f32 0.0, %v1930
  %1932 = vmatmul.bf16.gmra.mxu0 %v1906
  %v1933 = vpop.f32.mrf.mxu0
  %v1934 = vadd.f32 0.0, %v1933
  %v1935 = vpop.f32.mrf.mxu0
  %v1936 = vadd.f32 0.0, %v1935
  %1937 = vdwg.mxu0
  %1938 = vmatpush.bf16.msra.mxu0 %v1868
  %1939 = vmatpush.bf16.msra.mxu0 %v1866
  %1940 = vmatpush.bf16.msra.mxu0 %v1864
  %1941 = vmatpush.bf16.msra.mxu0 %v1862
  %1942 = vmatpush.bf16.msra.mxu0 %v1860
  %1943 = vmatpush.bf16.msra.mxu0 %v1858
  %1944 = vmatpush.bf16.msra.mxu0 %v1856
  %1945 = vmatpush.bf16.msra.mxu0 %v1854
  %1946 = vmatmul.bf16.gmra.mxu0 %v1904
  %v1947 = vpop.f32.mrf.mxu0
  %v1948 = vadd.f32 %v1929, %v1947
  %v1949 = vpop.f32.mrf.mxu0
  %v1950 = vadd.f32 %v1931, %v1949
  %1951 = vmatmul.bf16.gmra.mxu0 %v1907
  %v1952 = vpop.f32.mrf.mxu0
  %v1953 = vadd.f32 %v1934, %v1952
  %v1954 = vpop.f32.mrf.mxu0
  %v1955 = vadd.f32 %v1936, %v1954
  %1956 = vdwg.mxu0
  %1957 = vmatpush.bf16.msra.mxu0 0
  %1958 = vmatpush.bf16.msra.mxu0 0
  %1959 = vmatpush.bf16.msra.mxu0 0
  %1960 = vmatpush.bf16.msra.mxu0 0
  %1961 = vmatpush.bf16.msra.mxu0 0
  %1962 = vmatpush.bf16.msra.mxu0 0
  %1963 = vmatpush.bf16.msra.mxu0 %v1872
  %1964 = vmatpush.bf16.msra.mxu0 %v1870
  %1965 = vmatmul.bf16.gmra.mxu0 %v1914
  %v1966 = vpop.f32.mrf.mxu0
  %v1967 = vadd.f32 %v1948, %v1966
  %v1968 = vpop.f32.mrf.mxu0
  %v1969 = vadd.f32 %v1950, %v1968
  %1970 = vmatmul.bf16.gmra.mxu0 %v1917
  %v1971 = vpop.f32.mrf.mxu0
  %v1972 = vadd.f32 %v1953, %v1971
  %v1973 = vpop.f32.mrf.mxu0
  %v1974 = vadd.f32 %v1955, %v1973
  %1975 = vdwg.mxu0
  %1976 = vmatpush.bf16.msra.mxu0 %v1853
  %1977 = vmatpush.bf16.msra.mxu0 %v1851
  %1978 = vmatpush.bf16.msra.mxu0 %v1849
  %1979 = vmatpush.bf16.msra.mxu0 %v1847
  %1980 = vmatpush.bf16.msra.mxu0 %v1845
  %1981 = vmatpush.bf16.msra.mxu0 %v1843
  %1982 = vmatpush.bf16.msra.mxu0 %v1841
  %1983 = vmatpush.bf16.msra.mxu0 %v1839
  %1984 = vmatmul.bf16.gmra.mxu0 %v1903
  %v1985 = vpop.f32.mrf.mxu0
  %v1986 = vadd.f32 0.0, %v1985
  %v1987 = vpop.f32.mrf.mxu0
  %v1988 = vadd.f32 0.0, %v1987
  %1989 = vmatmul.bf16.gmra.mxu0 %v1906
  %v1990 = vpop.f32.mrf.mxu0
  %v1991 = vadd.f32 0.0, %v1990
  %v1992 = vpop.f32.mrf.mxu0
  %v1993 = vadd.f32 0.0, %v1992
  %1994 = vdwg.mxu0
  %1995 = vmatpush.bf16.msra.mxu0 %v1869
  %1996 = vmatpush.bf16.msra.mxu0 %v1867
  %1997 = vmatpush.bf16.msra.mxu0 %v1865
  %1998 = vmatpush.bf16.msra.mxu0 %v1863
  %1999 = vmatpush.bf16.msra.mxu0 %v1861
  %2000 = vmatpush.bf16.msra.mxu0 %v1859
  %2001 = vmatpush.bf16.msra.mxu0 %v1857
  %2002 = vmatpush.bf16.msra.mxu0 %v1855
  %2003 = vmatmul.bf16.gmra.mxu0 %v1904
  %v2004 = vpop.f32.mrf.mxu0
  %v2005 = vadd.f32 %v1986, %v2004
  %v2006 = vpop.f32.mrf.mxu0
  %v2007 = vadd.f32 %v1988, %v2006
  %2008 = vmatmul.bf16.gmra.mxu0 %v1907
  %v2009 = vpop.f32.mrf.mxu0
  %v2010 = vadd.f32 %v1991, %v2009
  %v2011 = vpop.f32.mrf.mxu0
  %v2012 = vadd.f32 %v1993, %v2011
  %2013 = vdwg.mxu0
  %2014 = vmatpush.bf16.msra.mxu0 0
  %2015 = vmatpush.bf16.msra.mxu0 0
  %2016 = vmatpush.bf16.msra.mxu0 0
  %2017 = vmatpush.bf16.msra.mxu0 0
  %2018 = vmatpush.bf16.msra.mxu0 0
  %2019 = vmatpush.bf16.msra.mxu0 0
  %2020 = vmatpush.bf16.msra.mxu0 %v1873
  %2021 = vmatpush.bf16.msra.mxu0 %v1871
  %2022 = vmatmul.bf16.gmra.mxu0 %v1914
  %v2023 = vpop.f32.mrf.mxu0
  %v2024 = vadd.f32 %v2005, %v2023
  %v2025 = vpop.f32.mrf.mxu0
  %v2026 = vadd.f32 %v2007, %v2025
  %2027 = vmatmul.bf16.gmra.mxu0 %v1917
  %v2028 = vpop.f32.mrf.mxu0
  %v2029 = vadd.f32 %v2010, %v2028
  %v2030 = vpop.f32.mrf.mxu0
  %v2031 = vadd.f32 %v2012, %v2030
  %2032 = vdwg.mxu0
  %2041 = vrot.lane.b32.xlu0 %v1967, 11
  %v2042 = vpop.permute.xlu0 %2041
  %2043 = vrot.lane.b32.xlu0 %v2024, 11
  %v2044 = vpop.permute.xlu0 %2043
  %2045 = vrot.lane.b32.xlu0 %v1969, 11
  %v2046 = vpop.permute.xlu0 %2045
  %2047 = vrot.lane.b32.xlu0 %v2026, 11
  %v2048 = vpop.permute.xlu0 %2047
  %2049 = vrot.lane.b32.xlu0 %v1972, 11
  %v2050 = vpop.permute.xlu0 %2049
  %2051 = vrot.lane.b32.xlu0 %v2029, 11
  %v2052 = vpop.permute.xlu0 %2051
  %2053 = vrot.lane.b32.xlu0 %v1974, 11
  %v2054 = vpop.permute.xlu0 %2053
  %2055 = vrot.lane.b32.xlu0 %v2031, 11
  %v2056 = vpop.permute.xlu0 %2055
  %v2057 = vsel %vm537, %v2042, %v2044
  %v2058 = vsel %vm537, %v2046, %v2048
  %v2059 = vsel %vm537, %v2050, %v2052
  %v2060 = vsel %vm537, %v2054, %v2056
  %v2069 = vadd.f32 %v1086, %v2042
  %v2070 = vadd.f32 %v1090, %v2057
  %v2071 = vadd.f32 %v1087, %v2046
  %v2072 = vadd.f32 %v1091, %v2058
  %v2073 = vadd.f32 %v1088, %v2050
  %v2074 = vadd.f32 %v1092, %v2059
  %v2075 = vadd.f32 %v1089, %v2054
  %v2076 = vadd.f32 %v1093, %v2060
  %s2077 = scalar_lea.vmem %s2, 96
  %v2078 = vld [vmem:[%s2077] sm:$0xff]
  %v2079 = vld [vmem:[%s2077 + $0x8] sm:$0xff]
  %v2080 = vld [vmem:[%s2077 + $0x10] sm:$0xff]
  %v2081 = vld [vmem:[%s2077 + $0x18] sm:$0xff]
  %2083 = vset.pattern.permute.xlu0 0
  %2084 = vperm.xlu0 %2083, %v2078
  %v2085 = vpop.permute.xlu0 %2084
  %2088 = vset.pattern.permute.xlu0 0
  %2089 = vperm.xlu0 %2088, %v2079
  %v2090 = vpop.permute.xlu0 %2089
  %2093 = vset.pattern.permute.xlu0 0
  %2094 = vperm.xlu0 %2093, %v2080
  %v2095 = vpop.permute.xlu0 %2094
  %2098 = vset.pattern.permute.xlu0 0
  %2099 = vperm.xlu0 %2098, %v2081
  %v2100 = vpop.permute.xlu0 %2099
  %v2102 = vadd.f32 %v2069, %v2085
  %v2103 = vadd.f32 %v2070, %v2085
  %v2104 = vadd.f32 %v2071, %v2090
  %v2105 = vadd.f32 %v2072, %v2090
  %v2106 = vadd.f32 %v2073, %v2095
  %v2107 = vadd.f32 %v2074, %v2095
  %v2108 = vadd.f32 %v2075, %v2100
  %v2109 = vadd.f32 %v2076, %v2100
  %v2110 = vmax.f32 %v2102, 0.0
  %v2111 = vmax.f32 %v2103, 0.0
  %v2112 = vmax.f32 %v2104, 0.0
  %v2113 = vmax.f32 %v2105, 0.0
  %v2114 = vmax.f32 %v2106, 0.0
  %v2115 = vmax.f32 %v2107, 0.0
  %v2116 = vmax.f32 %v2108, 0.0
  %v2117 = vmax.f32 %v2109, 0.0
  %v2118 = vmul.f32 %v2110, %v1072
  %v2119 = vmul.f32 %v2111, %v1075
  %v2120 = vmul.f32 %v2112, %v1072
  %v2121 = vmul.f32 %v2113, %v1075
  %v2122 = vmul.f32 %v2114, %v1072
  %v2123 = vmul.f32 %v2115, %v1075
  %v2124 = vmul.f32 %v2116, %v1072
  %v2125 = vmul.f32 %v2117, %v1075
  %v2126 = vsel %vm537, 0.0, %v2118
  %v2127 = vsel %vm537, 0.0, %v2120
  %v2128 = vsel %vm537, 0.0, %v2122
  %v2129 = vsel %vm537, 0.0, %v2124
  %v2130 = vsel %vm554, %v2119, 0.0
  %v2131 = vsel %vm554, %v2121, 0.0
  %v2132 = vsel %vm554, %v2123, 0.0
  %v2133 = vsel %vm554, %v2125, 0.0
  %2142 = vrot.lane.b32.xlu0 %v2126, 127
  %v2143 = vpop.permute.xlu0 %2142
  %2144 = vrot.lane.b32.xlu0 %v2130, 127
  %v2145 = vpop.permute.xlu0 %2144
  %2146 = vrot.lane.b32.xlu0 %v2127, 127
  %v2147 = vpop.permute.xlu0 %2146
  %2148 = vrot.lane.b32.xlu0 %v2131, 127
  %v2149 = vpop.permute.xlu0 %2148
  %2150 = vrot.lane.b32.xlu0 %v2128, 127
  %v2151 = vpop.permute.xlu0 %2150
  %2152 = vrot.lane.b32.xlu0 %v2132, 127
  %v2153 = vpop.permute.xlu0 %2152
  %2154 = vrot.lane.b32.xlu0 %v2129, 127
  %v2155 = vpop.permute.xlu0 %2154
  %2156 = vrot.lane.b32.xlu0 %v2133, 127
  %v2157 = vpop.permute.xlu0 %2156
  %v2158 = vsel %vm57, %v2143, %v2145
  %v2159 = vsel %vm57, %v2147, %v2149
  %v2160 = vsel %vm57, %v2151, %v2153
  %v2161 = vsel %vm57, %v2155, %v2157
  %2170 = vrot.lane.b32.xlu0 %v2126, 126
  %v2171 = vpop.permute.xlu0 %2170
  %2172 = vrot.lane.b32.xlu0 %v2130, 126
  %v2173 = vpop.permute.xlu0 %2172
  %2174 = vrot.lane.b32.xlu0 %v2127, 126
  %v2175 = vpop.permute.xlu0 %2174
  %2176 = vrot.lane.b32.xlu0 %v2131, 126
  %v2177 = vpop.permute.xlu0 %2176
  %2178 = vrot.lane.b32.xlu0 %v2128, 126
  %v2179 = vpop.permute.xlu0 %2178
  %2180 = vrot.lane.b32.xlu0 %v2132, 126
  %v2181 = vpop.permute.xlu0 %2180
  %2182 = vrot.lane.b32.xlu0 %v2129, 126
  %v2183 = vpop.permute.xlu0 %2182
  %2184 = vrot.lane.b32.xlu0 %v2133, 126
  %v2185 = vpop.permute.xlu0 %2184
  %v2186 = vsel %vm86, %v2171, %v2173
  %v2187 = vsel %vm86, %v2175, %v2177
  %v2188 = vsel %vm86, %v2179, %v2181
  %v2189 = vsel %vm86, %v2183, %v2185
  %2198 = vrot.lane.b32.xlu0 %v2126, 118
  %v2199 = vpop.permute.xlu0 %2198
  %2200 = vrot.lane.b32.xlu0 %v2130, 118
  %v2201 = vpop.permute.xlu0 %2200
  %2202 = vrot.lane.b32.xlu0 %v2127, 118
  %v2203 = vpop.permute.xlu0 %2202
  %2204 = vrot.lane.b32.xlu0 %v2131, 118
  %v2205 = vpop.permute.xlu0 %2204
  %2206 = vrot.lane.b32.xlu0 %v2128, 118
  %v2207 = vpop.permute.xlu0 %2206
  %2208 = vrot.lane.b32.xlu0 %v2132, 118
  %v2209 = vpop.permute.xlu0 %2208
  %2210 = vrot.lane.b32.xlu0 %v2129, 118
  %v2211 = vpop.permute.xlu0 %2210
  %2212 = vrot.lane.b32.xlu0 %v2133, 118
  %v2213 = vpop.permute.xlu0 %2212
  %v2214 = vsel %vm115, %v2199, %v2201
  %v2215 = vsel %vm115, %v2203, %v2205
  %v2216 = vsel %vm115, %v2207, %v2209
  %v2217 = vsel %vm115, %v2211, %v2213
  %2226 = vrot.lane.b32.xlu0 %v2126, 117
  %v2227 = vpop.permute.xlu0 %2226
  %2228 = vrot.lane.b32.xlu0 %v2130, 117
  %v2229 = vpop.permute.xlu0 %2228
  %2230 = vrot.lane.b32.xlu0 %v2127, 117
  %v2231 = vpop.permute.xlu0 %2230
  %2232 = vrot.lane.b32.xlu0 %v2131, 117
  %v2233 = vpop.permute.xlu0 %2232
  %2234 = vrot.lane.b32.xlu0 %v2128, 117
  %v2235 = vpop.permute.xlu0 %2234
  %2236 = vrot.lane.b32.xlu0 %v2132, 117
  %v2237 = vpop.permute.xlu0 %2236
  %2238 = vrot.lane.b32.xlu0 %v2129, 117
  %v2239 = vpop.permute.xlu0 %2238
  %2240 = vrot.lane.b32.xlu0 %v2133, 117
  %v2241 = vpop.permute.xlu0 %2240
  %v2242 = vsel %vm144, %v2227, %v2229
  %v2243 = vsel %vm144, %v2231, %v2233
  %v2244 = vsel %vm144, %v2235, %v2237
  %v2245 = vsel %vm144, %v2239, %v2241
  %2254 = vrot.lane.b32.xlu0 %v2126, 116
  %v2255 = vpop.permute.xlu0 %2254
  %2256 = vrot.lane.b32.xlu0 %v2130, 116
  %v2257 = vpop.permute.xlu0 %2256
  %2258 = vrot.lane.b32.xlu0 %v2127, 116
  %v2259 = vpop.permute.xlu0 %2258
  %2260 = vrot.lane.b32.xlu0 %v2131, 116
  %v2261 = vpop.permute.xlu0 %2260
  %2262 = vrot.lane.b32.xlu0 %v2128, 116
  %v2263 = vpop.permute.xlu0 %2262
  %2264 = vrot.lane.b32.xlu0 %v2132, 116
  %v2265 = vpop.permute.xlu0 %2264
  %2266 = vrot.lane.b32.xlu0 %v2129, 116
  %v2267 = vpop.permute.xlu0 %2266
  %2268 = vrot.lane.b32.xlu0 %v2133, 116
  %v2269 = vpop.permute.xlu0 %2268
  %v2270 = vsel %vm173, %v2255, %v2257
  %v2271 = vsel %vm173, %v2259, %v2261
  %v2272 = vsel %vm173, %v2263, %v2265
  %v2273 = vsel %vm173, %v2267, %v2269
  %2282 = vrot.lane.b32.xlu0 %v2126, 108
  %v2283 = vpop.permute.xlu0 %2282
  %2284 = vrot.lane.b32.xlu0 %v2130, 108
  %v2285 = vpop.permute.xlu0 %2284
  %2286 = vrot.lane.b32.xlu0 %v2127, 108
  %v2287 = vpop.permute.xlu0 %2286
  %2288 = vrot.lane.b32.xlu0 %v2131, 108
  %v2289 = vpop.permute.xlu0 %2288
  %2290 = vrot.lane.b32.xlu0 %v2128, 108
  %v2291 = vpop.permute.xlu0 %2290
  %2292 = vrot.lane.b32.xlu0 %v2132, 108
  %v2293 = vpop.permute.xlu0 %2292
  %2294 = vrot.lane.b32.xlu0 %v2129, 108
  %v2295 = vpop.permute.xlu0 %2294
  %2296 = vrot.lane.b32.xlu0 %v2133, 108
  %v2297 = vpop.permute.xlu0 %2296
  %v2298 = vsel %vm202, %v2283, %v2285
  %v2299 = vsel %vm202, %v2287, %v2289
  %v2300 = vsel %vm202, %v2291, %v2293
  %v2301 = vsel %vm202, %v2295, %v2297
  %2310 = vrot.lane.b32.xlu0 %v2126, 107
  %v2311 = vpop.permute.xlu0 %2310
  %2312 = vrot.lane.b32.xlu0 %v2130, 107
  %v2313 = vpop.permute.xlu0 %2312
  %2314 = vrot.lane.b32.xlu0 %v2127, 107
  %v2315 = vpop.permute.xlu0 %2314
  %2316 = vrot.lane.b32.xlu0 %v2131, 107
  %v2317 = vpop.permute.xlu0 %2316
  %2318 = vrot.lane.b32.xlu0 %v2128, 107
  %v2319 = vpop.permute.xlu0 %2318
  %2320 = vrot.lane.b32.xlu0 %v2132, 107
  %v2321 = vpop.permute.xlu0 %2320
  %2322 = vrot.lane.b32.xlu0 %v2129, 107
  %v2323 = vpop.permute.xlu0 %2322
  %2324 = vrot.lane.b32.xlu0 %v2133, 107
  %v2325 = vpop.permute.xlu0 %2324
  %v2326 = vsel %vm231, %v2311, %v2313
  %v2327 = vsel %vm231, %v2315, %v2317
  %v2328 = vsel %vm231, %v2319, %v2321
  %v2329 = vsel %vm231, %v2323, %v2325
  %2338 = vrot.lane.b32.xlu0 %v2126, 106
  %v2339 = vpop.permute.xlu0 %2338
  %2340 = vrot.lane.b32.xlu0 %v2130, 106
  %v2341 = vpop.permute.xlu0 %2340
  %2342 = vrot.lane.b32.xlu0 %v2127, 106
  %v2343 = vpop.permute.xlu0 %2342
  %2344 = vrot.lane.b32.xlu0 %v2131, 106
  %v2345 = vpop.permute.xlu0 %2344
  %2346 = vrot.lane.b32.xlu0 %v2128, 106
  %v2347 = vpop.permute.xlu0 %2346
  %2348 = vrot.lane.b32.xlu0 %v2132, 106
  %v2349 = vpop.permute.xlu0 %2348
  %2350 = vrot.lane.b32.xlu0 %v2129, 106
  %v2351 = vpop.permute.xlu0 %2350
  %2352 = vrot.lane.b32.xlu0 %v2133, 106
  %v2353 = vpop.permute.xlu0 %2352
  %v2354 = vsel %vm260, %v2339, %v2341
  %v2355 = vsel %vm260, %v2343, %v2345
  %v2356 = vsel %vm260, %v2347, %v2349
  %v2357 = vsel %vm260, %v2351, %v2353
  %v2366 = vpack.c.bf16 %v2127, %v2126
  %v2367 = vpack.c.bf16 %v2131, %v2130
  %v2368 = vpack.c.bf16 %v2129, %v2128
  %v2369 = vpack.c.bf16 %v2133, %v2132
  %v2370 = vpack.c.bf16 %v2159, %v2158
  %v2371 = vpack.c.bf16 %v2149, %v2145
  %v2372 = vpack.c.bf16 %v2161, %v2160
  %v2373 = vpack.c.bf16 %v2157, %v2153
  %v2374 = vpack.c.bf16 %v2187, %v2186
  %v2375 = vpack.c.bf16 %v2177, %v2173
  %v2376 = vpack.c.bf16 %v2189, %v2188
  %v2377 = vpack.c.bf16 %v2185, %v2181
  %v2378 = vpack.c.bf16 %v2215, %v2214
  %v2379 = vpack.c.bf16 %v2205, %v2201
  %v2380 = vpack.c.bf16 %v2217, %v2216
  %v2381 = vpack.c.bf16 %v2213, %v2209
  %v2382 = vpack.c.bf16 %v2243, %v2242
  %v2383 = vpack.c.bf16 %v2233, %v2229
  %v2384 = vpack.c.bf16 %v2245, %v2244
  %v2385 = vpack.c.bf16 %v2241, %v2237
  %v2386 = vpack.c.bf16 %v2271, %v2270
  %v2387 = vpack.c.bf16 %v2261, %v2257
  %v2388 = vpack.c.bf16 %v2273, %v2272
  %v2389 = vpack.c.bf16 %v2269, %v2265
  %v2390 = vpack.c.bf16 %v2299, %v2298
  %v2391 = vpack.c.bf16 %v2289, %v2285
  %v2392 = vpack.c.bf16 %v2301, %v2300
  %v2393 = vpack.c.bf16 %v2297, %v2293
  %v2394 = vpack.c.bf16 %v2327, %v2326
  %v2395 = vpack.c.bf16 %v2317, %v2313
  %v2396 = vpack.c.bf16 %v2329, %v2328
  %v2397 = vpack.c.bf16 %v2325, %v2321
  %v2398 = vpack.c.bf16 %v2355, %v2354
  %v2399 = vpack.c.bf16 %v2345, %v2341
  %v2400 = vpack.c.bf16 %v2357, %v2356
  %v2401 = vpack.c.bf16 %v2353, %v2349
  %s2402 = scalar_lea.vmem %s1, 192
  %v2403 = vld [vmem:[%s2402] sm:$0xff]
  %v2404 = vld [vmem:[%s2402 + $0x8] sm:$0xf]
  %v2405 = vld [vmem:[%s2402 + $0xc] sm:$0xff]
  %v2406 = vld [vmem:[%s2402 + $0x14] sm:$0xf]
  %v2407 = vld [vmem:[%s2402 + $0x18] sm:$0xff]
  %v2408 = vld [vmem:[%s2402 + $0x20] sm:$0xf]
  %v2409 = vld [vmem:[%s2402 + $0x24] sm:$0xff]
  %v2410 = vld [vmem:[%s2402 + $0x2c] sm:$0xf]
  %s2411 = scalar_lea.vmem %s2, 128
  %v2412 = vld [vmem:[%s2411] sm:$0xff]
  %v2413 = vld [vmem:[%s2411 + $0x8] sm:$0xff]
  %v2414 = vld [vmem:[%s2411 + $0x10] sm:$0xff]
  %v2415 = vld [vmem:[%s2411 + $0x18] sm:$0xff]
  %2417 = vset.pattern.permute.xlu0 0
  %2418 = vperm.xlu0 %2417, %v2412
  %v2419 = vpop.permute.xlu0 %2418
  %2422 = vset.pattern.permute.xlu0 0
  %2423 = vperm.xlu0 %2422, %v2413
  %v2424 = vpop.permute.xlu0 %2423
  %2427 = vset.pattern.permute.xlu0 0
  %2428 = vperm.xlu0 %2427, %v2414
  %v2429 = vpop.permute.xlu0 %2428
  %2432 = vset.pattern.permute.xlu0 0
  %2433 = vperm.xlu0 %2432, %v2415
  %v2434 = vpop.permute.xlu0 %2433
  %v2444 = vunpack.c.l.b16 %v2403
  %v2445 = vunpack.c.h.b16 %v2403
  %v2446 = vunpack.c.l.b16 %v2404
  %v2447 = vunpack.c.l.b16 %v2405
  %v2448 = vunpack.c.h.b16 %v2405
  %v2449 = vunpack.c.l.b16 %v2406
  %v2450 = vunpack.c.l.b16 %v2407
  %v2451 = vunpack.c.h.b16 %v2407
  %v2452 = vunpack.c.l.b16 %v2408
  %v2453 = vunpack.c.l.b16 %v2409
  %v2454 = vunpack.c.h.b16 %v2409
  %v2455 = vunpack.c.l.b16 %v2410
  %v2456 = vpack.c.b16 %v2447, %v2444
  %v2457 = vpack.c.b16 %v2448, %v2445
  %v2458 = vpack.c.b16 %v2449, %v2446
  %v2459 = vpack.c.b16 %v2453, %v2450
  %v2460 = vpack.c.b16 %v2454, %v2451
  %v2461 = vpack.c.b16 %v2455, %v2452
  %v2467 = vsel %vm371, %v2458, 0
  %v2470 = vsel %vm371, %v2461, 0
  %2472 = vmatpush.bf16.msra.mxu0 %v2380
  %2473 = vmatpush.bf16.msra.mxu0 %v2378
  %2474 = vmatpush.bf16.msra.mxu0 %v2376
  %2475 = vmatpush.bf16.msra.mxu0 %v2374
  %2476 = vmatpush.bf16.msra.mxu0 %v2372
  %2477 = vmatpush.bf16.msra.mxu0 %v2370
  %2478 = vmatpush.bf16.msra.mxu0 %v2368
  %2479 = vmatpush.bf16.msra.mxu0 %v2366
  %2480 = vmatmul.bf16.gmra.mxu0 %v2456
  %v2481 = vpop.f32.mrf.mxu0
  %v2482 = vadd.f32 %v2419, %v2481
  %v2483 = vpop.f32.mrf.mxu0
  %v2484 = vadd.f32 %v2424, %v2483
  %2485 = vmatmul.bf16.gmra.mxu0 %v2459
  %v2486 = vpop.f32.mrf.mxu0
  %v2487 = vadd.f32 %v2429, %v2486
  %v2488 = vpop.f32.mrf.mxu0
  %v2489 = vadd.f32 %v2434, %v2488
  %2490 = vdwg.mxu0
  %2491 = vmatpush.bf16.msra.mxu0 %v2396
  %2492 = vmatpush.bf16.msra.mxu0 %v2394
  %2493 = vmatpush.bf16.msra.mxu0 %v2392
  %2494 = vmatpush.bf16.msra.mxu0 %v2390
  %2495 = vmatpush.bf16.msra.mxu0 %v2388
  %2496 = vmatpush.bf16.msra.mxu0 %v2386
  %2497 = vmatpush.bf16.msra.mxu0 %v2384
  %2498 = vmatpush.bf16.msra.mxu0 %v2382
  %2499 = vmatmul.bf16.gmra.mxu0 %v2457
  %v2500 = vpop.f32.mrf.mxu0
  %v2501 = vadd.f32 %v2482, %v2500
  %v2502 = vpop.f32.mrf.mxu0
  %v2503 = vadd.f32 %v2484, %v2502
  %2504 = vmatmul.bf16.gmra.mxu0 %v2460
  %v2505 = vpop.f32.mrf.mxu0
  %v2506 = vadd.f32 %v2487, %v2505
  %v2507 = vpop.f32.mrf.mxu0
  %v2508 = vadd.f32 %v2489, %v2507
  %2509 = vdwg.mxu0
  %2510 = vmatpush.bf16.msra.mxu0 0
  %2511 = vmatpush.bf16.msra.mxu0 0
  %2512 = vmatpush.bf16.msra.mxu0 0
  %2513 = vmatpush.bf16.msra.mxu0 0
  %2514 = vmatpush.bf16.msra.mxu0 0
  %2515 = vmatpush.bf16.msra.mxu0 0
  %2516 = vmatpush.bf16.msra.mxu0 %v2400
  %2517 = vmatpush.bf16.msra.mxu0 %v2398
  %2518 = vmatmul.bf16.gmra.mxu0 %v2467
  %v2519 = vpop.f32.mrf.mxu0
  %v2520 = vadd.f32 %v2501, %v2519
  %v2521 = vpop.f32.mrf.mxu0
  %v2522 = vadd.f32 %v2503, %v2521
  %2523 = vmatmul.bf16.gmra.mxu0 %v2470
  %v2524 = vpop.f32.mrf.mxu0
  %v2525 = vadd.f32 %v2506, %v2524
  %v2526 = vpop.f32.mrf.mxu0
  %v2527 = vadd.f32 %v2508, %v2526
  %2528 = vdwg.mxu0
  %2529 = vmatpush.bf16.msra.mxu0 %v2381
  %2530 = vmatpush.bf16.msra.mxu0 %v2379
  %2531 = vmatpush.bf16.msra.mxu0 %v2377
  %2532 = vmatpush.bf16.msra.mxu0 %v2375
  %2533 = vmatpush.bf16.msra.mxu0 %v2373
  %2534 = vmatpush.bf16.msra.mxu0 %v2371
  %2535 = vmatpush.bf16.msra.mxu0 %v2369
  %2536 = vmatpush.bf16.msra.mxu0 %v2367
  %2537 = vmatmul.bf16.gmra.mxu0 %v2456
  %v2538 = vpop.f32.mrf.mxu0
  %v2539 = vadd.f32 %v2419, %v2538
  %v2540 = vpop.f32.mrf.mxu0
  %v2541 = vadd.f32 %v2424, %v2540
  %2542 = vmatmul.bf16.gmra.mxu0 %v2459
  %v2543 = vpop.f32.mrf.mxu0
  %v2544 = vadd.f32 %v2429, %v2543
  %v2545 = vpop.f32.mrf.mxu0
  %v2546 = vadd.f32 %v2434, %v2545
  %2547 = vdwg.mxu0
  %2548 = vmatpush.bf16.msra.mxu0 %v2397
  %2549 = vmatpush.bf16.msra.mxu0 %v2395
  %2550 = vmatpush.bf16.msra.mxu0 %v2393
  %2551 = vmatpush.bf16.msra.mxu0 %v2391
  %2552 = vmatpush.bf16.msra.mxu0 %v2389
  %2553 = vmatpush.bf16.msra.mxu0 %v2387
  %2554 = vmatpush.bf16.msra.mxu0 %v2385
  %2555 = vmatpush.bf16.msra.mxu0 %v2383
  %2556 = vmatmul.bf16.gmra.mxu0 %v2457
  %v2557 = vpop.f32.mrf.mxu0
  %v2558 = vadd.f32 %v2539, %v2557
  %v2559 = vpop.f32.mrf.mxu0
  %v2560 = vadd.f32 %v2541, %v2559
  %2561 = vmatmul.bf16.gmra.mxu0 %v2460
  %v2562 = vpop.f32.mrf.mxu0
  %v2563 = vadd.f32 %v2544, %v2562
  %v2564 = vpop.f32.mrf.mxu0
  %v2565 = vadd.f32 %v2546, %v2564
  %2566 = vdwg.mxu0
  %2567 = vmatpush.bf16.msra.mxu0 0
  %2568 = vmatpush.bf16.msra.mxu0 0
  %2569 = vmatpush.bf16.msra.mxu0 0
  %2570 = vmatpush.bf16.msra.mxu0 0
  %2571 = vmatpush.bf16.msra.mxu0 0
  %2572 = vmatpush.bf16.msra.mxu0 0
  %2573 = vmatpush.bf16.msra.mxu0 %v2401
  %2574 = vmatpush.bf16.msra.mxu0 %v2399
  %2575 = vmatmul.bf16.gmra.mxu0 %v2467
  %v2576 = vpop.f32.mrf.mxu0
  %v2577 = vadd.f32 %v2558, %v2576
  %v2578 = vpop.f32.mrf.mxu0
  %v2579 = vadd.f32 %v2560, %v2578
  %2580 = vmatmul.bf16.gmra.mxu0 %v2470
  %v2581 = vpop.f32.mrf.mxu0
  %v2582 = vadd.f32 %v2563, %v2581
  %v2583 = vpop.f32.mrf.mxu0
  %v2584 = vadd.f32 %v2565, %v2583
  %2585 = vdwg.mxu0
  %v2586 = vmax.f32 %v2520, 0.0
  %v2587 = vmax.f32 %v2577, 0.0
  %v2588 = vmax.f32 %v2522, 0.0
  %v2589 = vmax.f32 %v2579, 0.0
  %v2590 = vmax.f32 %v2525, 0.0
  %v2591 = vmax.f32 %v2582, 0.0
  %v2592 = vmax.f32 %v2527, 0.0
  %v2593 = vmax.f32 %v2584, 0.0
  %v2594 = vmul.f32 %v2586, %v501
  %v2595 = vmul.f32 %v2587, %v502
  %v2596 = vmul.f32 %v2588, %v501
  %v2597 = vmul.f32 %v2589, %v502
  %v2598 = vmul.f32 %v2590, %v501
  %v2599 = vmul.f32 %v2591, %v502
  %v2600 = vmul.f32 %v2592, %v501
  %v2601 = vmul.f32 %v2593, %v502
  %2610 = vrot.lane.b32.xlu0 %v2594, 11
  %v2611 = vpop.permute.xlu0 %2610
  %2612 = vrot.lane.b32.xlu0 %v2595, 11
  %v2613 = vpop.permute.xlu0 %2612
  %2614 = vrot.lane.b32.xlu0 %v2596, 11
  %v2615 = vpop.permute.xlu0 %2614
  %2616 = vrot.lane.b32.xlu0 %v2597, 11
  %v2617 = vpop.permute.xlu0 %2616
  %2618 = vrot.lane.b32.xlu0 %v2598, 11
  %v2619 = vpop.permute.xlu0 %2618
  %2620 = vrot.lane.b32.xlu0 %v2599, 11
  %v2621 = vpop.permute.xlu0 %2620
  %2622 = vrot.lane.b32.xlu0 %v2600, 11
  %v2623 = vpop.permute.xlu0 %2622
  %2624 = vrot.lane.b32.xlu0 %v2601, 11
  %v2625 = vpop.permute.xlu0 %2624
  %v2626 = vsel %vm537, %v2611, %v2613
  %v2627 = vsel %vm537, %v2615, %v2617
  %v2628 = vsel %vm537, %v2619, %v2621
  %v2629 = vsel %vm537, %v2623, %v2625
  %v2638 = vsel %vm537, 0.0, %v2611
  %v2639 = vsel %vm537, 0.0, %v2615
  %v2640 = vsel %vm537, 0.0, %v2619
  %v2641 = vsel %vm537, 0.0, %v2623
  %v2642 = vsel %vm554, %v2626, 0.0
  %v2643 = vsel %vm554, %v2627, 0.0
  %v2644 = vsel %vm554, %v2628, 0.0
  %v2645 = vsel %vm554, %v2629, 0.0
  %2654 = vrot.lane.b32.xlu0 %v2638, 127
  %v2655 = vpop.permute.xlu0 %2654
  %2656 = vrot.lane.b32.xlu0 %v2642, 127
  %v2657 = vpop.permute.xlu0 %2656
  %2658 = vrot.lane.b32.xlu0 %v2639, 127
  %v2659 = vpop.permute.xlu0 %2658
  %2660 = vrot.lane.b32.xlu0 %v2643, 127
  %v2661 = vpop.permute.xlu0 %2660
  %2662 = vrot.lane.b32.xlu0 %v2640, 127
  %v2663 = vpop.permute.xlu0 %2662
  %2664 = vrot.lane.b32.xlu0 %v2644, 127
  %v2665 = vpop.permute.xlu0 %2664
  %2666 = vrot.lane.b32.xlu0 %v2641, 127
  %v2667 = vpop.permute.xlu0 %2666
  %2668 = vrot.lane.b32.xlu0 %v2645, 127
  %v2669 = vpop.permute.xlu0 %2668
  %v2670 = vsel %vm57, %v2655, %v2657
  %v2671 = vsel %vm57, %v2659, %v2661
  %v2672 = vsel %vm57, %v2663, %v2665
  %v2673 = vsel %vm57, %v2667, %v2669
  %2682 = vrot.lane.b32.xlu0 %v2638, 126
  %v2683 = vpop.permute.xlu0 %2682
  %2684 = vrot.lane.b32.xlu0 %v2642, 126
  %v2685 = vpop.permute.xlu0 %2684
  %2686 = vrot.lane.b32.xlu0 %v2639, 126
  %v2687 = vpop.permute.xlu0 %2686
  %2688 = vrot.lane.b32.xlu0 %v2643, 126
  %v2689 = vpop.permute.xlu0 %2688
  %2690 = vrot.lane.b32.xlu0 %v2640, 126
  %v2691 = vpop.permute.xlu0 %2690
  %2692 = vrot.lane.b32.xlu0 %v2644, 126
  %v2693 = vpop.permute.xlu0 %2692
  %2694 = vrot.lane.b32.xlu0 %v2641, 126
  %v2695 = vpop.permute.xlu0 %2694
  %2696 = vrot.lane.b32.xlu0 %v2645, 126
  %v2697 = vpop.permute.xlu0 %2696
  %v2698 = vsel %vm86, %v2683, %v2685
  %v2699 = vsel %vm86, %v2687, %v2689
  %v2700 = vsel %vm86, %v2691, %v2693
  %v2701 = vsel %vm86, %v2695, %v2697
  %2710 = vrot.lane.b32.xlu0 %v2638, 118
  %v2711 = vpop.permute.xlu0 %2710
  %2712 = vrot.lane.b32.xlu0 %v2642, 118
  %v2713 = vpop.permute.xlu0 %2712
  %2714 = vrot.lane.b32.xlu0 %v2639, 118
  %v2715 = vpop.permute.xlu0 %2714
  %2716 = vrot.lane.b32.xlu0 %v2643, 118
  %v2717 = vpop.permute.xlu0 %2716
  %2718 = vrot.lane.b32.xlu0 %v2640, 118
  %v2719 = vpop.permute.xlu0 %2718
  %2720 = vrot.lane.b32.xlu0 %v2644, 118
  %v2721 = vpop.permute.xlu0 %2720
  %2722 = vrot.lane.b32.xlu0 %v2641, 118
  %v2723 = vpop.permute.xlu0 %2722
  %2724 = vrot.lane.b32.xlu0 %v2645, 118
  %v2725 = vpop.permute.xlu0 %2724
  %v2726 = vsel %vm115, %v2711, %v2713
  %v2727 = vsel %vm115, %v2715, %v2717
  %v2728 = vsel %vm115, %v2719, %v2721
  %v2729 = vsel %vm115, %v2723, %v2725
  %2738 = vrot.lane.b32.xlu0 %v2638, 117
  %v2739 = vpop.permute.xlu0 %2738
  %2740 = vrot.lane.b32.xlu0 %v2642, 117
  %v2741 = vpop.permute.xlu0 %2740
  %2742 = vrot.lane.b32.xlu0 %v2639, 117
  %v2743 = vpop.permute.xlu0 %2742
  %2744 = vrot.lane.b32.xlu0 %v2643, 117
  %v2745 = vpop.permute.xlu0 %2744
  %2746 = vrot.lane.b32.xlu0 %v2640, 117
  %v2747 = vpop.permute.xlu0 %2746
  %2748 = vrot.lane.b32.xlu0 %v2644, 117
  %v2749 = vpop.permute.xlu0 %2748
  %2750 = vrot.lane.b32.xlu0 %v2641, 117
  %v2751 = vpop.permute.xlu0 %2750
  %2752 = vrot.lane.b32.xlu0 %v2645, 117
  %v2753 = vpop.permute.xlu0 %2752
  %v2754 = vsel %vm144, %v2739, %v2741
  %v2755 = vsel %vm144, %v2743, %v2745
  %v2756 = vsel %vm144, %v2747, %v2749
  %v2757 = vsel %vm144, %v2751, %v2753
  %2766 = vrot.lane.b32.xlu0 %v2638, 116
  %v2767 = vpop.permute.xlu0 %2766
  %2768 = vrot.lane.b32.xlu0 %v2642, 116
  %v2769 = vpop.permute.xlu0 %2768
  %2770 = vrot.lane.b32.xlu0 %v2639, 116
  %v2771 = vpop.permute.xlu0 %2770
  %2772 = vrot.lane.b32.xlu0 %v2643, 116
  %v2773 = vpop.permute.xlu0 %2772
  %2774 = vrot.lane.b32.xlu0 %v2640, 116
  %v2775 = vpop.permute.xlu0 %2774
  %2776 = vrot.lane.b32.xlu0 %v2644, 116
  %v2777 = vpop.permute.xlu0 %2776
  %2778 = vrot.lane.b32.xlu0 %v2641, 116
  %v2779 = vpop.permute.xlu0 %2778
  %2780 = vrot.lane.b32.xlu0 %v2645, 116
  %v2781 = vpop.permute.xlu0 %2780
  %v2782 = vsel %vm173, %v2767, %v2769
  %v2783 = vsel %vm173, %v2771, %v2773
  %v2784 = vsel %vm173, %v2775, %v2777
  %v2785 = vsel %vm173, %v2779, %v2781
  %2794 = vrot.lane.b32.xlu0 %v2638, 108
  %v2795 = vpop.permute.xlu0 %2794
  %2796 = vrot.lane.b32.xlu0 %v2642, 108
  %v2797 = vpop.permute.xlu0 %2796
  %2798 = vrot.lane.b32.xlu0 %v2639, 108
  %v2799 = vpop.permute.xlu0 %2798
  %2800 = vrot.lane.b32.xlu0 %v2643, 108
  %v2801 = vpop.permute.xlu0 %2800
  %2802 = vrot.lane.b32.xlu0 %v2640, 108
  %v2803 = vpop.permute.xlu0 %2802
  %2804 = vrot.lane.b32.xlu0 %v2644, 108
  %v2805 = vpop.permute.xlu0 %2804
  %2806 = vrot.lane.b32.xlu0 %v2641, 108
  %v2807 = vpop.permute.xlu0 %2806
  %2808 = vrot.lane.b32.xlu0 %v2645, 108
  %v2809 = vpop.permute.xlu0 %2808
  %v2810 = vsel %vm202, %v2795, %v2797
  %v2811 = vsel %vm202, %v2799, %v2801
  %v2812 = vsel %vm202, %v2803, %v2805
  %v2813 = vsel %vm202, %v2807, %v2809
  %2822 = vrot.lane.b32.xlu0 %v2638, 107
  %v2823 = vpop.permute.xlu0 %2822
  %2824 = vrot.lane.b32.xlu0 %v2642, 107
  %v2825 = vpop.permute.xlu0 %2824
  %2826 = vrot.lane.b32.xlu0 %v2639, 107
  %v2827 = vpop.permute.xlu0 %2826
  %2828 = vrot.lane.b32.xlu0 %v2643, 107
  %v2829 = vpop.permute.xlu0 %2828
  %2830 = vrot.lane.b32.xlu0 %v2640, 107
  %v2831 = vpop.permute.xlu0 %2830
  %2832 = vrot.lane.b32.xlu0 %v2644, 107
  %v2833 = vpop.permute.xlu0 %2832
  %2834 = vrot.lane.b32.xlu0 %v2641, 107
  %v2835 = vpop.permute.xlu0 %2834
  %2836 = vrot.lane.b32.xlu0 %v2645, 107
  %v2837 = vpop.permute.xlu0 %2836
  %v2838 = vsel %vm231, %v2823, %v2825
  %v2839 = vsel %vm231, %v2827, %v2829
  %v2840 = vsel %vm231, %v2831, %v2833
  %v2841 = vsel %vm231, %v2835, %v2837
  %2850 = vrot.lane.b32.xlu0 %v2638, 106
  %v2851 = vpop.permute.xlu0 %2850
  %2852 = vrot.lane.b32.xlu0 %v2642, 106
  %v2853 = vpop.permute.xlu0 %2852
  %2854 = vrot.lane.b32.xlu0 %v2639, 106
  %v2855 = vpop.permute.xlu0 %2854
  %2856 = vrot.lane.b32.xlu0 %v2643, 106
  %v2857 = vpop.permute.xlu0 %2856
  %2858 = vrot.lane.b32.xlu0 %v2640, 106
  %v2859 = vpop.permute.xlu0 %2858
  %2860 = vrot.lane.b32.xlu0 %v2644, 106
  %v2861 = vpop.permute.xlu0 %2860
  %2862 = vrot.lane.b32.xlu0 %v2641, 106
  %v2863 = vpop.permute.xlu0 %2862
  %2864 = vrot.lane.b32.xlu0 %v2645, 106
  %v2865 = vpop.permute.xlu0 %2864
  %v2866 = vsel %vm260, %v2851, %v2853
  %v2867 = vsel %vm260, %v2855, %v2857
  %v2868 = vsel %vm260, %v2859, %v2861
  %v2869 = vsel %vm260, %v2863, %v2865
  %v2878 = vpack.c.bf16 %v2639, %v2638
  %v2879 = vpack.c.bf16 %v2643, %v2642
  %v2880 = vpack.c.bf16 %v2641, %v2640
  %v2881 = vpack.c.bf16 %v2645, %v2644
  %v2882 = vpack.c.bf16 %v2671, %v2670
  %v2883 = vpack.c.bf16 %v2661, %v2657
  %v2884 = vpack.c.bf16 %v2673, %v2672
  %v2885 = vpack.c.bf16 %v2669, %v2665
  %v2886 = vpack.c.bf16 %v2699, %v2698
  %v2887 = vpack.c.bf16 %v2689, %v2685
  %v2888 = vpack.c.bf16 %v2701, %v2700
  %v2889 = vpack.c.bf16 %v2697, %v2693
  %v2890 = vpack.c.bf16 %v2727, %v2726
  %v2891 = vpack.c.bf16 %v2717, %v2713
  %v2892 = vpack.c.bf16 %v2729, %v2728
  %v2893 = vpack.c.bf16 %v2725, %v2721
  %v2894 = vpack.c.bf16 %v2755, %v2754
  %v2895 = vpack.c.bf16 %v2745, %v2741
  %v2896 = vpack.c.bf16 %v2757, %v2756
  %v2897 = vpack.c.bf16 %v2753, %v2749
  %v2898 = vpack.c.bf16 %v2783, %v2782
  %v2899 = vpack.c.bf16 %v2773, %v2769
  %v2900 = vpack.c.bf16 %v2785, %v2784
  %v2901 = vpack.c.bf16 %v2781, %v2777
  %v2902 = vpack.c.bf16 %v2811, %v2810
  %v2903 = vpack.c.bf16 %v2801, %v2797
  %v2904 = vpack.c.bf16 %v2813, %v2812
  %v2905 = vpack.c.bf16 %v2809, %v2805
  %v2906 = vpack.c.bf16 %v2839, %v2838
  %v2907 = vpack.c.bf16 %v2829, %v2825
  %v2908 = vpack.c.bf16 %v2841, %v2840
  %v2909 = vpack.c.bf16 %v2837, %v2833
  %v2910 = vpack.c.bf16 %v2867, %v2866
  %v2911 = vpack.c.bf16 %v2857, %v2853
  %v2912 = vpack.c.bf16 %v2869, %v2868
  %v2913 = vpack.c.bf16 %v2865, %v2861
  %s2914 = scalar_lea.vmem %s1, 240
  %v2915 = vld [vmem:[%s2914] sm:$0xff]
  %v2916 = vld [vmem:[%s2914 + $0x8] sm:$0xf]
  %v2917 = vld [vmem:[%s2914 + $0xc] sm:$0xff]
  %v2918 = vld [vmem:[%s2914 + $0x14] sm:$0xf]
  %v2919 = vld [vmem:[%s2914 + $0x18] sm:$0xff]
  %v2920 = vld [vmem:[%s2914 + $0x20] sm:$0xf]
  %v2921 = vld [vmem:[%s2914 + $0x24] sm:$0xff]
  %v2922 = vld [vmem:[%s2914 + $0x2c] sm:$0xf]
  %v2931 = vunpack.c.l.b16 %v2915
  %v2932 = vunpack.c.h.b16 %v2915
  %v2933 = vunpack.c.l.b16 %v2916
  %v2934 = vunpack.c.l.b16 %v2917
  %v2935 = vunpack.c.h.b16 %v2917
  %v2936 = vunpack.c.l.b16 %v2918
  %v2937 = vunpack.c.l.b16 %v2919
  %v2938 = vunpack.c.h.b16 %v2919
  %v2939 = vunpack.c.l.b16 %v2920
  %v2940 = vunpack.c.l.b16 %v2921
  %v2941 = vunpack.c.h.b16 %v2921
  %v2942 = vunpack.c.l.b16 %v2922
  %v2943 = vpack.c.b16 %v2934, %v2931
  %v2944 = vpack.c.b16 %v2935, %v2932
  %v2945 = vpack.c.b16 %v2936, %v2933
  %v2946 = vpack.c.b16 %v2940, %v2937
  %v2947 = vpack.c.b16 %v2941, %v2938
  %v2948 = vpack.c.b16 %v2942, %v2939
  %v2954 = vsel %vm371, %v2945, 0
  %v2957 = vsel %vm371, %v2948, 0
  %2959 = vmatpush.bf16.msra.mxu0 %v2892
  %2960 = vmatpush.bf16.msra.mxu0 %v2890
  %2961 = vmatpush.bf16.msra.mxu0 %v2888
  %2962 = vmatpush.bf16.msra.mxu0 %v2886
  %2963 = vmatpush.bf16.msra.mxu0 %v2884
  %2964 = vmatpush.bf16.msra.mxu0 %v2882
  %2965 = vmatpush.bf16.msra.mxu0 %v2880
  %2966 = vmatpush.bf16.msra.mxu0 %v2878
  %2967 = vmatmul.bf16.gmra.mxu0 %v2943
  %v2968 = vpop.f32.mrf.mxu0
  %v2969 = vadd.f32 0.0, %v2968
  %v2970 = vpop.f32.mrf.mxu0
  %v2971 = vadd.f32 0.0, %v2970
  %2972 = vmatmul.bf16.gmra.mxu0 %v2946
  %v2973 = vpop.f32.mrf.mxu0
  %v2974 = vadd.f32 0.0, %v2973
  %v2975 = vpop.f32.mrf.mxu0
  %v2976 = vadd.f32 0.0, %v2975
  %2977 = vdwg.mxu0
  %2978 = vmatpush.bf16.msra.mxu0 %v2908
  %2979 = vmatpush.bf16.msra.mxu0 %v2906
  %2980 = vmatpush.bf16.msra.mxu0 %v2904
  %2981 = vmatpush.bf16.msra.mxu0 %v2902
  %2982 = vmatpush.bf16.msra.mxu0 %v2900
  %2983 = vmatpush.bf16.msra.mxu0 %v2898
  %2984 = vmatpush.bf16.msra.mxu0 %v2896
  %2985 = vmatpush.bf16.msra.mxu0 %v2894
  %2986 = vmatmul.bf16.gmra.mxu0 %v2944
  %v2987 = vpop.f32.mrf.mxu0
  %v2988 = vadd.f32 %v2969, %v2987
  %v2989 = vpop.f32.mrf.mxu0
  %v2990 = vadd.f32 %v2971, %v2989
  %2991 = vmatmul.bf16.gmra.mxu0 %v2947
  %v2992 = vpop.f32.mrf.mxu0
  %v2993 = vadd.f32 %v2974, %v2992
  %v2994 = vpop.f32.mrf.mxu0
  %v2995 = vadd.f32 %v2976, %v2994
  %2996 = vdwg.mxu0
  %2997 = vmatpush.bf16.msra.mxu0 0
  %2998 = vmatpush.bf16.msra.mxu0 0
  %2999 = vmatpush.bf16.msra.mxu0 0
  %3000 = vmatpush.bf16.msra.mxu0 0
  %3001 = vmatpush.bf16.msra.mxu0 0
  %3002 = vmatpush.bf16.msra.mxu0 0
  %3003 = vmatpush.bf16.msra.mxu0 %v2912
  %3004 = vmatpush.bf16.msra.mxu0 %v2910
  %3005 = vmatmul.bf16.gmra.mxu0 %v2954
  %v3006 = vpop.f32.mrf.mxu0
  %v3007 = vadd.f32 %v2988, %v3006
  %v3008 = vpop.f32.mrf.mxu0
  %v3009 = vadd.f32 %v2990, %v3008
  %3010 = vmatmul.bf16.gmra.mxu0 %v2957
  %v3011 = vpop.f32.mrf.mxu0
  %v3012 = vadd.f32 %v2993, %v3011
  %v3013 = vpop.f32.mrf.mxu0
  %v3014 = vadd.f32 %v2995, %v3013
  %3015 = vdwg.mxu0
  %3016 = vmatpush.bf16.msra.mxu0 %v2893
  %3017 = vmatpush.bf16.msra.mxu0 %v2891
  %3018 = vmatpush.bf16.msra.mxu0 %v2889
  %3019 = vmatpush.bf16.msra.mxu0 %v2887
  %3020 = vmatpush.bf16.msra.mxu0 %v2885
  %3021 = vmatpush.bf16.msra.mxu0 %v2883
  %3022 = vmatpush.bf16.msra.mxu0 %v2881
  %3023 = vmatpush.bf16.msra.mxu0 %v2879
  %3024 = vmatmul.bf16.gmra.mxu0 %v2943
  %v3025 = vpop.f32.mrf.mxu0
  %v3026 = vadd.f32 0.0, %v3025
  %v3027 = vpop.f32.mrf.mxu0
  %v3028 = vadd.f32 0.0, %v3027
  %3029 = vmatmul.bf16.gmra.mxu0 %v2946
  %v3030 = vpop.f32.mrf.mxu0
  %v3031 = vadd.f32 0.0, %v3030
  %v3032 = vpop.f32.mrf.mxu0
  %v3033 = vadd.f32 0.0, %v3032
  %3034 = vdwg.mxu0
  %3035 = vmatpush.bf16.msra.mxu0 %v2909
  %3036 = vmatpush.bf16.msra.mxu0 %v2907
  %3037 = vmatpush.bf16.msra.mxu0 %v2905
  %3038 = vmatpush.bf16.msra.mxu0 %v2903
  %3039 = vmatpush.bf16.msra.mxu0 %v2901
  %3040 = vmatpush.bf16.msra.mxu0 %v2899
  %3041 = vmatpush.bf16.msra.mxu0 %v2897
  %3042 = vmatpush.bf16.msra.mxu0 %v2895
  %3043 = vmatmul.bf16.gmra.mxu0 %v2944
  %v3044 = vpop.f32.mrf.mxu0
  %v3045 = vadd.f32 %v3026, %v3044
  %v3046 = vpop.f32.mrf.mxu0
  %v3047 = vadd.f32 %v3028, %v3046
  %3048 = vmatmul.bf16.gmra.mxu0 %v2947
  %v3049 = vpop.f32.mrf.mxu0
  %v3050 = vadd.f32 %v3031, %v3049
  %v3051 = vpop.f32.mrf.mxu0
  %v3052 = vadd.f32 %v3033, %v3051
  %3053 = vdwg.mxu0
  %3054 = vmatpush.bf16.msra.mxu0 0
  %3055 = vmatpush.bf16.msra.mxu0 0
  %3056 = vmatpush.bf16.msra.mxu0 0
  %3057 = vmatpush.bf16.msra.mxu0 0
  %3058 = vmatpush.bf16.msra.mxu0 0
  %3059 = vmatpush.bf16.msra.mxu0 0
  %3060 = vmatpush.bf16.msra.mxu0 %v2913
  %3061 = vmatpush.bf16.msra.mxu0 %v2911
  %3062 = vmatmul.bf16.gmra.mxu0 %v2954
  %v3063 = vpop.f32.mrf.mxu0
  %v3064 = vadd.f32 %v3045, %v3063
  %v3065 = vpop.f32.mrf.mxu0
  %v3066 = vadd.f32 %v3047, %v3065
  %3067 = vmatmul.bf16.gmra.mxu0 %v2957
  %v3068 = vpop.f32.mrf.mxu0
  %v3069 = vadd.f32 %v3050, %v3068
  %v3070 = vpop.f32.mrf.mxu0
  %v3071 = vadd.f32 %v3052, %v3070
  %3072 = vdwg.mxu0
  %3081 = vrot.lane.b32.xlu0 %v3007, 11
  %v3082 = vpop.permute.xlu0 %3081
  %3083 = vrot.lane.b32.xlu0 %v3064, 11
  %v3084 = vpop.permute.xlu0 %3083
  %3085 = vrot.lane.b32.xlu0 %v3009, 11
  %v3086 = vpop.permute.xlu0 %3085
  %3087 = vrot.lane.b32.xlu0 %v3066, 11
  %v3088 = vpop.permute.xlu0 %3087
  %3089 = vrot.lane.b32.xlu0 %v3012, 11
  %v3090 = vpop.permute.xlu0 %3089
  %3091 = vrot.lane.b32.xlu0 %v3069, 11
  %v3092 = vpop.permute.xlu0 %3091
  %3093 = vrot.lane.b32.xlu0 %v3014, 11
  %v3094 = vpop.permute.xlu0 %3093
  %3095 = vrot.lane.b32.xlu0 %v3071, 11
  %v3096 = vpop.permute.xlu0 %3095
  %v3097 = vsel %vm537, %v3082, %v3084
  %v3098 = vsel %vm537, %v3086, %v3088
  %v3099 = vsel %vm537, %v3090, %v3092
  %v3100 = vsel %vm537, %v3094, %v3096
  %v3109 = vadd.f32 %v2126, %v3082
  %v3110 = vadd.f32 %v2130, %v3097
  %v3111 = vadd.f32 %v2127, %v3086
  %v3112 = vadd.f32 %v2131, %v3098
  %v3113 = vadd.f32 %v2128, %v3090
  %v3114 = vadd.f32 %v2132, %v3099
  %v3115 = vadd.f32 %v2129, %v3094
  %v3116 = vadd.f32 %v2133, %v3100
  %s3117 = scalar_lea.vmem %s2, 160
  %v3118 = vld [vmem:[%s3117] sm:$0xff]
  %v3119 = vld [vmem:[%s3117 + $0x8] sm:$0xff]
  %v3120 = vld [vmem:[%s3117 + $0x10] sm:$0xff]
  %v3121 = vld [vmem:[%s3117 + $0x18] sm:$0xff]
  %3123 = vset.pattern.permute.xlu0 0
  %3124 = vperm.xlu0 %3123, %v3118
  %v3125 = vpop.permute.xlu0 %3124
  %3128 = vset.pattern.permute.xlu0 0
  %3129 = vperm.xlu0 %3128, %v3119
  %v3130 = vpop.permute.xlu0 %3129
  %3133 = vset.pattern.permute.xlu0 0
  %3134 = vperm.xlu0 %3133, %v3120
  %v3135 = vpop.permute.xlu0 %3134
  %3138 = vset.pattern.permute.xlu0 0
  %3139 = vperm.xlu0 %3138, %v3121
  %v3140 = vpop.permute.xlu0 %3139
  %v3142 = vadd.f32 %v3109, %v3125
  %v3143 = vadd.f32 %v3110, %v3125
  %v3144 = vadd.f32 %v3111, %v3130
  %v3145 = vadd.f32 %v3112, %v3130
  %v3146 = vadd.f32 %v3113, %v3135
  %v3147 = vadd.f32 %v3114, %v3135
  %v3148 = vadd.f32 %v3115, %v3140
  %v3149 = vadd.f32 %v3116, %v3140
  %v3150 = vmax.f32 %v3142, 0.0
  %v3151 = vmax.f32 %v3143, 0.0
  %v3152 = vmax.f32 %v3144, 0.0
  %v3153 = vmax.f32 %v3145, 0.0
  %v3154 = vmax.f32 %v3146, 0.0
  %v3155 = vmax.f32 %v3147, 0.0
  %v3156 = vmax.f32 %v3148, 0.0
  %v3157 = vmax.f32 %v3149, 0.0
  %v3158 = vmul.f32 %v3150, %v1072
  %v3159 = vmul.f32 %v3151, %v1075
  %v3160 = vmul.f32 %v3152, %v1072
  %v3161 = vmul.f32 %v3153, %v1075
  %v3162 = vmul.f32 %v3154, %v1072
  %v3163 = vmul.f32 %v3155, %v1075
  %v3164 = vmul.f32 %v3156, %v1072
  %v3165 = vmul.f32 %v3157, %v1075
  %v3166 = vsel %vm537, 0.0, %v3158
  %v3167 = vsel %vm537, 0.0, %v3160
  %v3168 = vsel %vm537, 0.0, %v3162
  %v3169 = vsel %vm537, 0.0, %v3164
  %v3170 = vsel %vm554, %v3159, 0.0
  %v3171 = vsel %vm554, %v3161, 0.0
  %v3172 = vsel %vm554, %v3163, 0.0
  %v3173 = vsel %vm554, %v3165, 0.0
  %3182 = vrot.lane.b32.xlu0 %v3166, 1
  %v3183 = vpop.permute.xlu0 %3182
  %3184 = vrot.lane.b32.xlu0 %v3170, 1
  %v3185 = vpop.permute.xlu0 %3184
  %3186 = vrot.lane.b32.xlu0 %v3167, 1
  %v3187 = vpop.permute.xlu0 %3186
  %3188 = vrot.lane.b32.xlu0 %v3171, 1
  %v3189 = vpop.permute.xlu0 %3188
  %3190 = vrot.lane.b32.xlu0 %v3168, 1
  %v3191 = vpop.permute.xlu0 %3190
  %3192 = vrot.lane.b32.xlu0 %v3172, 1
  %v3193 = vpop.permute.xlu0 %3192
  %3194 = vrot.lane.b32.xlu0 %v3169, 1
  %v3195 = vpop.permute.xlu0 %3194
  %3196 = vrot.lane.b32.xlu0 %v3173, 1
  %v3197 = vpop.permute.xlu0 %3196
  %vm3198 = vcmask 7168
  %v3199 = vsel %vm3198, %v3183, %v3185
  %v3200 = vsel %vm3198, %v3187, %v3189
  %v3201 = vsel %vm3198, %v3191, %v3193
  %v3202 = vsel %vm3198, %v3195, %v3197
  %3211 = vrot.lane.b32.xlu0 %v3166, 10
  %v3212 = vpop.permute.xlu0 %3211
  %3213 = vrot.lane.b32.xlu0 %v3170, 10
  %v3214 = vpop.permute.xlu0 %3213
  %3215 = vrot.lane.b32.xlu0 %v3167, 10
  %v3216 = vpop.permute.xlu0 %3215
  %3217 = vrot.lane.b32.xlu0 %v3171, 10
  %v3218 = vpop.permute.xlu0 %3217
  %3219 = vrot.lane.b32.xlu0 %v3168, 10
  %v3220 = vpop.permute.xlu0 %3219
  %3221 = vrot.lane.b32.xlu0 %v3172, 10
  %v3222 = vpop.permute.xlu0 %3221
  %3223 = vrot.lane.b32.xlu0 %v3169, 10
  %v3224 = vpop.permute.xlu0 %3223
  %3225 = vrot.lane.b32.xlu0 %v3173, 10
  %v3226 = vpop.permute.xlu0 %3225
  %vm3227 = vcmask 80896
  %v3228 = vsel %vm3227, %v3212, %v3214
  %v3229 = vsel %vm3227, %v3216, %v3218
  %v3230 = vsel %vm3227, %v3220, %v3222
  %v3231 = vsel %vm3227, %v3224, %v3226
  %3240 = vrot.lane.b32.xlu0 %v3166, 11
  %v3241 = vpop.permute.xlu0 %3240
  %3242 = vrot.lane.b32.xlu0 %v3170, 11
  %v3243 = vpop.permute.xlu0 %3242
  %3244 = vrot.lane.b32.xlu0 %v3167, 11
  %v3245 = vpop.permute.xlu0 %3244
  %3246 = vrot.lane.b32.xlu0 %v3171, 11
  %v3247 = vpop.permute.xlu0 %3246
  %3248 = vrot.lane.b32.xlu0 %v3168, 11
  %v3249 = vpop.permute.xlu0 %3248
  %3250 = vrot.lane.b32.xlu0 %v3172, 11
  %v3251 = vpop.permute.xlu0 %3250
  %3252 = vrot.lane.b32.xlu0 %v3169, 11
  %v3253 = vpop.permute.xlu0 %3252
  %3254 = vrot.lane.b32.xlu0 %v3173, 11
  %v3255 = vpop.permute.xlu0 %3254
  %v3256 = vsel %vm537, %v3241, %v3243
  %v3257 = vsel %vm537, %v3245, %v3247
  %v3258 = vsel %vm537, %v3249, %v3251
  %v3259 = vsel %vm537, %v3253, %v3255
  %v3268 = vpack.c.bf16 %v3167, %v3166
  %v3269 = vpack.c.bf16 %v3171, %v3170
  %v3270 = vpack.c.bf16 %v3169, %v3168
  %v3271 = vpack.c.bf16 %v3173, %v3172
  %v3272 = vpack.c.bf16 %v3187, %v3183
  %v3273 = vpack.c.bf16 %v3200, %v3199
  %v3274 = vpack.c.bf16 %v3195, %v3191
  %v3275 = vpack.c.bf16 %v3202, %v3201
  %v3276 = vpack.c.bf16 %v3216, %v3212
  %v3277 = vpack.c.bf16 %v3229, %v3228
  %v3278 = vpack.c.bf16 %v3224, %v3220
  %v3279 = vpack.c.bf16 %v3231, %v3230
  %v3280 = vpack.c.bf16 %v3245, %v3241
  %v3281 = vpack.c.bf16 %v3257, %v3256
  %v3282 = vpack.c.bf16 %v3253, %v3249
  %v3283 = vpack.c.bf16 %v3259, %v3258
  %v3284 = vld [vmem:[%s3] sm:$0xf]
  %v3285 = vld [vmem:[%s3 + $0x4] sm:$0xf]
  %v3286 = vld [vmem:[%s4] sm:$0xff]
  %v3287 = vld [vmem:[%s4 + $0x8] sm:$0xff]
  %3289 = vset.pattern.permute.xlu0 0
  %3290 = vperm.xlu0 %3289, %v3286
  %v3291 = vpop.permute.xlu0 %3290
  %3294 = vset.pattern.permute.xlu0 0
  %3295 = vperm.xlu0 %3294, %v3287
  %v3296 = vpop.permute.xlu0 %3295
  %v3300 = vunpack.c.l.b16 %v3284
  %v3301 = vunpack.c.l.b16 %v3285
  %v3302 = vpack.c.b16 %v3301, %v3300
  %3320 = vrot.lane.b32.xlu0 %v3268, 117
  %v3321 = vpop.permute.xlu0 %3320
  %3322 = vrot.lane.b32.xlu0 %v3269, 117
  %v3323 = vpop.permute.xlu0 %3322
  %3324 = vrot.lane.b32.xlu0 %v3270, 117
  %v3325 = vpop.permute.xlu0 %3324
  %3326 = vrot.lane.b32.xlu0 %v3271, 117
  %v3327 = vpop.permute.xlu0 %3326
  %3328 = vrot.lane.b32.xlu0 %v3272, 117
  %v3329 = vpop.permute.xlu0 %3328
  %3330 = vrot.lane.b32.xlu0 %v3273, 117
  %v3331 = vpop.permute.xlu0 %3330
  %3332 = vrot.lane.b32.xlu0 %v3274, 117
  %v3333 = vpop.permute.xlu0 %3332
  %3334 = vrot.lane.b32.xlu0 %v3275, 117
  %v3335 = vpop.permute.xlu0 %3334
  %3336 = vrot.lane.b32.xlu0 %v3276, 117
  %v3337 = vpop.permute.xlu0 %3336
  %3338 = vrot.lane.b32.xlu0 %v3277, 117
  %v3339 = vpop.permute.xlu0 %3338
  %3340 = vrot.lane.b32.xlu0 %v3278, 117
  %v3341 = vpop.permute.xlu0 %3340
  %3342 = vrot.lane.b32.xlu0 %v3279, 117
  %v3343 = vpop.permute.xlu0 %3342
  %3344 = vrot.lane.b32.xlu0 %v3280, 117
  %v3345 = vpop.permute.xlu0 %3344
  %3346 = vrot.lane.b32.xlu0 %v3281, 117
  %v3347 = vpop.permute.xlu0 %3346
  %3348 = vrot.lane.b32.xlu0 %v3282, 117
  %v3349 = vpop.permute.xlu0 %3348
  %3350 = vrot.lane.b32.xlu0 %v3283, 117
  %v3351 = vpop.permute.xlu0 %3350
  %vm3352 = vcmask 957440
  %v3353 = vsel %vm3352, %v3321, %v3323
  %v3354 = vsel %vm3352, %v3325, %v3327
  %v3355 = vsel %vm3352, %v3329, %v3331
  %v3356 = vsel %vm3352, %v3333, %v3335
  %v3357 = vsel %vm3352, %v3337, %v3339
  %v3358 = vsel %vm3352, %v3341, %v3343
  %v3359 = vsel %vm3352, %v3345, %v3347
  %v3360 = vsel %vm3352, %v3349, %v3351
  %3377 = vmatpush.bf16.msra.mxu0 %v3360
  %3378 = vmatpush.bf16.msra.mxu0 %v3359
  %3379 = vmatpush.bf16.msra.mxu0 %v3358
  %3380 = vmatpush.bf16.msra.mxu0 %v3357
  %3381 = vmatpush.bf16.msra.mxu0 %v3356
  %3382 = vmatpush.bf16.msra.mxu0 %v3355
  %3383 = vmatpush.bf16.msra.mxu0 %v3354
  %3384 = vmatpush.bf16.msra.mxu0 %v3353
  %3385 = vmatmul.bf16.gmra.mxu0 %v3302
  %v3386 = vpop.f32.mrf.mxu0
  %v3387 = vadd.f32 %v3291, %v3386
  %v3388 = vpop.f32.mrf.mxu0
  %v3389 = vadd.f32 %v3296, %v3388
  %3390 = vdwg.mxu0
  %3391 = vmatpush.bf16.msra.mxu0 %v3351
  %3392 = vmatpush.bf16.msra.mxu0 %v3347
  %3393 = vmatpush.bf16.msra.mxu0 %v3343
  %3394 = vmatpush.bf16.msra.mxu0 %v3339
  %3395 = vmatpush.bf16.msra.mxu0 %v3335
  %3396 = vmatpush.bf16.msra.mxu0 %v3331
  %3397 = vmatpush.bf16.msra.mxu0 %v3327
  %3398 = vmatpush.bf16.msra.mxu0 %v3323
  %3399 = vmatmul.bf16.gmra.mxu0 %v3302
  %v3400 = vpop.f32.mrf.mxu0
  %v3401 = vadd.f32 %v3291, %v3400
  %v3402 = vpop.f32.mrf.mxu0
  %v3403 = vadd.f32 %v3296, %v3402
  %3404 = vdwg.mxu0
  %v3405 = vmax.f32 %v3387, 0.0
  %v3406 = vmax.f32 %v3401, 0.0
  %v3407 = vmax.f32 %v3389, 0.0
  %v3408 = vmax.f32 %v3403, 0.0
  %s3409 = scalar_lea.vmem %s3, 8
  %v3410 = vld [vmem:[%s3409] sm:$0xf]
  %v3411 = vld [vmem:[%s3409 + $0x4] sm:$0xf]
  %v3414 = vunpack.c.l.b16 %v3410
  %v3415 = vunpack.c.l.b16 %v3411
  %v3416 = vpack.c.b16 %v3415, %v3414
  %3418 = vrot.lane.b32.xlu0 %v3268, 116
  %v3419 = vpop.permute.xlu0 %3418
  %3420 = vrot.lane.b32.xlu0 %v3269, 116
  %v3421 = vpop.permute.xlu0 %3420
  %3422 = vrot.lane.b32.xlu0 %v3270, 116
  %v3423 = vpop.permute.xlu0 %3422
  %3424 = vrot.lane.b32.xlu0 %v3271, 116
  %v3425 = vpop.permute.xlu0 %3424
  %3426 = vrot.lane.b32.xlu0 %v3272, 116
  %v3427 = vpop.permute.xlu0 %3426
  %3428 = vrot.lane.b32.xlu0 %v3273, 116
  %v3429 = vpop.permute.xlu0 %3428
  %3430 = vrot.lane.b32.xlu0 %v3274, 116
  %v3431 = vpop.permute.xlu0 %3430
  %3432 = vrot.lane.b32.xlu0 %v3275, 116
  %v3433 = vpop.permute.xlu0 %3432
  %3434 = vrot.lane.b32.xlu0 %v3276, 116
  %v3435 = vpop.permute.xlu0 %3434
  %3436 = vrot.lane.b32.xlu0 %v3277, 116
  %v3437 = vpop.permute.xlu0 %3436
  %3438 = vrot.lane.b32.xlu0 %v3278, 116
  %v3439 = vpop.permute.xlu0 %3438
  %3440 = vrot.lane.b32.xlu0 %v3279, 116
  %v3441 = vpop.permute.xlu0 %3440
  %3442 = vrot.lane.b32.xlu0 %v3280, 116
  %v3443 = vpop.permute.xlu0 %3442
  %3444 = vrot.lane.b32.xlu0 %v3281, 116
  %v3445 = vpop.permute.xlu0 %3444
  %3446 = vrot.lane.b32.xlu0 %v3282, 116
  %v3447 = vpop.permute.xlu0 %3446
  %3448 = vrot.lane.b32.xlu0 %v3283, 116
  %v3449 = vpop.permute.xlu0 %3448
  %vm3450 = vcmask 949248
  %v3451 = vsel %vm3450, %v3419, %v3421
  %v3452 = vsel %vm3450, %v3423, %v3425
  %v3453 = vsel %vm3450, %v3427, %v3429
  %v3454 = vsel %vm3450, %v3431, %v3433
  %v3455 = vsel %vm3450, %v3435, %v3437
  %v3456 = vsel %vm3450, %v3439, %v3441
  %v3457 = vsel %vm3450, %v3443, %v3445
  %v3458 = vsel %vm3450, %v3447, %v3449
  %3475 = vmatpush.bf16.msra.mxu0 %v3458
  %3476 = vmatpush.bf16.msra.mxu0 %v3457
  %3477 = vmatpush.bf16.msra.mxu0 %v3456
  %3478 = vmatpush.bf16.msra.mxu0 %v3455
  %3479 = vmatpush.bf16.msra.mxu0 %v3454
  %3480 = vmatpush.bf16.msra.mxu0 %v3453
  %3481 = vmatpush.bf16.msra.mxu0 %v3452
  %3482 = vmatpush.bf16.msra.mxu0 %v3451
  %3483 = vmatmul.bf16.gmra.mxu0 %v3416
  %v3484 = vpop.f32.mrf.mxu0
  %v3485 = vadd.f32 %v3291, %v3484
  %v3486 = vpop.f32.mrf.mxu0
  %v3487 = vadd.f32 %v3296, %v3486
  %3488 = vdwg.mxu0
  %3489 = vmatpush.bf16.msra.mxu0 %v3449
  %3490 = vmatpush.bf16.msra.mxu0 %v3445
  %3491 = vmatpush.bf16.msra.mxu0 %v3441
  %3492 = vmatpush.bf16.msra.mxu0 %v3437
  %3493 = vmatpush.bf16.msra.mxu0 %v3433
  %3494 = vmatpush.bf16.msra.mxu0 %v3429
  %3495 = vmatpush.bf16.msra.mxu0 %v3425
  %3496 = vmatpush.bf16.msra.mxu0 %v3421
  %3497 = vmatmul.bf16.gmra.mxu0 %v3416
  %v3498 = vpop.f32.mrf.mxu0
  %v3499 = vadd.f32 %v3291, %v3498
  %v3500 = vpop.f32.mrf.mxu0
  %v3501 = vadd.f32 %v3296, %v3500
  %3502 = vdwg.mxu0
  %v3503 = vmax.f32 %v3485, 0.0
  %v3504 = vmax.f32 %v3499, 0.0
  %v3505 = vmax.f32 %v3487, 0.0
  %v3506 = vmax.f32 %v3501, 0.0
  %s3507 = scalar_lea.vmem %s3, 16
  %v3508 = vld [vmem:[%s3507] sm:$0xf]
  %v3509 = vld [vmem:[%s3507 + $0x4] sm:$0xf]
  %v3512 = vunpack.c.l.b16 %v3508
  %v3513 = vunpack.c.l.b16 %v3509
  %v3514 = vpack.c.b16 %v3513, %v3512
  %3516 = vrot.lane.b32.xlu0 %v3268, 107
  %v3517 = vpop.permute.xlu0 %3516
  %3518 = vrot.lane.b32.xlu0 %v3269, 107
  %v3519 = vpop.permute.xlu0 %3518
  %3520 = vrot.lane.b32.xlu0 %v3270, 107
  %v3521 = vpop.permute.xlu0 %3520
  %3522 = vrot.lane.b32.xlu0 %v3271, 107
  %v3523 = vpop.permute.xlu0 %3522
  %3524 = vrot.lane.b32.xlu0 %v3272, 107
  %v3525 = vpop.permute.xlu0 %3524
  %3526 = vrot.lane.b32.xlu0 %v3273, 107
  %v3527 = vpop.permute.xlu0 %3526
  %3528 = vrot.lane.b32.xlu0 %v3274, 107
  %v3529 = vpop.permute.xlu0 %3528
  %3530 = vrot.lane.b32.xlu0 %v3275, 107
  %v3531 = vpop.permute.xlu0 %3530
  %3532 = vrot.lane.b32.xlu0 %v3276, 107
  %v3533 = vpop.permute.xlu0 %3532
  %3534 = vrot.lane.b32.xlu0 %v3277, 107
  %v3535 = vpop.permute.xlu0 %3534
  %3536 = vrot.lane.b32.xlu0 %v3278, 107
  %v3537 = vpop.permute.xlu0 %3536
  %3538 = vrot.lane.b32.xlu0 %v3279, 107
  %v3539 = vpop.permute.xlu0 %3538
  %3540 = vrot.lane.b32.xlu0 %v3280, 107
  %v3541 = vpop.permute.xlu0 %3540
  %3542 = vrot.lane.b32.xlu0 %v3281, 107
  %v3543 = vpop.permute.xlu0 %3542
  %3544 = vrot.lane.b32.xlu0 %v3282, 107
  %v3545 = vpop.permute.xlu0 %3544
  %3546 = vrot.lane.b32.xlu0 %v3283, 107
  %v3547 = vpop.permute.xlu0 %3546
  %vm3548 = vcmask 875520
  %v3549 = vsel %vm3548, %v3517, %v3519
  %v3550 = vsel %vm3548, %v3521, %v3523
  %v3551 = vsel %vm3548, %v3525, %v3527
  %v3552 = vsel %vm3548, %v3529, %v3531
  %v3553 = vsel %vm3548, %v3533, %v3535
  %v3554 = vsel %vm3548, %v3537, %v3539
  %v3555 = vsel %vm3548, %v3541, %v3543
  %v3556 = vsel %vm3548, %v3545, %v3547
  %3573 = vmatpush.bf16.msra.mxu0 %v3556
  %3574 = vmatpush.bf16.msra.mxu0 %v3555
  %3575 = vmatpush.bf16.msra.mxu0 %v3554
  %3576 = vmatpush.bf16.msra.mxu0 %v3553
  %3577 = vmatpush.bf16.msra.mxu0 %v3552
  %3578 = vmatpush.bf16.msra.mxu0 %v3551
  %3579 = vmatpush.bf16.msra.mxu0 %v3550
  %3580 = vmatpush.bf16.msra.mxu0 %v3549
  %3581 = vmatmul.bf16.gmra.mxu0 %v3514
  %v3582 = vpop.f32.mrf.mxu0
  %v3583 = vadd.f32 %v3291, %v3582
  %v3584 = vpop.f32.mrf.mxu0
  %v3585 = vadd.f32 %v3296, %v3584
  %3586 = vdwg.mxu0
  %3587 = vmatpush.bf16.msra.mxu0 %v3547
  %3588 = vmatpush.bf16.msra.mxu0 %v3543
  %3589 = vmatpush.bf16.msra.mxu0 %v3539
  %3590 = vmatpush.bf16.msra.mxu0 %v3535
  %3591 = vmatpush.bf16.msra.mxu0 %v3531
  %3592 = vmatpush.bf16.msra.mxu0 %v3527
  %3593 = vmatpush.bf16.msra.mxu0 %v3523
  %3594 = vmatpush.bf16.msra.mxu0 %v3519
  %3595 = vmatmul.bf16.gmra.mxu0 %v3514
  %v3596 = vpop.f32.mrf.mxu0
  %v3597 = vadd.f32 %v3291, %v3596
  %v3598 = vpop.f32.mrf.mxu0
  %v3599 = vadd.f32 %v3296, %v3598
  %3600 = vdwg.mxu0
  %v3601 = vmax.f32 %v3583, 0.0
  %v3602 = vmax.f32 %v3597, 0.0
  %v3603 = vmax.f32 %v3585, 0.0
  %v3604 = vmax.f32 %v3599, 0.0
  %s3605 = scalar_lea.vmem %s3, 24
  %v3606 = vld [vmem:[%s3605] sm:$0xf]
  %v3607 = vld [vmem:[%s3605 + $0x4] sm:$0xf]
  %v3610 = vunpack.c.l.b16 %v3606
  %v3611 = vunpack.c.l.b16 %v3607
  %v3612 = vpack.c.b16 %v3611, %v3610
  %3614 = vrot.lane.b32.xlu0 %v3268, 106
  %v3615 = vpop.permute.xlu0 %3614
  %3616 = vrot.lane.b32.xlu0 %v3269, 106
  %v3617 = vpop.permute.xlu0 %3616
  %3618 = vrot.lane.b32.xlu0 %v3270, 106
  %v3619 = vpop.permute.xlu0 %3618
  %3620 = vrot.lane.b32.xlu0 %v3271, 106
  %v3621 = vpop.permute.xlu0 %3620
  %3622 = vrot.lane.b32.xlu0 %v3272, 106
  %v3623 = vpop.permute.xlu0 %3622
  %3624 = vrot.lane.b32.xlu0 %v3273, 106
  %v3625 = vpop.permute.xlu0 %3624
  %3626 = vrot.lane.b32.xlu0 %v3274, 106
  %v3627 = vpop.permute.xlu0 %3626
  %3628 = vrot.lane.b32.xlu0 %v3275, 106
  %v3629 = vpop.permute.xlu0 %3628
  %3630 = vrot.lane.b32.xlu0 %v3276, 106
  %v3631 = vpop.permute.xlu0 %3630
  %3632 = vrot.lane.b32.xlu0 %v3277, 106
  %v3633 = vpop.permute.xlu0 %3632
  %3634 = vrot.lane.b32.xlu0 %v3278, 106
  %v3635 = vpop.permute.xlu0 %3634
  %3636 = vrot.lane.b32.xlu0 %v3279, 106
  %v3637 = vpop.permute.xlu0 %3636
  %3638 = vrot.lane.b32.xlu0 %v3280, 106
  %v3639 = vpop.permute.xlu0 %3638
  %3640 = vrot.lane.b32.xlu0 %v3281, 106
  %v3641 = vpop.permute.xlu0 %3640
  %3642 = vrot.lane.b32.xlu0 %v3282, 106
  %v3643 = vpop.permute.xlu0 %3642
  %3644 = vrot.lane.b32.xlu0 %v3283, 106
  %v3645 = vpop.permute.xlu0 %3644
  %vm3646 = vcmask 867328
  %v3647 = vsel %vm3646, %v3615, %v3617
  %v3648 = vsel %vm3646, %v3619, %v3621
  %v3649 = vsel %vm3646, %v3623, %v3625
  %v3650 = vsel %vm3646, %v3627, %v3629
  %v3651 = vsel %vm3646, %v3631, %v3633
  %v3652 = vsel %vm3646, %v3635, %v3637
  %v3653 = vsel %vm3646, %v3639, %v3641
  %v3654 = vsel %vm3646, %v3643, %v3645
  %3671 = vmatpush.bf16.msra.mxu0 %v3654
  %3672 = vmatpush.bf16.msra.mxu0 %v3653
  %3673 = vmatpush.bf16.msra.mxu0 %v3652
  %3674 = vmatpush.bf16.msra.mxu0 %v3651
  %3675 = vmatpush.bf16.msra.mxu0 %v3650
  %3676 = vmatpush.bf16.msra.mxu0 %v3649
  %3677 = vmatpush.bf16.msra.mxu0 %v3648
  %3678 = vmatpush.bf16.msra.mxu0 %v3647
  %3679 = vmatmul.bf16.gmra.mxu0 %v3612
  %v3680 = vpop.f32.mrf.mxu0
  %v3681 = vadd.f32 %v3291, %v3680
  %v3682 = vpop.f32.mrf.mxu0
  %v3683 = vadd.f32 %v3296, %v3682
  %3684 = vdwg.mxu0
  %3685 = vmatpush.bf16.msra.mxu0 %v3645
  %3686 = vmatpush.bf16.msra.mxu0 %v3641
  %3687 = vmatpush.bf16.msra.mxu0 %v3637
  %3688 = vmatpush.bf16.msra.mxu0 %v3633
  %3689 = vmatpush.bf16.msra.mxu0 %v3629
  %3690 = vmatpush.bf16.msra.mxu0 %v3625
  %3691 = vmatpush.bf16.msra.mxu0 %v3621
  %3692 = vmatpush.bf16.msra.mxu0 %v3617
  %3693 = vmatmul.bf16.gmra.mxu0 %v3612
  %v3694 = vpop.f32.mrf.mxu0
  %v3695 = vadd.f32 %v3291, %v3694
  %v3696 = vpop.f32.mrf.mxu0
  %v3697 = vadd.f32 %v3296, %v3696
  %3698 = vdwg.mxu0
  %v3699 = vmax.f32 %v3681, 0.0
  %v3700 = vmax.f32 %v3695, 0.0
  %v3701 = vmax.f32 %v3683, 0.0
  %v3702 = vmax.f32 %v3697, 0.0
  %3703 = vst [vmem:[%s6] sm:$0xff] %v3405
  %vm3704 = vcmask 588800
  %3705 = vst.msk [vmem:[%s6 + $0x8] sm:$0xff] %vm3704, %v3406
  %3706 = vst [vmem:[%s6 + $0x10] sm:$0xff] %v3407
  %3707 = vst.msk [vmem:[%s6 + $0x18] sm:$0xff] %vm3704, %v3408
  %3708 = vst [vmem:[%s6 + $0x20] sm:$0xff] %v3503
  %3709 = vst.msk [vmem:[%s6 + $0x28] sm:$0xff] %vm3704, %v3504
  %3710 = vst [vmem:[%s6 + $0x30] sm:$0xff] %v3505
  %3711 = vst.msk [vmem:[%s6 + $0x38] sm:$0xff] %vm3704, %v3506
  %3712 = vst [vmem:[%s6 + $0x40] sm:$0xff] %v3601
  %3713 = vst.msk [vmem:[%s6 + $0x48] sm:$0xff] %vm3704, %v3602
  %3714 = vst [vmem:[%s6 + $0x50] sm:$0xff] %v3603
  %3715 = vst.msk [vmem:[%s6 + $0x58] sm:$0xff] %vm3704, %v3604
  %3716 = vst [vmem:[%s6 + $0x60] sm:$0xff] %v3699
  %3717 = vst.msk [vmem:[%s6 + $0x68] sm:$0xff] %vm3704, %v3700
  %3718 = vst [vmem:[%s6 + $0x70] sm:$0xff] %v3701
  %3719 = vst.msk [vmem:[%s6 + $0x78] sm:$0xff] %vm3704, %v3702
  // Predicated region
  $region26: #{refine_net_forward.4} parent=0 // pred_check
    _
  $region27: #{refine_net_forward.4} parent=0 // pred_check_branch
    %3721 = sbr.rel (0) target = $region29
  $region28: #{refine_net_forward.4} parent=0 // pred_region
    _
  $region29: #{refine_net_forward.4} parent=0 // pred_fallthru
    _
  // Predicated region
  $region30: #{refine_net_forward.4} parent=0 // pred_check
    _
  $region31: #{refine_net_forward.4} parent=0 // pred_check_branch
    %3723 = sbr.rel (0) target = $region33
  $region32: #{refine_net_forward.4} parent=0 // pred_region
    _
  $region33: #{refine_net_forward.4} parent=0 // pred_fallthru
    _

// kernel: refine_net_forward.5
$region0: #{refine_net_forward.5}
  #allocation0 [shape = 'u32[]', space=smem, size = 0x4, offset = 0x4, fixed_abs, tag = 'smem constant byte address 0x4 - core index']
  #allocation1 [shape = 'u32[72,128]{1,0:T(1,128)}', space=vmem, size = 0x9000, scoped, tag = 'internal scratch']
  %s0 = inlined_call_operand.vmem [shape: f32[16,768], index: 0, kind: input, shape index: {}]
  %s1 = inlined_call_operand.vmem [shape: bf16[8,144], index: 1, kind: input, shape index: {}]
  %s2 = inlined_call_operand.vmem [shape: f32[8,648], index: 2, kind: output, shape index: {}]
  %s3 = sld [smem:[#allocation0]]
  $region18: #{refine_net_forward.5} parent=0
    _
  %s5 = ssub.s32 1, %s3
  %s6 = scalar_select 0, %s5, %s3
  // Predicated region
  $region2: #{refine_net_forward.5} parent=0 // pred_check
    _
  $region3: #{refine_net_forward.5} parent=0 // pred_check_branch
    %8 = sbr.rel (0) target = $region5
  $region4: #{refine_net_forward.5} parent=0 // pred_region
    _
  $region5: #{refine_net_forward.5} parent=0 // pred_fallthru
    _
  // Predicated region
  $region6: #{refine_net_forward.5} parent=0 // pred_check
    _
  $region7: #{refine_net_forward.5} parent=0 // pred_check_branch
    %10 = sbr.rel (0) target = $region9
  $region8: #{refine_net_forward.5} parent=0 // pred_region
    _
  $region9: #{refine_net_forward.5} parent=0 // pred_fallthru
    _
  %v12 = vld [vmem:[%s0] sm:$0xff]
  %v13 = vld [vmem:[%s0 + $0x8] sm:$0xff]
  %v14 = vld [vmem:[%s0 + $0x10] sm:$0xff]
  %v15 = vld [vmem:[%s0 + $0x18] sm:$0xff]
  %v16 = vld [vmem:[%s0 + $0x20] sm:$0xff]
  %v17 = vld [vmem:[%s0 + $0x28] sm:$0xff]
  %v18 = vld [vmem:[%s0 + $0x30] sm:$0xff]
  %v19 = vld [vmem:[%s0 + $0x38] sm:$0xff]
  %v20 = vld [vmem:[%s0 + $0x40] sm:$0xff]
  %v21 = vld [vmem:[%s0 + $0x48] sm:$0xff]
  %v22 = vld [vmem:[%s0 + $0x50] sm:$0xff]
  %v23 = vld [vmem:[%s0 + $0x58] sm:$0xff]
  %36 = vrot.lane.b32.xlu0 %v12, 127
  %v37 = vpop.permute.xlu0 %36
  %38 = vrot.lane.b32.xlu0 %v13, 127
  %v39 = vpop.permute.xlu0 %38
  %40 = vrot.lane.b32.xlu0 %v14, 127
  %v41 = vpop.permute.xlu0 %40
  %42 = vrot.lane.b32.xlu0 %v15, 127
  %v43 = vpop.permute.xlu0 %42
  %44 = vrot.lane.b32.xlu0 %v16, 127
  %v45 = vpop.permute.xlu0 %44
  %46 = vrot.lane.b32.xlu0 %v17, 127
  %v47 = vpop.permute.xlu0 %46
  %48 = vrot.lane.b32.xlu0 %v18, 127
  %v49 = vpop.permute.xlu0 %48
  %50 = vrot.lane.b32.xlu0 %v19, 127
  %v51 = vpop.permute.xlu0 %50
  %52 = vrot.lane.b32.xlu0 %v20, 127
  %v53 = vpop.permute.xlu0 %52
  %54 = vrot.lane.b32.xlu0 %v21, 127
  %v55 = vpop.permute.xlu0 %54
  %56 = vrot.lane.b32.xlu0 %v22, 127
  %v57 = vpop.permute.xlu0 %56
  %58 = vrot.lane.b32.xlu0 %v23, 127
  %v59 = vpop.permute.xlu0 %58
  %vm60 = vcmask 1039360
  %v61 = vsel %vm60, %v37, %v39
  %v62 = vsel %vm60, %v39, %v41
  %v63 = vsel %vm60, %v41, %v43
  %v64 = vsel %vm60, %v43, %v45
  %v65 = vsel %vm60, %v45, %v47
  %v66 = vsel %vm60, %v49, %v51
  %v67 = vsel %vm60, %v51, %v53
  %v68 = vsel %vm60, %v53, %v55
  %v69 = vsel %vm60, %v55, %v57
  %v70 = vsel %vm60, %v57, %v59
  %83 = vrot.lane.b32.xlu0 %v12, 126
  %v84 = vpop.permute.xlu0 %83
  %85 = vrot.lane.b32.xlu0 %v13, 126
  %v86 = vpop.permute.xlu0 %85
  %87 = vrot.lane.b32.xlu0 %v14, 126
  %v88 = vpop.permute.xlu0 %87
  %89 = vrot.lane.b32.xlu0 %v15, 126
  %v90 = vpop.permute.xlu0 %89
  %91 = vrot.lane.b32.xlu0 %v16, 126
  %v92 = vpop.permute.xlu0 %91
  %93 = vrot.lane.b32.xlu0 %v17, 126
  %v94 = vpop.permute.xlu0 %93
  %95 = vrot.lane.b32.xlu0 %v18, 126
  %v96 = vpop.permute.xlu0 %95
  %97 = vrot.lane.b32.xlu0 %v19, 126
  %v98 = vpop.permute.xlu0 %97
  %99 = vrot.lane.b32.xlu0 %v20, 126
  %v100 = vpop.permute.xlu0 %99
  %101 = vrot.lane.b32.xlu0 %v21, 126
  %v102 = vpop.permute.xlu0 %101
  %103 = vrot.lane.b32.xlu0 %v22, 126
  %v104 = vpop.permute.xlu0 %103
  %105 = vrot.lane.b32.xlu0 %v23, 126
  %v106 = vpop.permute.xlu0 %105
  %vm107 = vcmask 1031168
  %v108 = vsel %vm107, %v84, %v86
  %v109 = vsel %vm107, %v86, %v88
  %v110 = vsel %vm107, %v88, %v90
  %v111 = vsel %vm107, %v90, %v92
  %v112 = vsel %vm107, %v92, %v94
  %v113 = vsel %vm107, %v96, %v98
  %v114 = vsel %vm107, %v98, %v100
  %v115 = vsel %vm107, %v100, %v102
  %v116 = vsel %vm107, %v102, %v104
  %v117 = vsel %vm107, %v104, %v106
  %130 = vrot.lane.b32.xlu0 %v12, 110
  %v131 = vpop.permute.xlu0 %130
  %132 = vrot.lane.b32.xlu0 %v13, 110
  %v133 = vpop.permute.xlu0 %132
  %134 = vrot.lane.b32.xlu0 %v14, 110
  %v135 = vpop.permute.xlu0 %134
  %136 = vrot.lane.b32.xlu0 %v15, 110
  %v137 = vpop.permute.xlu0 %136
  %138 = vrot.lane.b32.xlu0 %v16, 110
  %v139 = vpop.permute.xlu0 %138
  %140 = vrot.lane.b32.xlu0 %v17, 110
  %v141 = vpop.permute.xlu0 %140
  %142 = vrot.lane.b32.xlu0 %v18, 110
  %v143 = vpop.permute.xlu0 %142
  %144 = vrot.lane.b32.xlu0 %v19, 110
  %v145 = vpop.permute.xlu0 %144
  %146 = vrot.lane.b32.xlu0 %v20, 110
  %v147 = vpop.permute.xlu0 %146
  %148 = vrot.lane.b32.xlu0 %v21, 110
  %v149 = vpop.permute.xlu0 %148
  %150 = vrot.lane.b32.xlu0 %v22, 110
  %v151 = vpop.permute.xlu0 %150
  %152 = vrot.lane.b32.xlu0 %v23, 110
  %v153 = vpop.permute.xlu0 %152
  %vm154 = vcmask 900096
  %v155 = vsel %vm154, %v131, %v133
  %v156 = vsel %vm154, %v133, %v135
  %v157 = vsel %vm154, %v135, %v137
  %v158 = vsel %vm154, %v137, %v139
  %v159 = vsel %vm154, %v139, %v141
  %v160 = vsel %vm154, %v143, %v145
  %v161 = vsel %vm154, %v145, %v147
  %v162 = vsel %vm154, %v147, %v149
  %v163 = vsel %vm154, %v149, %v151
  %v164 = vsel %vm154, %v151, %v153
  %177 = vrot.lane.b32.xlu0 %v12, 109
  %v178 = vpop.permute.xlu0 %177
  %179 = vrot.lane.b32.xlu0 %v13, 109
  %v180 = vpop.permute.xlu0 %179
  %181 = vrot.lane.b32.xlu0 %v14, 109
  %v182 = vpop.permute.xlu0 %181
  %183 = vrot.lane.b32.xlu0 %v15, 109
  %v184 = vpop.permute.xlu0 %183
  %185 = vrot.lane.b32.xlu0 %v16, 109
  %v186 = vpop.permute.xlu0 %185
  %187 = vrot.lane.b32.xlu0 %v17, 109
  %v188 = vpop.permute.xlu0 %187
  %189 = vrot.lane.b32.xlu0 %v18, 109
  %v190 = vpop.permute.xlu0 %189
  %191 = vrot.lane.b32.xlu0 %v19, 109
  %v192 = vpop.permute.xlu0 %191
  %193 = vrot.lane.b32.xlu0 %v20, 109
  %v194 = vpop.permute.xlu0 %193
  %195 = vrot.lane.b32.xlu0 %v21, 109
  %v196 = vpop.permute.xlu0 %195
  %197 = vrot.lane.b32.xlu0 %v22, 109
  %v198 = vpop.permute.xlu0 %197
  %199 = vrot.lane.b32.xlu0 %v23, 109
  %v200 = vpop.permute.xlu0 %199
  %vm201 = vcmask 891904
  %v202 = vsel %vm201, %v178, %v180
  %v203 = vsel %vm201, %v180, %v182
  %v204 = vsel %vm201, %v182, %v184
  %v205 = vsel %vm201, %v184, %v186
  %v206 = vsel %vm201, %v186, %v188
  %v207 = vsel %vm201, %v190, %v192
  %v208 = vsel %vm201, %v192, %v194
  %v209 = vsel %vm201, %v194, %v196
  %v210 = vsel %vm201, %v196, %v198
  %v211 = vsel %vm201, %v198, %v200
  %224 = vrot.lane.b32.xlu0 %v12, 108
  %v225 = vpop.permute.xlu0 %224
  %226 = vrot.lane.b32.xlu0 %v13, 108
  %v227 = vpop.permute.xlu0 %226
  %228 = vrot.lane.b32.xlu0 %v14, 108
  %v229 = vpop.permute.xlu0 %228
  %230 = vrot.lane.b32.xlu0 %v15, 108
  %v231 = vpop.permute.xlu0 %230
  %232 = vrot.lane.b32.xlu0 %v16, 108
  %v233 = vpop.permute.xlu0 %232
  %234 = vrot.lane.b32.xlu0 %v17, 108
  %v235 = vpop.permute.xlu0 %234
  %236 = vrot.lane.b32.xlu0 %v18, 108
  %v237 = vpop.permute.xlu0 %236
  %238 = vrot.lane.b32.xlu0 %v19, 108
  %v239 = vpop.permute.xlu0 %238
  %240 = vrot.lane.b32.xlu0 %v20, 108
  %v241 = vpop.permute.xlu0 %240
  %242 = vrot.lane.b32.xlu0 %v21, 108
  %v243 = vpop.permute.xlu0 %242
  %244 = vrot.lane.b32.xlu0 %v22, 108
  %v245 = vpop.permute.xlu0 %244
  %246 = vrot.lane.b32.xlu0 %v23, 108
  %v247 = vpop.permute.xlu0 %246
  %vm248 = vcmask 883712
  %v249 = vsel %vm248, %v225, %v227
  %v250 = vsel %vm248, %v227, %v229
  %v251 = vsel %vm248, %v229, %v231
  %v252 = vsel %vm248, %v231, %v233
  %v253 = vsel %vm248, %v233, %v235
  %v254 = vsel %vm248, %v237, %v239
  %v255 = vsel %vm248, %v239, %v241
  %v256 = vsel %vm248, %v241, %v243
  %v257 = vsel %vm248, %v243, %v245
  %v258 = vsel %vm248, %v245, %v247
  %271 = vrot.lane.b32.xlu0 %v12, 92
  %v272 = vpop.permute.xlu0 %271
  %273 = vrot.lane.b32.xlu0 %v13, 92
  %v274 = vpop.permute.xlu0 %273
  %275 = vrot.lane.b32.xlu0 %v14, 92
  %v276 = vpop.permute.xlu0 %275
  %277 = vrot.lane.b32.xlu0 %v15, 92
  %v278 = vpop.permute.xlu0 %277
  %279 = vrot.lane.b32.xlu0 %v16, 92
  %v280 = vpop.permute.xlu0 %279
  %281 = vrot.lane.b32.xlu0 %v17, 92
  %v282 = vpop.permute.xlu0 %281
  %283 = vrot.lane.b32.xlu0 %v18, 92
  %v284 = vpop.permute.xlu0 %283
  %285 = vrot.lane.b32.xlu0 %v19, 92
  %v286 = vpop.permute.xlu0 %285
  %287 = vrot.lane.b32.xlu0 %v20, 92
  %v288 = vpop.permute.xlu0 %287
  %289 = vrot.lane.b32.xlu0 %v21, 92
  %v290 = vpop.permute.xlu0 %289
  %291 = vrot.lane.b32.xlu0 %v22, 92
  %v292 = vpop.permute.xlu0 %291
  %293 = vrot.lane.b32.xlu0 %v23, 92
  %v294 = vpop.permute.xlu0 %293
  %vm295 = vcmask 752640
  %v296 = vsel %vm295, %v272, %v274
  %v297 = vsel %vm295, %v274, %v276
  %v298 = vsel %vm295, %v276, %v278
  %v299 = vsel %vm295, %v278, %v280
  %v300 = vsel %vm295, %v280, %v282
  %v301 = vsel %vm295, %v284, %v286
  %v302 = vsel %vm295, %v286, %v288
  %v303 = vsel %vm295, %v288, %v290
  %v304 = vsel %vm295, %v290, %v292
  %v305 = vsel %vm295, %v292, %v294
  %318 = vrot.lane.b32.xlu0 %v12, 91
  %v319 = vpop.permute.xlu0 %318
  %320 = vrot.lane.b32.xlu0 %v13, 91
  %v321 = vpop.permute.xlu0 %320
  %322 = vrot.lane.b32.xlu0 %v14, 91
  %v323 = vpop.permute.xlu0 %322
  %324 = vrot.lane.b32.xlu0 %v15, 91
  %v325 = vpop.permute.xlu0 %324
  %326 = vrot.lane.b32.xlu0 %v16, 91
  %v327 = vpop.permute.xlu0 %326
  %328 = vrot.lane.b32.xlu0 %v17, 91
  %v329 = vpop.permute.xlu0 %328
  %330 = vrot.lane.b32.xlu0 %v18, 91
  %v331 = vpop.permute.xlu0 %330
  %332 = vrot.lane.b32.xlu0 %v19, 91
  %v333 = vpop.permute.xlu0 %332
  %334 = vrot.lane.b32.xlu0 %v20, 91
  %v335 = vpop.permute.xlu0 %334
  %336 = vrot.lane.b32.xlu0 %v21, 91
  %v337 = vpop.permute.xlu0 %336
  %338 = vrot.lane.b32.xlu0 %v22, 91
  %v339 = vpop.permute.xlu0 %338
  %340 = vrot.lane.b32.xlu0 %v23, 91
  %v341 = vpop.permute.xlu0 %340
  %vm342 = vcmask 744448
  %v343 = vsel %vm342, %v319, %v321
  %v344 = vsel %vm342, %v321, %v323
  %v345 = vsel %vm342, %v323, %v325
  %v346 = vsel %vm342, %v325, %v327
  %v347 = vsel %vm342, %v327, %v329
  %v348 = vsel %vm342, %v331, %v333
  %v349 = vsel %vm342, %v333, %v335
  %v350 = vsel %vm342, %v335, %v337
  %v351 = vsel %vm342, %v337, %v339
  %v352 = vsel %vm342, %v339, %v341
  %365 = vrot.lane.b32.xlu0 %v12, 90
  %v366 = vpop.permute.xlu0 %365
  %367 = vrot.lane.b32.xlu0 %v13, 90
  %v368 = vpop.permute.xlu0 %367
  %369 = vrot.lane.b32.xlu0 %v14, 90
  %v370 = vpop.permute.xlu0 %369
  %371 = vrot.lane.b32.xlu0 %v15, 90
  %v372 = vpop.permute.xlu0 %371
  %373 = vrot.lane.b32.xlu0 %v16, 90
  %v374 = vpop.permute.xlu0 %373
  %375 = vrot.lane.b32.xlu0 %v17, 90
  %v376 = vpop.permute.xlu0 %375
  %377 = vrot.lane.b32.xlu0 %v18, 90
  %v378 = vpop.permute.xlu0 %377
  %379 = vrot.lane.b32.xlu0 %v19, 90
  %v380 = vpop.permute.xlu0 %379
  %381 = vrot.lane.b32.xlu0 %v20, 90
  %v382 = vpop.permute.xlu0 %381
  %383 = vrot.lane.b32.xlu0 %v21, 90
  %v384 = vpop.permute.xlu0 %383
  %385 = vrot.lane.b32.xlu0 %v22, 90
  %v386 = vpop.permute.xlu0 %385
  %387 = vrot.lane.b32.xlu0 %v23, 90
  %v388 = vpop.permute.xlu0 %387
  %vm389 = vcmask 736256
  %v390 = vsel %vm389, %v366, %v368
  %v391 = vsel %vm389, %v368, %v370
  %v392 = vsel %vm389, %v370, %v372
  %v393 = vsel %vm389, %v372, %v374
  %v394 = vsel %vm389, %v374, %v376
  %v395 = vsel %vm389, %v378, %v380
  %v396 = vsel %vm389, %v380, %v382
  %v397 = vsel %vm389, %v382, %v384
  %v398 = vsel %vm389, %v384, %v386
  %v399 = vsel %vm389, %v386, %v388
  %v412 = vpack.c.bf16 %v18, %v12
  %v413 = vpack.c.bf16 %v19, %v13
  %v414 = vpack.c.bf16 %v20, %v14
  %v415 = vpack.c.bf16 %v21, %v15
  %v416 = vpack.c.bf16 %v22, %v16
  %v417 = vpack.c.bf16 %v23, %v17
  %v418 = vpack.c.bf16 %v66, %v61
  %v419 = vpack.c.bf16 %v67, %v62
  %v420 = vpack.c.bf16 %v68, %v63
  %v421 = vpack.c.bf16 %v69, %v64
  %v422 = vpack.c.bf16 %v70, %v65
  %v423 = vpack.c.bf16 %v59, %v47
  %v424 = vpack.c.bf16 %v113, %v108
  %v425 = vpack.c.bf16 %v114, %v109
  %v426 = vpack.c.bf16 %v115, %v110
  %v427 = vpack.c.bf16 %v116, %v111
  %v428 = vpack.c.bf16 %v117, %v112
  %v429 = vpack.c.bf16 %v106, %v94
  %v430 = vpack.c.bf16 %v160, %v155
  %v431 = vpack.c.bf16 %v161, %v156
  %v432 = vpack.c.bf16 %v162, %v157
  %v433 = vpack.c.bf16 %v163, %v158
  %v434 = vpack.c.bf16 %v164, %v159
  %v435 = vpack.c.bf16 %v153, %v141
  %v436 = vpack.c.bf16 %v207, %v202
  %v437 = vpack.c.bf16 %v208, %v203
  %v438 = vpack.c.bf16 %v209, %v204
  %v439 = vpack.c.bf16 %v210, %v205
  %v440 = vpack.c.bf16 %v211, %v206
  %v441 = vpack.c.bf16 %v200, %v188
  %v442 = vpack.c.bf16 %v254, %v249
  %v443 = vpack.c.bf16 %v255, %v250
  %v444 = vpack.c.bf16 %v256, %v251
  %v445 = vpack.c.bf16 %v257, %v252
  %v446 = vpack.c.bf16 %v258, %v253
  %v447 = vpack.c.bf16 %v247, %v235
  %v448 = vpack.c.bf16 %v301, %v296
  %v449 = vpack.c.bf16 %v302, %v297
  %v450 = vpack.c.bf16 %v303, %v298
  %v451 = vpack.c.bf16 %v304, %v299
  %v452 = vpack.c.bf16 %v305, %v300
  %v453 = vpack.c.bf16 %v294, %v282
  %v454 = vpack.c.bf16 %v348, %v343
  %v455 = vpack.c.bf16 %v349, %v344
  %v456 = vpack.c.bf16 %v350, %v345
  %v457 = vpack.c.bf16 %v351, %v346
  %v458 = vpack.c.bf16 %v352, %v347
  %v459 = vpack.c.bf16 %v341, %v329
  %v460 = vpack.c.bf16 %v395, %v390
  %v461 = vpack.c.bf16 %v396, %v391
  %v462 = vpack.c.bf16 %v397, %v392
  %v463 = vpack.c.bf16 %v398, %v393
  %v464 = vpack.c.bf16 %v399, %v394
  %v465 = vpack.c.bf16 %v388, %v376
  %v466 = vld [vmem:[%s1] sm:$0xff]
  %v468 = vunpack.c.l.b16 %v466
  %v469 = vunpack.c.h.b16 %v466
  %v470 = vpack.c.b16 %v468, %v468
  %v471 = vpack.c.b16 %v469, %v469
  %vm473 = vcmask 130048
  %v475 = vsel %vm473, %v471, 0
  %477 = vmatpush.bf16.msra.mxu0 %v454
  %478 = vmatpush.bf16.msra.mxu0 %v448
  %479 = vmatpush.bf16.msra.mxu0 %v442
  %480 = vmatpush.bf16.msra.mxu0 %v436
  %481 = vmatpush.bf16.msra.mxu0 %v430
  %482 = vmatpush.bf16.msra.mxu0 %v424
  %483 = vmatpush.bf16.msra.mxu0 %v418
  %484 = vmatpush.bf16.msra.mxu0 %v412
  %485 = vmatmul.bf16.gmra.mxu0 %v470
  %v486 = vpop.f32.mrf.mxu0
  %v487 = vadd.f32 0.0, %v486
  %v488 = vpop.f32.mrf.mxu0
  %489 = vdwg.mxu0
  %490 = vmatpush.bf16.msra.mxu0 0
  %491 = vmatpush.bf16.msra.mxu0 0
  %492 = vmatpush.bf16.msra.mxu0 0
  %493 = vmatpush.bf16.msra.mxu0 0
  %494 = vmatpush.bf16.msra.mxu0 0
  %495 = vmatpush.bf16.msra.mxu0 0
  %496 = vmatpush.bf16.msra.mxu0 0
  %497 = vmatpush.bf16.msra.mxu0 %v460
  %498 = vmatmul.bf16.gmra.mxu0 %v475
  %v499 = vpop.f32.mrf.mxu0
  %v500 = vadd.f32 %v487, %v499
  %v501 = vpop.f32.mrf.mxu0
  %502 = vdwg.mxu0
  %503 = vmatpush.bf16.msra.mxu0 %v455
  %504 = vmatpush.bf16.msra.mxu0 %v449
  %505 = vmatpush.bf16.msra.mxu0 %v443
  %506 = vmatpush.bf16.msra.mxu0 %v437
  %507 = vmatpush.bf16.msra.mxu0 %v431
  %508 = vmatpush.bf16.msra.mxu0 %v425
  %509 = vmatpush.bf16.msra.mxu0 %v419
  %510 = vmatpush.bf16.msra.mxu0 %v413
  %511 = vmatmul.bf16.gmra.mxu0 %v470
  %v512 = vpop.f32.mrf.mxu0
  %v513 = vadd.f32 0.0, %v512
  %v514 = vpop.f32.mrf.mxu0
  %515 = vdwg.mxu0
  %516 = vmatpush.bf16.msra.mxu0 0
  %517 = vmatpush.bf16.msra.mxu0 0
  %518 = vmatpush.bf16.msra.mxu0 0
  %519 = vmatpush.bf16.msra.mxu0 0
  %520 = vmatpush.bf16.msra.mxu0 0
  %521 = vmatpush.bf16.msra.mxu0 0
  %522 = vmatpush.bf16.msra.mxu0 0
  %523 = vmatpush.bf16.msra.mxu0 %v461
  %524 = vmatmul.bf16.gmra.mxu0 %v475
  %v525 = vpop.f32.mrf.mxu0
  %v526 = vadd.f32 %v513, %v525
  %v527 = vpop.f32.mrf.mxu0
  %528 = vdwg.mxu0
  %529 = vmatpush.bf16.msra.mxu0 %v456
  %530 = vmatpush.bf16.msra.mxu0 %v450
  %531 = vmatpush.bf16.msra.mxu0 %v444
  %532 = vmatpush.bf16.msra.mxu0 %v438
  %533 = vmatpush.bf16.msra.mxu0 %v432
  %534 = vmatpush.bf16.msra.mxu0 %v426
  %535 = vmatpush.bf16.msra.mxu0 %v420
  %536 = vmatpush.bf16.msra.mxu0 %v414
  %537 = vmatmul.bf16.gmra.mxu0 %v470
  %v538 = vpop.f32.mrf.mxu0
  %v539 = vadd.f32 0.0, %v538
  %v540 = vpop.f32.mrf.mxu0
  %541 = vdwg.mxu0
  %542 = vmatpush.bf16.msra.mxu0 0
  %543 = vmatpush.bf16.msra.mxu0 0
  %544 = vmatpush.bf16.msra.mxu0 0
  %545 = vmatpush.bf16.msra.mxu0 0
  %546 = vmatpush.bf16.msra.mxu0 0
  %547 = vmatpush.bf16.msra.mxu0 0
  %548 = vmatpush.bf16.msra.mxu0 0
  %549 = vmatpush.bf16.msra.mxu0 %v462
  %550 = vmatmul.bf16.gmra.mxu0 %v475
  %v551 = vpop.f32.mrf.mxu0
  %v552 = vadd.f32 %v539, %v551
  %v553 = vpop.f32.mrf.mxu0
  %554 = vdwg.mxu0
  %555 = vmatpush.bf16.msra.mxu0 %v457
  %556 = vmatpush.bf16.msra.mxu0 %v451
  %557 = vmatpush.bf16.msra.mxu0 %v445
  %558 = vmatpush.bf16.msra.mxu0 %v439
  %559 = vmatpush.bf16.msra.mxu0 %v433
  %560 = vmatpush.bf16.msra.mxu0 %v427
  %561 = vmatpush.bf16.msra.mxu0 %v421
  %562 = vmatpush.bf16.msra.mxu0 %v415
  %563 = vmatmul.bf16.gmra.mxu0 %v470
  %v564 = vpop.f32.mrf.mxu0
  %v565 = vadd.f32 0.0, %v564
  %v566 = vpop.f32.mrf.mxu0
  %567 = vdwg.mxu0
  %568 = vmatpush.bf16.msra.mxu0 0
  %569 = vmatpush.bf16.msra.mxu0 0
  %570 = vmatpush.bf16.msra.mxu0 0
  %571 = vmatpush.bf16.msra.mxu0 0
  %572 = vmatpush.bf16.msra.mxu0 0
  %573 = vmatpush.bf16.msra.mxu0 0
  %574 = vmatpush.bf16.msra.mxu0 0
  %575 = vmatpush.bf16.msra.mxu0 %v463
  %576 = vmatmul.bf16.gmra.mxu0 %v475
  %v577 = vpop.f32.mrf.mxu0
  %v578 = vadd.f32 %v565, %v577
  %v579 = vpop.f32.mrf.mxu0
  %580 = vdwg.mxu0
  %581 = vmatpush.bf16.msra.mxu0 %v458
  %582 = vmatpush.bf16.msra.mxu0 %v452
  %583 = vmatpush.bf16.msra.mxu0 %v446
  %584 = vmatpush.bf16.msra.mxu0 %v440
  %585 = vmatpush.bf16.msra.mxu0 %v434
  %586 = vmatpush.bf16.msra.mxu0 %v428
  %587 = vmatpush.bf16.msra.mxu0 %v422
  %588 = vmatpush.bf16.msra.mxu0 %v416
  %589 = vmatmul.bf16.gmra.mxu0 %v470
  %v590 = vpop.f32.mrf.mxu0
  %v591 = vadd.f32 0.0, %v590
  %v592 = vpop.f32.mrf.mxu0
  %593 = vdwg.mxu0
  %594 = vmatpush.bf16.msra.mxu0 0
  %595 = vmatpush.bf16.msra.mxu0 0
  %596 = vmatpush.bf16.msra.mxu0 0
  %597 = vmatpush.bf16.msra.mxu0 0
  %598 = vmatpush.bf16.msra.mxu0 0
  %599 = vmatpush.bf16.msra.mxu0 0
  %600 = vmatpush.bf16.msra.mxu0 0
  %601 = vmatpush.bf16.msra.mxu0 %v464
  %602 = vmatmul.bf16.gmra.mxu0 %v475
  %v603 = vpop.f32.mrf.mxu0
  %v604 = vadd.f32 %v591, %v603
  %v605 = vpop.f32.mrf.mxu0
  %606 = vdwg.mxu0
  %607 = vmatpush.bf16.msra.mxu0 %v459
  %608 = vmatpush.bf16.msra.mxu0 %v453
  %609 = vmatpush.bf16.msra.mxu0 %v447
  %610 = vmatpush.bf16.msra.mxu0 %v441
  %611 = vmatpush.bf16.msra.mxu0 %v435
  %612 = vmatpush.bf16.msra.mxu0 %v429
  %613 = vmatpush.bf16.msra.mxu0 %v423
  %614 = vmatpush.bf16.msra.mxu0 %v417
  %615 = vmatmul.bf16.gmra.mxu0 %v470
  %v616 = vpop.f32.mrf.mxu0
  %v617 = vadd.f32 0.0, %v616
  %v618 = vpop.f32.mrf.mxu0
  %619 = vdwg.mxu0
  %620 = vmatpush.bf16.msra.mxu0 0
  %621 = vmatpush.bf16.msra.mxu0 0
  %622 = vmatpush.bf16.msra.mxu0 0
  %623 = vmatpush.bf16.msra.mxu0 0
  %624 = vmatpush.bf16.msra.mxu0 0
  %625 = vmatpush.bf16.msra.mxu0 0
  %626 = vmatpush.bf16.msra.mxu0 0
  %627 = vmatpush.bf16.msra.mxu0 %v465
  %628 = vmatmul.bf16.gmra.mxu0 %v475
  %v629 = vpop.f32.mrf.mxu0
  %v630 = vadd.f32 %v617, %v629
  %v631 = vpop.f32.mrf.mxu0
  %632 = vdwg.mxu0
  %633 = vst [vmem:[%s2] sm:$0xff] %v500
  %634 = vst [vmem:[%s2 + $0x8] sm:$0xff] %v526
  %635 = vst [vmem:[%s2 + $0x10] sm:$0xff] %v552
  %636 = vst [vmem:[%s2 + $0x18] sm:$0xff] %v578
  %637 = vst [vmem:[%s2 + $0x20] sm:$0xff] %v604
  %vm638 = vcmask 64512
  %639 = vst.msk [vmem:[%s2 + $0x28] sm:$0xff] %vm638, %v630
  // Predicated region
  $region10: #{refine_net_forward.5} parent=0 // pred_check
    _
  $region11: #{refine_net_forward.5} parent=0 // pred_check_branch
    %641 = sbr.rel (0) target = $region13
  $region12: #{refine_net_forward.5} parent=0 // pred_region
    _
  $region13: #{refine_net_forward.5} parent=0 // pred_fallthru
    _
  // Predicated region
  $region14: #{refine_net_forward.5} parent=0 // pred_check
    _
  $region15: #{refine_net_forward.5} parent=0 // pred_check_branch
    %643 = sbr.rel (0) target = $region17
  $region16: #{refine_net_forward.5} parent=0 // pred_region
    _
  $region17: #{refine_net_forward.5} parent=0 // pred_fallthru
    _

</llo_original>
